<compile_context>
chip_gen: v5e
topology: v5e:2x2
jax: 0.10.0
libtpu: 0.0.40
codegen_flags: <defaults>
</compile_context>

<pallas_src>
import jax
import jax.numpy as jnp
import numpy as np
from jax.experimental import pallas as pl
from jax.experimental.pallas import tpu as pltpu

HIDDEN = 1024


def _simclr_kernel(x_ref, we_ref, be_ref, w1_ref, b1_ref, w2_ref, b2_ref, z_ref):
    # x_ref:  [TB, F]      flattened image views (bf16)
    # we_ref: [F, 1024]    encoder weight (bf16),  be_ref: [1, 1024] (f32)
    # w1_ref: [1024, 1024] proj layer 1 (bf16),    b1_ref: [1, 1024] (f32)
    # w2_ref: [1024, P]    proj layer 2 (bf16),    b2_ref: [1, P]    (f32)
    # z_ref:  [TB, P]      (f32)
    # bf16 MXU inputs, f32 accumulation throughout.
    h = jnp.dot(x_ref[...], we_ref[...],
                preferred_element_type=jnp.float32) + be_ref[...]
    h1 = jnp.dot(h.astype(jnp.bfloat16), w1_ref[...],
                 preferred_element_type=jnp.float32) + b1_ref[...]
    h1 = jnp.maximum(h1, 0.0)  # ReLU
    z_ref[...] = (jnp.dot(h1.astype(jnp.bfloat16), w2_ref[...],
                          preferred_element_type=jnp.float32)
                  + b2_ref[...]).astype(z_ref.dtype)


def _round_up(n, m):
    return (n + m - 1) // m * m


def _vmem_limit_bytes(tb, f, h, p):
    """Derive a scoped-VMEM limit from the actual working set (valid on v7x)."""
    bf16, f32 = 2, 4
    weights = (f * h + h * h + h * p) * bf16 + (2 * h + p) * f32
    x_tile = tb * f * bf16
    out_tile = tb * p * f32
    interm = 2 * tb * h * f32
    # Assume double-buffering on every pallas-managed buffer + compiler scratch.
    total = 2 * (weights + x_tile + out_tile) + 2 * interm + (8 << 20)
    return int(min(max(total, 24 << 20), 48 << 20))


def simclr_forward_views(x_flat, params):
    """Encoder + projection head on stacked views [N, F] -> [N, P], one kernel."""
    we, be, w1, b1, w2, b2 = params
    nrows, F = x_flat.shape
    H = we.shape[1]
    P = w2.shape[1]

    # Pad the stacked-view batch to the f32 sublane tile (8); tile at 128 rows
    # for large batches so intermediates (TB x 1024 f32) stay small on v7x.
    bp = _round_up(nrows, 8)
    tb = 128 if bp >= 128 else bp
    bp = _round_up(bp, tb)
    if bp != nrows:
        x_flat = jnp.pad(x_flat, ((0, bp - nrows), (0, 0)))

    z = pl.pallas_call(
        _simclr_kernel,
        out_shape=jax.ShapeDtypeStruct((bp, P), jnp.float32),
        grid_spec=pltpu.PrefetchScalarGridSpec(
            num_scalar_prefetch=0,
            grid=(bp // tb,),
            in_specs=[
                pl.BlockSpec((tb, F), lambda i: (i, 0)),   # x tile (pipelined)
                pl.BlockSpec((F, H), lambda i: (0, 0)),    # encoder W (resident)
                pl.BlockSpec((1, H), lambda i: (0, 0)),    # encoder b
                pl.BlockSpec((H, H), lambda i: (0, 0)),    # proj W1 (resident)
                pl.BlockSpec((1, H), lambda i: (0, 0)),    # proj b1
                pl.BlockSpec((H, P), lambda i: (0, 0)),    # proj W2 (resident)
                pl.BlockSpec((1, P), lambda i: (0, 0)),    # proj b2
            ],
            out_specs=pl.BlockSpec((tb, P), lambda i: (i, 0)),
        ),
        compiler_params=pltpu.CompilerParams(
            dimension_semantics=("parallel",),
            vmem_limit_bytes=_vmem_limit_bytes(tb, F, H, P)),
    )(x_flat, we, be, w1, b1, w2, b2)
    return z[:nrows]


def init_params(key, in_features, hidden=HIDDEN, projection_dim=128):
    """PyTorch-Linear-style init U(-1/sqrt(fan_in), 1/sqrt(fan_in)).

    Weights stored bf16 (MXU inputs), biases f32 (added after f32 accumulate).
    """
    ks = jax.random.split(key, 6)

    def lin(kw, kb, fan_in, fan_out):
        bound = 1.0 / jnp.sqrt(fan_in)
        w = jax.random.uniform(kw, (fan_in, fan_out), jnp.float32, -bound, bound)
        b = jax.random.uniform(kb, (1, fan_out), jnp.float32, -bound, bound)
        return w.astype(jnp.bfloat16), b

    we, be = lin(ks[0], ks[1], in_features, hidden)       # base_encoder linear
    w1, b1 = lin(ks[2], ks[3], hidden, hidden)            # projection[0]
    w2, b2 = lin(ks[4], ks[5], hidden, projection_dim)    # projection[2]
    return (we, be, w1, b1, w2, b2)


def generate_pairs(x, key):
    """Deterministic stand-in for augmentation.apply_random_augmentation."""
    k1, k2 = jax.random.split(key)
    x1 = x + 0.01 * jax.random.normal(k1, x.shape, x.dtype)
    x2 = jnp.flip(x, axis=-1) + 0.01 * jax.random.normal(k2, x.shape, x.dtype)
    return x1, x2


def _stack_views(x, key):
    B = x.shape[0]
    x1, x2 = generate_pairs(x, key)
    views = jnp.concatenate([x1.reshape(B, -1), x2.reshape(B, -1)], axis=0)
    return views.astype(jnp.bfloat16)


def simclr_forward(x, params, key):
    """x: [B, C, H, W] (NCHW, matching the PyTorch convention) -> (z1, z2)."""
    B = x.shape[0]
    views = _stack_views(x, key)          # [2B, F], both views in one kernel call
    z = simclr_forward_views(views, params)
    return z[:B], z[B:]


def _reference_forward(x, params, key):
    """Pure-JAX reference with the same bf16-input / f32-accumulate path."""
    we, be, w1, b1, w2, b2 = params
    B = x.shape[0]
    views = _stack_views(x, key)
    h = jnp.dot(views, we, preferred_element_type=jnp.float32) + be
    h1 = jnp.maximum(
        jnp.dot(h.astype(jnp.bfloat16), w1, preferred_element_type=jnp.float32) + b1,
        0.0)
    z = jnp.dot(h1.astype(jnp.bfloat16), w2, preferred_element_type=jnp.float32) + b2
    return z[:B], z[B:]


if __name__ == "__main__":
    # Small shapes consistent with the module: C*H*W = 1024 feeds the 1024-dim
    # projection head directly through the synthetic linear encoder.
    B, C, H, W = 2, 4, 16, 16
    projection_dim = 128

    root = jax.random.PRNGKey(0)
    k_x, k_params, k_aug = jax.random.split(root, 3)

    x = jax.random.normal(k_x, (B, C, H, W), jnp.float32)
    params = init_params(k_params, in_features=C * H * W,
                         hidden=HIDDEN, projection_dim=projection_dim)

    z1, z2 = simclr_forward(x, params, k_aug)
    jax.block_until_ready((z1, z2))

    assert z1.shape == (B, projection_dim) and z2.shape == (B, projection_dim)
    assert z1.dtype == jnp.float32 and z2.dtype == jnp.float32

    # Sanity-check against the pure-JAX reference (same bf16/f32-acc numerics).
    z1_ref, z2_ref = _reference_forward(x, params, k_aug)
    np.testing.assert_allclose(np.asarray(z1), np.asarray(z1_ref),
                               rtol=5e-2, atol=5e-2)
    np.testing.assert_allclose(np.asarray(z2), np.asarray(z2_ref),
                               rtol=5e-2, atol=5e-2)

    print("KERNEL_OK")
</pallas_src>

<mosaic_0001>
module attributes {stable_mosaic.version = 11 : i64} {
  func.func @_simclr_kernel(%arg0: i32, %arg1: memref<8x1024xbf16, #tpu.memory_space<vmem>>, %arg2: memref<1024x1024xbf16, #tpu.memory_space<vmem>>, %arg3: memref<1x1024xf32, #tpu.memory_space<vmem>>, %arg4: memref<1024x1024xbf16, #tpu.memory_space<vmem>>, %arg5: memref<1x1024xf32, #tpu.memory_space<vmem>>, %arg6: memref<1024x128xbf16, #tpu.memory_space<vmem>>, %arg7: memref<1x128xf32, #tpu.memory_space<vmem>>, %arg8: memref<8x128xf32, #tpu.memory_space<vmem>>) attributes {dimension_semantics = [#tpu.dimension_semantics<parallel>], iteration_bounds = array<i64: 1>, scalar_prefetch = 0 : i64, scratch_operands = 0 : i64, tpu.core_type = #tpu.core_type<tc>, window_params = [{transform_indices = @transform_0, window_bounds = array<i64: 8, 1024>}, {pipeline_mode = #tpu.pipeline_mode<synchronous>, transform_indices = @transform_1, window_bounds = array<i64: 1024, 1024>}, {pipeline_mode = #tpu.pipeline_mode<synchronous>, transform_indices = @transform_2, window_bounds = array<i64: 1, 1024>}, {pipeline_mode = #tpu.pipeline_mode<synchronous>, transform_indices = @transform_3, window_bounds = array<i64: 1024, 1024>}, {pipeline_mode = #tpu.pipeline_mode<synchronous>, transform_indices = @transform_4, window_bounds = array<i64: 1, 1024>}, {pipeline_mode = #tpu.pipeline_mode<synchronous>, transform_indices = @transform_5, window_bounds = array<i64: 1024, 128>}, {pipeline_mode = #tpu.pipeline_mode<synchronous>, transform_indices = @transform_6, window_bounds = array<i64: 1, 128>}, {transform_indices = @transform_7, window_bounds = array<i64: 8, 128>}]} {
    %c0 = arith.constant 0 : index
    %c0_0 = arith.constant 0 : index
    %0 = vector.load %arg1[%c0, %c0_0] : memref<8x1024xbf16, #tpu.memory_space<vmem>>, vector<8x1024xbf16>
    %c0_1 = arith.constant 0 : index
    %c0_2 = arith.constant 0 : index
    %1 = vector.load %arg2[%c0_1, %c0_2] : memref<1024x1024xbf16, #tpu.memory_space<vmem>>, vector<1024x1024xbf16>
    %cst = arith.constant dense<0.000000e+00> : vector<8x1024xf32>
    %2 = tpu.matmul %0, %1, %cst {dimension_numbers = #tpu.dot_dimension_numbers<[1], [0], [0], [1], [0, 0, 1, 1], [], []>} : vector<8x1024xbf16>, vector<1024x1024xbf16>, vector<8x1024xf32> -> vector<8x1024xf32>
    %c0_3 = arith.constant 0 : index
    %c0_4 = arith.constant 0 : index
    %3 = vector.load %arg3[%c0_3, %c0_4] : memref<1x1024xf32, #tpu.memory_space<vmem>>, vector<1x1024xf32>
    %4 = vector.broadcast %3 : vector<1x1024xf32> to vector<8x1024xf32>
    %5 = arith.addf %2, %4 : vector<8x1024xf32>
    %6 = arith.truncf %5 : vector<8x1024xf32> to vector<8x1024xbf16>
    %c0_5 = arith.constant 0 : index
    %c0_6 = arith.constant 0 : index
    %7 = vector.load %arg4[%c0_5, %c0_6] : memref<1024x1024xbf16, #tpu.memory_space<vmem>>, vector<1024x1024xbf16>
    %cst_7 = arith.constant dense<0.000000e+00> : vector<8x1024xf32>
    %8 = tpu.matmul %6, %7, %cst_7 {dimension_numbers = #tpu.dot_dimension_numbers<[1], [0], [0], [1], [0, 0, 1, 1], [], []>} : vector<8x1024xbf16>, vector<1024x1024xbf16>, vector<8x1024xf32> -> vector<8x1024xf32>
    %c0_8 = arith.constant 0 : index
    %c0_9 = arith.constant 0 : index
    %9 = vector.load %arg5[%c0_8, %c0_9] : memref<1x1024xf32, #tpu.memory_space<vmem>>, vector<1x1024xf32>
    %10 = vector.broadcast %9 : vector<1x1024xf32> to vector<8x1024xf32>
    %11 = arith.addf %8, %10 : vector<8x1024xf32>
    %cst_10 = arith.constant 0.000000e+00 : f32
    %12 = vector.broadcast %cst_10 : f32 to vector<8x1024xf32>
    %13 = arith.maximumf %11, %12 : vector<8x1024xf32>
    %14 = arith.truncf %13 : vector<8x1024xf32> to vector<8x1024xbf16>
    %c0_11 = arith.constant 0 : index
    %c0_12 = arith.constant 0 : index
    %15 = vector.load %arg6[%c0_11, %c0_12] : memref<1024x128xbf16, #tpu.memory_space<vmem>>, vector<1024x128xbf16>
    %cst_13 = arith.constant dense<0.000000e+00> : vector<8x128xf32>
    %16 = tpu.matmul %14, %15, %cst_13 {dimension_numbers = #tpu.dot_dimension_numbers<[1], [0], [0], [1], [0, 0, 1, 1], [], []>} : vector<8x1024xbf16>, vector<1024x128xbf16>, vector<8x128xf32> -> vector<8x128xf32>
    %c0_14 = arith.constant 0 : index
    %c0_15 = arith.constant 0 : index
    %17 = vector.load %arg7[%c0_14, %c0_15] : memref<1x128xf32, #tpu.memory_space<vmem>>, vector<1x128xf32>
    %18 = vector.broadcast %17 : vector<1x128xf32> to vector<8x128xf32>
    %19 = arith.addf %16, %18 : vector<8x128xf32>
    %c0_16 = arith.constant 0 : index
    %c0_17 = arith.constant 0 : index
    %20 = vector.load %arg8[%c0_16, %c0_17] : memref<8x128xf32, #tpu.memory_space<vmem>>, vector<8x128xf32>
    tpu.vector_store %arg8[%c0_16, %c0_17], %19 {strides = array<i32>} : memref<8x128xf32, #tpu.memory_space<vmem>>, vector<8x128xf32>,
    return
  }
  func.func @transform_0(%arg0: i32) -> (i32, i32) {
    %c0_i32 = arith.constant 0 : i32
    %c0_i32_0 = arith.constant 0 : i32
    return %arg0, %c0_i32 : i32, i32
  }
  func.func @transform_1(%arg0: i32) -> (i32, i32) {
    %c0_i32 = arith.constant 0 : i32
    %c0_i32_0 = arith.constant 0 : i32
    %c0_i32_1 = arith.constant 0 : i32
    return %c0_i32, %c0_i32_0 : i32, i32
  }
  func.func @transform_2(%arg0: i32) -> (i32, i32) {
    %c0_i32 = arith.constant 0 : i32
    %c0_i32_0 = arith.constant 0 : i32
    %c0_i32_1 = arith.constant 0 : i32
    return %c0_i32, %c0_i32_0 : i32, i32
  }
  func.func @transform_3(%arg0: i32) -> (i32, i32) {
    %c0_i32 = arith.constant 0 : i32
    %c0_i32_0 = arith.constant 0 : i32
    %c0_i32_1 = arith.constant 0 : i32
    return %c0_i32, %c0_i32_0 : i32, i32
  }
  func.func @transform_4(%arg0: i32) -> (i32, i32) {
    %c0_i32 = arith.constant 0 : i32
    %c0_i32_0 = arith.constant 0 : i32
    %c0_i32_1 = arith.constant 0 : i32
    return %c0_i32, %c0_i32_0 : i32, i32
  }
  func.func @transform_5(%arg0: i32) -> (i32, i32) {
    %c0_i32 = arith.constant 0 : i32
    %c0_i32_0 = arith.constant 0 : i32
    %c0_i32_1 = arith.constant 0 : i32
    return %c0_i32, %c0_i32_0 : i32, i32
  }
  func.func @transform_6(%arg0: i32) -> (i32, i32) {
    %c0_i32 = arith.constant 0 : i32
    %c0_i32_0 = arith.constant 0 : i32
    %c0_i32_1 = arith.constant 0 : i32
    return %c0_i32, %c0_i32_0 : i32, i32
  }
  func.func @transform_7(%arg0: i32) -> (i32, i32) {
    %c0_i32 = arith.constant 0 : i32
    %c0_i32_0 = arith.constant 0 : i32
    return %arg0, %c0_i32 : i32, i32
  }
}

</mosaic_0001>

<llo_original>
// kernel: tpu_custom_call.1
$region0: #{tpu_custom_call.1}
  #allocation0 [shape = 'u32[]', space=smem, size = 0x4, offset = 0x4, fixed_abs, tag = 'smem constant byte address 0x4 - core index']
  #allocation1 [shape = 'u32[72,128]{1,0:T(1,128)}', space=vmem, size = 0x9000, scoped, tag = 'internal scratch']
  %s0 = inlined_call_operand.hbm [shape: bf16[8,1024], index: 0, kind: input, shape index: {}]
  %s1 = inlined_call_operand.hbm [shape: bf16[1024,1024], index: 1, kind: input, shape index: {}]
  %s2 = inlined_call_operand.hbm [shape: f32[1,1024], index: 2, kind: input, shape index: {}]
  %s3 = inlined_call_operand.hbm [shape: bf16[1024,1024], index: 3, kind: input, shape index: {}]
  %s4 = inlined_call_operand.hbm [shape: f32[1,1024], index: 4, kind: input, shape index: {}]
  %s5 = inlined_call_operand.hbm [shape: bf16[1024,128], index: 5, kind: input, shape index: {}]
  %s6 = inlined_call_operand.hbm [shape: f32[1,128], index: 6, kind: input, shape index: {}]
  %s7 = inlined_call_operand.hbm [shape: f32[8,128], index: 7, kind: output, shape index: {}]
  %s8 = sld [smem:[#allocation0]]
  $region66: #{tpu_custom_call.1} parent=0
    _
  %s10 = ssub.s32 1, %s8
  %s11 = scalar_select 0, %s10, %s8
  $region1: #{tpu_custom_call.1} parent=0
    #allocation2 [shape = 'u8[16384]{0}', space=vmem, size = 0x4000, scoped, tag = 'input window, operand 0, single buffered']
    #allocation3 [shape = 's32[1]{0}', space=sflag, size = 0x4, scoped, tag = 'scoped memory for tpu_custom_call.1']
    #allocation4 [shape = 's32[1]{0}', space=sflag, size = 0x4, scoped, tag = 'scoped memory for tpu_custom_call.1']
    #allocation5 [shape = 'u8[2097152]{0}', space=vmem, size = 0x200000, scoped, tag = 'input window, operand 1, single buffered']
    #allocation6 [shape = 's32[1]{0}', space=sflag, size = 0x4, scoped, tag = 'scoped memory for tpu_custom_call.1']
    #allocation7 [shape = 'u8[4096]{0}', space=vmem, size = 0x1000, scoped, tag = 'input window, operand 2, single buffered']
    #allocation8 [shape = 'u8[2097152]{0}', space=vmem, size = 0x200000, scoped, tag = 'input window, operand 3, single buffered']
    #allocation9 [shape = 's32[1]{0}', space=sflag, size = 0x4, scoped, tag = 'scoped memory for tpu_custom_call.1']
    #allocation10 [shape = 'u8[4096]{0}', space=vmem, size = 0x1000, scoped, tag = 'input window, operand 4, single buffered']
    #allocation11 [shape = 'u8[262144]{0}', space=vmem, size = 0x40000, scoped, tag = 'input window, operand 5, single buffered']
    #allocation12 [shape = 's32[1]{0}', space=sflag, size = 0x4, scoped, tag = 'scoped memory for tpu_custom_call.1']
    #allocation13 [shape = 'u8[512]{0}', space=vmem, size = 0x400, scoped, tag = 'input window, operand 6, single buffered']
    #allocation14 [shape = 'u8[4096]{0}', space=vmem, size = 0x1000, scoped, tag = 'output window, operand 0, single buffered']
    %12 = vsyncpa [#allocation3], 0
    %13 = vsyncpa [#allocation6], 0
    %14 = vsyncpa [#allocation9], 0
    %15 = vsyncpa [#allocation12], 0
    %16 = vsyncpa [#allocation4], 0
    // Predicated region
    $region2: #{tpu_custom_call.1} parent=1 // pred_check
      _
    $region3: #{tpu_custom_call.1} parent=1 // pred_check_branch
      %18 = sbr.rel (0) target = $region5
    $region4: #{tpu_custom_call.1} parent=1 // pred_region
      %20 = vsyncadd [#allocation3], 0
      %s22 = sshll.u32 %s0, 4
      %s23 = int_to_ptr.hbm [resolvable:$true] %s22
      %s24 = sshll.u32 [#allocation2], 4
      %s25 = int_to_ptr.vmem [resolvable:$true] %s24
      %27 = dma.hbm_to_vmem [thread:$0]  %s23, 512, %s25, [#allocation3]
    $region5: #{tpu_custom_call.1} parent=1 // pred_fallthru
      _
    // Predicated region
    $region6: #{tpu_custom_call.1} parent=1 // pred_check
      _
    $region7: #{tpu_custom_call.1} parent=1 // pred_check_branch
      %29 = sbr.rel (0) target = $region9
    $region8: #{tpu_custom_call.1} parent=1 // pred_region
      %31 = vsyncadd [#allocation6], 0
      %s32 = sshll.u32 %s1, 4
      %s33 = int_to_ptr.hbm [resolvable:$true] %s32
      %s34 = sshll.u32 [#allocation5], 4
      %s35 = int_to_ptr.vmem [resolvable:$true] %s34
      %40 = dma.hbm_to_vmem [thread:$0]  %s33, 65536, %s35, [#allocation6], 512, 512, 32
    $region9: #{tpu_custom_call.1} parent=1 // pred_fallthru
      _
    // Predicated region
    $region10: #{tpu_custom_call.1} parent=1 // pred_check
      _
    $region11: #{tpu_custom_call.1} parent=1 // pred_check_branch
      %42 = sbr.rel (0) target = $region13
    $region12: #{tpu_custom_call.1} parent=1 // pred_region
      %44 = vsyncadd [#allocation6], 0
      %s46 = sshll.u32 %s2, 4
      %s47 = int_to_ptr.hbm [resolvable:$true] %s46
      %s48 = sshll.u32 [#allocation7], 4
      %s49 = int_to_ptr.vmem [resolvable:$true] %s48
      %51 = dma.hbm_to_vmem [thread:$0]  %s47, 128, %s49, [#allocation6]
    $region13: #{tpu_custom_call.1} parent=1 // pred_fallthru
      _
    // Predicated region
    $region14: #{tpu_custom_call.1} parent=1 // pred_check
      _
    $region15: #{tpu_custom_call.1} parent=1 // pred_check_branch
      %53 = sbr.rel (0) target = $region17
    $region16: #{tpu_custom_call.1} parent=1 // pred_region
      %55 = vsyncadd [#allocation9], 0
      %s56 = sshll.u32 %s3, 4
      %s57 = int_to_ptr.hbm [resolvable:$true] %s56
      %s58 = sshll.u32 [#allocation8], 4
      %s59 = int_to_ptr.vmem [resolvable:$true] %s58
      %64 = dma.hbm_to_vmem [thread:$0]  %s57, 65536, %s59, [#allocation9], 512, 512, 32
    $region17: #{tpu_custom_call.1} parent=1 // pred_fallthru
      _
    // Predicated region
    $region18: #{tpu_custom_call.1} parent=1 // pred_check
      _
    $region19: #{tpu_custom_call.1} parent=1 // pred_check_branch
      %66 = sbr.rel (0) target = $region21
    $region20: #{tpu_custom_call.1} parent=1 // pred_region
      %68 = vsyncadd [#allocation9], 0
      %s70 = sshll.u32 %s4, 4
      %s71 = int_to_ptr.hbm [resolvable:$true] %s70
      %s72 = sshll.u32 [#allocation10], 4
      %s73 = int_to_ptr.vmem [resolvable:$true] %s72
      %75 = dma.hbm_to_vmem [thread:$0]  %s71, 128, %s73, [#allocation9]
    $region21: #{tpu_custom_call.1} parent=1 // pred_fallthru
      _
    // Predicated region
    $region22: #{tpu_custom_call.1} parent=1 // pred_check
      _
    $region23: #{tpu_custom_call.1} parent=1 // pred_check_branch
      %77 = sbr.rel (0) target = $region25
    $region24: #{tpu_custom_call.1} parent=1 // pred_region
      %79 = vsyncadd [#allocation12], 0
      %s80 = sshll.u32 %s5, 4
      %s81 = int_to_ptr.hbm [resolvable:$true] %s80
      %s82 = sshll.u32 [#allocation11], 4
      %s83 = int_to_ptr.vmem [resolvable:$true] %s82
      %88 = dma.hbm_to_vmem [thread:$0]  %s81, 8192, %s83, [#allocation12], 64, 64, 4
    $region25: #{tpu_custom_call.1} parent=1 // pred_fallthru
      _
    // Predicated region
    $region26: #{tpu_custom_call.1} parent=1 // pred_check
      _
    $region27: #{tpu_custom_call.1} parent=1 // pred_check_branch
      %90 = sbr.rel (0) target = $region29
    $region28: #{tpu_custom_call.1} parent=1 // pred_region
      %92 = vsyncadd [#allocation12], 0
      %s94 = sshll.u32 %s6, 4
      %s95 = int_to_ptr.hbm [resolvable:$true] %s94
      %s96 = sshll.u32 [#allocation13], 4
      %s97 = int_to_ptr.vmem [resolvable:$true] %s96
      %99 = dma.hbm_to_vmem [thread:$0]  %s95, 16, %s97, [#allocation12]
    $region29: #{tpu_custom_call.1} parent=1 // pred_fallthru
      _
    // Predicated region
    $region30: #{tpu_custom_call.1} parent=1 // pred_check
      _
    $region31: #{tpu_custom_call.1} parent=1 // pred_check_branch
      %101 = sbr.rel (0) target = $region33
    $region32: #{tpu_custom_call.1} parent=1 // pred_region
      %103 = dma.done [#allocation3], 512
    $region33: #{tpu_custom_call.1} parent=1 // pred_fallthru
      _
    // Predicated region
    $region34: #{tpu_custom_call.1} parent=1 // pred_check
      _
    $region35: #{tpu_custom_call.1} parent=1 // pred_check_branch
      %105 = sbr.rel (0) target = $region37
    $region36: #{tpu_custom_call.1} parent=1 // pred_region
      %107 = dma.done [#allocation6], 65536
    $region37: #{tpu_custom_call.1} parent=1 // pred_fallthru
      _
    // Predicated region
    $region38: #{tpu_custom_call.1} parent=1 // pred_check
      _
    $region39: #{tpu_custom_call.1} parent=1 // pred_check_branch
      %109 = sbr.rel (0) target = $region41
    $region40: #{tpu_custom_call.1} parent=1 // pred_region
      %111 = dma.done [#allocation6], 128
    $region41: #{tpu_custom_call.1} parent=1 // pred_fallthru
      _
    // Predicated region
    $region42: #{tpu_custom_call.1} parent=1 // pred_check
      _
    $region43: #{tpu_custom_call.1} parent=1 // pred_check_branch
      %113 = sbr.rel (0) target = $region45
    $region44: #{tpu_custom_call.1} parent=1 // pred_region
      %115 = dma.done [#allocation9], 65536
    $region45: #{tpu_custom_call.1} parent=1 // pred_fallthru
      _
    // Predicated region
    $region46: #{tpu_custom_call.1} parent=1 // pred_check
      _
    $region47: #{tpu_custom_call.1} parent=1 // pred_check_branch
      %117 = sbr.rel (0) target = $region49
    $region48: #{tpu_custom_call.1} parent=1 // pred_region
      %119 = dma.done [#allocation9], 128
    $region49: #{tpu_custom_call.1} parent=1 // pred_fallthru
      _
    // Predicated region
    $region50: #{tpu_custom_call.1} parent=1 // pred_check
      _
    $region51: #{tpu_custom_call.1} parent=1 // pred_check_branch
      %121 = sbr.rel (0) target = $region53
    $region52: #{tpu_custom_call.1} parent=1 // pred_region
      %123 = dma.done [#allocation12], 8192
    $region53: #{tpu_custom_call.1} parent=1 // pred_fallthru
      _
    // Predicated region
    $region54: #{tpu_custom_call.1} parent=1 // pred_check
      _
    $region55: #{tpu_custom_call.1} parent=1 // pred_check_branch
      %125 = sbr.rel (0) target = $region57
    $region56: #{tpu_custom_call.1} parent=1 // pred_region
      %127 = dma.done [#allocation12], 16
    $region57: #{tpu_custom_call.1} parent=1 // pred_fallthru
      _
    %v128 = vld [vmem:[#allocation2] sm:$0xff]
    %v129 = vld [vmem:[#allocation2 + $0x8] sm:$0xff]
    %v130 = vld [vmem:[#allocation2 + $0x10] sm:$0xff]
    %v131 = vld [vmem:[#allocation2 + $0x18] sm:$0xff]
    %v132 = vld [vmem:[#allocation5] sm:$0xff]
    %v133 = vld [vmem:[#allocation5 + $0x8] sm:$0xff]
    %v134 = vld [vmem:[#allocation5 + $0x10] sm:$0xff]
    %v135 = vld [vmem:[#allocation5 + $0x18] sm:$0xff]
    %v136 = vld [vmem:[#allocation5 + $0x20] sm:$0xff]
    %v137 = vld [vmem:[#allocation5 + $0x28] sm:$0xff]
    %v138 = vld [vmem:[#allocation5 + $0x30] sm:$0xff]
    %v139 = vld [vmem:[#allocation5 + $0x38] sm:$0xff]
    %v140 = vld [vmem:[#allocation5 + $0x40] sm:$0xff]
    %v141 = vld [vmem:[#allocation5 + $0x48] sm:$0xff]
    %v142 = vld [vmem:[#allocation5 + $0x50] sm:$0xff]
    %v143 = vld [vmem:[#allocation5 + $0x58] sm:$0xff]
    %v144 = vld [vmem:[#allocation5 + $0x60] sm:$0xff]
    %v145 = vld [vmem:[#allocation5 + $0x68] sm:$0xff]
    %v146 = vld [vmem:[#allocation5 + $0x70] sm:$0xff]
    %v147 = vld [vmem:[#allocation5 + $0x78] sm:$0xff]
    %v148 = vld [vmem:[#allocation5 + $0x80] sm:$0xff]
    %v149 = vld [vmem:[#allocation5 + $0x88] sm:$0xff]
    %v150 = vld [vmem:[#allocation5 + $0x90] sm:$0xff]
    %v151 = vld [vmem:[#allocation5 + $0x98] sm:$0xff]
    %v152 = vld [vmem:[#allocation5 + $0xa0] sm:$0xff]
    %v153 = vld [vmem:[#allocation5 + $0xa8] sm:$0xff]
    %v154 = vld [vmem:[#allocation5 + $0xb0] sm:$0xff]
    %v155 = vld [vmem:[#allocation5 + $0xb8] sm:$0xff]
    %v156 = vld [vmem:[#allocation5 + $0xc0] sm:$0xff]
    %v157 = vld [vmem:[#allocation5 + $0xc8] sm:$0xff]
    %v158 = vld [vmem:[#allocation5 + $0xd0] sm:$0xff]
    %v159 = vld [vmem:[#allocation5 + $0xd8] sm:$0xff]
    %v160 = vld [vmem:[#allocation5 + $0xe0] sm:$0xff]
    %v161 = vld [vmem:[#allocation5 + $0xe8] sm:$0xff]
    %v162 = vld [vmem:[#allocation5 + $0xf0] sm:$0xff]
    %v163 = vld [vmem:[#allocation5 + $0xf8] sm:$0xff]
    %v164 = vld [vmem:[#allocation5 + $0x100] sm:$0xff]
    %v165 = vld [vmem:[#allocation5 + $0x108] sm:$0xff]
    %v166 = vld [vmem:[#allocation5 + $0x110] sm:$0xff]
    %v167 = vld [vmem:[#allocation5 + $0x118] sm:$0xff]
    %v168 = vld [vmem:[#allocation5 + $0x120] sm:$0xff]
    %v169 = vld [vmem:[#allocation5 + $0x128] sm:$0xff]
    %v170 = vld [vmem:[#allocation5 + $0x130] sm:$0xff]
    %v171 = vld [vmem:[#allocation5 + $0x138] sm:$0xff]
    %v172 = vld [vmem:[#allocation5 + $0x140] sm:$0xff]
    %v173 = vld [vmem:[#allocation5 + $0x148] sm:$0xff]
    %v174 = vld [vmem:[#allocation5 + $0x150] sm:$0xff]
    %v175 = vld [vmem:[#allocation5 + $0x158] sm:$0xff]
    %v176 = vld [vmem:[#allocation5 + $0x160] sm:$0xff]
    %v177 = vld [vmem:[#allocation5 + $0x168] sm:$0xff]
    %v178 = vld [vmem:[#allocation5 + $0x170] sm:$0xff]
    %v179 = vld [vmem:[#allocation5 + $0x178] sm:$0xff]
    %v180 = vld [vmem:[#allocation5 + $0x180] sm:$0xff]
    %v181 = vld [vmem:[#allocation5 + $0x188] sm:$0xff]
    %v182 = vld [vmem:[#allocation5 + $0x190] sm:$0xff]
    %v183 = vld [vmem:[#allocation5 + $0x198] sm:$0xff]
    %v184 = vld [vmem:[#allocation5 + $0x1a0] sm:$0xff]
    %v185 = vld [vmem:[#allocation5 + $0x1a8] sm:$0xff]
    %v186 = vld [vmem:[#allocation5 + $0x1b0] sm:$0xff]
    %v187 = vld [vmem:[#allocation5 + $0x1b8] sm:$0xff]
    %v188 = vld [vmem:[#allocation5 + $0x1c0] sm:$0xff]
    %v189 = vld [vmem:[#allocation5 + $0x1c8] sm:$0xff]
    %v190 = vld [vmem:[#allocation5 + $0x1d0] sm:$0xff]
    %v191 = vld [vmem:[#allocation5 + $0x1d8] sm:$0xff]
    %v192 = vld [vmem:[#allocation5 + $0x1e0] sm:$0xff]
    %v193 = vld [vmem:[#allocation5 + $0x1e8] sm:$0xff]
    %v194 = vld [vmem:[#allocation5 + $0x1f0] sm:$0xff]
    %v195 = vld [vmem:[#allocation5 + $0x1f8] sm:$0xff]
    %v196 = vld [vmem:[#allocation5 + $0x200] sm:$0xff]
    %v197 = vld [vmem:[#allocation5 + $0x208] sm:$0xff]
    %v198 = vld [vmem:[#allocation5 + $0x210] sm:$0xff]
    %v199 = vld [vmem:[#allocation5 + $0x218] sm:$0xff]
    %v200 = vld [vmem:[#allocation5 + $0x220] sm:$0xff]
    %v201 = vld [vmem:[#allocation5 + $0x228] sm:$0xff]
    %v202 = vld [vmem:[#allocation5 + $0x230] sm:$0xff]
    %v203 = vld [vmem:[#allocation5 + $0x238] sm:$0xff]
    %v204 = vld [vmem:[#allocation5 + $0x240] sm:$0xff]
    %v205 = vld [vmem:[#allocation5 + $0x248] sm:$0xff]
    %v206 = vld [vmem:[#allocation5 + $0x250] sm:$0xff]
    %v207 = vld [vmem:[#allocation5 + $0x258] sm:$0xff]
    %v208 = vld [vmem:[#allocation5 + $0x260] sm:$0xff]
    %v209 = vld [vmem:[#allocation5 + $0x268] sm:$0xff]
    %v210 = vld [vmem:[#allocation5 + $0x270] sm:$0xff]
    %v211 = vld [vmem:[#allocation5 + $0x278] sm:$0xff]
    %v212 = vld [vmem:[#allocation5 + $0x280] sm:$0xff]
    %v213 = vld [vmem:[#allocation5 + $0x288] sm:$0xff]
    %v214 = vld [vmem:[#allocation5 + $0x290] sm:$0xff]
    %v215 = vld [vmem:[#allocation5 + $0x298] sm:$0xff]
    %v216 = vld [vmem:[#allocation5 + $0x2a0] sm:$0xff]
    %v217 = vld [vmem:[#allocation5 + $0x2a8] sm:$0xff]
    %v218 = vld [vmem:[#allocation5 + $0x2b0] sm:$0xff]
    %v219 = vld [vmem:[#allocation5 + $0x2b8] sm:$0xff]
    %v220 = vld [vmem:[#allocation5 + $0x2c0] sm:$0xff]
    %v221 = vld [vmem:[#allocation5 + $0x2c8] sm:$0xff]
    %v222 = vld [vmem:[#allocation5 + $0x2d0] sm:$0xff]
    %v223 = vld [vmem:[#allocation5 + $0x2d8] sm:$0xff]
    %v224 = vld [vmem:[#allocation5 + $0x2e0] sm:$0xff]
    %v225 = vld [vmem:[#allocation5 + $0x2e8] sm:$0xff]
    %v226 = vld [vmem:[#allocation5 + $0x2f0] sm:$0xff]
    %v227 = vld [vmem:[#allocation5 + $0x2f8] sm:$0xff]
    %v228 = vld [vmem:[#allocation5 + $0x300] sm:$0xff]
    %v229 = vld [vmem:[#allocation5 + $0x308] sm:$0xff]
    %v230 = vld [vmem:[#allocation5 + $0x310] sm:$0xff]
    %v231 = vld [vmem:[#allocation5 + $0x318] sm:$0xff]
    %v232 = vld [vmem:[#allocation5 + $0x320] sm:$0xff]
    %v233 = vld [vmem:[#allocation5 + $0x328] sm:$0xff]
    %v234 = vld [vmem:[#allocation5 + $0x330] sm:$0xff]
    %v235 = vld [vmem:[#allocation5 + $0x338] sm:$0xff]
    %v236 = vld [vmem:[#allocation5 + $0x340] sm:$0xff]
    %v237 = vld [vmem:[#allocation5 + $0x348] sm:$0xff]
    %v238 = vld [vmem:[#allocation5 + $0x350] sm:$0xff]
    %v239 = vld [vmem:[#allocation5 + $0x358] sm:$0xff]
    %v240 = vld [vmem:[#allocation5 + $0x360] sm:$0xff]
    %v241 = vld [vmem:[#allocation5 + $0x368] sm:$0xff]
    %v242 = vld [vmem:[#allocation5 + $0x370] sm:$0xff]
    %v243 = vld [vmem:[#allocation5 + $0x378] sm:$0xff]
    %v244 = vld [vmem:[#allocation5 + $0x380] sm:$0xff]
    %v245 = vld [vmem:[#allocation5 + $0x388] sm:$0xff]
    %v246 = vld [vmem:[#allocation5 + $0x390] sm:$0xff]
    %v247 = vld [vmem:[#allocation5 + $0x398] sm:$0xff]
    %v248 = vld [vmem:[#allocation5 + $0x3a0] sm:$0xff]
    %v249 = vld [vmem:[#allocation5 + $0x3a8] sm:$0xff]
    %v250 = vld [vmem:[#allocation5 + $0x3b0] sm:$0xff]
    %v251 = vld [vmem:[#allocation5 + $0x3b8] sm:$0xff]
    %v252 = vld [vmem:[#allocation5 + $0x3c0] sm:$0xff]
    %v253 = vld [vmem:[#allocation5 + $0x3c8] sm:$0xff]
    %v254 = vld [vmem:[#allocation5 + $0x3d0] sm:$0xff]
    %v255 = vld [vmem:[#allocation5 + $0x3d8] sm:$0xff]
    %v256 = vld [vmem:[#allocation5 + $0x3e0] sm:$0xff]
    %v257 = vld [vmem:[#allocation5 + $0x3e8] sm:$0xff]
    %v258 = vld [vmem:[#allocation5 + $0x3f0] sm:$0xff]
    %v259 = vld [vmem:[#allocation5 + $0x3f8] sm:$0xff]
    %v260 = vld [vmem:[#allocation5 + $0x400] sm:$0xff]
    %v261 = vld [vmem:[#allocation5 + $0x408] sm:$0xff]
    %v262 = vld [vmem:[#allocation5 + $0x410] sm:$0xff]
    %v263 = vld [vmem:[#allocation5 + $0x418] sm:$0xff]
    %v264 = vld [vmem:[#allocation5 + $0x420] sm:$0xff]
    %v265 = vld [vmem:[#allocation5 + $0x428] sm:$0xff]
    %v266 = vld [vmem:[#allocation5 + $0x430] sm:$0xff]
    %v267 = vld [vmem:[#allocation5 + $0x438] sm:$0xff]
    %v268 = vld [vmem:[#allocation5 + $0x440] sm:$0xff]
    %v269 = vld [vmem:[#allocation5 + $0x448] sm:$0xff]
    %v270 = vld [vmem:[#allocation5 + $0x450] sm:$0xff]
    %v271 = vld [vmem:[#allocation5 + $0x458] sm:$0xff]
    %v272 = vld [vmem:[#allocation5 + $0x460] sm:$0xff]
    %v273 = vld [vmem:[#allocation5 + $0x468] sm:$0xff]
    %v274 = vld [vmem:[#allocation5 + $0x470] sm:$0xff]
    %v275 = vld [vmem:[#allocation5 + $0x478] sm:$0xff]
    %v276 = vld [vmem:[#allocation5 + $0x480] sm:$0xff]
    %v277 = vld [vmem:[#allocation5 + $0x488] sm:$0xff]
    %v278 = vld [vmem:[#allocation5 + $0x490] sm:$0xff]
    %v279 = vld [vmem:[#allocation5 + $0x498] sm:$0xff]
    %v280 = vld [vmem:[#allocation5 + $0x4a0] sm:$0xff]
    %v281 = vld [vmem:[#allocation5 + $0x4a8] sm:$0xff]
    %v282 = vld [vmem:[#allocation5 + $0x4b0] sm:$0xff]
    %v283 = vld [vmem:[#allocation5 + $0x4b8] sm:$0xff]
    %v284 = vld [vmem:[#allocation5 + $0x4c0] sm:$0xff]
    %v285 = vld [vmem:[#allocation5 + $0x4c8] sm:$0xff]
    %v286 = vld [vmem:[#allocation5 + $0x4d0] sm:$0xff]
    %v287 = vld [vmem:[#allocation5 + $0x4d8] sm:$0xff]
    %v288 = vld [vmem:[#allocation5 + $0x4e0] sm:$0xff]
    %v289 = vld [vmem:[#allocation5 + $0x4e8] sm:$0xff]
    %v290 = vld [vmem:[#allocation5 + $0x4f0] sm:$0xff]
    %v291 = vld [vmem:[#allocation5 + $0x4f8] sm:$0xff]
    %v292 = vld [vmem:[#allocation5 + $0x500] sm:$0xff]
    %v293 = vld [vmem:[#allocation5 + $0x508] sm:$0xff]
    %v294 = vld [vmem:[#allocation5 + $0x510] sm:$0xff]
    %v295 = vld [vmem:[#allocation5 + $0x518] sm:$0xff]
    %v296 = vld [vmem:[#allocation5 + $0x520] sm:$0xff]
    %v297 = vld [vmem:[#allocation5 + $0x528] sm:$0xff]
    %v298 = vld [vmem:[#allocation5 + $0x530] sm:$0xff]
    %v299 = vld [vmem:[#allocation5 + $0x538] sm:$0xff]
    %v300 = vld [vmem:[#allocation5 + $0x540] sm:$0xff]
    %v301 = vld [vmem:[#allocation5 + $0x548] sm:$0xff]
    %v302 = vld [vmem:[#allocation5 + $0x550] sm:$0xff]
    %v303 = vld [vmem:[#allocation5 + $0x558] sm:$0xff]
    %v304 = vld [vmem:[#allocation5 + $0x560] sm:$0xff]
    %v305 = vld [vmem:[#allocation5 + $0x568] sm:$0xff]
    %v306 = vld [vmem:[#allocation5 + $0x570] sm:$0xff]
    %v307 = vld [vmem:[#allocation5 + $0x578] sm:$0xff]
    %v308 = vld [vmem:[#allocation5 + $0x580] sm:$0xff]
    %v309 = vld [vmem:[#allocation5 + $0x588] sm:$0xff]
    %v310 = vld [vmem:[#allocation5 + $0x590] sm:$0xff]
    %v311 = vld [vmem:[#allocation5 + $0x598] sm:$0xff]
    %v312 = vld [vmem:[#allocation5 + $0x5a0] sm:$0xff]
    %v313 = vld [vmem:[#allocation5 + $0x5a8] sm:$0xff]
    %v314 = vld [vmem:[#allocation5 + $0x5b0] sm:$0xff]
    %v315 = vld [vmem:[#allocation5 + $0x5b8] sm:$0xff]
    %v316 = vld [vmem:[#allocation5 + $0x5c0] sm:$0xff]
    %v317 = vld [vmem:[#allocation5 + $0x5c8] sm:$0xff]
    %v318 = vld [vmem:[#allocation5 + $0x5d0] sm:$0xff]
    %v319 = vld [vmem:[#allocation5 + $0x5d8] sm:$0xff]
    %v320 = vld [vmem:[#allocation5 + $0x5e0] sm:$0xff]
    %v321 = vld [vmem:[#allocation5 + $0x5e8] sm:$0xff]
    %v322 = vld [vmem:[#allocation5 + $0x5f0] sm:$0xff]
    %v323 = vld [vmem:[#allocation5 + $0x5f8] sm:$0xff]
    %v324 = vld [vmem:[#allocation5 + $0x600] sm:$0xff]
    %v325 = vld [vmem:[#allocation5 + $0x608] sm:$0xff]
    %v326 = vld [vmem:[#allocation5 + $0x610] sm:$0xff]
    %v327 = vld [vmem:[#allocation5 + $0x618] sm:$0xff]
    %v328 = vld [vmem:[#allocation5 + $0x620] sm:$0xff]
    %v329 = vld [vmem:[#allocation5 + $0x628] sm:$0xff]
    %v330 = vld [vmem:[#allocation5 + $0x630] sm:$0xff]
    %v331 = vld [vmem:[#allocation5 + $0x638] sm:$0xff]
    %v332 = vld [vmem:[#allocation5 + $0x640] sm:$0xff]
    %v333 = vld [vmem:[#allocation5 + $0x648] sm:$0xff]
    %v334 = vld [vmem:[#allocation5 + $0x650] sm:$0xff]
    %v335 = vld [vmem:[#allocation5 + $0x658] sm:$0xff]
    %v336 = vld [vmem:[#allocation5 + $0x660] sm:$0xff]
    %v337 = vld [vmem:[#allocation5 + $0x668] sm:$0xff]
    %v338 = vld [vmem:[#allocation5 + $0x670] sm:$0xff]
    %v339 = vld [vmem:[#allocation5 + $0x678] sm:$0xff]
    %v340 = vld [vmem:[#allocation5 + $0x680] sm:$0xff]
    %v341 = vld [vmem:[#allocation5 + $0x688] sm:$0xff]
    %v342 = vld [vmem:[#allocation5 + $0x690] sm:$0xff]
    %v343 = vld [vmem:[#allocation5 + $0x698] sm:$0xff]
    %v344 = vld [vmem:[#allocation5 + $0x6a0] sm:$0xff]
    %v345 = vld [vmem:[#allocation5 + $0x6a8] sm:$0xff]
    %v346 = vld [vmem:[#allocation5 + $0x6b0] sm:$0xff]
    %v347 = vld [vmem:[#allocation5 + $0x6b8] sm:$0xff]
    %v348 = vld [vmem:[#allocation5 + $0x6c0] sm:$0xff]
    %v349 = vld [vmem:[#allocation5 + $0x6c8] sm:$0xff]
    %v350 = vld [vmem:[#allocation5 + $0x6d0] sm:$0xff]
    %v351 = vld [vmem:[#allocation5 + $0x6d8] sm:$0xff]
    %v352 = vld [vmem:[#allocation5 + $0x6e0] sm:$0xff]
    %v353 = vld [vmem:[#allocation5 + $0x6e8] sm:$0xff]
    %v354 = vld [vmem:[#allocation5 + $0x6f0] sm:$0xff]
    %v355 = vld [vmem:[#allocation5 + $0x6f8] sm:$0xff]
    %v356 = vld [vmem:[#allocation5 + $0x700] sm:$0xff]
    %v357 = vld [vmem:[#allocation5 + $0x708] sm:$0xff]
    %v358 = vld [vmem:[#allocation5 + $0x710] sm:$0xff]
    %v359 = vld [vmem:[#allocation5 + $0x718] sm:$0xff]
    %v360 = vld [vmem:[#allocation5 + $0x720] sm:$0xff]
    %v361 = vld [vmem:[#allocation5 + $0x728] sm:$0xff]
    %v362 = vld [vmem:[#allocation5 + $0x730] sm:$0xff]
    %v363 = vld [vmem:[#allocation5 + $0x738] sm:$0xff]
    %v364 = vld [vmem:[#allocation5 + $0x740] sm:$0xff]
    %v365 = vld [vmem:[#allocation5 + $0x748] sm:$0xff]
    %v366 = vld [vmem:[#allocation5 + $0x750] sm:$0xff]
    %v367 = vld [vmem:[#allocation5 + $0x758] sm:$0xff]
    %v368 = vld [vmem:[#allocation5 + $0x760] sm:$0xff]
    %v369 = vld [vmem:[#allocation5 + $0x768] sm:$0xff]
    %v370 = vld [vmem:[#allocation5 + $0x770] sm:$0xff]
    %v371 = vld [vmem:[#allocation5 + $0x778] sm:$0xff]
    %v372 = vld [vmem:[#allocation5 + $0x780] sm:$0xff]
    %v373 = vld [vmem:[#allocation5 + $0x788] sm:$0xff]
    %v374 = vld [vmem:[#allocation5 + $0x790] sm:$0xff]
    %v375 = vld [vmem:[#allocation5 + $0x798] sm:$0xff]
    %v376 = vld [vmem:[#allocation5 + $0x7a0] sm:$0xff]
    %v377 = vld [vmem:[#allocation5 + $0x7a8] sm:$0xff]
    %v378 = vld [vmem:[#allocation5 + $0x7b0] sm:$0xff]
    %v379 = vld [vmem:[#allocation5 + $0x7b8] sm:$0xff]
    %v380 = vld [vmem:[#allocation5 + $0x7c0] sm:$0xff]
    %v381 = vld [vmem:[#allocation5 + $0x7c8] sm:$0xff]
    %v382 = vld [vmem:[#allocation5 + $0x7d0] sm:$0xff]
    %v383 = vld [vmem:[#allocation5 + $0x7d8] sm:$0xff]
    %v384 = vld [vmem:[#allocation5 + $0x7e0] sm:$0xff]
    %v385 = vld [vmem:[#allocation5 + $0x7e8] sm:$0xff]
    %v386 = vld [vmem:[#allocation5 + $0x7f0] sm:$0xff]
    %v387 = vld [vmem:[#allocation5 + $0x7f8] sm:$0xff]
    %v388 = vld [vmem:[#allocation5 + $0x800] sm:$0xff]
    %v389 = vld [vmem:[#allocation5 + $0x808] sm:$0xff]
    %v390 = vld [vmem:[#allocation5 + $0x810] sm:$0xff]
    %v391 = vld [vmem:[#allocation5 + $0x818] sm:$0xff]
    %v392 = vld [vmem:[#allocation5 + $0x820] sm:$0xff]
    %v393 = vld [vmem:[#allocation5 + $0x828] sm:$0xff]
    %v394 = vld [vmem:[#allocation5 + $0x830] sm:$0xff]
    %v395 = vld [vmem:[#allocation5 + $0x838] sm:$0xff]
    %v396 = vld [vmem:[#allocation5 + $0x840] sm:$0xff]
    %v397 = vld [vmem:[#allocation5 + $0x848] sm:$0xff]
    %v398 = vld [vmem:[#allocation5 + $0x850] sm:$0xff]
    %v399 = vld [vmem:[#allocation5 + $0x858] sm:$0xff]
    %v400 = vld [vmem:[#allocation5 + $0x860] sm:$0xff]
    %v401 = vld [vmem:[#allocation5 + $0x868] sm:$0xff]
    %v402 = vld [vmem:[#allocation5 + $0x870] sm:$0xff]
    %v403 = vld [vmem:[#allocation5 + $0x878] sm:$0xff]
    %v404 = vld [vmem:[#allocation5 + $0x880] sm:$0xff]
    %v405 = vld [vmem:[#allocation5 + $0x888] sm:$0xff]
    %v406 = vld [vmem:[#allocation5 + $0x890] sm:$0xff]
    %v407 = vld [vmem:[#allocation5 + $0x898] sm:$0xff]
    %v408 = vld [vmem:[#allocation5 + $0x8a0] sm:$0xff]
    %v409 = vld [vmem:[#allocation5 + $0x8a8] sm:$0xff]
    %v410 = vld [vmem:[#allocation5 + $0x8b0] sm:$0xff]
    %v411 = vld [vmem:[#allocation5 + $0x8b8] sm:$0xff]
    %v412 = vld [vmem:[#allocation5 + $0x8c0] sm:$0xff]
    %v413 = vld [vmem:[#allocation5 + $0x8c8] sm:$0xff]
    %v414 = vld [vmem:[#allocation5 + $0x8d0] sm:$0xff]
    %v415 = vld [vmem:[#allocation5 + $0x8d8] sm:$0xff]
    %v416 = vld [vmem:[#allocation5 + $0x8e0] sm:$0xff]
    %v417 = vld [vmem:[#allocation5 + $0x8e8] sm:$0xff]
    %v418 = vld [vmem:[#allocation5 + $0x8f0] sm:$0xff]
    %v419 = vld [vmem:[#allocation5 + $0x8f8] sm:$0xff]
    %v420 = vld [vmem:[#allocation5 + $0x900] sm:$0xff]
    %v421 = vld [vmem:[#allocation5 + $0x908] sm:$0xff]
    %v422 = vld [vmem:[#allocation5 + $0x910] sm:$0xff]
    %v423 = vld [vmem:[#allocation5 + $0x918] sm:$0xff]
    %v424 = vld [vmem:[#allocation5 + $0x920] sm:$0xff]
    %v425 = vld [vmem:[#allocation5 + $0x928] sm:$0xff]
    %v426 = vld [vmem:[#allocation5 + $0x930] sm:$0xff]
    %v427 = vld [vmem:[#allocation5 + $0x938] sm:$0xff]
    %v428 = vld [vmem:[#allocation5 + $0x940] sm:$0xff]
    %v429 = vld [vmem:[#allocation5 + $0x948] sm:$0xff]
    %v430 = vld [vmem:[#allocation5 + $0x950] sm:$0xff]
    %v431 = vld [vmem:[#allocation5 + $0x958] sm:$0xff]
    %v432 = vld [vmem:[#allocation5 + $0x960] sm:$0xff]
    %v433 = vld [vmem:[#allocation5 + $0x968] sm:$0xff]
    %v434 = vld [vmem:[#allocation5 + $0x970] sm:$0xff]
    %v435 = vld [vmem:[#allocation5 + $0x978] sm:$0xff]
    %v436 = vld [vmem:[#allocation5 + $0x980] sm:$0xff]
    %v437 = vld [vmem:[#allocation5 + $0x988] sm:$0xff]
    %v438 = vld [vmem:[#allocation5 + $0x990] sm:$0xff]
    %v439 = vld [vmem:[#allocation5 + $0x998] sm:$0xff]
    %v440 = vld [vmem:[#allocation5 + $0x9a0] sm:$0xff]
    %v441 = vld [vmem:[#allocation5 + $0x9a8] sm:$0xff]
    %v442 = vld [vmem:[#allocation5 + $0x9b0] sm:$0xff]
    %v443 = vld [vmem:[#allocation5 + $0x9b8] sm:$0xff]
    %v444 = vld [vmem:[#allocation5 + $0x9c0] sm:$0xff]
    %v445 = vld [vmem:[#allocation5 + $0x9c8] sm:$0xff]
    %v446 = vld [vmem:[#allocation5 + $0x9d0] sm:$0xff]
    %v447 = vld [vmem:[#allocation5 + $0x9d8] sm:$0xff]
    %v448 = vld [vmem:[#allocation5 + $0x9e0] sm:$0xff]
    %v449 = vld [vmem:[#allocation5 + $0x9e8] sm:$0xff]
    %v450 = vld [vmem:[#allocation5 + $0x9f0] sm:$0xff]
    %v451 = vld [vmem:[#allocation5 + $0x9f8] sm:$0xff]
    %v452 = vld [vmem:[#allocation5 + $0xa00] sm:$0xff]
    %v453 = vld [vmem:[#allocation5 + $0xa08] sm:$0xff]
    %v454 = vld [vmem:[#allocation5 + $0xa10] sm:$0xff]
    %v455 = vld [vmem:[#allocation5 + $0xa18] sm:$0xff]
    %v456 = vld [vmem:[#allocation5 + $0xa20] sm:$0xff]
    %v457 = vld [vmem:[#allocation5 + $0xa28] sm:$0xff]
    %v458 = vld [vmem:[#allocation5 + $0xa30] sm:$0xff]
    %v459 = vld [vmem:[#allocation5 + $0xa38] sm:$0xff]
    %v460 = vld [vmem:[#allocation5 + $0xa40] sm:$0xff]
    %v461 = vld [vmem:[#allocation5 + $0xa48] sm:$0xff]
    %v462 = vld [vmem:[#allocation5 + $0xa50] sm:$0xff]
    %v463 = vld [vmem:[#allocation5 + $0xa58] sm:$0xff]
    %v464 = vld [vmem:[#allocation5 + $0xa60] sm:$0xff]
    %v465 = vld [vmem:[#allocation5 + $0xa68] sm:$0xff]
    %v466 = vld [vmem:[#allocation5 + $0xa70] sm:$0xff]
    %v467 = vld [vmem:[#allocation5 + $0xa78] sm:$0xff]
    %v468 = vld [vmem:[#allocation5 + $0xa80] sm:$0xff]
    %v469 = vld [vmem:[#allocation5 + $0xa88] sm:$0xff]
    %v470 = vld [vmem:[#allocation5 + $0xa90] sm:$0xff]
    %v471 = vld [vmem:[#allocation5 + $0xa98] sm:$0xff]
    %v472 = vld [vmem:[#allocation5 + $0xaa0] sm:$0xff]
    %v473 = vld [vmem:[#allocation5 + $0xaa8] sm:$0xff]
    %v474 = vld [vmem:[#allocation5 + $0xab0] sm:$0xff]
    %v475 = vld [vmem:[#allocation5 + $0xab8] sm:$0xff]
    %v476 = vld [vmem:[#allocation5 + $0xac0] sm:$0xff]
    %v477 = vld [vmem:[#allocation5 + $0xac8] sm:$0xff]
    %v478 = vld [vmem:[#allocation5 + $0xad0] sm:$0xff]
    %v479 = vld [vmem:[#allocation5 + $0xad8] sm:$0xff]
    %v480 = vld [vmem:[#allocation5 + $0xae0] sm:$0xff]
    %v481 = vld [vmem:[#allocation5 + $0xae8] sm:$0xff]
    %v482 = vld [vmem:[#allocation5 + $0xaf0] sm:$0xff]
    %v483 = vld [vmem:[#allocation5 + $0xaf8] sm:$0xff]
    %v484 = vld [vmem:[#allocation5 + $0xb00] sm:$0xff]
    %v485 = vld [vmem:[#allocation5 + $0xb08] sm:$0xff]
    %v486 = vld [vmem:[#allocation5 + $0xb10] sm:$0xff]
    %v487 = vld [vmem:[#allocation5 + $0xb18] sm:$0xff]
    %v488 = vld [vmem:[#allocation5 + $0xb20] sm:$0xff]
    %v489 = vld [vmem:[#allocation5 + $0xb28] sm:$0xff]
    %v490 = vld [vmem:[#allocation5 + $0xb30] sm:$0xff]
    %v491 = vld [vmem:[#allocation5 + $0xb38] sm:$0xff]
    %v492 = vld [vmem:[#allocation5 + $0xb40] sm:$0xff]
    %v493 = vld [vmem:[#allocation5 + $0xb48] sm:$0xff]
    %v494 = vld [vmem:[#allocation5 + $0xb50] sm:$0xff]
    %v495 = vld [vmem:[#allocation5 + $0xb58] sm:$0xff]
    %v496 = vld [vmem:[#allocation5 + $0xb60] sm:$0xff]
    %v497 = vld [vmem:[#allocation5 + $0xb68] sm:$0xff]
    %v498 = vld [vmem:[#allocation5 + $0xb70] sm:$0xff]
    %v499 = vld [vmem:[#allocation5 + $0xb78] sm:$0xff]
    %v500 = vld [vmem:[#allocation5 + $0xb80] sm:$0xff]
    %v501 = vld [vmem:[#allocation5 + $0xb88] sm:$0xff]
    %v502 = vld [vmem:[#allocation5 + $0xb90] sm:$0xff]
    %v503 = vld [vmem:[#allocation5 + $0xb98] sm:$0xff]
    %v504 = vld [vmem:[#allocation5 + $0xba0] sm:$0xff]
    %v505 = vld [vmem:[#allocation5 + $0xba8] sm:$0xff]
    %v506 = vld [vmem:[#allocation5 + $0xbb0] sm:$0xff]
    %v507 = vld [vmem:[#allocation5 + $0xbb8] sm:$0xff]
    %v508 = vld [vmem:[#allocation5 + $0xbc0] sm:$0xff]
    %v509 = vld [vmem:[#allocation5 + $0xbc8] sm:$0xff]
    %v510 = vld [vmem:[#allocation5 + $0xbd0] sm:$0xff]
    %v511 = vld [vmem:[#allocation5 + $0xbd8] sm:$0xff]
    %v512 = vld [vmem:[#allocation5 + $0xbe0] sm:$0xff]
    %v513 = vld [vmem:[#allocation5 + $0xbe8] sm:$0xff]
    %v514 = vld [vmem:[#allocation5 + $0xbf0] sm:$0xff]
    %v515 = vld [vmem:[#allocation5 + $0xbf8] sm:$0xff]
    %v516 = vld [vmem:[#allocation5 + $0xc00] sm:$0xff]
    %v517 = vld [vmem:[#allocation5 + $0xc08] sm:$0xff]
    %v518 = vld [vmem:[#allocation5 + $0xc10] sm:$0xff]
    %v519 = vld [vmem:[#allocation5 + $0xc18] sm:$0xff]
    %v520 = vld [vmem:[#allocation5 + $0xc20] sm:$0xff]
    %v521 = vld [vmem:[#allocation5 + $0xc28] sm:$0xff]
    %v522 = vld [vmem:[#allocation5 + $0xc30] sm:$0xff]
    %v523 = vld [vmem:[#allocation5 + $0xc38] sm:$0xff]
    %v524 = vld [vmem:[#allocation5 + $0xc40] sm:$0xff]
    %v525 = vld [vmem:[#allocation5 + $0xc48] sm:$0xff]
    %v526 = vld [vmem:[#allocation5 + $0xc50] sm:$0xff]
    %v527 = vld [vmem:[#allocation5 + $0xc58] sm:$0xff]
    %v528 = vld [vmem:[#allocation5 + $0xc60] sm:$0xff]
    %v529 = vld [vmem:[#allocation5 + $0xc68] sm:$0xff]
    %v530 = vld [vmem:[#allocation5 + $0xc70] sm:$0xff]
    %v531 = vld [vmem:[#allocation5 + $0xc78] sm:$0xff]
    %v532 = vld [vmem:[#allocation5 + $0xc80] sm:$0xff]
    %v533 = vld [vmem:[#allocation5 + $0xc88] sm:$0xff]
    %v534 = vld [vmem:[#allocation5 + $0xc90] sm:$0xff]
    %v535 = vld [vmem:[#allocation5 + $0xc98] sm:$0xff]
    %v536 = vld [vmem:[#allocation5 + $0xca0] sm:$0xff]
    %v537 = vld [vmem:[#allocation5 + $0xca8] sm:$0xff]
    %v538 = vld [vmem:[#allocation5 + $0xcb0] sm:$0xff]
    %v539 = vld [vmem:[#allocation5 + $0xcb8] sm:$0xff]
    %v540 = vld [vmem:[#allocation5 + $0xcc0] sm:$0xff]
    %v541 = vld [vmem:[#allocation5 + $0xcc8] sm:$0xff]
    %v542 = vld [vmem:[#allocation5 + $0xcd0] sm:$0xff]
    %v543 = vld [vmem:[#allocation5 + $0xcd8] sm:$0xff]
    %v544 = vld [vmem:[#allocation5 + $0xce0] sm:$0xff]
    %v545 = vld [vmem:[#allocation5 + $0xce8] sm:$0xff]
    %v546 = vld [vmem:[#allocation5 + $0xcf0] sm:$0xff]
    %v547 = vld [vmem:[#allocation5 + $0xcf8] sm:$0xff]
    %v548 = vld [vmem:[#allocation5 + $0xd00] sm:$0xff]
    %v549 = vld [vmem:[#allocation5 + $0xd08] sm:$0xff]
    %v550 = vld [vmem:[#allocation5 + $0xd10] sm:$0xff]
    %v551 = vld [vmem:[#allocation5 + $0xd18] sm:$0xff]
    %v552 = vld [vmem:[#allocation5 + $0xd20] sm:$0xff]
    %v553 = vld [vmem:[#allocation5 + $0xd28] sm:$0xff]
    %v554 = vld [vmem:[#allocation5 + $0xd30] sm:$0xff]
    %v555 = vld [vmem:[#allocation5 + $0xd38] sm:$0xff]
    %v556 = vld [vmem:[#allocation5 + $0xd40] sm:$0xff]
    %v557 = vld [vmem:[#allocation5 + $0xd48] sm:$0xff]
    %v558 = vld [vmem:[#allocation5 + $0xd50] sm:$0xff]
    %v559 = vld [vmem:[#allocation5 + $0xd58] sm:$0xff]
    %v560 = vld [vmem:[#allocation5 + $0xd60] sm:$0xff]
    %v561 = vld [vmem:[#allocation5 + $0xd68] sm:$0xff]
    %v562 = vld [vmem:[#allocation5 + $0xd70] sm:$0xff]
    %v563 = vld [vmem:[#allocation5 + $0xd78] sm:$0xff]
    %v564 = vld [vmem:[#allocation5 + $0xd80] sm:$0xff]
    %v565 = vld [vmem:[#allocation5 + $0xd88] sm:$0xff]
    %v566 = vld [vmem:[#allocation5 + $0xd90] sm:$0xff]
    %v567 = vld [vmem:[#allocation5 + $0xd98] sm:$0xff]
    %v568 = vld [vmem:[#allocation5 + $0xda0] sm:$0xff]
    %v569 = vld [vmem:[#allocation5 + $0xda8] sm:$0xff]
    %v570 = vld [vmem:[#allocation5 + $0xdb0] sm:$0xff]
    %v571 = vld [vmem:[#allocation5 + $0xdb8] sm:$0xff]
    %v572 = vld [vmem:[#allocation5 + $0xdc0] sm:$0xff]
    %v573 = vld [vmem:[#allocation5 + $0xdc8] sm:$0xff]
    %v574 = vld [vmem:[#allocation5 + $0xdd0] sm:$0xff]
    %v575 = vld [vmem:[#allocation5 + $0xdd8] sm:$0xff]
    %v576 = vld [vmem:[#allocation5 + $0xde0] sm:$0xff]
    %v577 = vld [vmem:[#allocation5 + $0xde8] sm:$0xff]
    %v578 = vld [vmem:[#allocation5 + $0xdf0] sm:$0xff]
    %v579 = vld [vmem:[#allocation5 + $0xdf8] sm:$0xff]
    %v580 = vld [vmem:[#allocation5 + $0xe00] sm:$0xff]
    %v581 = vld [vmem:[#allocation5 + $0xe08] sm:$0xff]
    %v582 = vld [vmem:[#allocation5 + $0xe10] sm:$0xff]
    %v583 = vld [vmem:[#allocation5 + $0xe18] sm:$0xff]
    %v584 = vld [vmem:[#allocation5 + $0xe20] sm:$0xff]
    %v585 = vld [vmem:[#allocation5 + $0xe28] sm:$0xff]
    %v586 = vld [vmem:[#allocation5 + $0xe30] sm:$0xff]
    %v587 = vld [vmem:[#allocation5 + $0xe38] sm:$0xff]
    %v588 = vld [vmem:[#allocation5 + $0xe40] sm:$0xff]
    %v589 = vld [vmem:[#allocation5 + $0xe48] sm:$0xff]
    %v590 = vld [vmem:[#allocation5 + $0xe50] sm:$0xff]
    %v591 = vld [vmem:[#allocation5 + $0xe58] sm:$0xff]
    %v592 = vld [vmem:[#allocation5 + $0xe60] sm:$0xff]
    %v593 = vld [vmem:[#allocation5 + $0xe68] sm:$0xff]
    %v594 = vld [vmem:[#allocation5 + $0xe70] sm:$0xff]
    %v595 = vld [vmem:[#allocation5 + $0xe78] sm:$0xff]
    %v596 = vld [vmem:[#allocation5 + $0xe80] sm:$0xff]
    %v597 = vld [vmem:[#allocation5 + $0xe88] sm:$0xff]
    %v598 = vld [vmem:[#allocation5 + $0xe90] sm:$0xff]
    %v599 = vld [vmem:[#allocation5 + $0xe98] sm:$0xff]
    %v600 = vld [vmem:[#allocation5 + $0xea0] sm:$0xff]
    %v601 = vld [vmem:[#allocation5 + $0xea8] sm:$0xff]
    %v602 = vld [vmem:[#allocation5 + $0xeb0] sm:$0xff]
    %v603 = vld [vmem:[#allocation5 + $0xeb8] sm:$0xff]
    %v604 = vld [vmem:[#allocation5 + $0xec0] sm:$0xff]
    %v605 = vld [vmem:[#allocation5 + $0xec8] sm:$0xff]
    %v606 = vld [vmem:[#allocation5 + $0xed0] sm:$0xff]
    %v607 = vld [vmem:[#allocation5 + $0xed8] sm:$0xff]
    %v608 = vld [vmem:[#allocation5 + $0xee0] sm:$0xff]
    %v609 = vld [vmem:[#allocation5 + $0xee8] sm:$0xff]
    %v610 = vld [vmem:[#allocation5 + $0xef0] sm:$0xff]
    %v611 = vld [vmem:[#allocation5 + $0xef8] sm:$0xff]
    %v612 = vld [vmem:[#allocation5 + $0xf00] sm:$0xff]
    %v613 = vld [vmem:[#allocation5 + $0xf08] sm:$0xff]
    %v614 = vld [vmem:[#allocation5 + $0xf10] sm:$0xff]
    %v615 = vld [vmem:[#allocation5 + $0xf18] sm:$0xff]
    %v616 = vld [vmem:[#allocation5 + $0xf20] sm:$0xff]
    %v617 = vld [vmem:[#allocation5 + $0xf28] sm:$0xff]
    %v618 = vld [vmem:[#allocation5 + $0xf30] sm:$0xff]
    %v619 = vld [vmem:[#allocation5 + $0xf38] sm:$0xff]
    %v620 = vld [vmem:[#allocation5 + $0xf40] sm:$0xff]
    %v621 = vld [vmem:[#allocation5 + $0xf48] sm:$0xff]
    %v622 = vld [vmem:[#allocation5 + $0xf50] sm:$0xff]
    %v623 = vld [vmem:[#allocation5 + $0xf58] sm:$0xff]
    %v624 = vld [vmem:[#allocation5 + $0xf60] sm:$0xff]
    %v625 = vld [vmem:[#allocation5 + $0xf68] sm:$0xff]
    %v626 = vld [vmem:[#allocation5 + $0xf70] sm:$0xff]
    %v627 = vld [vmem:[#allocation5 + $0xf78] sm:$0xff]
    %v628 = vld [vmem:[#allocation5 + $0xf80] sm:$0xff]
    %v629 = vld [vmem:[#allocation5 + $0xf88] sm:$0xff]
    %v630 = vld [vmem:[#allocation5 + $0xf90] sm:$0xff]
    %v631 = vld [vmem:[#allocation5 + $0xf98] sm:$0xff]
    %v632 = vld [vmem:[#allocation5 + $0xfa0] sm:$0xff]
    %v633 = vld [vmem:[#allocation5 + $0xfa8] sm:$0xff]
    %v634 = vld [vmem:[#allocation5 + $0xfb0] sm:$0xff]
    %v635 = vld [vmem:[#allocation5 + $0xfb8] sm:$0xff]
    %v636 = vld [vmem:[#allocation5 + $0xfc0] sm:$0xff]
    %v637 = vld [vmem:[#allocation5 + $0xfc8] sm:$0xff]
    %v638 = vld [vmem:[#allocation5 + $0xfd0] sm:$0xff]
    %v639 = vld [vmem:[#allocation5 + $0xfd8] sm:$0xff]
    %v640 = vld [vmem:[#allocation5 + $0xfe0] sm:$0xff]
    %v641 = vld [vmem:[#allocation5 + $0xfe8] sm:$0xff]
    %v642 = vld [vmem:[#allocation5 + $0xff0] sm:$0xff]
    %v643 = vld [vmem:[#allocation5 + $0xff8] sm:$0xff]
    %v644 = vld [vmem:[#allocation7] sm:$0xff]
    %v646 = vperm.slane %v644, 0
    %v647 = vperm.slane %v644, 1
    %v648 = vperm.slane %v644, 2
    %v649 = vperm.slane %v644, 3
    %v650 = vperm.slane %v644, 4
    %v651 = vperm.slane %v644, 5
    %v652 = vperm.slane %v644, 6
    %v653 = vperm.slane %v644, 7
    %v666 = vunpack.c.l.b16 %v128
    %v667 = vunpack.c.h.b16 %v128
    %v668 = vunpack.c.l.b16 %v129
    %v669 = vunpack.c.h.b16 %v129
    %v670 = vunpack.c.l.b16 %v130
    %v671 = vunpack.c.h.b16 %v130
    %v672 = vunpack.c.l.b16 %v131
    %v673 = vunpack.c.h.b16 %v131
    %v674 = vpack.c.b16 %v666, %v666
    %v675 = vpack.c.b16 %v667, %v667
    %v676 = vpack.c.b16 %v668, %v668
    %v677 = vpack.c.b16 %v669, %v669
    %v678 = vpack.c.b16 %v670, %v670
    %v679 = vpack.c.b16 %v671, %v671
    %v680 = vpack.c.b16 %v672, %v672
    %v681 = vpack.c.b16 %v673, %v673
    %v1202 = vunpack.c.l.b16 %v132
    %v1203 = vunpack.c.h.b16 %v132
    %v1204 = vunpack.c.l.b16 %v133
    %v1205 = vunpack.c.h.b16 %v133
    %v1206 = vunpack.c.l.b16 %v134
    %v1207 = vunpack.c.h.b16 %v134
    %v1208 = vunpack.c.l.b16 %v135
    %v1209 = vunpack.c.h.b16 %v135
    %v1210 = vunpack.c.l.b16 %v136
    %v1211 = vunpack.c.h.b16 %v136
    %v1212 = vunpack.c.l.b16 %v137
    %v1213 = vunpack.c.h.b16 %v137
    %v1214 = vunpack.c.l.b16 %v138
    %v1215 = vunpack.c.h.b16 %v138
    %v1216 = vunpack.c.l.b16 %v139
    %v1217 = vunpack.c.h.b16 %v139
    %v1218 = vunpack.c.l.b16 %v140
    %v1219 = vunpack.c.h.b16 %v140
    %v1220 = vunpack.c.l.b16 %v141
    %v1221 = vunpack.c.h.b16 %v141
    %v1222 = vunpack.c.l.b16 %v142
    %v1223 = vunpack.c.h.b16 %v142
    %v1224 = vunpack.c.l.b16 %v143
    %v1225 = vunpack.c.h.b16 %v143
    %v1226 = vunpack.c.l.b16 %v144
    %v1227 = vunpack.c.h.b16 %v144
    %v1228 = vunpack.c.l.b16 %v145
    %v1229 = vunpack.c.h.b16 %v145
    %v1230 = vunpack.c.l.b16 %v146
    %v1231 = vunpack.c.h.b16 %v146
    %v1232 = vunpack.c.l.b16 %v147
    %v1233 = vunpack.c.h.b16 %v147
    %v1234 = vunpack.c.l.b16 %v148
    %v1235 = vunpack.c.h.b16 %v148
    %v1236 = vunpack.c.l.b16 %v149
    %v1237 = vunpack.c.h.b16 %v149
    %v1238 = vunpack.c.l.b16 %v150
    %v1239 = vunpack.c.h.b16 %v150
    %v1240 = vunpack.c.l.b16 %v151
    %v1241 = vunpack.c.h.b16 %v151
    %v1242 = vunpack.c.l.b16 %v152
    %v1243 = vunpack.c.h.b16 %v152
    %v1244 = vunpack.c.l.b16 %v153
    %v1245 = vunpack.c.h.b16 %v153
    %v1246 = vunpack.c.l.b16 %v154
    %v1247 = vunpack.c.h.b16 %v154
    %v1248 = vunpack.c.l.b16 %v155
    %v1249 = vunpack.c.h.b16 %v155
    %v1250 = vunpack.c.l.b16 %v156
    %v1251 = vunpack.c.h.b16 %v156
    %v1252 = vunpack.c.l.b16 %v157
    %v1253 = vunpack.c.h.b16 %v157
    %v1254 = vunpack.c.l.b16 %v158
    %v1255 = vunpack.c.h.b16 %v158
    %v1256 = vunpack.c.l.b16 %v159
    %v1257 = vunpack.c.h.b16 %v159
    %v1258 = vunpack.c.l.b16 %v160
    %v1259 = vunpack.c.h.b16 %v160
    %v1260 = vunpack.c.l.b16 %v161
    %v1261 = vunpack.c.h.b16 %v161
    %v1262 = vunpack.c.l.b16 %v162
    %v1263 = vunpack.c.h.b16 %v162
    %v1264 = vunpack.c.l.b16 %v163
    %v1265 = vunpack.c.h.b16 %v163
    %v1266 = vunpack.c.l.b16 %v164
    %v1267 = vunpack.c.h.b16 %v164
    %v1268 = vunpack.c.l.b16 %v165
    %v1269 = vunpack.c.h.b16 %v165
    %v1270 = vunpack.c.l.b16 %v166
    %v1271 = vunpack.c.h.b16 %v166
    %v1272 = vunpack.c.l.b16 %v167
    %v1273 = vunpack.c.h.b16 %v167
    %v1274 = vunpack.c.l.b16 %v168
    %v1275 = vunpack.c.h.b16 %v168
    %v1276 = vunpack.c.l.b16 %v169
    %v1277 = vunpack.c.h.b16 %v169
    %v1278 = vunpack.c.l.b16 %v170
    %v1279 = vunpack.c.h.b16 %v170
    %v1280 = vunpack.c.l.b16 %v171
    %v1281 = vunpack.c.h.b16 %v171
    %v1282 = vunpack.c.l.b16 %v172
    %v1283 = vunpack.c.h.b16 %v172
    %v1284 = vunpack.c.l.b16 %v173
    %v1285 = vunpack.c.h.b16 %v173
    %v1286 = vunpack.c.l.b16 %v174
    %v1287 = vunpack.c.h.b16 %v174
    %v1288 = vunpack.c.l.b16 %v175
    %v1289 = vunpack.c.h.b16 %v175
    %v1290 = vunpack.c.l.b16 %v176
    %v1291 = vunpack.c.h.b16 %v176
    %v1292 = vunpack.c.l.b16 %v177
    %v1293 = vunpack.c.h.b16 %v177
    %v1294 = vunpack.c.l.b16 %v178
    %v1295 = vunpack.c.h.b16 %v178
    %v1296 = vunpack.c.l.b16 %v179
    %v1297 = vunpack.c.h.b16 %v179
    %v1298 = vunpack.c.l.b16 %v180
    %v1299 = vunpack.c.h.b16 %v180
    %v1300 = vunpack.c.l.b16 %v181
    %v1301 = vunpack.c.h.b16 %v181
    %v1302 = vunpack.c.l.b16 %v182
    %v1303 = vunpack.c.h.b16 %v182
    %v1304 = vunpack.c.l.b16 %v183
    %v1305 = vunpack.c.h.b16 %v183
    %v1306 = vunpack.c.l.b16 %v184
    %v1307 = vunpack.c.h.b16 %v184
    %v1308 = vunpack.c.l.b16 %v185
    %v1309 = vunpack.c.h.b16 %v185
    %v1310 = vunpack.c.l.b16 %v186
    %v1311 = vunpack.c.h.b16 %v186
    %v1312 = vunpack.c.l.b16 %v187
    %v1313 = vunpack.c.h.b16 %v187
    %v1314 = vunpack.c.l.b16 %v188
    %v1315 = vunpack.c.h.b16 %v188
    %v1316 = vunpack.c.l.b16 %v189
    %v1317 = vunpack.c.h.b16 %v189
    %v1318 = vunpack.c.l.b16 %v190
    %v1319 = vunpack.c.h.b16 %v190
    %v1320 = vunpack.c.l.b16 %v191
    %v1321 = vunpack.c.h.b16 %v191
    %v1322 = vunpack.c.l.b16 %v192
    %v1323 = vunpack.c.h.b16 %v192
    %v1324 = vunpack.c.l.b16 %v193
    %v1325 = vunpack.c.h.b16 %v193
    %v1326 = vunpack.c.l.b16 %v194
    %v1327 = vunpack.c.h.b16 %v194
    %v1328 = vunpack.c.l.b16 %v195
    %v1329 = vunpack.c.h.b16 %v195
    %v1330 = vunpack.c.l.b16 %v196
    %v1331 = vunpack.c.h.b16 %v196
    %v1332 = vunpack.c.l.b16 %v197
    %v1333 = vunpack.c.h.b16 %v197
    %v1334 = vunpack.c.l.b16 %v198
    %v1335 = vunpack.c.h.b16 %v198
    %v1336 = vunpack.c.l.b16 %v199
    %v1337 = vunpack.c.h.b16 %v199
    %v1338 = vunpack.c.l.b16 %v200
    %v1339 = vunpack.c.h.b16 %v200
    %v1340 = vunpack.c.l.b16 %v201
    %v1341 = vunpack.c.h.b16 %v201
    %v1342 = vunpack.c.l.b16 %v202
    %v1343 = vunpack.c.h.b16 %v202
    %v1344 = vunpack.c.l.b16 %v203
    %v1345 = vunpack.c.h.b16 %v203
    %v1346 = vunpack.c.l.b16 %v204
    %v1347 = vunpack.c.h.b16 %v204
    %v1348 = vunpack.c.l.b16 %v205
    %v1349 = vunpack.c.h.b16 %v205
    %v1350 = vunpack.c.l.b16 %v206
    %v1351 = vunpack.c.h.b16 %v206
    %v1352 = vunpack.c.l.b16 %v207
    %v1353 = vunpack.c.h.b16 %v207
    %v1354 = vunpack.c.l.b16 %v208
    %v1355 = vunpack.c.h.b16 %v208
    %v1356 = vunpack.c.l.b16 %v209
    %v1357 = vunpack.c.h.b16 %v209
    %v1358 = vunpack.c.l.b16 %v210
    %v1359 = vunpack.c.h.b16 %v210
    %v1360 = vunpack.c.l.b16 %v211
    %v1361 = vunpack.c.h.b16 %v211
    %v1362 = vunpack.c.l.b16 %v212
    %v1363 = vunpack.c.h.b16 %v212
    %v1364 = vunpack.c.l.b16 %v213
    %v1365 = vunpack.c.h.b16 %v213
    %v1366 = vunpack.c.l.b16 %v214
    %v1367 = vunpack.c.h.b16 %v214
    %v1368 = vunpack.c.l.b16 %v215
    %v1369 = vunpack.c.h.b16 %v215
    %v1370 = vunpack.c.l.b16 %v216
    %v1371 = vunpack.c.h.b16 %v216
    %v1372 = vunpack.c.l.b16 %v217
    %v1373 = vunpack.c.h.b16 %v217
    %v1374 = vunpack.c.l.b16 %v218
    %v1375 = vunpack.c.h.b16 %v218
    %v1376 = vunpack.c.l.b16 %v219
    %v1377 = vunpack.c.h.b16 %v219
    %v1378 = vunpack.c.l.b16 %v220
    %v1379 = vunpack.c.h.b16 %v220
    %v1380 = vunpack.c.l.b16 %v221
    %v1381 = vunpack.c.h.b16 %v221
    %v1382 = vunpack.c.l.b16 %v222
    %v1383 = vunpack.c.h.b16 %v222
    %v1384 = vunpack.c.l.b16 %v223
    %v1385 = vunpack.c.h.b16 %v223
    %v1386 = vunpack.c.l.b16 %v224
    %v1387 = vunpack.c.h.b16 %v224
    %v1388 = vunpack.c.l.b16 %v225
    %v1389 = vunpack.c.h.b16 %v225
    %v1390 = vunpack.c.l.b16 %v226
    %v1391 = vunpack.c.h.b16 %v226
    %v1392 = vunpack.c.l.b16 %v227
    %v1393 = vunpack.c.h.b16 %v227
    %v1394 = vunpack.c.l.b16 %v228
    %v1395 = vunpack.c.h.b16 %v228
    %v1396 = vunpack.c.l.b16 %v229
    %v1397 = vunpack.c.h.b16 %v229
    %v1398 = vunpack.c.l.b16 %v230
    %v1399 = vunpack.c.h.b16 %v230
    %v1400 = vunpack.c.l.b16 %v231
    %v1401 = vunpack.c.h.b16 %v231
    %v1402 = vunpack.c.l.b16 %v232
    %v1403 = vunpack.c.h.b16 %v232
    %v1404 = vunpack.c.l.b16 %v233
    %v1405 = vunpack.c.h.b16 %v233
    %v1406 = vunpack.c.l.b16 %v234
    %v1407 = vunpack.c.h.b16 %v234
    %v1408 = vunpack.c.l.b16 %v235
    %v1409 = vunpack.c.h.b16 %v235
    %v1410 = vunpack.c.l.b16 %v236
    %v1411 = vunpack.c.h.b16 %v236
    %v1412 = vunpack.c.l.b16 %v237
    %v1413 = vunpack.c.h.b16 %v237
    %v1414 = vunpack.c.l.b16 %v238
    %v1415 = vunpack.c.h.b16 %v238
    %v1416 = vunpack.c.l.b16 %v239
    %v1417 = vunpack.c.h.b16 %v239
    %v1418 = vunpack.c.l.b16 %v240
    %v1419 = vunpack.c.h.b16 %v240
    %v1420 = vunpack.c.l.b16 %v241
    %v1421 = vunpack.c.h.b16 %v241
    %v1422 = vunpack.c.l.b16 %v242
    %v1423 = vunpack.c.h.b16 %v242
    %v1424 = vunpack.c.l.b16 %v243
    %v1425 = vunpack.c.h.b16 %v243
    %v1426 = vunpack.c.l.b16 %v244
    %v1427 = vunpack.c.h.b16 %v244
    %v1428 = vunpack.c.l.b16 %v245
    %v1429 = vunpack.c.h.b16 %v245
    %v1430 = vunpack.c.l.b16 %v246
    %v1431 = vunpack.c.h.b16 %v246
    %v1432 = vunpack.c.l.b16 %v247
    %v1433 = vunpack.c.h.b16 %v247
    %v1434 = vunpack.c.l.b16 %v248
    %v1435 = vunpack.c.h.b16 %v248
    %v1436 = vunpack.c.l.b16 %v249
    %v1437 = vunpack.c.h.b16 %v249
    %v1438 = vunpack.c.l.b16 %v250
    %v1439 = vunpack.c.h.b16 %v250
    %v1440 = vunpack.c.l.b16 %v251
    %v1441 = vunpack.c.h.b16 %v251
    %v1442 = vunpack.c.l.b16 %v252
    %v1443 = vunpack.c.h.b16 %v252
    %v1444 = vunpack.c.l.b16 %v253
    %v1445 = vunpack.c.h.b16 %v253
    %v1446 = vunpack.c.l.b16 %v254
    %v1447 = vunpack.c.h.b16 %v254
    %v1448 = vunpack.c.l.b16 %v255
    %v1449 = vunpack.c.h.b16 %v255
    %v1450 = vunpack.c.l.b16 %v256
    %v1451 = vunpack.c.h.b16 %v256
    %v1452 = vunpack.c.l.b16 %v257
    %v1453 = vunpack.c.h.b16 %v257
    %v1454 = vunpack.c.l.b16 %v258
    %v1455 = vunpack.c.h.b16 %v258
    %v1456 = vunpack.c.l.b16 %v259
    %v1457 = vunpack.c.h.b16 %v259
    %v1458 = vunpack.c.l.b16 %v260
    %v1459 = vunpack.c.h.b16 %v260
    %v1460 = vunpack.c.l.b16 %v261
    %v1461 = vunpack.c.h.b16 %v261
    %v1462 = vunpack.c.l.b16 %v262
    %v1463 = vunpack.c.h.b16 %v262
    %v1464 = vunpack.c.l.b16 %v263
    %v1465 = vunpack.c.h.b16 %v263
    %v1466 = vunpack.c.l.b16 %v264
    %v1467 = vunpack.c.h.b16 %v264
    %v1468 = vunpack.c.l.b16 %v265
    %v1469 = vunpack.c.h.b16 %v265
    %v1470 = vunpack.c.l.b16 %v266
    %v1471 = vunpack.c.h.b16 %v266
    %v1472 = vunpack.c.l.b16 %v267
    %v1473 = vunpack.c.h.b16 %v267
    %v1474 = vunpack.c.l.b16 %v268
    %v1475 = vunpack.c.h.b16 %v268
    %v1476 = vunpack.c.l.b16 %v269
    %v1477 = vunpack.c.h.b16 %v269
    %v1478 = vunpack.c.l.b16 %v270
    %v1479 = vunpack.c.h.b16 %v270
    %v1480 = vunpack.c.l.b16 %v271
    %v1481 = vunpack.c.h.b16 %v271
    %v1482 = vunpack.c.l.b16 %v272
    %v1483 = vunpack.c.h.b16 %v272
    %v1484 = vunpack.c.l.b16 %v273
    %v1485 = vunpack.c.h.b16 %v273
    %v1486 = vunpack.c.l.b16 %v274
    %v1487 = vunpack.c.h.b16 %v274
    %v1488 = vunpack.c.l.b16 %v275
    %v1489 = vunpack.c.h.b16 %v275
    %v1490 = vunpack.c.l.b16 %v276
    %v1491 = vunpack.c.h.b16 %v276
    %v1492 = vunpack.c.l.b16 %v277
    %v1493 = vunpack.c.h.b16 %v277
    %v1494 = vunpack.c.l.b16 %v278
    %v1495 = vunpack.c.h.b16 %v278
    %v1496 = vunpack.c.l.b16 %v279
    %v1497 = vunpack.c.h.b16 %v279
    %v1498 = vunpack.c.l.b16 %v280
    %v1499 = vunpack.c.h.b16 %v280
    %v1500 = vunpack.c.l.b16 %v281
    %v1501 = vunpack.c.h.b16 %v281
    %v1502 = vunpack.c.l.b16 %v282
    %v1503 = vunpack.c.h.b16 %v282
    %v1504 = vunpack.c.l.b16 %v283
    %v1505 = vunpack.c.h.b16 %v283
    %v1506 = vunpack.c.l.b16 %v284
    %v1507 = vunpack.c.h.b16 %v284
    %v1508 = vunpack.c.l.b16 %v285
    %v1509 = vunpack.c.h.b16 %v285
    %v1510 = vunpack.c.l.b16 %v286
    %v1511 = vunpack.c.h.b16 %v286
    %v1512 = vunpack.c.l.b16 %v287
    %v1513 = vunpack.c.h.b16 %v287
    %v1514 = vunpack.c.l.b16 %v288
    %v1515 = vunpack.c.h.b16 %v288
    %v1516 = vunpack.c.l.b16 %v289
    %v1517 = vunpack.c.h.b16 %v289
    %v1518 = vunpack.c.l.b16 %v290
    %v1519 = vunpack.c.h.b16 %v290
    %v1520 = vunpack.c.l.b16 %v291
    %v1521 = vunpack.c.h.b16 %v291
    %v1522 = vunpack.c.l.b16 %v292
    %v1523 = vunpack.c.h.b16 %v292
    %v1524 = vunpack.c.l.b16 %v293
    %v1525 = vunpack.c.h.b16 %v293
    %v1526 = vunpack.c.l.b16 %v294
    %v1527 = vunpack.c.h.b16 %v294
    %v1528 = vunpack.c.l.b16 %v295
    %v1529 = vunpack.c.h.b16 %v295
    %v1530 = vunpack.c.l.b16 %v296
    %v1531 = vunpack.c.h.b16 %v296
    %v1532 = vunpack.c.l.b16 %v297
    %v1533 = vunpack.c.h.b16 %v297
    %v1534 = vunpack.c.l.b16 %v298
    %v1535 = vunpack.c.h.b16 %v298
    %v1536 = vunpack.c.l.b16 %v299
    %v1537 = vunpack.c.h.b16 %v299
    %v1538 = vunpack.c.l.b16 %v300
    %v1539 = vunpack.c.h.b16 %v300
    %v1540 = vunpack.c.l.b16 %v301
    %v1541 = vunpack.c.h.b16 %v301
    %v1542 = vunpack.c.l.b16 %v302
    %v1543 = vunpack.c.h.b16 %v302
    %v1544 = vunpack.c.l.b16 %v303
    %v1545 = vunpack.c.h.b16 %v303
    %v1546 = vunpack.c.l.b16 %v304
    %v1547 = vunpack.c.h.b16 %v304
    %v1548 = vunpack.c.l.b16 %v305
    %v1549 = vunpack.c.h.b16 %v305
    %v1550 = vunpack.c.l.b16 %v306
    %v1551 = vunpack.c.h.b16 %v306
    %v1552 = vunpack.c.l.b16 %v307
    %v1553 = vunpack.c.h.b16 %v307
    %v1554 = vunpack.c.l.b16 %v308
    %v1555 = vunpack.c.h.b16 %v308
    %v1556 = vunpack.c.l.b16 %v309
    %v1557 = vunpack.c.h.b16 %v309
    %v1558 = vunpack.c.l.b16 %v310
    %v1559 = vunpack.c.h.b16 %v310
    %v1560 = vunpack.c.l.b16 %v311
    %v1561 = vunpack.c.h.b16 %v311
    %v1562 = vunpack.c.l.b16 %v312
    %v1563 = vunpack.c.h.b16 %v312
    %v1564 = vunpack.c.l.b16 %v313
    %v1565 = vunpack.c.h.b16 %v313
    %v1566 = vunpack.c.l.b16 %v314
    %v1567 = vunpack.c.h.b16 %v314
    %v1568 = vunpack.c.l.b16 %v315
    %v1569 = vunpack.c.h.b16 %v315
    %v1570 = vunpack.c.l.b16 %v316
    %v1571 = vunpack.c.h.b16 %v316
    %v1572 = vunpack.c.l.b16 %v317
    %v1573 = vunpack.c.h.b16 %v317
    %v1574 = vunpack.c.l.b16 %v318
    %v1575 = vunpack.c.h.b16 %v318
    %v1576 = vunpack.c.l.b16 %v319
    %v1577 = vunpack.c.h.b16 %v319
    %v1578 = vunpack.c.l.b16 %v320
    %v1579 = vunpack.c.h.b16 %v320
    %v1580 = vunpack.c.l.b16 %v321
    %v1581 = vunpack.c.h.b16 %v321
    %v1582 = vunpack.c.l.b16 %v322
    %v1583 = vunpack.c.h.b16 %v322
    %v1584 = vunpack.c.l.b16 %v323
    %v1585 = vunpack.c.h.b16 %v323
    %v1586 = vunpack.c.l.b16 %v324
    %v1587 = vunpack.c.h.b16 %v324
    %v1588 = vunpack.c.l.b16 %v325
    %v1589 = vunpack.c.h.b16 %v325
    %v1590 = vunpack.c.l.b16 %v326
    %v1591 = vunpack.c.h.b16 %v326
    %v1592 = vunpack.c.l.b16 %v327
    %v1593 = vunpack.c.h.b16 %v327
    %v1594 = vunpack.c.l.b16 %v328
    %v1595 = vunpack.c.h.b16 %v328
    %v1596 = vunpack.c.l.b16 %v329
    %v1597 = vunpack.c.h.b16 %v329
    %v1598 = vunpack.c.l.b16 %v330
    %v1599 = vunpack.c.h.b16 %v330
    %v1600 = vunpack.c.l.b16 %v331
    %v1601 = vunpack.c.h.b16 %v331
    %v1602 = vunpack.c.l.b16 %v332
    %v1603 = vunpack.c.h.b16 %v332
    %v1604 = vunpack.c.l.b16 %v333
    %v1605 = vunpack.c.h.b16 %v333
    %v1606 = vunpack.c.l.b16 %v334
    %v1607 = vunpack.c.h.b16 %v334
    %v1608 = vunpack.c.l.b16 %v335
    %v1609 = vunpack.c.h.b16 %v335
    %v1610 = vunpack.c.l.b16 %v336
    %v1611 = vunpack.c.h.b16 %v336
    %v1612 = vunpack.c.l.b16 %v337
    %v1613 = vunpack.c.h.b16 %v337
    %v1614 = vunpack.c.l.b16 %v338
    %v1615 = vunpack.c.h.b16 %v338
    %v1616 = vunpack.c.l.b16 %v339
    %v1617 = vunpack.c.h.b16 %v339
    %v1618 = vunpack.c.l.b16 %v340
    %v1619 = vunpack.c.h.b16 %v340
    %v1620 = vunpack.c.l.b16 %v341
    %v1621 = vunpack.c.h.b16 %v341
    %v1622 = vunpack.c.l.b16 %v342
    %v1623 = vunpack.c.h.b16 %v342
    %v1624 = vunpack.c.l.b16 %v343
    %v1625 = vunpack.c.h.b16 %v343
    %v1626 = vunpack.c.l.b16 %v344
    %v1627 = vunpack.c.h.b16 %v344
    %v1628 = vunpack.c.l.b16 %v345
    %v1629 = vunpack.c.h.b16 %v345
    %v1630 = vunpack.c.l.b16 %v346
    %v1631 = vunpack.c.h.b16 %v346
    %v1632 = vunpack.c.l.b16 %v347
    %v1633 = vunpack.c.h.b16 %v347
    %v1634 = vunpack.c.l.b16 %v348
    %v1635 = vunpack.c.h.b16 %v348
    %v1636 = vunpack.c.l.b16 %v349
    %v1637 = vunpack.c.h.b16 %v349
    %v1638 = vunpack.c.l.b16 %v350
    %v1639 = vunpack.c.h.b16 %v350
    %v1640 = vunpack.c.l.b16 %v351
    %v1641 = vunpack.c.h.b16 %v351
    %v1642 = vunpack.c.l.b16 %v352
    %v1643 = vunpack.c.h.b16 %v352
    %v1644 = vunpack.c.l.b16 %v353
    %v1645 = vunpack.c.h.b16 %v353
    %v1646 = vunpack.c.l.b16 %v354
    %v1647 = vunpack.c.h.b16 %v354
    %v1648 = vunpack.c.l.b16 %v355
    %v1649 = vunpack.c.h.b16 %v355
    %v1650 = vunpack.c.l.b16 %v356
    %v1651 = vunpack.c.h.b16 %v356
    %v1652 = vunpack.c.l.b16 %v357
    %v1653 = vunpack.c.h.b16 %v357
    %v1654 = vunpack.c.l.b16 %v358
    %v1655 = vunpack.c.h.b16 %v358
    %v1656 = vunpack.c.l.b16 %v359
    %v1657 = vunpack.c.h.b16 %v359
    %v1658 = vunpack.c.l.b16 %v360
    %v1659 = vunpack.c.h.b16 %v360
    %v1660 = vunpack.c.l.b16 %v361
    %v1661 = vunpack.c.h.b16 %v361
    %v1662 = vunpack.c.l.b16 %v362
    %v1663 = vunpack.c.h.b16 %v362
    %v1664 = vunpack.c.l.b16 %v363
    %v1665 = vunpack.c.h.b16 %v363
    %v1666 = vunpack.c.l.b16 %v364
    %v1667 = vunpack.c.h.b16 %v364
    %v1668 = vunpack.c.l.b16 %v365
    %v1669 = vunpack.c.h.b16 %v365
    %v1670 = vunpack.c.l.b16 %v366
    %v1671 = vunpack.c.h.b16 %v366
    %v1672 = vunpack.c.l.b16 %v367
    %v1673 = vunpack.c.h.b16 %v367
    %v1674 = vunpack.c.l.b16 %v368
    %v1675 = vunpack.c.h.b16 %v368
    %v1676 = vunpack.c.l.b16 %v369
    %v1677 = vunpack.c.h.b16 %v369
    %v1678 = vunpack.c.l.b16 %v370
    %v1679 = vunpack.c.h.b16 %v370
    %v1680 = vunpack.c.l.b16 %v371
    %v1681 = vunpack.c.h.b16 %v371
    %v1682 = vunpack.c.l.b16 %v372
    %v1683 = vunpack.c.h.b16 %v372
    %v1684 = vunpack.c.l.b16 %v373
    %v1685 = vunpack.c.h.b16 %v373
    %v1686 = vunpack.c.l.b16 %v374
    %v1687 = vunpack.c.h.b16 %v374
    %v1688 = vunpack.c.l.b16 %v375
    %v1689 = vunpack.c.h.b16 %v375
    %v1690 = vunpack.c.l.b16 %v376
    %v1691 = vunpack.c.h.b16 %v376
    %v1692 = vunpack.c.l.b16 %v377
    %v1693 = vunpack.c.h.b16 %v377
    %v1694 = vunpack.c.l.b16 %v378
    %v1695 = vunpack.c.h.b16 %v378
    %v1696 = vunpack.c.l.b16 %v379
    %v1697 = vunpack.c.h.b16 %v379
    %v1698 = vunpack.c.l.b16 %v380
    %v1699 = vunpack.c.h.b16 %v380
    %v1700 = vunpack.c.l.b16 %v381
    %v1701 = vunpack.c.h.b16 %v381
    %v1702 = vunpack.c.l.b16 %v382
    %v1703 = vunpack.c.h.b16 %v382
    %v1704 = vunpack.c.l.b16 %v383
    %v1705 = vunpack.c.h.b16 %v383
    %v1706 = vunpack.c.l.b16 %v384
    %v1707 = vunpack.c.h.b16 %v384
    %v1708 = vunpack.c.l.b16 %v385
    %v1709 = vunpack.c.h.b16 %v385
    %v1710 = vunpack.c.l.b16 %v386
    %v1711 = vunpack.c.h.b16 %v386
    %v1712 = vunpack.c.l.b16 %v387
    %v1713 = vunpack.c.h.b16 %v387
    %v1714 = vunpack.c.l.b16 %v388
    %v1715 = vunpack.c.h.b16 %v388
    %v1716 = vunpack.c.l.b16 %v389
    %v1717 = vunpack.c.h.b16 %v389
    %v1718 = vunpack.c.l.b16 %v390
    %v1719 = vunpack.c.h.b16 %v390
    %v1720 = vunpack.c.l.b16 %v391
    %v1721 = vunpack.c.h.b16 %v391
    %v1722 = vunpack.c.l.b16 %v392
    %v1723 = vunpack.c.h.b16 %v392
    %v1724 = vunpack.c.l.b16 %v393
    %v1725 = vunpack.c.h.b16 %v393
    %v1726 = vunpack.c.l.b16 %v394
    %v1727 = vunpack.c.h.b16 %v394
    %v1728 = vunpack.c.l.b16 %v395
    %v1729 = vunpack.c.h.b16 %v395
    %v1730 = vunpack.c.l.b16 %v396
    %v1731 = vunpack.c.h.b16 %v396
    %v1732 = vunpack.c.l.b16 %v397
    %v1733 = vunpack.c.h.b16 %v397
    %v1734 = vunpack.c.l.b16 %v398
    %v1735 = vunpack.c.h.b16 %v398
    %v1736 = vunpack.c.l.b16 %v399
    %v1737 = vunpack.c.h.b16 %v399
    %v1738 = vunpack.c.l.b16 %v400
    %v1739 = vunpack.c.h.b16 %v400
    %v1740 = vunpack.c.l.b16 %v401
    %v1741 = vunpack.c.h.b16 %v401
    %v1742 = vunpack.c.l.b16 %v402
    %v1743 = vunpack.c.h.b16 %v402
    %v1744 = vunpack.c.l.b16 %v403
    %v1745 = vunpack.c.h.b16 %v403
    %v1746 = vunpack.c.l.b16 %v404
    %v1747 = vunpack.c.h.b16 %v404
    %v1748 = vunpack.c.l.b16 %v405
    %v1749 = vunpack.c.h.b16 %v405
    %v1750 = vunpack.c.l.b16 %v406
    %v1751 = vunpack.c.h.b16 %v406
    %v1752 = vunpack.c.l.b16 %v407
    %v1753 = vunpack.c.h.b16 %v407
    %v1754 = vunpack.c.l.b16 %v408
    %v1755 = vunpack.c.h.b16 %v408
    %v1756 = vunpack.c.l.b16 %v409
    %v1757 = vunpack.c.h.b16 %v409
    %v1758 = vunpack.c.l.b16 %v410
    %v1759 = vunpack.c.h.b16 %v410
    %v1760 = vunpack.c.l.b16 %v411
    %v1761 = vunpack.c.h.b16 %v411
    %v1762 = vunpack.c.l.b16 %v412
    %v1763 = vunpack.c.h.b16 %v412
    %v1764 = vunpack.c.l.b16 %v413
    %v1765 = vunpack.c.h.b16 %v413
    %v1766 = vunpack.c.l.b16 %v414
    %v1767 = vunpack.c.h.b16 %v414
    %v1768 = vunpack.c.l.b16 %v415
    %v1769 = vunpack.c.h.b16 %v415
    %v1770 = vunpack.c.l.b16 %v416
    %v1771 = vunpack.c.h.b16 %v416
    %v1772 = vunpack.c.l.b16 %v417
    %v1773 = vunpack.c.h.b16 %v417
    %v1774 = vunpack.c.l.b16 %v418
    %v1775 = vunpack.c.h.b16 %v418
    %v1776 = vunpack.c.l.b16 %v419
    %v1777 = vunpack.c.h.b16 %v419
    %v1778 = vunpack.c.l.b16 %v420
    %v1779 = vunpack.c.h.b16 %v420
    %v1780 = vunpack.c.l.b16 %v421
    %v1781 = vunpack.c.h.b16 %v421
    %v1782 = vunpack.c.l.b16 %v422
    %v1783 = vunpack.c.h.b16 %v422
    %v1784 = vunpack.c.l.b16 %v423
    %v1785 = vunpack.c.h.b16 %v423
    %v1786 = vunpack.c.l.b16 %v424
    %v1787 = vunpack.c.h.b16 %v424
    %v1788 = vunpack.c.l.b16 %v425
    %v1789 = vunpack.c.h.b16 %v425
    %v1790 = vunpack.c.l.b16 %v426
    %v1791 = vunpack.c.h.b16 %v426
    %v1792 = vunpack.c.l.b16 %v427
    %v1793 = vunpack.c.h.b16 %v427
    %v1794 = vunpack.c.l.b16 %v428
    %v1795 = vunpack.c.h.b16 %v428
    %v1796 = vunpack.c.l.b16 %v429
    %v1797 = vunpack.c.h.b16 %v429
    %v1798 = vunpack.c.l.b16 %v430
    %v1799 = vunpack.c.h.b16 %v430
    %v1800 = vunpack.c.l.b16 %v431
    %v1801 = vunpack.c.h.b16 %v431
    %v1802 = vunpack.c.l.b16 %v432
    %v1803 = vunpack.c.h.b16 %v432
    %v1804 = vunpack.c.l.b16 %v433
    %v1805 = vunpack.c.h.b16 %v433
    %v1806 = vunpack.c.l.b16 %v434
    %v1807 = vunpack.c.h.b16 %v434
    %v1808 = vunpack.c.l.b16 %v435
    %v1809 = vunpack.c.h.b16 %v435
    %v1810 = vunpack.c.l.b16 %v436
    %v1811 = vunpack.c.h.b16 %v436
    %v1812 = vunpack.c.l.b16 %v437
    %v1813 = vunpack.c.h.b16 %v437
    %v1814 = vunpack.c.l.b16 %v438
    %v1815 = vunpack.c.h.b16 %v438
    %v1816 = vunpack.c.l.b16 %v439
    %v1817 = vunpack.c.h.b16 %v439
    %v1818 = vunpack.c.l.b16 %v440
    %v1819 = vunpack.c.h.b16 %v440
    %v1820 = vunpack.c.l.b16 %v441
    %v1821 = vunpack.c.h.b16 %v441
    %v1822 = vunpack.c.l.b16 %v442
    %v1823 = vunpack.c.h.b16 %v442
    %v1824 = vunpack.c.l.b16 %v443
    %v1825 = vunpack.c.h.b16 %v443
    %v1826 = vunpack.c.l.b16 %v444
    %v1827 = vunpack.c.h.b16 %v444
    %v1828 = vunpack.c.l.b16 %v445
    %v1829 = vunpack.c.h.b16 %v445
    %v1830 = vunpack.c.l.b16 %v446
    %v1831 = vunpack.c.h.b16 %v446
    %v1832 = vunpack.c.l.b16 %v447
    %v1833 = vunpack.c.h.b16 %v447
    %v1834 = vunpack.c.l.b16 %v448
    %v1835 = vunpack.c.h.b16 %v448
    %v1836 = vunpack.c.l.b16 %v449
    %v1837 = vunpack.c.h.b16 %v449
    %v1838 = vunpack.c.l.b16 %v450
    %v1839 = vunpack.c.h.b16 %v450
    %v1840 = vunpack.c.l.b16 %v451
    %v1841 = vunpack.c.h.b16 %v451
    %v1842 = vunpack.c.l.b16 %v452
    %v1843 = vunpack.c.h.b16 %v452
    %v1844 = vunpack.c.l.b16 %v453
    %v1845 = vunpack.c.h.b16 %v453
    %v1846 = vunpack.c.l.b16 %v454
    %v1847 = vunpack.c.h.b16 %v454
    %v1848 = vunpack.c.l.b16 %v455
    %v1849 = vunpack.c.h.b16 %v455
    %v1850 = vunpack.c.l.b16 %v456
    %v1851 = vunpack.c.h.b16 %v456
    %v1852 = vunpack.c.l.b16 %v457
    %v1853 = vunpack.c.h.b16 %v457
    %v1854 = vunpack.c.l.b16 %v458
    %v1855 = vunpack.c.h.b16 %v458
    %v1856 = vunpack.c.l.b16 %v459
    %v1857 = vunpack.c.h.b16 %v459
    %v1858 = vunpack.c.l.b16 %v460
    %v1859 = vunpack.c.h.b16 %v460
    %v1860 = vunpack.c.l.b16 %v461
    %v1861 = vunpack.c.h.b16 %v461
    %v1862 = vunpack.c.l.b16 %v462
    %v1863 = vunpack.c.h.b16 %v462
    %v1864 = vunpack.c.l.b16 %v463
    %v1865 = vunpack.c.h.b16 %v463
    %v1866 = vunpack.c.l.b16 %v464
    %v1867 = vunpack.c.h.b16 %v464
    %v1868 = vunpack.c.l.b16 %v465
    %v1869 = vunpack.c.h.b16 %v465
    %v1870 = vunpack.c.l.b16 %v466
    %v1871 = vunpack.c.h.b16 %v466
    %v1872 = vunpack.c.l.b16 %v467
    %v1873 = vunpack.c.h.b16 %v467
    %v1874 = vunpack.c.l.b16 %v468
    %v1875 = vunpack.c.h.b16 %v468
    %v1876 = vunpack.c.l.b16 %v469
    %v1877 = vunpack.c.h.b16 %v469
    %v1878 = vunpack.c.l.b16 %v470
    %v1879 = vunpack.c.h.b16 %v470
    %v1880 = vunpack.c.l.b16 %v471
    %v1881 = vunpack.c.h.b16 %v471
    %v1882 = vunpack.c.l.b16 %v472
    %v1883 = vunpack.c.h.b16 %v472
    %v1884 = vunpack.c.l.b16 %v473
    %v1885 = vunpack.c.h.b16 %v473
    %v1886 = vunpack.c.l.b16 %v474
    %v1887 = vunpack.c.h.b16 %v474
    %v1888 = vunpack.c.l.b16 %v475
    %v1889 = vunpack.c.h.b16 %v475
    %v1890 = vunpack.c.l.b16 %v476
    %v1891 = vunpack.c.h.b16 %v476
    %v1892 = vunpack.c.l.b16 %v477
    %v1893 = vunpack.c.h.b16 %v477
    %v1894 = vunpack.c.l.b16 %v478
    %v1895 = vunpack.c.h.b16 %v478
    %v1896 = vunpack.c.l.b16 %v479
    %v1897 = vunpack.c.h.b16 %v479
    %v1898 = vunpack.c.l.b16 %v480
    %v1899 = vunpack.c.h.b16 %v480
    %v1900 = vunpack.c.l.b16 %v481
    %v1901 = vunpack.c.h.b16 %v481
    %v1902 = vunpack.c.l.b16 %v482
    %v1903 = vunpack.c.h.b16 %v482
    %v1904 = vunpack.c.l.b16 %v483
    %v1905 = vunpack.c.h.b16 %v483
    %v1906 = vunpack.c.l.b16 %v484
    %v1907 = vunpack.c.h.b16 %v484
    %v1908 = vunpack.c.l.b16 %v485
    %v1909 = vunpack.c.h.b16 %v485
    %v1910 = vunpack.c.l.b16 %v486
    %v1911 = vunpack.c.h.b16 %v486
    %v1912 = vunpack.c.l.b16 %v487
    %v1913 = vunpack.c.h.b16 %v487
    %v1914 = vunpack.c.l.b16 %v488
    %v1915 = vunpack.c.h.b16 %v488
    %v1916 = vunpack.c.l.b16 %v489
    %v1917 = vunpack.c.h.b16 %v489
    %v1918 = vunpack.c.l.b16 %v490
    %v1919 = vunpack.c.h.b16 %v490
    %v1920 = vunpack.c.l.b16 %v491
    %v1921 = vunpack.c.h.b16 %v491
    %v1922 = vunpack.c.l.b16 %v492
    %v1923 = vunpack.c.h.b16 %v492
    %v1924 = vunpack.c.l.b16 %v493
    %v1925 = vunpack.c.h.b16 %v493
    %v1926 = vunpack.c.l.b16 %v494
    %v1927 = vunpack.c.h.b16 %v494
    %v1928 = vunpack.c.l.b16 %v495
    %v1929 = vunpack.c.h.b16 %v495
    %v1930 = vunpack.c.l.b16 %v496
    %v1931 = vunpack.c.h.b16 %v496
    %v1932 = vunpack.c.l.b16 %v497
    %v1933 = vunpack.c.h.b16 %v497
    %v1934 = vunpack.c.l.b16 %v498
    %v1935 = vunpack.c.h.b16 %v498
    %v1936 = vunpack.c.l.b16 %v499
    %v1937 = vunpack.c.h.b16 %v499
    %v1938 = vunpack.c.l.b16 %v500
    %v1939 = vunpack.c.h.b16 %v500
    %v1940 = vunpack.c.l.b16 %v501
    %v1941 = vunpack.c.h.b16 %v501
    %v1942 = vunpack.c.l.b16 %v502
    %v1943 = vunpack.c.h.b16 %v502
    %v1944 = vunpack.c.l.b16 %v503
    %v1945 = vunpack.c.h.b16 %v503
    %v1946 = vunpack.c.l.b16 %v504
    %v1947 = vunpack.c.h.b16 %v504
    %v1948 = vunpack.c.l.b16 %v505
    %v1949 = vunpack.c.h.b16 %v505
    %v1950 = vunpack.c.l.b16 %v506
    %v1951 = vunpack.c.h.b16 %v506
    %v1952 = vunpack.c.l.b16 %v507
    %v1953 = vunpack.c.h.b16 %v507
    %v1954 = vunpack.c.l.b16 %v508
    %v1955 = vunpack.c.h.b16 %v508
    %v1956 = vunpack.c.l.b16 %v509
    %v1957 = vunpack.c.h.b16 %v509
    %v1958 = vunpack.c.l.b16 %v510
    %v1959 = vunpack.c.h.b16 %v510
    %v1960 = vunpack.c.l.b16 %v511
    %v1961 = vunpack.c.h.b16 %v511
    %v1962 = vunpack.c.l.b16 %v512
    %v1963 = vunpack.c.h.b16 %v512
    %v1964 = vunpack.c.l.b16 %v513
    %v1965 = vunpack.c.h.b16 %v513
    %v1966 = vunpack.c.l.b16 %v514
    %v1967 = vunpack.c.h.b16 %v514
    %v1968 = vunpack.c.l.b16 %v515
    %v1969 = vunpack.c.h.b16 %v515
    %v1970 = vunpack.c.l.b16 %v516
    %v1971 = vunpack.c.h.b16 %v516
    %v1972 = vunpack.c.l.b16 %v517
    %v1973 = vunpack.c.h.b16 %v517
    %v1974 = vunpack.c.l.b16 %v518
    %v1975 = vunpack.c.h.b16 %v518
    %v1976 = vunpack.c.l.b16 %v519
    %v1977 = vunpack.c.h.b16 %v519
    %v1978 = vunpack.c.l.b16 %v520
    %v1979 = vunpack.c.h.b16 %v520
    %v1980 = vunpack.c.l.b16 %v521
    %v1981 = vunpack.c.h.b16 %v521
    %v1982 = vunpack.c.l.b16 %v522
    %v1983 = vunpack.c.h.b16 %v522
    %v1984 = vunpack.c.l.b16 %v523
    %v1985 = vunpack.c.h.b16 %v523
    %v1986 = vunpack.c.l.b16 %v524
    %v1987 = vunpack.c.h.b16 %v524
    %v1988 = vunpack.c.l.b16 %v525
    %v1989 = vunpack.c.h.b16 %v525
    %v1990 = vunpack.c.l.b16 %v526
    %v1991 = vunpack.c.h.b16 %v526
    %v1992 = vunpack.c.l.b16 %v527
    %v1993 = vunpack.c.h.b16 %v527
    %v1994 = vunpack.c.l.b16 %v528
    %v1995 = vunpack.c.h.b16 %v528
    %v1996 = vunpack.c.l.b16 %v529
    %v1997 = vunpack.c.h.b16 %v529
    %v1998 = vunpack.c.l.b16 %v530
    %v1999 = vunpack.c.h.b16 %v530
    %v2000 = vunpack.c.l.b16 %v531
    %v2001 = vunpack.c.h.b16 %v531
    %v2002 = vunpack.c.l.b16 %v532
    %v2003 = vunpack.c.h.b16 %v532
    %v2004 = vunpack.c.l.b16 %v533
    %v2005 = vunpack.c.h.b16 %v533
    %v2006 = vunpack.c.l.b16 %v534
    %v2007 = vunpack.c.h.b16 %v534
    %v2008 = vunpack.c.l.b16 %v535
    %v2009 = vunpack.c.h.b16 %v535
    %v2010 = vunpack.c.l.b16 %v536
    %v2011 = vunpack.c.h.b16 %v536
    %v2012 = vunpack.c.l.b16 %v537
    %v2013 = vunpack.c.h.b16 %v537
    %v2014 = vunpack.c.l.b16 %v538
    %v2015 = vunpack.c.h.b16 %v538
    %v2016 = vunpack.c.l.b16 %v539
    %v2017 = vunpack.c.h.b16 %v539
    %v2018 = vunpack.c.l.b16 %v540
    %v2019 = vunpack.c.h.b16 %v540
    %v2020 = vunpack.c.l.b16 %v541
    %v2021 = vunpack.c.h.b16 %v541
    %v2022 = vunpack.c.l.b16 %v542
    %v2023 = vunpack.c.h.b16 %v542
    %v2024 = vunpack.c.l.b16 %v543
    %v2025 = vunpack.c.h.b16 %v543
    %v2026 = vunpack.c.l.b16 %v544
    %v2027 = vunpack.c.h.b16 %v544
    %v2028 = vunpack.c.l.b16 %v545
    %v2029 = vunpack.c.h.b16 %v545
    %v2030 = vunpack.c.l.b16 %v546
    %v2031 = vunpack.c.h.b16 %v546
    %v2032 = vunpack.c.l.b16 %v547
    %v2033 = vunpack.c.h.b16 %v547
    %v2034 = vunpack.c.l.b16 %v548
    %v2035 = vunpack.c.h.b16 %v548
    %v2036 = vunpack.c.l.b16 %v549
    %v2037 = vunpack.c.h.b16 %v549
    %v2038 = vunpack.c.l.b16 %v550
    %v2039 = vunpack.c.h.b16 %v550
    %v2040 = vunpack.c.l.b16 %v551
    %v2041 = vunpack.c.h.b16 %v551
    %v2042 = vunpack.c.l.b16 %v552
    %v2043 = vunpack.c.h.b16 %v552
    %v2044 = vunpack.c.l.b16 %v553
    %v2045 = vunpack.c.h.b16 %v553
    %v2046 = vunpack.c.l.b16 %v554
    %v2047 = vunpack.c.h.b16 %v554
    %v2048 = vunpack.c.l.b16 %v555
    %v2049 = vunpack.c.h.b16 %v555
    %v2050 = vunpack.c.l.b16 %v556
    %v2051 = vunpack.c.h.b16 %v556
    %v2052 = vunpack.c.l.b16 %v557
    %v2053 = vunpack.c.h.b16 %v557
    %v2054 = vunpack.c.l.b16 %v558
    %v2055 = vunpack.c.h.b16 %v558
    %v2056 = vunpack.c.l.b16 %v559
    %v2057 = vunpack.c.h.b16 %v559
    %v2058 = vunpack.c.l.b16 %v560
    %v2059 = vunpack.c.h.b16 %v560
    %v2060 = vunpack.c.l.b16 %v561
    %v2061 = vunpack.c.h.b16 %v561
    %v2062 = vunpack.c.l.b16 %v562
    %v2063 = vunpack.c.h.b16 %v562
    %v2064 = vunpack.c.l.b16 %v563
    %v2065 = vunpack.c.h.b16 %v563
    %v2066 = vunpack.c.l.b16 %v564
    %v2067 = vunpack.c.h.b16 %v564
    %v2068 = vunpack.c.l.b16 %v565
    %v2069 = vunpack.c.h.b16 %v565
    %v2070 = vunpack.c.l.b16 %v566
    %v2071 = vunpack.c.h.b16 %v566
    %v2072 = vunpack.c.l.b16 %v567
    %v2073 = vunpack.c.h.b16 %v567
    %v2074 = vunpack.c.l.b16 %v568
    %v2075 = vunpack.c.h.b16 %v568
    %v2076 = vunpack.c.l.b16 %v569
    %v2077 = vunpack.c.h.b16 %v569
    %v2078 = vunpack.c.l.b16 %v570
    %v2079 = vunpack.c.h.b16 %v570
    %v2080 = vunpack.c.l.b16 %v571
    %v2081 = vunpack.c.h.b16 %v571
    %v2082 = vunpack.c.l.b16 %v572
    %v2083 = vunpack.c.h.b16 %v572
    %v2084 = vunpack.c.l.b16 %v573
    %v2085 = vunpack.c.h.b16 %v573
    %v2086 = vunpack.c.l.b16 %v574
    %v2087 = vunpack.c.h.b16 %v574
    %v2088 = vunpack.c.l.b16 %v575
    %v2089 = vunpack.c.h.b16 %v575
    %v2090 = vunpack.c.l.b16 %v576
    %v2091 = vunpack.c.h.b16 %v576
    %v2092 = vunpack.c.l.b16 %v577
    %v2093 = vunpack.c.h.b16 %v577
    %v2094 = vunpack.c.l.b16 %v578
    %v2095 = vunpack.c.h.b16 %v578
    %v2096 = vunpack.c.l.b16 %v579
    %v2097 = vunpack.c.h.b16 %v579
    %v2098 = vunpack.c.l.b16 %v580
    %v2099 = vunpack.c.h.b16 %v580
    %v2100 = vunpack.c.l.b16 %v581
    %v2101 = vunpack.c.h.b16 %v581
    %v2102 = vunpack.c.l.b16 %v582
    %v2103 = vunpack.c.h.b16 %v582
    %v2104 = vunpack.c.l.b16 %v583
    %v2105 = vunpack.c.h.b16 %v583
    %v2106 = vunpack.c.l.b16 %v584
    %v2107 = vunpack.c.h.b16 %v584
    %v2108 = vunpack.c.l.b16 %v585
    %v2109 = vunpack.c.h.b16 %v585
    %v2110 = vunpack.c.l.b16 %v586
    %v2111 = vunpack.c.h.b16 %v586
    %v2112 = vunpack.c.l.b16 %v587
    %v2113 = vunpack.c.h.b16 %v587
    %v2114 = vunpack.c.l.b16 %v588
    %v2115 = vunpack.c.h.b16 %v588
    %v2116 = vunpack.c.l.b16 %v589
    %v2117 = vunpack.c.h.b16 %v589
    %v2118 = vunpack.c.l.b16 %v590
    %v2119 = vunpack.c.h.b16 %v590
    %v2120 = vunpack.c.l.b16 %v591
    %v2121 = vunpack.c.h.b16 %v591
    %v2122 = vunpack.c.l.b16 %v592
    %v2123 = vunpack.c.h.b16 %v592
    %v2124 = vunpack.c.l.b16 %v593
    %v2125 = vunpack.c.h.b16 %v593
    %v2126 = vunpack.c.l.b16 %v594
    %v2127 = vunpack.c.h.b16 %v594
    %v2128 = vunpack.c.l.b16 %v595
    %v2129 = vunpack.c.h.b16 %v595
    %v2130 = vunpack.c.l.b16 %v596
    %v2131 = vunpack.c.h.b16 %v596
    %v2132 = vunpack.c.l.b16 %v597
    %v2133 = vunpack.c.h.b16 %v597
    %v2134 = vunpack.c.l.b16 %v598
    %v2135 = vunpack.c.h.b16 %v598
    %v2136 = vunpack.c.l.b16 %v599
    %v2137 = vunpack.c.h.b16 %v599
    %v2138 = vunpack.c.l.b16 %v600
    %v2139 = vunpack.c.h.b16 %v600
    %v2140 = vunpack.c.l.b16 %v601
    %v2141 = vunpack.c.h.b16 %v601
    %v2142 = vunpack.c.l.b16 %v602
    %v2143 = vunpack.c.h.b16 %v602
    %v2144 = vunpack.c.l.b16 %v603
    %v2145 = vunpack.c.h.b16 %v603
    %v2146 = vunpack.c.l.b16 %v604
    %v2147 = vunpack.c.h.b16 %v604
    %v2148 = vunpack.c.l.b16 %v605
    %v2149 = vunpack.c.h.b16 %v605
    %v2150 = vunpack.c.l.b16 %v606
    %v2151 = vunpack.c.h.b16 %v606
    %v2152 = vunpack.c.l.b16 %v607
    %v2153 = vunpack.c.h.b16 %v607
    %v2154 = vunpack.c.l.b16 %v608
    %v2155 = vunpack.c.h.b16 %v608
    %v2156 = vunpack.c.l.b16 %v609
    %v2157 = vunpack.c.h.b16 %v609
    %v2158 = vunpack.c.l.b16 %v610
    %v2159 = vunpack.c.h.b16 %v610
    %v2160 = vunpack.c.l.b16 %v611
    %v2161 = vunpack.c.h.b16 %v611
    %v2162 = vunpack.c.l.b16 %v612
    %v2163 = vunpack.c.h.b16 %v612
    %v2164 = vunpack.c.l.b16 %v613
    %v2165 = vunpack.c.h.b16 %v613
    %v2166 = vunpack.c.l.b16 %v614
    %v2167 = vunpack.c.h.b16 %v614
    %v2168 = vunpack.c.l.b16 %v615
    %v2169 = vunpack.c.h.b16 %v615
    %v2170 = vunpack.c.l.b16 %v616
    %v2171 = vunpack.c.h.b16 %v616
    %v2172 = vunpack.c.l.b16 %v617
    %v2173 = vunpack.c.h.b16 %v617
    %v2174 = vunpack.c.l.b16 %v618
    %v2175 = vunpack.c.h.b16 %v618
    %v2176 = vunpack.c.l.b16 %v619
    %v2177 = vunpack.c.h.b16 %v619
    %v2178 = vunpack.c.l.b16 %v620
    %v2179 = vunpack.c.h.b16 %v620
    %v2180 = vunpack.c.l.b16 %v621
    %v2181 = vunpack.c.h.b16 %v621
    %v2182 = vunpack.c.l.b16 %v622
    %v2183 = vunpack.c.h.b16 %v622
    %v2184 = vunpack.c.l.b16 %v623
    %v2185 = vunpack.c.h.b16 %v623
    %v2186 = vunpack.c.l.b16 %v624
    %v2187 = vunpack.c.h.b16 %v624
    %v2188 = vunpack.c.l.b16 %v625
    %v2189 = vunpack.c.h.b16 %v625
    %v2190 = vunpack.c.l.b16 %v626
    %v2191 = vunpack.c.h.b16 %v626
    %v2192 = vunpack.c.l.b16 %v627
    %v2193 = vunpack.c.h.b16 %v627
    %v2194 = vunpack.c.l.b16 %v628
    %v2195 = vunpack.c.h.b16 %v628
    %v2196 = vunpack.c.l.b16 %v629
    %v2197 = vunpack.c.h.b16 %v629
    %v2198 = vunpack.c.l.b16 %v630
    %v2199 = vunpack.c.h.b16 %v630
    %v2200 = vunpack.c.l.b16 %v631
    %v2201 = vunpack.c.h.b16 %v631
    %v2202 = vunpack.c.l.b16 %v632
    %v2203 = vunpack.c.h.b16 %v632
    %v2204 = vunpack.c.l.b16 %v633
    %v2205 = vunpack.c.h.b16 %v633
    %v2206 = vunpack.c.l.b16 %v634
    %v2207 = vunpack.c.h.b16 %v634
    %v2208 = vunpack.c.l.b16 %v635
    %v2209 = vunpack.c.h.b16 %v635
    %v2210 = vunpack.c.l.b16 %v636
    %v2211 = vunpack.c.h.b16 %v636
    %v2212 = vunpack.c.l.b16 %v637
    %v2213 = vunpack.c.h.b16 %v637
    %v2214 = vunpack.c.l.b16 %v638
    %v2215 = vunpack.c.h.b16 %v638
    %v2216 = vunpack.c.l.b16 %v639
    %v2217 = vunpack.c.h.b16 %v639
    %v2218 = vunpack.c.l.b16 %v640
    %v2219 = vunpack.c.h.b16 %v640
    %v2220 = vunpack.c.l.b16 %v641
    %v2221 = vunpack.c.h.b16 %v641
    %v2222 = vunpack.c.l.b16 %v642
    %v2223 = vunpack.c.h.b16 %v642
    %v2224 = vunpack.c.l.b16 %v643
    %v2225 = vunpack.c.h.b16 %v643
    %v2226 = vpack.c.b16 %v1210, %v1202
    %v2227 = vpack.c.b16 %v1211, %v1203
    %v2228 = vpack.c.b16 %v1212, %v1204
    %v2229 = vpack.c.b16 %v1213, %v1205
    %v2230 = vpack.c.b16 %v1214, %v1206
    %v2231 = vpack.c.b16 %v1215, %v1207
    %v2232 = vpack.c.b16 %v1216, %v1208
    %v2233 = vpack.c.b16 %v1217, %v1209
    %v2234 = vpack.c.b16 %v1226, %v1218
    %v2235 = vpack.c.b16 %v1227, %v1219
    %v2236 = vpack.c.b16 %v1228, %v1220
    %v2237 = vpack.c.b16 %v1229, %v1221
    %v2238 = vpack.c.b16 %v1230, %v1222
    %v2239 = vpack.c.b16 %v1231, %v1223
    %v2240 = vpack.c.b16 %v1232, %v1224
    %v2241 = vpack.c.b16 %v1233, %v1225
    %v2242 = vpack.c.b16 %v1242, %v1234
    %v2243 = vpack.c.b16 %v1243, %v1235
    %v2244 = vpack.c.b16 %v1244, %v1236
    %v2245 = vpack.c.b16 %v1245, %v1237
    %v2246 = vpack.c.b16 %v1246, %v1238
    %v2247 = vpack.c.b16 %v1247, %v1239
    %v2248 = vpack.c.b16 %v1248, %v1240
    %v2249 = vpack.c.b16 %v1249, %v1241
    %v2250 = vpack.c.b16 %v1258, %v1250
    %v2251 = vpack.c.b16 %v1259, %v1251
    %v2252 = vpack.c.b16 %v1260, %v1252
    %v2253 = vpack.c.b16 %v1261, %v1253
    %v2254 = vpack.c.b16 %v1262, %v1254
    %v2255 = vpack.c.b16 %v1263, %v1255
    %v2256 = vpack.c.b16 %v1264, %v1256
    %v2257 = vpack.c.b16 %v1265, %v1257
    %v2258 = vpack.c.b16 %v1274, %v1266
    %v2259 = vpack.c.b16 %v1275, %v1267
    %v2260 = vpack.c.b16 %v1276, %v1268
    %v2261 = vpack.c.b16 %v1277, %v1269
    %v2262 = vpack.c.b16 %v1278, %v1270
    %v2263 = vpack.c.b16 %v1279, %v1271
    %v2264 = vpack.c.b16 %v1280, %v1272
    %v2265 = vpack.c.b16 %v1281, %v1273
    %v2266 = vpack.c.b16 %v1290, %v1282
    %v2267 = vpack.c.b16 %v1291, %v1283
    %v2268 = vpack.c.b16 %v1292, %v1284
    %v2269 = vpack.c.b16 %v1293, %v1285
    %v2270 = vpack.c.b16 %v1294, %v1286
    %v2271 = vpack.c.b16 %v1295, %v1287
    %v2272 = vpack.c.b16 %v1296, %v1288
    %v2273 = vpack.c.b16 %v1297, %v1289
    %v2274 = vpack.c.b16 %v1306, %v1298
    %v2275 = vpack.c.b16 %v1307, %v1299
    %v2276 = vpack.c.b16 %v1308, %v1300
    %v2277 = vpack.c.b16 %v1309, %v1301
    %v2278 = vpack.c.b16 %v1310, %v1302
    %v2279 = vpack.c.b16 %v1311, %v1303
    %v2280 = vpack.c.b16 %v1312, %v1304
    %v2281 = vpack.c.b16 %v1313, %v1305
    %v2282 = vpack.c.b16 %v1322, %v1314
    %v2283 = vpack.c.b16 %v1323, %v1315
    %v2284 = vpack.c.b16 %v1324, %v1316
    %v2285 = vpack.c.b16 %v1325, %v1317
    %v2286 = vpack.c.b16 %v1326, %v1318
    %v2287 = vpack.c.b16 %v1327, %v1319
    %v2288 = vpack.c.b16 %v1328, %v1320
    %v2289 = vpack.c.b16 %v1329, %v1321
    %v2290 = vpack.c.b16 %v1338, %v1330
    %v2291 = vpack.c.b16 %v1339, %v1331
    %v2292 = vpack.c.b16 %v1340, %v1332
    %v2293 = vpack.c.b16 %v1341, %v1333
    %v2294 = vpack.c.b16 %v1342, %v1334
    %v2295 = vpack.c.b16 %v1343, %v1335
    %v2296 = vpack.c.b16 %v1344, %v1336
    %v2297 = vpack.c.b16 %v1345, %v1337
    %v2298 = vpack.c.b16 %v1354, %v1346
    %v2299 = vpack.c.b16 %v1355, %v1347
    %v2300 = vpack.c.b16 %v1356, %v1348
    %v2301 = vpack.c.b16 %v1357, %v1349
    %v2302 = vpack.c.b16 %v1358, %v1350
    %v2303 = vpack.c.b16 %v1359, %v1351
    %v2304 = vpack.c.b16 %v1360, %v1352
    %v2305 = vpack.c.b16 %v1361, %v1353
    %v2306 = vpack.c.b16 %v1370, %v1362
    %v2307 = vpack.c.b16 %v1371, %v1363
    %v2308 = vpack.c.b16 %v1372, %v1364
    %v2309 = vpack.c.b16 %v1373, %v1365
    %v2310 = vpack.c.b16 %v1374, %v1366
    %v2311 = vpack.c.b16 %v1375, %v1367
    %v2312 = vpack.c.b16 %v1376, %v1368
    %v2313 = vpack.c.b16 %v1377, %v1369
    %v2314 = vpack.c.b16 %v1386, %v1378
    %v2315 = vpack.c.b16 %v1387, %v1379
    %v2316 = vpack.c.b16 %v1388, %v1380
    %v2317 = vpack.c.b16 %v1389, %v1381
    %v2318 = vpack.c.b16 %v1390, %v1382
    %v2319 = vpack.c.b16 %v1391, %v1383
    %v2320 = vpack.c.b16 %v1392, %v1384
    %v2321 = vpack.c.b16 %v1393, %v1385
    %v2322 = vpack.c.b16 %v1402, %v1394
    %v2323 = vpack.c.b16 %v1403, %v1395
    %v2324 = vpack.c.b16 %v1404, %v1396
    %v2325 = vpack.c.b16 %v1405, %v1397
    %v2326 = vpack.c.b16 %v1406, %v1398
    %v2327 = vpack.c.b16 %v1407, %v1399
    %v2328 = vpack.c.b16 %v1408, %v1400
    %v2329 = vpack.c.b16 %v1409, %v1401
    %v2330 = vpack.c.b16 %v1418, %v1410
    %v2331 = vpack.c.b16 %v1419, %v1411
    %v2332 = vpack.c.b16 %v1420, %v1412
    %v2333 = vpack.c.b16 %v1421, %v1413
    %v2334 = vpack.c.b16 %v1422, %v1414
    %v2335 = vpack.c.b16 %v1423, %v1415
    %v2336 = vpack.c.b16 %v1424, %v1416
    %v2337 = vpack.c.b16 %v1425, %v1417
    %v2338 = vpack.c.b16 %v1434, %v1426
    %v2339 = vpack.c.b16 %v1435, %v1427
    %v2340 = vpack.c.b16 %v1436, %v1428
    %v2341 = vpack.c.b16 %v1437, %v1429
    %v2342 = vpack.c.b16 %v1438, %v1430
    %v2343 = vpack.c.b16 %v1439, %v1431
    %v2344 = vpack.c.b16 %v1440, %v1432
    %v2345 = vpack.c.b16 %v1441, %v1433
    %v2346 = vpack.c.b16 %v1450, %v1442
    %v2347 = vpack.c.b16 %v1451, %v1443
    %v2348 = vpack.c.b16 %v1452, %v1444
    %v2349 = vpack.c.b16 %v1453, %v1445
    %v2350 = vpack.c.b16 %v1454, %v1446
    %v2351 = vpack.c.b16 %v1455, %v1447
    %v2352 = vpack.c.b16 %v1456, %v1448
    %v2353 = vpack.c.b16 %v1457, %v1449
    %v2354 = vpack.c.b16 %v1466, %v1458
    %v2355 = vpack.c.b16 %v1467, %v1459
    %v2356 = vpack.c.b16 %v1468, %v1460
    %v2357 = vpack.c.b16 %v1469, %v1461
    %v2358 = vpack.c.b16 %v1470, %v1462
    %v2359 = vpack.c.b16 %v1471, %v1463
    %v2360 = vpack.c.b16 %v1472, %v1464
    %v2361 = vpack.c.b16 %v1473, %v1465
    %v2362 = vpack.c.b16 %v1482, %v1474
    %v2363 = vpack.c.b16 %v1483, %v1475
    %v2364 = vpack.c.b16 %v1484, %v1476
    %v2365 = vpack.c.b16 %v1485, %v1477
    %v2366 = vpack.c.b16 %v1486, %v1478
    %v2367 = vpack.c.b16 %v1487, %v1479
    %v2368 = vpack.c.b16 %v1488, %v1480
    %v2369 = vpack.c.b16 %v1489, %v1481
    %v2370 = vpack.c.b16 %v1498, %v1490
    %v2371 = vpack.c.b16 %v1499, %v1491
    %v2372 = vpack.c.b16 %v1500, %v1492
    %v2373 = vpack.c.b16 %v1501, %v1493
    %v2374 = vpack.c.b16 %v1502, %v1494
    %v2375 = vpack.c.b16 %v1503, %v1495
    %v2376 = vpack.c.b16 %v1504, %v1496
    %v2377 = vpack.c.b16 %v1505, %v1497
    %v2378 = vpack.c.b16 %v1514, %v1506
    %v2379 = vpack.c.b16 %v1515, %v1507
    %v2380 = vpack.c.b16 %v1516, %v1508
    %v2381 = vpack.c.b16 %v1517, %v1509
    %v2382 = vpack.c.b16 %v1518, %v1510
    %v2383 = vpack.c.b16 %v1519, %v1511
    %v2384 = vpack.c.b16 %v1520, %v1512
    %v2385 = vpack.c.b16 %v1521, %v1513
    %v2386 = vpack.c.b16 %v1530, %v1522
    %v2387 = vpack.c.b16 %v1531, %v1523
    %v2388 = vpack.c.b16 %v1532, %v1524
    %v2389 = vpack.c.b16 %v1533, %v1525
    %v2390 = vpack.c.b16 %v1534, %v1526
    %v2391 = vpack.c.b16 %v1535, %v1527
    %v2392 = vpack.c.b16 %v1536, %v1528
    %v2393 = vpack.c.b16 %v1537, %v1529
    %v2394 = vpack.c.b16 %v1546, %v1538
    %v2395 = vpack.c.b16 %v1547, %v1539
    %v2396 = vpack.c.b16 %v1548, %v1540
    %v2397 = vpack.c.b16 %v1549, %v1541
    %v2398 = vpack.c.b16 %v1550, %v1542
    %v2399 = vpack.c.b16 %v1551, %v1543
    %v2400 = vpack.c.b16 %v1552, %v1544
    %v2401 = vpack.c.b16 %v1553, %v1545
    %v2402 = vpack.c.b16 %v1562, %v1554
    %v2403 = vpack.c.b16 %v1563, %v1555
    %v2404 = vpack.c.b16 %v1564, %v1556
    %v2405 = vpack.c.b16 %v1565, %v1557
    %v2406 = vpack.c.b16 %v1566, %v1558
    %v2407 = vpack.c.b16 %v1567, %v1559
    %v2408 = vpack.c.b16 %v1568, %v1560
    %v2409 = vpack.c.b16 %v1569, %v1561
    %v2410 = vpack.c.b16 %v1578, %v1570
    %v2411 = vpack.c.b16 %v1579, %v1571
    %v2412 = vpack.c.b16 %v1580, %v1572
    %v2413 = vpack.c.b16 %v1581, %v1573
    %v2414 = vpack.c.b16 %v1582, %v1574
    %v2415 = vpack.c.b16 %v1583, %v1575
    %v2416 = vpack.c.b16 %v1584, %v1576
    %v2417 = vpack.c.b16 %v1585, %v1577
    %v2418 = vpack.c.b16 %v1594, %v1586
    %v2419 = vpack.c.b16 %v1595, %v1587
    %v2420 = vpack.c.b16 %v1596, %v1588
    %v2421 = vpack.c.b16 %v1597, %v1589
    %v2422 = vpack.c.b16 %v1598, %v1590
    %v2423 = vpack.c.b16 %v1599, %v1591
    %v2424 = vpack.c.b16 %v1600, %v1592
    %v2425 = vpack.c.b16 %v1601, %v1593
    %v2426 = vpack.c.b16 %v1610, %v1602
    %v2427 = vpack.c.b16 %v1611, %v1603
    %v2428 = vpack.c.b16 %v1612, %v1604
    %v2429 = vpack.c.b16 %v1613, %v1605
    %v2430 = vpack.c.b16 %v1614, %v1606
    %v2431 = vpack.c.b16 %v1615, %v1607
    %v2432 = vpack.c.b16 %v1616, %v1608
    %v2433 = vpack.c.b16 %v1617, %v1609
    %v2434 = vpack.c.b16 %v1626, %v1618
    %v2435 = vpack.c.b16 %v1627, %v1619
    %v2436 = vpack.c.b16 %v1628, %v1620
    %v2437 = vpack.c.b16 %v1629, %v1621
    %v2438 = vpack.c.b16 %v1630, %v1622
    %v2439 = vpack.c.b16 %v1631, %v1623
    %v2440 = vpack.c.b16 %v1632, %v1624
    %v2441 = vpack.c.b16 %v1633, %v1625
    %v2442 = vpack.c.b16 %v1642, %v1634
    %v2443 = vpack.c.b16 %v1643, %v1635
    %v2444 = vpack.c.b16 %v1644, %v1636
    %v2445 = vpack.c.b16 %v1645, %v1637
    %v2446 = vpack.c.b16 %v1646, %v1638
    %v2447 = vpack.c.b16 %v1647, %v1639
    %v2448 = vpack.c.b16 %v1648, %v1640
    %v2449 = vpack.c.b16 %v1649, %v1641
    %v2450 = vpack.c.b16 %v1658, %v1650
    %v2451 = vpack.c.b16 %v1659, %v1651
    %v2452 = vpack.c.b16 %v1660, %v1652
    %v2453 = vpack.c.b16 %v1661, %v1653
    %v2454 = vpack.c.b16 %v1662, %v1654
    %v2455 = vpack.c.b16 %v1663, %v1655
    %v2456 = vpack.c.b16 %v1664, %v1656
    %v2457 = vpack.c.b16 %v1665, %v1657
    %v2458 = vpack.c.b16 %v1674, %v1666
    %v2459 = vpack.c.b16 %v1675, %v1667
    %v2460 = vpack.c.b16 %v1676, %v1668
    %v2461 = vpack.c.b16 %v1677, %v1669
    %v2462 = vpack.c.b16 %v1678, %v1670
    %v2463 = vpack.c.b16 %v1679, %v1671
    %v2464 = vpack.c.b16 %v1680, %v1672
    %v2465 = vpack.c.b16 %v1681, %v1673
    %v2466 = vpack.c.b16 %v1690, %v1682
    %v2467 = vpack.c.b16 %v1691, %v1683
    %v2468 = vpack.c.b16 %v1692, %v1684
    %v2469 = vpack.c.b16 %v1693, %v1685
    %v2470 = vpack.c.b16 %v1694, %v1686
    %v2471 = vpack.c.b16 %v1695, %v1687
    %v2472 = vpack.c.b16 %v1696, %v1688
    %v2473 = vpack.c.b16 %v1697, %v1689
    %v2474 = vpack.c.b16 %v1706, %v1698
    %v2475 = vpack.c.b16 %v1707, %v1699
    %v2476 = vpack.c.b16 %v1708, %v1700
    %v2477 = vpack.c.b16 %v1709, %v1701
    %v2478 = vpack.c.b16 %v1710, %v1702
    %v2479 = vpack.c.b16 %v1711, %v1703
    %v2480 = vpack.c.b16 %v1712, %v1704
    %v2481 = vpack.c.b16 %v1713, %v1705
    %v2482 = vpack.c.b16 %v1722, %v1714
    %v2483 = vpack.c.b16 %v1723, %v1715
    %v2484 = vpack.c.b16 %v1724, %v1716
    %v2485 = vpack.c.b16 %v1725, %v1717
    %v2486 = vpack.c.b16 %v1726, %v1718
    %v2487 = vpack.c.b16 %v1727, %v1719
    %v2488 = vpack.c.b16 %v1728, %v1720
    %v2489 = vpack.c.b16 %v1729, %v1721
    %v2490 = vpack.c.b16 %v1738, %v1730
    %v2491 = vpack.c.b16 %v1739, %v1731
    %v2492 = vpack.c.b16 %v1740, %v1732
    %v2493 = vpack.c.b16 %v1741, %v1733
    %v2494 = vpack.c.b16 %v1742, %v1734
    %v2495 = vpack.c.b16 %v1743, %v1735
    %v2496 = vpack.c.b16 %v1744, %v1736
    %v2497 = vpack.c.b16 %v1745, %v1737
    %v2498 = vpack.c.b16 %v1754, %v1746
    %v2499 = vpack.c.b16 %v1755, %v1747
    %v2500 = vpack.c.b16 %v1756, %v1748
    %v2501 = vpack.c.b16 %v1757, %v1749
    %v2502 = vpack.c.b16 %v1758, %v1750
    %v2503 = vpack.c.b16 %v1759, %v1751
    %v2504 = vpack.c.b16 %v1760, %v1752
    %v2505 = vpack.c.b16 %v1761, %v1753
    %v2506 = vpack.c.b16 %v1770, %v1762
    %v2507 = vpack.c.b16 %v1771, %v1763
    %v2508 = vpack.c.b16 %v1772, %v1764
    %v2509 = vpack.c.b16 %v1773, %v1765
    %v2510 = vpack.c.b16 %v1774, %v1766
    %v2511 = vpack.c.b16 %v1775, %v1767
    %v2512 = vpack.c.b16 %v1776, %v1768
    %v2513 = vpack.c.b16 %v1777, %v1769
    %v2514 = vpack.c.b16 %v1786, %v1778
    %v2515 = vpack.c.b16 %v1787, %v1779
    %v2516 = vpack.c.b16 %v1788, %v1780
    %v2517 = vpack.c.b16 %v1789, %v1781
    %v2518 = vpack.c.b16 %v1790, %v1782
    %v2519 = vpack.c.b16 %v1791, %v1783
    %v2520 = vpack.c.b16 %v1792, %v1784
    %v2521 = vpack.c.b16 %v1793, %v1785
    %v2522 = vpack.c.b16 %v1802, %v1794
    %v2523 = vpack.c.b16 %v1803, %v1795
    %v2524 = vpack.c.b16 %v1804, %v1796
    %v2525 = vpack.c.b16 %v1805, %v1797
    %v2526 = vpack.c.b16 %v1806, %v1798
    %v2527 = vpack.c.b16 %v1807, %v1799
    %v2528 = vpack.c.b16 %v1808, %v1800
    %v2529 = vpack.c.b16 %v1809, %v1801
    %v2530 = vpack.c.b16 %v1818, %v1810
    %v2531 = vpack.c.b16 %v1819, %v1811
    %v2532 = vpack.c.b16 %v1820, %v1812
    %v2533 = vpack.c.b16 %v1821, %v1813
    %v2534 = vpack.c.b16 %v1822, %v1814
    %v2535 = vpack.c.b16 %v1823, %v1815
    %v2536 = vpack.c.b16 %v1824, %v1816
    %v2537 = vpack.c.b16 %v1825, %v1817
    %v2538 = vpack.c.b16 %v1834, %v1826
    %v2539 = vpack.c.b16 %v1835, %v1827
    %v2540 = vpack.c.b16 %v1836, %v1828
    %v2541 = vpack.c.b16 %v1837, %v1829
    %v2542 = vpack.c.b16 %v1838, %v1830
    %v2543 = vpack.c.b16 %v1839, %v1831
    %v2544 = vpack.c.b16 %v1840, %v1832
    %v2545 = vpack.c.b16 %v1841, %v1833
    %v2546 = vpack.c.b16 %v1850, %v1842
    %v2547 = vpack.c.b16 %v1851, %v1843
    %v2548 = vpack.c.b16 %v1852, %v1844
    %v2549 = vpack.c.b16 %v1853, %v1845
    %v2550 = vpack.c.b16 %v1854, %v1846
    %v2551 = vpack.c.b16 %v1855, %v1847
    %v2552 = vpack.c.b16 %v1856, %v1848
    %v2553 = vpack.c.b16 %v1857, %v1849
    %v2554 = vpack.c.b16 %v1866, %v1858
    %v2555 = vpack.c.b16 %v1867, %v1859
    %v2556 = vpack.c.b16 %v1868, %v1860
    %v2557 = vpack.c.b16 %v1869, %v1861
    %v2558 = vpack.c.b16 %v1870, %v1862
    %v2559 = vpack.c.b16 %v1871, %v1863
    %v2560 = vpack.c.b16 %v1872, %v1864
    %v2561 = vpack.c.b16 %v1873, %v1865
    %v2562 = vpack.c.b16 %v1882, %v1874
    %v2563 = vpack.c.b16 %v1883, %v1875
    %v2564 = vpack.c.b16 %v1884, %v1876
    %v2565 = vpack.c.b16 %v1885, %v1877
    %v2566 = vpack.c.b16 %v1886, %v1878
    %v2567 = vpack.c.b16 %v1887, %v1879
    %v2568 = vpack.c.b16 %v1888, %v1880
    %v2569 = vpack.c.b16 %v1889, %v1881
    %v2570 = vpack.c.b16 %v1898, %v1890
    %v2571 = vpack.c.b16 %v1899, %v1891
    %v2572 = vpack.c.b16 %v1900, %v1892
    %v2573 = vpack.c.b16 %v1901, %v1893
    %v2574 = vpack.c.b16 %v1902, %v1894
    %v2575 = vpack.c.b16 %v1903, %v1895
    %v2576 = vpack.c.b16 %v1904, %v1896
    %v2577 = vpack.c.b16 %v1905, %v1897
    %v2578 = vpack.c.b16 %v1914, %v1906
    %v2579 = vpack.c.b16 %v1915, %v1907
    %v2580 = vpack.c.b16 %v1916, %v1908
    %v2581 = vpack.c.b16 %v1917, %v1909
    %v2582 = vpack.c.b16 %v1918, %v1910
    %v2583 = vpack.c.b16 %v1919, %v1911
    %v2584 = vpack.c.b16 %v1920, %v1912
    %v2585 = vpack.c.b16 %v1921, %v1913
    %v2586 = vpack.c.b16 %v1930, %v1922
    %v2587 = vpack.c.b16 %v1931, %v1923
    %v2588 = vpack.c.b16 %v1932, %v1924
    %v2589 = vpack.c.b16 %v1933, %v1925
    %v2590 = vpack.c.b16 %v1934, %v1926
    %v2591 = vpack.c.b16 %v1935, %v1927
    %v2592 = vpack.c.b16 %v1936, %v1928
    %v2593 = vpack.c.b16 %v1937, %v1929
    %v2594 = vpack.c.b16 %v1946, %v1938
    %v2595 = vpack.c.b16 %v1947, %v1939
    %v2596 = vpack.c.b16 %v1948, %v1940
    %v2597 = vpack.c.b16 %v1949, %v1941
    %v2598 = vpack.c.b16 %v1950, %v1942
    %v2599 = vpack.c.b16 %v1951, %v1943
    %v2600 = vpack.c.b16 %v1952, %v1944
    %v2601 = vpack.c.b16 %v1953, %v1945
    %v2602 = vpack.c.b16 %v1962, %v1954
    %v2603 = vpack.c.b16 %v1963, %v1955
    %v2604 = vpack.c.b16 %v1964, %v1956
    %v2605 = vpack.c.b16 %v1965, %v1957
    %v2606 = vpack.c.b16 %v1966, %v1958
    %v2607 = vpack.c.b16 %v1967, %v1959
    %v2608 = vpack.c.b16 %v1968, %v1960
    %v2609 = vpack.c.b16 %v1969, %v1961
    %v2610 = vpack.c.b16 %v1978, %v1970
    %v2611 = vpack.c.b16 %v1979, %v1971
    %v2612 = vpack.c.b16 %v1980, %v1972
    %v2613 = vpack.c.b16 %v1981, %v1973
    %v2614 = vpack.c.b16 %v1982, %v1974
    %v2615 = vpack.c.b16 %v1983, %v1975
    %v2616 = vpack.c.b16 %v1984, %v1976
    %v2617 = vpack.c.b16 %v1985, %v1977
    %v2618 = vpack.c.b16 %v1994, %v1986
    %v2619 = vpack.c.b16 %v1995, %v1987
    %v2620 = vpack.c.b16 %v1996, %v1988
    %v2621 = vpack.c.b16 %v1997, %v1989
    %v2622 = vpack.c.b16 %v1998, %v1990
    %v2623 = vpack.c.b16 %v1999, %v1991
    %v2624 = vpack.c.b16 %v2000, %v1992
    %v2625 = vpack.c.b16 %v2001, %v1993
    %v2626 = vpack.c.b16 %v2010, %v2002
    %v2627 = vpack.c.b16 %v2011, %v2003
    %v2628 = vpack.c.b16 %v2012, %v2004
    %v2629 = vpack.c.b16 %v2013, %v2005
    %v2630 = vpack.c.b16 %v2014, %v2006
    %v2631 = vpack.c.b16 %v2015, %v2007
    %v2632 = vpack.c.b16 %v2016, %v2008
    %v2633 = vpack.c.b16 %v2017, %v2009
    %v2634 = vpack.c.b16 %v2026, %v2018
    %v2635 = vpack.c.b16 %v2027, %v2019
    %v2636 = vpack.c.b16 %v2028, %v2020
    %v2637 = vpack.c.b16 %v2029, %v2021
    %v2638 = vpack.c.b16 %v2030, %v2022
    %v2639 = vpack.c.b16 %v2031, %v2023
    %v2640 = vpack.c.b16 %v2032, %v2024
    %v2641 = vpack.c.b16 %v2033, %v2025
    %v2642 = vpack.c.b16 %v2042, %v2034
    %v2643 = vpack.c.b16 %v2043, %v2035
    %v2644 = vpack.c.b16 %v2044, %v2036
    %v2645 = vpack.c.b16 %v2045, %v2037
    %v2646 = vpack.c.b16 %v2046, %v2038
    %v2647 = vpack.c.b16 %v2047, %v2039
    %v2648 = vpack.c.b16 %v2048, %v2040
    %v2649 = vpack.c.b16 %v2049, %v2041
    %v2650 = vpack.c.b16 %v2058, %v2050
    %v2651 = vpack.c.b16 %v2059, %v2051
    %v2652 = vpack.c.b16 %v2060, %v2052
    %v2653 = vpack.c.b16 %v2061, %v2053
    %v2654 = vpack.c.b16 %v2062, %v2054
    %v2655 = vpack.c.b16 %v2063, %v2055
    %v2656 = vpack.c.b16 %v2064, %v2056
    %v2657 = vpack.c.b16 %v2065, %v2057
    %v2658 = vpack.c.b16 %v2074, %v2066
    %v2659 = vpack.c.b16 %v2075, %v2067
    %v2660 = vpack.c.b16 %v2076, %v2068
    %v2661 = vpack.c.b16 %v2077, %v2069
    %v2662 = vpack.c.b16 %v2078, %v2070
    %v2663 = vpack.c.b16 %v2079, %v2071
    %v2664 = vpack.c.b16 %v2080, %v2072
    %v2665 = vpack.c.b16 %v2081, %v2073
    %v2666 = vpack.c.b16 %v2090, %v2082
    %v2667 = vpack.c.b16 %v2091, %v2083
    %v2668 = vpack.c.b16 %v2092, %v2084
    %v2669 = vpack.c.b16 %v2093, %v2085
    %v2670 = vpack.c.b16 %v2094, %v2086
    %v2671 = vpack.c.b16 %v2095, %v2087
    %v2672 = vpack.c.b16 %v2096, %v2088
    %v2673 = vpack.c.b16 %v2097, %v2089
    %v2674 = vpack.c.b16 %v2106, %v2098
    %v2675 = vpack.c.b16 %v2107, %v2099
    %v2676 = vpack.c.b16 %v2108, %v2100
    %v2677 = vpack.c.b16 %v2109, %v2101
    %v2678 = vpack.c.b16 %v2110, %v2102
    %v2679 = vpack.c.b16 %v2111, %v2103
    %v2680 = vpack.c.b16 %v2112, %v2104
    %v2681 = vpack.c.b16 %v2113, %v2105
    %v2682 = vpack.c.b16 %v2122, %v2114
    %v2683 = vpack.c.b16 %v2123, %v2115
    %v2684 = vpack.c.b16 %v2124, %v2116
    %v2685 = vpack.c.b16 %v2125, %v2117
    %v2686 = vpack.c.b16 %v2126, %v2118
    %v2687 = vpack.c.b16 %v2127, %v2119
    %v2688 = vpack.c.b16 %v2128, %v2120
    %v2689 = vpack.c.b16 %v2129, %v2121
    %v2690 = vpack.c.b16 %v2138, %v2130
    %v2691 = vpack.c.b16 %v2139, %v2131
    %v2692 = vpack.c.b16 %v2140, %v2132
    %v2693 = vpack.c.b16 %v2141, %v2133
    %v2694 = vpack.c.b16 %v2142, %v2134
    %v2695 = vpack.c.b16 %v2143, %v2135
    %v2696 = vpack.c.b16 %v2144, %v2136
    %v2697 = vpack.c.b16 %v2145, %v2137
    %v2698 = vpack.c.b16 %v2154, %v2146
    %v2699 = vpack.c.b16 %v2155, %v2147
    %v2700 = vpack.c.b16 %v2156, %v2148
    %v2701 = vpack.c.b16 %v2157, %v2149
    %v2702 = vpack.c.b16 %v2158, %v2150
    %v2703 = vpack.c.b16 %v2159, %v2151
    %v2704 = vpack.c.b16 %v2160, %v2152
    %v2705 = vpack.c.b16 %v2161, %v2153
    %v2706 = vpack.c.b16 %v2170, %v2162
    %v2707 = vpack.c.b16 %v2171, %v2163
    %v2708 = vpack.c.b16 %v2172, %v2164
    %v2709 = vpack.c.b16 %v2173, %v2165
    %v2710 = vpack.c.b16 %v2174, %v2166
    %v2711 = vpack.c.b16 %v2175, %v2167
    %v2712 = vpack.c.b16 %v2176, %v2168
    %v2713 = vpack.c.b16 %v2177, %v2169
    %v2714 = vpack.c.b16 %v2186, %v2178
    %v2715 = vpack.c.b16 %v2187, %v2179
    %v2716 = vpack.c.b16 %v2188, %v2180
    %v2717 = vpack.c.b16 %v2189, %v2181
    %v2718 = vpack.c.b16 %v2190, %v2182
    %v2719 = vpack.c.b16 %v2191, %v2183
    %v2720 = vpack.c.b16 %v2192, %v2184
    %v2721 = vpack.c.b16 %v2193, %v2185
    %v2722 = vpack.c.b16 %v2202, %v2194
    %v2723 = vpack.c.b16 %v2203, %v2195
    %v2724 = vpack.c.b16 %v2204, %v2196
    %v2725 = vpack.c.b16 %v2205, %v2197
    %v2726 = vpack.c.b16 %v2206, %v2198
    %v2727 = vpack.c.b16 %v2207, %v2199
    %v2728 = vpack.c.b16 %v2208, %v2200
    %v2729 = vpack.c.b16 %v2209, %v2201
    %v2730 = vpack.c.b16 %v2218, %v2210
    %v2731 = vpack.c.b16 %v2219, %v2211
    %v2732 = vpack.c.b16 %v2220, %v2212
    %v2733 = vpack.c.b16 %v2221, %v2213
    %v2734 = vpack.c.b16 %v2222, %v2214
    %v2735 = vpack.c.b16 %v2223, %v2215
    %v2736 = vpack.c.b16 %v2224, %v2216
    %v2737 = vpack.c.b16 %v2225, %v2217
    %3250 = vmatpush.bf16.msra.mxu0 %v2282
    %3251 = vmatpush.bf16.msra.mxu0 %v2274
    %3252 = vmatpush.bf16.msra.mxu0 %v2266
    %3253 = vmatpush.bf16.msra.mxu0 %v2258
    %3254 = vmatpush.bf16.msra.mxu0 %v2250
    %3255 = vmatpush.bf16.msra.mxu0 %v2242
    %3256 = vmatpush.bf16.msra.mxu0 %v2234
    %3257 = vmatpush.bf16.msra.mxu0 %v2226
    %3258 = vmatmul.bf16.gmra.mxu0 %v674
    %v3259 = vpop.f32.mrf.mxu0
    %v3260 = vadd.f32 %v646, %v3259
    %v3261 = vpop.f32.mrf.mxu0
    %3262 = vdwg.mxu0
    %3263 = vmatpush.bf16.msra.mxu0 %v2346
    %3264 = vmatpush.bf16.msra.mxu0 %v2338
    %3265 = vmatpush.bf16.msra.mxu0 %v2330
    %3266 = vmatpush.bf16.msra.mxu0 %v2322
    %3267 = vmatpush.bf16.msra.mxu0 %v2314
    %3268 = vmatpush.bf16.msra.mxu0 %v2306
    %3269 = vmatpush.bf16.msra.mxu0 %v2298
    %3270 = vmatpush.bf16.msra.mxu0 %v2290
    %3271 = vmatmul.bf16.gmra.mxu0 %v675
    %v3272 = vpop.f32.mrf.mxu0
    %v3273 = vadd.f32 %v3260, %v3272
    %v3274 = vpop.f32.mrf.mxu0
    %3275 = vdwg.mxu0
    %3276 = vmatpush.bf16.msra.mxu0 %v2410
    %3277 = vmatpush.bf16.msra.mxu0 %v2402
    %3278 = vmatpush.bf16.msra.mxu0 %v2394
    %3279 = vmatpush.bf16.msra.mxu0 %v2386
    %3280 = vmatpush.bf16.msra.mxu0 %v2378
    %3281 = vmatpush.bf16.msra.mxu0 %v2370
    %3282 = vmatpush.bf16.msra.mxu0 %v2362
    %3283 = vmatpush.bf16.msra.mxu0 %v2354
    %3284 = vmatmul.bf16.gmra.mxu0 %v676
    %v3285 = vpop.f32.mrf.mxu0
    %v3286 = vadd.f32 %v3273, %v3285
    %v3287 = vpop.f32.mrf.mxu0
    %3288 = vdwg.mxu0
    %3289 = vmatpush.bf16.msra.mxu0 %v2474
    %3290 = vmatpush.bf16.msra.mxu0 %v2466
    %3291 = vmatpush.bf16.msra.mxu0 %v2458
    %3292 = vmatpush.bf16.msra.mxu0 %v2450
    %3293 = vmatpush.bf16.msra.mxu0 %v2442
    %3294 = vmatpush.bf16.msra.mxu0 %v2434
    %3295 = vmatpush.bf16.msra.mxu0 %v2426
    %3296 = vmatpush.bf16.msra.mxu0 %v2418
    %3297 = vmatmul.bf16.gmra.mxu0 %v677
    %v3298 = vpop.f32.mrf.mxu0
    %v3299 = vadd.f32 %v3286, %v3298
    %v3300 = vpop.f32.mrf.mxu0
    %3301 = vdwg.mxu0
    %3302 = vmatpush.bf16.msra.mxu0 %v2538
    %3303 = vmatpush.bf16.msra.mxu0 %v2530
    %3304 = vmatpush.bf16.msra.mxu0 %v2522
    %3305 = vmatpush.bf16.msra.mxu0 %v2514
    %3306 = vmatpush.bf16.msra.mxu0 %v2506
    %3307 = vmatpush.bf16.msra.mxu0 %v2498
    %3308 = vmatpush.bf16.msra.mxu0 %v2490
    %3309 = vmatpush.bf16.msra.mxu0 %v2482
    %3310 = vmatmul.bf16.gmra.mxu0 %v678
    %v3311 = vpop.f32.mrf.mxu0
    %v3312 = vadd.f32 %v3299, %v3311
    %v3313 = vpop.f32.mrf.mxu0
    %3314 = vdwg.mxu0
    %3315 = vmatpush.bf16.msra.mxu0 %v2602
    %3316 = vmatpush.bf16.msra.mxu0 %v2594
    %3317 = vmatpush.bf16.msra.mxu0 %v2586
    %3318 = vmatpush.bf16.msra.mxu0 %v2578
    %3319 = vmatpush.bf16.msra.mxu0 %v2570
    %3320 = vmatpush.bf16.msra.mxu0 %v2562
    %3321 = vmatpush.bf16.msra.mxu0 %v2554
    %3322 = vmatpush.bf16.msra.mxu0 %v2546
    %3323 = vmatmul.bf16.gmra.mxu0 %v679
    %v3324 = vpop.f32.mrf.mxu0
    %v3325 = vadd.f32 %v3312, %v3324
    %v3326 = vpop.f32.mrf.mxu0
    %3327 = vdwg.mxu0
    %3328 = vmatpush.bf16.msra.mxu0 %v2666
    %3329 = vmatpush.bf16.msra.mxu0 %v2658
    %3330 = vmatpush.bf16.msra.mxu0 %v2650
    %3331 = vmatpush.bf16.msra.mxu0 %v2642
    %3332 = vmatpush.bf16.msra.mxu0 %v2634
    %3333 = vmatpush.bf16.msra.mxu0 %v2626
    %3334 = vmatpush.bf16.msra.mxu0 %v2618
    %3335 = vmatpush.bf16.msra.mxu0 %v2610
    %3336 = vmatmul.bf16.gmra.mxu0 %v680
    %v3337 = vpop.f32.mrf.mxu0
    %v3338 = vadd.f32 %v3325, %v3337
    %v3339 = vpop.f32.mrf.mxu0
    %3340 = vdwg.mxu0
    %3341 = vmatpush.bf16.msra.mxu0 %v2730
    %3342 = vmatpush.bf16.msra.mxu0 %v2722
    %3343 = vmatpush.bf16.msra.mxu0 %v2714
    %3344 = vmatpush.bf16.msra.mxu0 %v2706
    %3345 = vmatpush.bf16.msra.mxu0 %v2698
    %3346 = vmatpush.bf16.msra.mxu0 %v2690
    %3347 = vmatpush.bf16.msra.mxu0 %v2682
    %3348 = vmatpush.bf16.msra.mxu0 %v2674
    %3349 = vmatmul.bf16.gmra.mxu0 %v681
    %v3350 = vpop.f32.mrf.mxu0
    %v3351 = vadd.f32 %v3338, %v3350
    %v3352 = vpop.f32.mrf.mxu0
    %3353 = vdwg.mxu0
    %3354 = vmatpush.bf16.msra.mxu0 %v2283
    %3355 = vmatpush.bf16.msra.mxu0 %v2275
    %3356 = vmatpush.bf16.msra.mxu0 %v2267
    %3357 = vmatpush.bf16.msra.mxu0 %v2259
    %3358 = vmatpush.bf16.msra.mxu0 %v2251
    %3359 = vmatpush.bf16.msra.mxu0 %v2243
    %3360 = vmatpush.bf16.msra.mxu0 %v2235
    %3361 = vmatpush.bf16.msra.mxu0 %v2227
    %3362 = vmatmul.bf16.gmra.mxu0 %v674
    %v3363 = vpop.f32.mrf.mxu0
    %v3364 = vadd.f32 %v647, %v3363
    %v3365 = vpop.f32.mrf.mxu0
    %3366 = vdwg.mxu0
    %3367 = vmatpush.bf16.msra.mxu0 %v2347
    %3368 = vmatpush.bf16.msra.mxu0 %v2339
    %3369 = vmatpush.bf16.msra.mxu0 %v2331
    %3370 = vmatpush.bf16.msra.mxu0 %v2323
    %3371 = vmatpush.bf16.msra.mxu0 %v2315
    %3372 = vmatpush.bf16.msra.mxu0 %v2307
    %3373 = vmatpush.bf16.msra.mxu0 %v2299
    %3374 = vmatpush.bf16.msra.mxu0 %v2291
    %3375 = vmatmul.bf16.gmra.mxu0 %v675
    %v3376 = vpop.f32.mrf.mxu0
    %v3377 = vadd.f32 %v3364, %v3376
    %v3378 = vpop.f32.mrf.mxu0
    %3379 = vdwg.mxu0
    %3380 = vmatpush.bf16.msra.mxu0 %v2411
    %3381 = vmatpush.bf16.msra.mxu0 %v2403
    %3382 = vmatpush.bf16.msra.mxu0 %v2395
    %3383 = vmatpush.bf16.msra.mxu0 %v2387
    %3384 = vmatpush.bf16.msra.mxu0 %v2379
    %3385 = vmatpush.bf16.msra.mxu0 %v2371
    %3386 = vmatpush.bf16.msra.mxu0 %v2363
    %3387 = vmatpush.bf16.msra.mxu0 %v2355
    %3388 = vmatmul.bf16.gmra.mxu0 %v676
    %v3389 = vpop.f32.mrf.mxu0
    %v3390 = vadd.f32 %v3377, %v3389
    %v3391 = vpop.f32.mrf.mxu0
    %3392 = vdwg.mxu0
    %3393 = vmatpush.bf16.msra.mxu0 %v2475
    %3394 = vmatpush.bf16.msra.mxu0 %v2467
    %3395 = vmatpush.bf16.msra.mxu0 %v2459
    %3396 = vmatpush.bf16.msra.mxu0 %v2451
    %3397 = vmatpush.bf16.msra.mxu0 %v2443
    %3398 = vmatpush.bf16.msra.mxu0 %v2435
    %3399 = vmatpush.bf16.msra.mxu0 %v2427
    %3400 = vmatpush.bf16.msra.mxu0 %v2419
    %3401 = vmatmul.bf16.gmra.mxu0 %v677
    %v3402 = vpop.f32.mrf.mxu0
    %v3403 = vadd.f32 %v3390, %v3402
    %v3404 = vpop.f32.mrf.mxu0
    %3405 = vdwg.mxu0
    %3406 = vmatpush.bf16.msra.mxu0 %v2539
    %3407 = vmatpush.bf16.msra.mxu0 %v2531
    %3408 = vmatpush.bf16.msra.mxu0 %v2523
    %3409 = vmatpush.bf16.msra.mxu0 %v2515
    %3410 = vmatpush.bf16.msra.mxu0 %v2507
    %3411 = vmatpush.bf16.msra.mxu0 %v2499
    %3412 = vmatpush.bf16.msra.mxu0 %v2491
    %3413 = vmatpush.bf16.msra.mxu0 %v2483
    %3414 = vmatmul.bf16.gmra.mxu0 %v678
    %v3415 = vpop.f32.mrf.mxu0
    %v3416 = vadd.f32 %v3403, %v3415
    %v3417 = vpop.f32.mrf.mxu0
    %3418 = vdwg.mxu0
    %3419 = vmatpush.bf16.msra.mxu0 %v2603
    %3420 = vmatpush.bf16.msra.mxu0 %v2595
    %3421 = vmatpush.bf16.msra.mxu0 %v2587
    %3422 = vmatpush.bf16.msra.mxu0 %v2579
    %3423 = vmatpush.bf16.msra.mxu0 %v2571
    %3424 = vmatpush.bf16.msra.mxu0 %v2563
    %3425 = vmatpush.bf16.msra.mxu0 %v2555
    %3426 = vmatpush.bf16.msra.mxu0 %v2547
    %3427 = vmatmul.bf16.gmra.mxu0 %v679
    %v3428 = vpop.f32.mrf.mxu0
    %v3429 = vadd.f32 %v3416, %v3428
    %v3430 = vpop.f32.mrf.mxu0
    %3431 = vdwg.mxu0
    %3432 = vmatpush.bf16.msra.mxu0 %v2667
    %3433 = vmatpush.bf16.msra.mxu0 %v2659
    %3434 = vmatpush.bf16.msra.mxu0 %v2651
    %3435 = vmatpush.bf16.msra.mxu0 %v2643
    %3436 = vmatpush.bf16.msra.mxu0 %v2635
    %3437 = vmatpush.bf16.msra.mxu0 %v2627
    %3438 = vmatpush.bf16.msra.mxu0 %v2619
    %3439 = vmatpush.bf16.msra.mxu0 %v2611
    %3440 = vmatmul.bf16.gmra.mxu0 %v680
    %v3441 = vpop.f32.mrf.mxu0
    %v3442 = vadd.f32 %v3429, %v3441
    %v3443 = vpop.f32.mrf.mxu0
    %3444 = vdwg.mxu0
    %3445 = vmatpush.bf16.msra.mxu0 %v2731
    %3446 = vmatpush.bf16.msra.mxu0 %v2723
    %3447 = vmatpush.bf16.msra.mxu0 %v2715
    %3448 = vmatpush.bf16.msra.mxu0 %v2707
    %3449 = vmatpush.bf16.msra.mxu0 %v2699
    %3450 = vmatpush.bf16.msra.mxu0 %v2691
    %3451 = vmatpush.bf16.msra.mxu0 %v2683
    %3452 = vmatpush.bf16.msra.mxu0 %v2675
    %3453 = vmatmul.bf16.gmra.mxu0 %v681
    %v3454 = vpop.f32.mrf.mxu0
    %v3455 = vadd.f32 %v3442, %v3454
    %v3456 = vpop.f32.mrf.mxu0
    %3457 = vdwg.mxu0
    %3458 = vmatpush.bf16.msra.mxu0 %v2284
    %3459 = vmatpush.bf16.msra.mxu0 %v2276
    %3460 = vmatpush.bf16.msra.mxu0 %v2268
    %3461 = vmatpush.bf16.msra.mxu0 %v2260
    %3462 = vmatpush.bf16.msra.mxu0 %v2252
    %3463 = vmatpush.bf16.msra.mxu0 %v2244
    %3464 = vmatpush.bf16.msra.mxu0 %v2236
    %3465 = vmatpush.bf16.msra.mxu0 %v2228
    %3466 = vmatmul.bf16.gmra.mxu0 %v674
    %v3467 = vpop.f32.mrf.mxu0
    %v3468 = vadd.f32 %v648, %v3467
    %v3469 = vpop.f32.mrf.mxu0
    %3470 = vdwg.mxu0
    %3471 = vmatpush.bf16.msra.mxu0 %v2348
    %3472 = vmatpush.bf16.msra.mxu0 %v2340
    %3473 = vmatpush.bf16.msra.mxu0 %v2332
    %3474 = vmatpush.bf16.msra.mxu0 %v2324
    %3475 = vmatpush.bf16.msra.mxu0 %v2316
    %3476 = vmatpush.bf16.msra.mxu0 %v2308
    %3477 = vmatpush.bf16.msra.mxu0 %v2300
    %3478 = vmatpush.bf16.msra.mxu0 %v2292
    %3479 = vmatmul.bf16.gmra.mxu0 %v675
    %v3480 = vpop.f32.mrf.mxu0
    %v3481 = vadd.f32 %v3468, %v3480
    %v3482 = vpop.f32.mrf.mxu0
    %3483 = vdwg.mxu0
    %3484 = vmatpush.bf16.msra.mxu0 %v2412
    %3485 = vmatpush.bf16.msra.mxu0 %v2404
    %3486 = vmatpush.bf16.msra.mxu0 %v2396
    %3487 = vmatpush.bf16.msra.mxu0 %v2388
    %3488 = vmatpush.bf16.msra.mxu0 %v2380
    %3489 = vmatpush.bf16.msra.mxu0 %v2372
    %3490 = vmatpush.bf16.msra.mxu0 %v2364
    %3491 = vmatpush.bf16.msra.mxu0 %v2356
    %3492 = vmatmul.bf16.gmra.mxu0 %v676
    %v3493 = vpop.f32.mrf.mxu0
    %v3494 = vadd.f32 %v3481, %v3493
    %v3495 = vpop.f32.mrf.mxu0
    %3496 = vdwg.mxu0
    %3497 = vmatpush.bf16.msra.mxu0 %v2476
    %3498 = vmatpush.bf16.msra.mxu0 %v2468
    %3499 = vmatpush.bf16.msra.mxu0 %v2460
    %3500 = vmatpush.bf16.msra.mxu0 %v2452
    %3501 = vmatpush.bf16.msra.mxu0 %v2444
    %3502 = vmatpush.bf16.msra.mxu0 %v2436
    %3503 = vmatpush.bf16.msra.mxu0 %v2428
    %3504 = vmatpush.bf16.msra.mxu0 %v2420
    %3505 = vmatmul.bf16.gmra.mxu0 %v677
    %v3506 = vpop.f32.mrf.mxu0
    %v3507 = vadd.f32 %v3494, %v3506
    %v3508 = vpop.f32.mrf.mxu0
    %3509 = vdwg.mxu0
    %3510 = vmatpush.bf16.msra.mxu0 %v2540
    %3511 = vmatpush.bf16.msra.mxu0 %v2532
    %3512 = vmatpush.bf16.msra.mxu0 %v2524
    %3513 = vmatpush.bf16.msra.mxu0 %v2516
    %3514 = vmatpush.bf16.msra.mxu0 %v2508
    %3515 = vmatpush.bf16.msra.mxu0 %v2500
    %3516 = vmatpush.bf16.msra.mxu0 %v2492
    %3517 = vmatpush.bf16.msra.mxu0 %v2484
    %3518 = vmatmul.bf16.gmra.mxu0 %v678
    %v3519 = vpop.f32.mrf.mxu0
    %v3520 = vadd.f32 %v3507, %v3519
    %v3521 = vpop.f32.mrf.mxu0
    %3522 = vdwg.mxu0
    %3523 = vmatpush.bf16.msra.mxu0 %v2604
    %3524 = vmatpush.bf16.msra.mxu0 %v2596
    %3525 = vmatpush.bf16.msra.mxu0 %v2588
    %3526 = vmatpush.bf16.msra.mxu0 %v2580
    %3527 = vmatpush.bf16.msra.mxu0 %v2572
    %3528 = vmatpush.bf16.msra.mxu0 %v2564
    %3529 = vmatpush.bf16.msra.mxu0 %v2556
    %3530 = vmatpush.bf16.msra.mxu0 %v2548
    %3531 = vmatmul.bf16.gmra.mxu0 %v679
    %v3532 = vpop.f32.mrf.mxu0
    %v3533 = vadd.f32 %v3520, %v3532
    %v3534 = vpop.f32.mrf.mxu0
    %3535 = vdwg.mxu0
    %3536 = vmatpush.bf16.msra.mxu0 %v2668
    %3537 = vmatpush.bf16.msra.mxu0 %v2660
    %3538 = vmatpush.bf16.msra.mxu0 %v2652
    %3539 = vmatpush.bf16.msra.mxu0 %v2644
    %3540 = vmatpush.bf16.msra.mxu0 %v2636
    %3541 = vmatpush.bf16.msra.mxu0 %v2628
    %3542 = vmatpush.bf16.msra.mxu0 %v2620
    %3543 = vmatpush.bf16.msra.mxu0 %v2612
    %3544 = vmatmul.bf16.gmra.mxu0 %v680
    %v3545 = vpop.f32.mrf.mxu0
    %v3546 = vadd.f32 %v3533, %v3545
    %v3547 = vpop.f32.mrf.mxu0
    %3548 = vdwg.mxu0
    %3549 = vmatpush.bf16.msra.mxu0 %v2732
    %3550 = vmatpush.bf16.msra.mxu0 %v2724
    %3551 = vmatpush.bf16.msra.mxu0 %v2716
    %3552 = vmatpush.bf16.msra.mxu0 %v2708
    %3553 = vmatpush.bf16.msra.mxu0 %v2700
    %3554 = vmatpush.bf16.msra.mxu0 %v2692
    %3555 = vmatpush.bf16.msra.mxu0 %v2684
    %3556 = vmatpush.bf16.msra.mxu0 %v2676
    %3557 = vmatmul.bf16.gmra.mxu0 %v681
    %v3558 = vpop.f32.mrf.mxu0
    %v3559 = vadd.f32 %v3546, %v3558
    %v3560 = vpop.f32.mrf.mxu0
    %3561 = vdwg.mxu0
    %3562 = vmatpush.bf16.msra.mxu0 %v2285
    %3563 = vmatpush.bf16.msra.mxu0 %v2277
    %3564 = vmatpush.bf16.msra.mxu0 %v2269
    %3565 = vmatpush.bf16.msra.mxu0 %v2261
    %3566 = vmatpush.bf16.msra.mxu0 %v2253
    %3567 = vmatpush.bf16.msra.mxu0 %v2245
    %3568 = vmatpush.bf16.msra.mxu0 %v2237
    %3569 = vmatpush.bf16.msra.mxu0 %v2229
    %3570 = vmatmul.bf16.gmra.mxu0 %v674
    %v3571 = vpop.f32.mrf.mxu0
    %v3572 = vadd.f32 %v649, %v3571
    %v3573 = vpop.f32.mrf.mxu0
    %3574 = vdwg.mxu0
    %3575 = vmatpush.bf16.msra.mxu0 %v2349
    %3576 = vmatpush.bf16.msra.mxu0 %v2341
    %3577 = vmatpush.bf16.msra.mxu0 %v2333
    %3578 = vmatpush.bf16.msra.mxu0 %v2325
    %3579 = vmatpush.bf16.msra.mxu0 %v2317
    %3580 = vmatpush.bf16.msra.mxu0 %v2309
    %3581 = vmatpush.bf16.msra.mxu0 %v2301
    %3582 = vmatpush.bf16.msra.mxu0 %v2293
    %3583 = vmatmul.bf16.gmra.mxu0 %v675
    %v3584 = vpop.f32.mrf.mxu0
    %v3585 = vadd.f32 %v3572, %v3584
    %v3586 = vpop.f32.mrf.mxu0
    %3587 = vdwg.mxu0
    %3588 = vmatpush.bf16.msra.mxu0 %v2413
    %3589 = vmatpush.bf16.msra.mxu0 %v2405
    %3590 = vmatpush.bf16.msra.mxu0 %v2397
    %3591 = vmatpush.bf16.msra.mxu0 %v2389
    %3592 = vmatpush.bf16.msra.mxu0 %v2381
    %3593 = vmatpush.bf16.msra.mxu0 %v2373
    %3594 = vmatpush.bf16.msra.mxu0 %v2365
    %3595 = vmatpush.bf16.msra.mxu0 %v2357
    %3596 = vmatmul.bf16.gmra.mxu0 %v676
    %v3597 = vpop.f32.mrf.mxu0
    %v3598 = vadd.f32 %v3585, %v3597
    %v3599 = vpop.f32.mrf.mxu0
    %3600 = vdwg.mxu0
    %3601 = vmatpush.bf16.msra.mxu0 %v2477
    %3602 = vmatpush.bf16.msra.mxu0 %v2469
    %3603 = vmatpush.bf16.msra.mxu0 %v2461
    %3604 = vmatpush.bf16.msra.mxu0 %v2453
    %3605 = vmatpush.bf16.msra.mxu0 %v2445
    %3606 = vmatpush.bf16.msra.mxu0 %v2437
    %3607 = vmatpush.bf16.msra.mxu0 %v2429
    %3608 = vmatpush.bf16.msra.mxu0 %v2421
    %3609 = vmatmul.bf16.gmra.mxu0 %v677
    %v3610 = vpop.f32.mrf.mxu0
    %v3611 = vadd.f32 %v3598, %v3610
    %v3612 = vpop.f32.mrf.mxu0
    %3613 = vdwg.mxu0
    %3614 = vmatpush.bf16.msra.mxu0 %v2541
    %3615 = vmatpush.bf16.msra.mxu0 %v2533
    %3616 = vmatpush.bf16.msra.mxu0 %v2525
    %3617 = vmatpush.bf16.msra.mxu0 %v2517
    %3618 = vmatpush.bf16.msra.mxu0 %v2509
    %3619 = vmatpush.bf16.msra.mxu0 %v2501
    %3620 = vmatpush.bf16.msra.mxu0 %v2493
    %3621 = vmatpush.bf16.msra.mxu0 %v2485
    %3622 = vmatmul.bf16.gmra.mxu0 %v678
    %v3623 = vpop.f32.mrf.mxu0
    %v3624 = vadd.f32 %v3611, %v3623
    %v3625 = vpop.f32.mrf.mxu0
    %3626 = vdwg.mxu0
    %3627 = vmatpush.bf16.msra.mxu0 %v2605
    %3628 = vmatpush.bf16.msra.mxu0 %v2597
    %3629 = vmatpush.bf16.msra.mxu0 %v2589
    %3630 = vmatpush.bf16.msra.mxu0 %v2581
    %3631 = vmatpush.bf16.msra.mxu0 %v2573
    %3632 = vmatpush.bf16.msra.mxu0 %v2565
    %3633 = vmatpush.bf16.msra.mxu0 %v2557
    %3634 = vmatpush.bf16.msra.mxu0 %v2549
    %3635 = vmatmul.bf16.gmra.mxu0 %v679
    %v3636 = vpop.f32.mrf.mxu0
    %v3637 = vadd.f32 %v3624, %v3636
    %v3638 = vpop.f32.mrf.mxu0
    %3639 = vdwg.mxu0
    %3640 = vmatpush.bf16.msra.mxu0 %v2669
    %3641 = vmatpush.bf16.msra.mxu0 %v2661
    %3642 = vmatpush.bf16.msra.mxu0 %v2653
    %3643 = vmatpush.bf16.msra.mxu0 %v2645
    %3644 = vmatpush.bf16.msra.mxu0 %v2637
    %3645 = vmatpush.bf16.msra.mxu0 %v2629
    %3646 = vmatpush.bf16.msra.mxu0 %v2621
    %3647 = vmatpush.bf16.msra.mxu0 %v2613
    %3648 = vmatmul.bf16.gmra.mxu0 %v680
    %v3649 = vpop.f32.mrf.mxu0
    %v3650 = vadd.f32 %v3637, %v3649
    %v3651 = vpop.f32.mrf.mxu0
    %3652 = vdwg.mxu0
    %3653 = vmatpush.bf16.msra.mxu0 %v2733
    %3654 = vmatpush.bf16.msra.mxu0 %v2725
    %3655 = vmatpush.bf16.msra.mxu0 %v2717
    %3656 = vmatpush.bf16.msra.mxu0 %v2709
    %3657 = vmatpush.bf16.msra.mxu0 %v2701
    %3658 = vmatpush.bf16.msra.mxu0 %v2693
    %3659 = vmatpush.bf16.msra.mxu0 %v2685
    %3660 = vmatpush.bf16.msra.mxu0 %v2677
    %3661 = vmatmul.bf16.gmra.mxu0 %v681
    %v3662 = vpop.f32.mrf.mxu0
    %v3663 = vadd.f32 %v3650, %v3662
    %v3664 = vpop.f32.mrf.mxu0
    %3665 = vdwg.mxu0
    %3666 = vmatpush.bf16.msra.mxu0 %v2286
    %3667 = vmatpush.bf16.msra.mxu0 %v2278
    %3668 = vmatpush.bf16.msra.mxu0 %v2270
    %3669 = vmatpush.bf16.msra.mxu0 %v2262
    %3670 = vmatpush.bf16.msra.mxu0 %v2254
    %3671 = vmatpush.bf16.msra.mxu0 %v2246
    %3672 = vmatpush.bf16.msra.mxu0 %v2238
    %3673 = vmatpush.bf16.msra.mxu0 %v2230
    %3674 = vmatmul.bf16.gmra.mxu0 %v674
    %v3675 = vpop.f32.mrf.mxu0
    %v3676 = vadd.f32 %v650, %v3675
    %v3677 = vpop.f32.mrf.mxu0
    %3678 = vdwg.mxu0
    %3679 = vmatpush.bf16.msra.mxu0 %v2350
    %3680 = vmatpush.bf16.msra.mxu0 %v2342
    %3681 = vmatpush.bf16.msra.mxu0 %v2334
    %3682 = vmatpush.bf16.msra.mxu0 %v2326
    %3683 = vmatpush.bf16.msra.mxu0 %v2318
    %3684 = vmatpush.bf16.msra.mxu0 %v2310
    %3685 = vmatpush.bf16.msra.mxu0 %v2302
    %3686 = vmatpush.bf16.msra.mxu0 %v2294
    %3687 = vmatmul.bf16.gmra.mxu0 %v675
    %v3688 = vpop.f32.mrf.mxu0
    %v3689 = vadd.f32 %v3676, %v3688
    %v3690 = vpop.f32.mrf.mxu0
    %3691 = vdwg.mxu0
    %3692 = vmatpush.bf16.msra.mxu0 %v2414
    %3693 = vmatpush.bf16.msra.mxu0 %v2406
    %3694 = vmatpush.bf16.msra.mxu0 %v2398
    %3695 = vmatpush.bf16.msra.mxu0 %v2390
    %3696 = vmatpush.bf16.msra.mxu0 %v2382
    %3697 = vmatpush.bf16.msra.mxu0 %v2374
    %3698 = vmatpush.bf16.msra.mxu0 %v2366
    %3699 = vmatpush.bf16.msra.mxu0 %v2358
    %3700 = vmatmul.bf16.gmra.mxu0 %v676
    %v3701 = vpop.f32.mrf.mxu0
    %v3702 = vadd.f32 %v3689, %v3701
    %v3703 = vpop.f32.mrf.mxu0
    %3704 = vdwg.mxu0
    %3705 = vmatpush.bf16.msra.mxu0 %v2478
    %3706 = vmatpush.bf16.msra.mxu0 %v2470
    %3707 = vmatpush.bf16.msra.mxu0 %v2462
    %3708 = vmatpush.bf16.msra.mxu0 %v2454
    %3709 = vmatpush.bf16.msra.mxu0 %v2446
    %3710 = vmatpush.bf16.msra.mxu0 %v2438
    %3711 = vmatpush.bf16.msra.mxu0 %v2430
    %3712 = vmatpush.bf16.msra.mxu0 %v2422
    %3713 = vmatmul.bf16.gmra.mxu0 %v677
    %v3714 = vpop.f32.mrf.mxu0
    %v3715 = vadd.f32 %v3702, %v3714
    %v3716 = vpop.f32.mrf.mxu0
    %3717 = vdwg.mxu0
    %3718 = vmatpush.bf16.msra.mxu0 %v2542
    %3719 = vmatpush.bf16.msra.mxu0 %v2534
    %3720 = vmatpush.bf16.msra.mxu0 %v2526
    %3721 = vmatpush.bf16.msra.mxu0 %v2518
    %3722 = vmatpush.bf16.msra.mxu0 %v2510
    %3723 = vmatpush.bf16.msra.mxu0 %v2502
    %3724 = vmatpush.bf16.msra.mxu0 %v2494
    %3725 = vmatpush.bf16.msra.mxu0 %v2486
    %3726 = vmatmul.bf16.gmra.mxu0 %v678
    %v3727 = vpop.f32.mrf.mxu0
    %v3728 = vadd.f32 %v3715, %v3727
    %v3729 = vpop.f32.mrf.mxu0
    %3730 = vdwg.mxu0
    %3731 = vmatpush.bf16.msra.mxu0 %v2606
    %3732 = vmatpush.bf16.msra.mxu0 %v2598
    %3733 = vmatpush.bf16.msra.mxu0 %v2590
    %3734 = vmatpush.bf16.msra.mxu0 %v2582
    %3735 = vmatpush.bf16.msra.mxu0 %v2574
    %3736 = vmatpush.bf16.msra.mxu0 %v2566
    %3737 = vmatpush.bf16.msra.mxu0 %v2558
    %3738 = vmatpush.bf16.msra.mxu0 %v2550
    %3739 = vmatmul.bf16.gmra.mxu0 %v679
    %v3740 = vpop.f32.mrf.mxu0
    %v3741 = vadd.f32 %v3728, %v3740
    %v3742 = vpop.f32.mrf.mxu0
    %3743 = vdwg.mxu0
    %3744 = vmatpush.bf16.msra.mxu0 %v2670
    %3745 = vmatpush.bf16.msra.mxu0 %v2662
    %3746 = vmatpush.bf16.msra.mxu0 %v2654
    %3747 = vmatpush.bf16.msra.mxu0 %v2646
    %3748 = vmatpush.bf16.msra.mxu0 %v2638
    %3749 = vmatpush.bf16.msra.mxu0 %v2630
    %3750 = vmatpush.bf16.msra.mxu0 %v2622
    %3751 = vmatpush.bf16.msra.mxu0 %v2614
    %3752 = vmatmul.bf16.gmra.mxu0 %v680
    %v3753 = vpop.f32.mrf.mxu0
    %v3754 = vadd.f32 %v3741, %v3753
    %v3755 = vpop.f32.mrf.mxu0
    %3756 = vdwg.mxu0
    %3757 = vmatpush.bf16.msra.mxu0 %v2734
    %3758 = vmatpush.bf16.msra.mxu0 %v2726
    %3759 = vmatpush.bf16.msra.mxu0 %v2718
    %3760 = vmatpush.bf16.msra.mxu0 %v2710
    %3761 = vmatpush.bf16.msra.mxu0 %v2702
    %3762 = vmatpush.bf16.msra.mxu0 %v2694
    %3763 = vmatpush.bf16.msra.mxu0 %v2686
    %3764 = vmatpush.bf16.msra.mxu0 %v2678
    %3765 = vmatmul.bf16.gmra.mxu0 %v681
    %v3766 = vpop.f32.mrf.mxu0
    %v3767 = vadd.f32 %v3754, %v3766
    %v3768 = vpop.f32.mrf.mxu0
    %3769 = vdwg.mxu0
    %3770 = vmatpush.bf16.msra.mxu0 %v2287
    %3771 = vmatpush.bf16.msra.mxu0 %v2279
    %3772 = vmatpush.bf16.msra.mxu0 %v2271
    %3773 = vmatpush.bf16.msra.mxu0 %v2263
    %3774 = vmatpush.bf16.msra.mxu0 %v2255
    %3775 = vmatpush.bf16.msra.mxu0 %v2247
    %3776 = vmatpush.bf16.msra.mxu0 %v2239
    %3777 = vmatpush.bf16.msra.mxu0 %v2231
    %3778 = vmatmul.bf16.gmra.mxu0 %v674
    %v3779 = vpop.f32.mrf.mxu0
    %v3780 = vadd.f32 %v651, %v3779
    %v3781 = vpop.f32.mrf.mxu0
    %3782 = vdwg.mxu0
    %3783 = vmatpush.bf16.msra.mxu0 %v2351
    %3784 = vmatpush.bf16.msra.mxu0 %v2343
    %3785 = vmatpush.bf16.msra.mxu0 %v2335
    %3786 = vmatpush.bf16.msra.mxu0 %v2327
    %3787 = vmatpush.bf16.msra.mxu0 %v2319
    %3788 = vmatpush.bf16.msra.mxu0 %v2311
    %3789 = vmatpush.bf16.msra.mxu0 %v2303
    %3790 = vmatpush.bf16.msra.mxu0 %v2295
    %3791 = vmatmul.bf16.gmra.mxu0 %v675
    %v3792 = vpop.f32.mrf.mxu0
    %v3793 = vadd.f32 %v3780, %v3792
    %v3794 = vpop.f32.mrf.mxu0
    %3795 = vdwg.mxu0
    %3796 = vmatpush.bf16.msra.mxu0 %v2415
    %3797 = vmatpush.bf16.msra.mxu0 %v2407
    %3798 = vmatpush.bf16.msra.mxu0 %v2399
    %3799 = vmatpush.bf16.msra.mxu0 %v2391
    %3800 = vmatpush.bf16.msra.mxu0 %v2383
    %3801 = vmatpush.bf16.msra.mxu0 %v2375
    %3802 = vmatpush.bf16.msra.mxu0 %v2367
    %3803 = vmatpush.bf16.msra.mxu0 %v2359
    %3804 = vmatmul.bf16.gmra.mxu0 %v676
    %v3805 = vpop.f32.mrf.mxu0
    %v3806 = vadd.f32 %v3793, %v3805
    %v3807 = vpop.f32.mrf.mxu0
    %3808 = vdwg.mxu0
    %3809 = vmatpush.bf16.msra.mxu0 %v2479
    %3810 = vmatpush.bf16.msra.mxu0 %v2471
    %3811 = vmatpush.bf16.msra.mxu0 %v2463
    %3812 = vmatpush.bf16.msra.mxu0 %v2455
    %3813 = vmatpush.bf16.msra.mxu0 %v2447
    %3814 = vmatpush.bf16.msra.mxu0 %v2439
    %3815 = vmatpush.bf16.msra.mxu0 %v2431
    %3816 = vmatpush.bf16.msra.mxu0 %v2423
    %3817 = vmatmul.bf16.gmra.mxu0 %v677
    %v3818 = vpop.f32.mrf.mxu0
    %v3819 = vadd.f32 %v3806, %v3818
    %v3820 = vpop.f32.mrf.mxu0
    %3821 = vdwg.mxu0
    %3822 = vmatpush.bf16.msra.mxu0 %v2543
    %3823 = vmatpush.bf16.msra.mxu0 %v2535
    %3824 = vmatpush.bf16.msra.mxu0 %v2527
    %3825 = vmatpush.bf16.msra.mxu0 %v2519
    %3826 = vmatpush.bf16.msra.mxu0 %v2511
    %3827 = vmatpush.bf16.msra.mxu0 %v2503
    %3828 = vmatpush.bf16.msra.mxu0 %v2495
    %3829 = vmatpush.bf16.msra.mxu0 %v2487
    %3830 = vmatmul.bf16.gmra.mxu0 %v678
    %v3831 = vpop.f32.mrf.mxu0
    %v3832 = vadd.f32 %v3819, %v3831
    %v3833 = vpop.f32.mrf.mxu0
    %3834 = vdwg.mxu0
    %3835 = vmatpush.bf16.msra.mxu0 %v2607
    %3836 = vmatpush.bf16.msra.mxu0 %v2599
    %3837 = vmatpush.bf16.msra.mxu0 %v2591
    %3838 = vmatpush.bf16.msra.mxu0 %v2583
    %3839 = vmatpush.bf16.msra.mxu0 %v2575
    %3840 = vmatpush.bf16.msra.mxu0 %v2567
    %3841 = vmatpush.bf16.msra.mxu0 %v2559
    %3842 = vmatpush.bf16.msra.mxu0 %v2551
    %3843 = vmatmul.bf16.gmra.mxu0 %v679
    %v3844 = vpop.f32.mrf.mxu0
    %v3845 = vadd.f32 %v3832, %v3844
    %v3846 = vpop.f32.mrf.mxu0
    %3847 = vdwg.mxu0
    %3848 = vmatpush.bf16.msra.mxu0 %v2671
    %3849 = vmatpush.bf16.msra.mxu0 %v2663
    %3850 = vmatpush.bf16.msra.mxu0 %v2655
    %3851 = vmatpush.bf16.msra.mxu0 %v2647
    %3852 = vmatpush.bf16.msra.mxu0 %v2639
    %3853 = vmatpush.bf16.msra.mxu0 %v2631
    %3854 = vmatpush.bf16.msra.mxu0 %v2623
    %3855 = vmatpush.bf16.msra.mxu0 %v2615
    %3856 = vmatmul.bf16.gmra.mxu0 %v680
    %v3857 = vpop.f32.mrf.mxu0
    %v3858 = vadd.f32 %v3845, %v3857
    %v3859 = vpop.f32.mrf.mxu0
    %3860 = vdwg.mxu0
    %3861 = vmatpush.bf16.msra.mxu0 %v2735
    %3862 = vmatpush.bf16.msra.mxu0 %v2727
    %3863 = vmatpush.bf16.msra.mxu0 %v2719
    %3864 = vmatpush.bf16.msra.mxu0 %v2711
    %3865 = vmatpush.bf16.msra.mxu0 %v2703
    %3866 = vmatpush.bf16.msra.mxu0 %v2695
    %3867 = vmatpush.bf16.msra.mxu0 %v2687
    %3868 = vmatpush.bf16.msra.mxu0 %v2679
    %3869 = vmatmul.bf16.gmra.mxu0 %v681
    %v3870 = vpop.f32.mrf.mxu0
    %v3871 = vadd.f32 %v3858, %v3870
    %v3872 = vpop.f32.mrf.mxu0
    %3873 = vdwg.mxu0
    %3874 = vmatpush.bf16.msra.mxu0 %v2288
    %3875 = vmatpush.bf16.msra.mxu0 %v2280
    %3876 = vmatpush.bf16.msra.mxu0 %v2272
    %3877 = vmatpush.bf16.msra.mxu0 %v2264
    %3878 = vmatpush.bf16.msra.mxu0 %v2256
    %3879 = vmatpush.bf16.msra.mxu0 %v2248
    %3880 = vmatpush.bf16.msra.mxu0 %v2240
    %3881 = vmatpush.bf16.msra.mxu0 %v2232
    %3882 = vmatmul.bf16.gmra.mxu0 %v674
    %v3883 = vpop.f32.mrf.mxu0
    %v3884 = vadd.f32 %v652, %v3883
    %v3885 = vpop.f32.mrf.mxu0
    %3886 = vdwg.mxu0
    %3887 = vmatpush.bf16.msra.mxu0 %v2352
    %3888 = vmatpush.bf16.msra.mxu0 %v2344
    %3889 = vmatpush.bf16.msra.mxu0 %v2336
    %3890 = vmatpush.bf16.msra.mxu0 %v2328
    %3891 = vmatpush.bf16.msra.mxu0 %v2320
    %3892 = vmatpush.bf16.msra.mxu0 %v2312
    %3893 = vmatpush.bf16.msra.mxu0 %v2304
    %3894 = vmatpush.bf16.msra.mxu0 %v2296
    %3895 = vmatmul.bf16.gmra.mxu0 %v675
    %v3896 = vpop.f32.mrf.mxu0
    %v3897 = vadd.f32 %v3884, %v3896
    %v3898 = vpop.f32.mrf.mxu0
    %3899 = vdwg.mxu0
    %3900 = vmatpush.bf16.msra.mxu0 %v2416
    %3901 = vmatpush.bf16.msra.mxu0 %v2408
    %3902 = vmatpush.bf16.msra.mxu0 %v2400
    %3903 = vmatpush.bf16.msra.mxu0 %v2392
    %3904 = vmatpush.bf16.msra.mxu0 %v2384
    %3905 = vmatpush.bf16.msra.mxu0 %v2376
    %3906 = vmatpush.bf16.msra.mxu0 %v2368
    %3907 = vmatpush.bf16.msra.mxu0 %v2360
    %3908 = vmatmul.bf16.gmra.mxu0 %v676
    %v3909 = vpop.f32.mrf.mxu0
    %v3910 = vadd.f32 %v3897, %v3909
    %v3911 = vpop.f32.mrf.mxu0
    %3912 = vdwg.mxu0
    %3913 = vmatpush.bf16.msra.mxu0 %v2480
    %3914 = vmatpush.bf16.msra.mxu0 %v2472
    %3915 = vmatpush.bf16.msra.mxu0 %v2464
    %3916 = vmatpush.bf16.msra.mxu0 %v2456
    %3917 = vmatpush.bf16.msra.mxu0 %v2448
    %3918 = vmatpush.bf16.msra.mxu0 %v2440
    %3919 = vmatpush.bf16.msra.mxu0 %v2432
    %3920 = vmatpush.bf16.msra.mxu0 %v2424
    %3921 = vmatmul.bf16.gmra.mxu0 %v677
    %v3922 = vpop.f32.mrf.mxu0
    %v3923 = vadd.f32 %v3910, %v3922
    %v3924 = vpop.f32.mrf.mxu0
    %3925 = vdwg.mxu0
    %3926 = vmatpush.bf16.msra.mxu0 %v2544
    %3927 = vmatpush.bf16.msra.mxu0 %v2536
    %3928 = vmatpush.bf16.msra.mxu0 %v2528
    %3929 = vmatpush.bf16.msra.mxu0 %v2520
    %3930 = vmatpush.bf16.msra.mxu0 %v2512
    %3931 = vmatpush.bf16.msra.mxu0 %v2504
    %3932 = vmatpush.bf16.msra.mxu0 %v2496
    %3933 = vmatpush.bf16.msra.mxu0 %v2488
    %3934 = vmatmul.bf16.gmra.mxu0 %v678
    %v3935 = vpop.f32.mrf.mxu0
    %v3936 = vadd.f32 %v3923, %v3935
    %v3937 = vpop.f32.mrf.mxu0
    %3938 = vdwg.mxu0
    %3939 = vmatpush.bf16.msra.mxu0 %v2608
    %3940 = vmatpush.bf16.msra.mxu0 %v2600
    %3941 = vmatpush.bf16.msra.mxu0 %v2592
    %3942 = vmatpush.bf16.msra.mxu0 %v2584
    %3943 = vmatpush.bf16.msra.mxu0 %v2576
    %3944 = vmatpush.bf16.msra.mxu0 %v2568
    %3945 = vmatpush.bf16.msra.mxu0 %v2560
    %3946 = vmatpush.bf16.msra.mxu0 %v2552
    %3947 = vmatmul.bf16.gmra.mxu0 %v679
    %v3948 = vpop.f32.mrf.mxu0
    %v3949 = vadd.f32 %v3936, %v3948
    %v3950 = vpop.f32.mrf.mxu0
    %3951 = vdwg.mxu0
    %3952 = vmatpush.bf16.msra.mxu0 %v2672
    %3953 = vmatpush.bf16.msra.mxu0 %v2664
    %3954 = vmatpush.bf16.msra.mxu0 %v2656
    %3955 = vmatpush.bf16.msra.mxu0 %v2648
    %3956 = vmatpush.bf16.msra.mxu0 %v2640
    %3957 = vmatpush.bf16.msra.mxu0 %v2632
    %3958 = vmatpush.bf16.msra.mxu0 %v2624
    %3959 = vmatpush.bf16.msra.mxu0 %v2616
    %3960 = vmatmul.bf16.gmra.mxu0 %v680
    %v3961 = vpop.f32.mrf.mxu0
    %v3962 = vadd.f32 %v3949, %v3961
    %v3963 = vpop.f32.mrf.mxu0
    %3964 = vdwg.mxu0
    %3965 = vmatpush.bf16.msra.mxu0 %v2736
    %3966 = vmatpush.bf16.msra.mxu0 %v2728
    %3967 = vmatpush.bf16.msra.mxu0 %v2720
    %3968 = vmatpush.bf16.msra.mxu0 %v2712
    %3969 = vmatpush.bf16.msra.mxu0 %v2704
    %3970 = vmatpush.bf16.msra.mxu0 %v2696
    %3971 = vmatpush.bf16.msra.mxu0 %v2688
    %3972 = vmatpush.bf16.msra.mxu0 %v2680
    %3973 = vmatmul.bf16.gmra.mxu0 %v681
    %v3974 = vpop.f32.mrf.mxu0
    %v3975 = vadd.f32 %v3962, %v3974
    %v3976 = vpop.f32.mrf.mxu0
    %3977 = vdwg.mxu0
    %3978 = vmatpush.bf16.msra.mxu0 %v2289
    %3979 = vmatpush.bf16.msra.mxu0 %v2281
    %3980 = vmatpush.bf16.msra.mxu0 %v2273
    %3981 = vmatpush.bf16.msra.mxu0 %v2265
    %3982 = vmatpush.bf16.msra.mxu0 %v2257
    %3983 = vmatpush.bf16.msra.mxu0 %v2249
    %3984 = vmatpush.bf16.msra.mxu0 %v2241
    %3985 = vmatpush.bf16.msra.mxu0 %v2233
    %3986 = vmatmul.bf16.gmra.mxu0 %v674
    %v3987 = vpop.f32.mrf.mxu0
    %v3988 = vadd.f32 %v653, %v3987
    %v3989 = vpop.f32.mrf.mxu0
    %3990 = vdwg.mxu0
    %3991 = vmatpush.bf16.msra.mxu0 %v2353
    %3992 = vmatpush.bf16.msra.mxu0 %v2345
    %3993 = vmatpush.bf16.msra.mxu0 %v2337
    %3994 = vmatpush.bf16.msra.mxu0 %v2329
    %3995 = vmatpush.bf16.msra.mxu0 %v2321
    %3996 = vmatpush.bf16.msra.mxu0 %v2313
    %3997 = vmatpush.bf16.msra.mxu0 %v2305
    %3998 = vmatpush.bf16.msra.mxu0 %v2297
    %3999 = vmatmul.bf16.gmra.mxu0 %v675
    %v4000 = vpop.f32.mrf.mxu0
    %v4001 = vadd.f32 %v3988, %v4000
    %v4002 = vpop.f32.mrf.mxu0
    %4003 = vdwg.mxu0
    %4004 = vmatpush.bf16.msra.mxu0 %v2417
    %4005 = vmatpush.bf16.msra.mxu0 %v2409
    %4006 = vmatpush.bf16.msra.mxu0 %v2401
    %4007 = vmatpush.bf16.msra.mxu0 %v2393
    %4008 = vmatpush.bf16.msra.mxu0 %v2385
    %4009 = vmatpush.bf16.msra.mxu0 %v2377
    %4010 = vmatpush.bf16.msra.mxu0 %v2369
    %4011 = vmatpush.bf16.msra.mxu0 %v2361
    %4012 = vmatmul.bf16.gmra.mxu0 %v676
    %v4013 = vpop.f32.mrf.mxu0
    %v4014 = vadd.f32 %v4001, %v4013
    %v4015 = vpop.f32.mrf.mxu0
    %4016 = vdwg.mxu0
    %4017 = vmatpush.bf16.msra.mxu0 %v2481
    %4018 = vmatpush.bf16.msra.mxu0 %v2473
    %4019 = vmatpush.bf16.msra.mxu0 %v2465
    %4020 = vmatpush.bf16.msra.mxu0 %v2457
    %4021 = vmatpush.bf16.msra.mxu0 %v2449
    %4022 = vmatpush.bf16.msra.mxu0 %v2441
    %4023 = vmatpush.bf16.msra.mxu0 %v2433
    %4024 = vmatpush.bf16.msra.mxu0 %v2425
    %4025 = vmatmul.bf16.gmra.mxu0 %v677
    %v4026 = vpop.f32.mrf.mxu0
    %v4027 = vadd.f32 %v4014, %v4026
    %v4028 = vpop.f32.mrf.mxu0
    %4029 = vdwg.mxu0
    %4030 = vmatpush.bf16.msra.mxu0 %v2545
    %4031 = vmatpush.bf16.msra.mxu0 %v2537
    %4032 = vmatpush.bf16.msra.mxu0 %v2529
    %4033 = vmatpush.bf16.msra.mxu0 %v2521
    %4034 = vmatpush.bf16.msra.mxu0 %v2513
    %4035 = vmatpush.bf16.msra.mxu0 %v2505
    %4036 = vmatpush.bf16.msra.mxu0 %v2497
    %4037 = vmatpush.bf16.msra.mxu0 %v2489
    %4038 = vmatmul.bf16.gmra.mxu0 %v678
    %v4039 = vpop.f32.mrf.mxu0
    %v4040 = vadd.f32 %v4027, %v4039
    %v4041 = vpop.f32.mrf.mxu0
    %4042 = vdwg.mxu0
    %4043 = vmatpush.bf16.msra.mxu0 %v2609
    %4044 = vmatpush.bf16.msra.mxu0 %v2601
    %4045 = vmatpush.bf16.msra.mxu0 %v2593
    %4046 = vmatpush.bf16.msra.mxu0 %v2585
    %4047 = vmatpush.bf16.msra.mxu0 %v2577
    %4048 = vmatpush.bf16.msra.mxu0 %v2569
    %4049 = vmatpush.bf16.msra.mxu0 %v2561
    %4050 = vmatpush.bf16.msra.mxu0 %v2553
    %4051 = vmatmul.bf16.gmra.mxu0 %v679
    %v4052 = vpop.f32.mrf.mxu0
    %v4053 = vadd.f32 %v4040, %v4052
    %v4054 = vpop.f32.mrf.mxu0
    %4055 = vdwg.mxu0
    %4056 = vmatpush.bf16.msra.mxu0 %v2673
    %4057 = vmatpush.bf16.msra.mxu0 %v2665
    %4058 = vmatpush.bf16.msra.mxu0 %v2657
    %4059 = vmatpush.bf16.msra.mxu0 %v2649
    %4060 = vmatpush.bf16.msra.mxu0 %v2641
    %4061 = vmatpush.bf16.msra.mxu0 %v2633
    %4062 = vmatpush.bf16.msra.mxu0 %v2625
    %4063 = vmatpush.bf16.msra.mxu0 %v2617
    %4064 = vmatmul.bf16.gmra.mxu0 %v680
    %v4065 = vpop.f32.mrf.mxu0
    %v4066 = vadd.f32 %v4053, %v4065
    %v4067 = vpop.f32.mrf.mxu0
    %4068 = vdwg.mxu0
    %4069 = vmatpush.bf16.msra.mxu0 %v2737
    %4070 = vmatpush.bf16.msra.mxu0 %v2729
    %4071 = vmatpush.bf16.msra.mxu0 %v2721
    %4072 = vmatpush.bf16.msra.mxu0 %v2713
    %4073 = vmatpush.bf16.msra.mxu0 %v2705
    %4074 = vmatpush.bf16.msra.mxu0 %v2697
    %4075 = vmatpush.bf16.msra.mxu0 %v2689
    %4076 = vmatpush.bf16.msra.mxu0 %v2681
    %4077 = vmatmul.bf16.gmra.mxu0 %v681
    %v4078 = vpop.f32.mrf.mxu0
    %v4079 = vadd.f32 %v4066, %v4078
    %v4080 = vpop.f32.mrf.mxu0
    %4081 = vdwg.mxu0
    %v4082 = vpack.c.bf16 %v3351, %v3351
    %v4083 = vpack.c.bf16 %v3455, %v3455
    %v4084 = vpack.c.bf16 %v3559, %v3559
    %v4085 = vpack.c.bf16 %v3663, %v3663
    %v4086 = vpack.c.bf16 %v3767, %v3767
    %v4087 = vpack.c.bf16 %v3871, %v3871
    %v4088 = vpack.c.bf16 %v3975, %v3975
    %v4089 = vpack.c.bf16 %v4079, %v4079
    %v4090 = vld [vmem:[#allocation8] sm:$0xff]
    %v4091 = vld [vmem:[#allocation8 + $0x8] sm:$0xff]
    %v4092 = vld [vmem:[#allocation8 + $0x10] sm:$0xff]
    %v4093 = vld [vmem:[#allocation8 + $0x18] sm:$0xff]
    %v4094 = vld [vmem:[#allocation8 + $0x20] sm:$0xff]
    %v4095 = vld [vmem:[#allocation8 + $0x28] sm:$0xff]
    %v4096 = vld [vmem:[#allocation8 + $0x30] sm:$0xff]
    %v4097 = vld [vmem:[#allocation8 + $0x38] sm:$0xff]
    %v4098 = vld [vmem:[#allocation8 + $0x40] sm:$0xff]
    %v4099 = vld [vmem:[#allocation8 + $0x48] sm:$0xff]
    %v4100 = vld [vmem:[#allocation8 + $0x50] sm:$0xff]
    %v4101 = vld [vmem:[#allocation8 + $0x58] sm:$0xff]
    %v4102 = vld [vmem:[#allocation8 + $0x60] sm:$0xff]
    %v4103 = vld [vmem:[#allocation8 + $0x68] sm:$0xff]
    %v4104 = vld [vmem:[#allocation8 + $0x70] sm:$0xff]
    %v4105 = vld [vmem:[#allocation8 + $0x78] sm:$0xff]
    %v4106 = vld [vmem:[#allocation8 + $0x80] sm:$0xff]
    %v4107 = vld [vmem:[#allocation8 + $0x88] sm:$0xff]
    %v4108 = vld [vmem:[#allocation8 + $0x90] sm:$0xff]
    %v4109 = vld [vmem:[#allocation8 + $0x98] sm:$0xff]
    %v4110 = vld [vmem:[#allocation8 + $0xa0] sm:$0xff]
    %v4111 = vld [vmem:[#allocation8 + $0xa8] sm:$0xff]
    %v4112 = vld [vmem:[#allocation8 + $0xb0] sm:$0xff]
    %v4113 = vld [vmem:[#allocation8 + $0xb8] sm:$0xff]
    %v4114 = vld [vmem:[#allocation8 + $0xc0] sm:$0xff]
    %v4115 = vld [vmem:[#allocation8 + $0xc8] sm:$0xff]
    %v4116 = vld [vmem:[#allocation8 + $0xd0] sm:$0xff]
    %v4117 = vld [vmem:[#allocation8 + $0xd8] sm:$0xff]
    %v4118 = vld [vmem:[#allocation8 + $0xe0] sm:$0xff]
    %v4119 = vld [vmem:[#allocation8 + $0xe8] sm:$0xff]
    %v4120 = vld [vmem:[#allocation8 + $0xf0] sm:$0xff]
    %v4121 = vld [vmem:[#allocation8 + $0xf8] sm:$0xff]
    %v4122 = vld [vmem:[#allocation8 + $0x100] sm:$0xff]
    %v4123 = vld [vmem:[#allocation8 + $0x108] sm:$0xff]
    %v4124 = vld [vmem:[#allocation8 + $0x110] sm:$0xff]
    %v4125 = vld [vmem:[#allocation8 + $0x118] sm:$0xff]
    %v4126 = vld [vmem:[#allocation8 + $0x120] sm:$0xff]
    %v4127 = vld [vmem:[#allocation8 + $0x128] sm:$0xff]
    %v4128 = vld [vmem:[#allocation8 + $0x130] sm:$0xff]
    %v4129 = vld [vmem:[#allocation8 + $0x138] sm:$0xff]
    %v4130 = vld [vmem:[#allocation8 + $0x140] sm:$0xff]
    %v4131 = vld [vmem:[#allocation8 + $0x148] sm:$0xff]
    %v4132 = vld [vmem:[#allocation8 + $0x150] sm:$0xff]
    %v4133 = vld [vmem:[#allocation8 + $0x158] sm:$0xff]
    %v4134 = vld [vmem:[#allocation8 + $0x160] sm:$0xff]
    %v4135 = vld [vmem:[#allocation8 + $0x168] sm:$0xff]
    %v4136 = vld [vmem:[#allocation8 + $0x170] sm:$0xff]
    %v4137 = vld [vmem:[#allocation8 + $0x178] sm:$0xff]
    %v4138 = vld [vmem:[#allocation8 + $0x180] sm:$0xff]
    %v4139 = vld [vmem:[#allocation8 + $0x188] sm:$0xff]
    %v4140 = vld [vmem:[#allocation8 + $0x190] sm:$0xff]
    %v4141 = vld [vmem:[#allocation8 + $0x198] sm:$0xff]
    %v4142 = vld [vmem:[#allocation8 + $0x1a0] sm:$0xff]
    %v4143 = vld [vmem:[#allocation8 + $0x1a8] sm:$0xff]
    %v4144 = vld [vmem:[#allocation8 + $0x1b0] sm:$0xff]
    %v4145 = vld [vmem:[#allocation8 + $0x1b8] sm:$0xff]
    %v4146 = vld [vmem:[#allocation8 + $0x1c0] sm:$0xff]
    %v4147 = vld [vmem:[#allocation8 + $0x1c8] sm:$0xff]
    %v4148 = vld [vmem:[#allocation8 + $0x1d0] sm:$0xff]
    %v4149 = vld [vmem:[#allocation8 + $0x1d8] sm:$0xff]
    %v4150 = vld [vmem:[#allocation8 + $0x1e0] sm:$0xff]
    %v4151 = vld [vmem:[#allocation8 + $0x1e8] sm:$0xff]
    %v4152 = vld [vmem:[#allocation8 + $0x1f0] sm:$0xff]
    %v4153 = vld [vmem:[#allocation8 + $0x1f8] sm:$0xff]
    %v4154 = vld [vmem:[#allocation8 + $0x200] sm:$0xff]
    %v4155 = vld [vmem:[#allocation8 + $0x208] sm:$0xff]
    %v4156 = vld [vmem:[#allocation8 + $0x210] sm:$0xff]
    %v4157 = vld [vmem:[#allocation8 + $0x218] sm:$0xff]
    %v4158 = vld [vmem:[#allocation8 + $0x220] sm:$0xff]
    %v4159 = vld [vmem:[#allocation8 + $0x228] sm:$0xff]
    %v4160 = vld [vmem:[#allocation8 + $0x230] sm:$0xff]
    %v4161 = vld [vmem:[#allocation8 + $0x238] sm:$0xff]
    %v4162 = vld [vmem:[#allocation8 + $0x240] sm:$0xff]
    %v4163 = vld [vmem:[#allocation8 + $0x248] sm:$0xff]
    %v4164 = vld [vmem:[#allocation8 + $0x250] sm:$0xff]
    %v4165 = vld [vmem:[#allocation8 + $0x258] sm:$0xff]
    %v4166 = vld [vmem:[#allocation8 + $0x260] sm:$0xff]
    %v4167 = vld [vmem:[#allocation8 + $0x268] sm:$0xff]
    %v4168 = vld [vmem:[#allocation8 + $0x270] sm:$0xff]
    %v4169 = vld [vmem:[#allocation8 + $0x278] sm:$0xff]
    %v4170 = vld [vmem:[#allocation8 + $0x280] sm:$0xff]
    %v4171 = vld [vmem:[#allocation8 + $0x288] sm:$0xff]
    %v4172 = vld [vmem:[#allocation8 + $0x290] sm:$0xff]
    %v4173 = vld [vmem:[#allocation8 + $0x298] sm:$0xff]
    %v4174 = vld [vmem:[#allocation8 + $0x2a0] sm:$0xff]
    %v4175 = vld [vmem:[#allocation8 + $0x2a8] sm:$0xff]
    %v4176 = vld [vmem:[#allocation8 + $0x2b0] sm:$0xff]
    %v4177 = vld [vmem:[#allocation8 + $0x2b8] sm:$0xff]
    %v4178 = vld [vmem:[#allocation8 + $0x2c0] sm:$0xff]
    %v4179 = vld [vmem:[#allocation8 + $0x2c8] sm:$0xff]
    %v4180 = vld [vmem:[#allocation8 + $0x2d0] sm:$0xff]
    %v4181 = vld [vmem:[#allocation8 + $0x2d8] sm:$0xff]
    %v4182 = vld [vmem:[#allocation8 + $0x2e0] sm:$0xff]
    %v4183 = vld [vmem:[#allocation8 + $0x2e8] sm:$0xff]
    %v4184 = vld [vmem:[#allocation8 + $0x2f0] sm:$0xff]
    %v4185 = vld [vmem:[#allocation8 + $0x2f8] sm:$0xff]
    %v4186 = vld [vmem:[#allocation8 + $0x300] sm:$0xff]
    %v4187 = vld [vmem:[#allocation8 + $0x308] sm:$0xff]
    %v4188 = vld [vmem:[#allocation8 + $0x310] sm:$0xff]
    %v4189 = vld [vmem:[#allocation8 + $0x318] sm:$0xff]
    %v4190 = vld [vmem:[#allocation8 + $0x320] sm:$0xff]
    %v4191 = vld [vmem:[#allocation8 + $0x328] sm:$0xff]
    %v4192 = vld [vmem:[#allocation8 + $0x330] sm:$0xff]
    %v4193 = vld [vmem:[#allocation8 + $0x338] sm:$0xff]
    %v4194 = vld [vmem:[#allocation8 + $0x340] sm:$0xff]
    %v4195 = vld [vmem:[#allocation8 + $0x348] sm:$0xff]
    %v4196 = vld [vmem:[#allocation8 + $0x350] sm:$0xff]
    %v4197 = vld [vmem:[#allocation8 + $0x358] sm:$0xff]
    %v4198 = vld [vmem:[#allocation8 + $0x360] sm:$0xff]
    %v4199 = vld [vmem:[#allocation8 + $0x368] sm:$0xff]
    %v4200 = vld [vmem:[#allocation8 + $0x370] sm:$0xff]
    %v4201 = vld [vmem:[#allocation8 + $0x378] sm:$0xff]
    %v4202 = vld [vmem:[#allocation8 + $0x380] sm:$0xff]
    %v4203 = vld [vmem:[#allocation8 + $0x388] sm:$0xff]
    %v4204 = vld [vmem:[#allocation8 + $0x390] sm:$0xff]
    %v4205 = vld [vmem:[#allocation8 + $0x398] sm:$0xff]
    %v4206 = vld [vmem:[#allocation8 + $0x3a0] sm:$0xff]
    %v4207 = vld [vmem:[#allocation8 + $0x3a8] sm:$0xff]
    %v4208 = vld [vmem:[#allocation8 + $0x3b0] sm:$0xff]
    %v4209 = vld [vmem:[#allocation8 + $0x3b8] sm:$0xff]
    %v4210 = vld [vmem:[#allocation8 + $0x3c0] sm:$0xff]
    %v4211 = vld [vmem:[#allocation8 + $0x3c8] sm:$0xff]
    %v4212 = vld [vmem:[#allocation8 + $0x3d0] sm:$0xff]
    %v4213 = vld [vmem:[#allocation8 + $0x3d8] sm:$0xff]
    %v4214 = vld [vmem:[#allocation8 + $0x3e0] sm:$0xff]
    %v4215 = vld [vmem:[#allocation8 + $0x3e8] sm:$0xff]
    %v4216 = vld [vmem:[#allocation8 + $0x3f0] sm:$0xff]
    %v4217 = vld [vmem:[#allocation8 + $0x3f8] sm:$0xff]
    %v4218 = vld [vmem:[#allocation8 + $0x400] sm:$0xff]
    %v4219 = vld [vmem:[#allocation8 + $0x408] sm:$0xff]
    %v4220 = vld [vmem:[#allocation8 + $0x410] sm:$0xff]
    %v4221 = vld [vmem:[#allocation8 + $0x418] sm:$0xff]
    %v4222 = vld [vmem:[#allocation8 + $0x420] sm:$0xff]
    %v4223 = vld [vmem:[#allocation8 + $0x428] sm:$0xff]
    %v4224 = vld [vmem:[#allocation8 + $0x430] sm:$0xff]
    %v4225 = vld [vmem:[#allocation8 + $0x438] sm:$0xff]
    %v4226 = vld [vmem:[#allocation8 + $0x440] sm:$0xff]
    %v4227 = vld [vmem:[#allocation8 + $0x448] sm:$0xff]
    %v4228 = vld [vmem:[#allocation8 + $0x450] sm:$0xff]
    %v4229 = vld [vmem:[#allocation8 + $0x458] sm:$0xff]
    %v4230 = vld [vmem:[#allocation8 + $0x460] sm:$0xff]
    %v4231 = vld [vmem:[#allocation8 + $0x468] sm:$0xff]
    %v4232 = vld [vmem:[#allocation8 + $0x470] sm:$0xff]
    %v4233 = vld [vmem:[#allocation8 + $0x478] sm:$0xff]
    %v4234 = vld [vmem:[#allocation8 + $0x480] sm:$0xff]
    %v4235 = vld [vmem:[#allocation8 + $0x488] sm:$0xff]
    %v4236 = vld [vmem:[#allocation8 + $0x490] sm:$0xff]
    %v4237 = vld [vmem:[#allocation8 + $0x498] sm:$0xff]
    %v4238 = vld [vmem:[#allocation8 + $0x4a0] sm:$0xff]
    %v4239 = vld [vmem:[#allocation8 + $0x4a8] sm:$0xff]
    %v4240 = vld [vmem:[#allocation8 + $0x4b0] sm:$0xff]
    %v4241 = vld [vmem:[#allocation8 + $0x4b8] sm:$0xff]
    %v4242 = vld [vmem:[#allocation8 + $0x4c0] sm:$0xff]
    %v4243 = vld [vmem:[#allocation8 + $0x4c8] sm:$0xff]
    %v4244 = vld [vmem:[#allocation8 + $0x4d0] sm:$0xff]
    %v4245 = vld [vmem:[#allocation8 + $0x4d8] sm:$0xff]
    %v4246 = vld [vmem:[#allocation8 + $0x4e0] sm:$0xff]
    %v4247 = vld [vmem:[#allocation8 + $0x4e8] sm:$0xff]
    %v4248 = vld [vmem:[#allocation8 + $0x4f0] sm:$0xff]
    %v4249 = vld [vmem:[#allocation8 + $0x4f8] sm:$0xff]
    %v4250 = vld [vmem:[#allocation8 + $0x500] sm:$0xff]
    %v4251 = vld [vmem:[#allocation8 + $0x508] sm:$0xff]
    %v4252 = vld [vmem:[#allocation8 + $0x510] sm:$0xff]
    %v4253 = vld [vmem:[#allocation8 + $0x518] sm:$0xff]
    %v4254 = vld [vmem:[#allocation8 + $0x520] sm:$0xff]
    %v4255 = vld [vmem:[#allocation8 + $0x528] sm:$0xff]
    %v4256 = vld [vmem:[#allocation8 + $0x530] sm:$0xff]
    %v4257 = vld [vmem:[#allocation8 + $0x538] sm:$0xff]
    %v4258 = vld [vmem:[#allocation8 + $0x540] sm:$0xff]
    %v4259 = vld [vmem:[#allocation8 + $0x548] sm:$0xff]
    %v4260 = vld [vmem:[#allocation8 + $0x550] sm:$0xff]
    %v4261 = vld [vmem:[#allocation8 + $0x558] sm:$0xff]
    %v4262 = vld [vmem:[#allocation8 + $0x560] sm:$0xff]
    %v4263 = vld [vmem:[#allocation8 + $0x568] sm:$0xff]
    %v4264 = vld [vmem:[#allocation8 + $0x570] sm:$0xff]
    %v4265 = vld [vmem:[#allocation8 + $0x578] sm:$0xff]
    %v4266 = vld [vmem:[#allocation8 + $0x580] sm:$0xff]
    %v4267 = vld [vmem:[#allocation8 + $0x588] sm:$0xff]
    %v4268 = vld [vmem:[#allocation8 + $0x590] sm:$0xff]
    %v4269 = vld [vmem:[#allocation8 + $0x598] sm:$0xff]
    %v4270 = vld [vmem:[#allocation8 + $0x5a0] sm:$0xff]
    %v4271 = vld [vmem:[#allocation8 + $0x5a8] sm:$0xff]
    %v4272 = vld [vmem:[#allocation8 + $0x5b0] sm:$0xff]
    %v4273 = vld [vmem:[#allocation8 + $0x5b8] sm:$0xff]
    %v4274 = vld [vmem:[#allocation8 + $0x5c0] sm:$0xff]
    %v4275 = vld [vmem:[#allocation8 + $0x5c8] sm:$0xff]
    %v4276 = vld [vmem:[#allocation8 + $0x5d0] sm:$0xff]
    %v4277 = vld [vmem:[#allocation8 + $0x5d8] sm:$0xff]
    %v4278 = vld [vmem:[#allocation8 + $0x5e0] sm:$0xff]
    %v4279 = vld [vmem:[#allocation8 + $0x5e8] sm:$0xff]
    %v4280 = vld [vmem:[#allocation8 + $0x5f0] sm:$0xff]
    %v4281 = vld [vmem:[#allocation8 + $0x5f8] sm:$0xff]
    %v4282 = vld [vmem:[#allocation8 + $0x600] sm:$0xff]
    %v4283 = vld [vmem:[#allocation8 + $0x608] sm:$0xff]
    %v4284 = vld [vmem:[#allocation8 + $0x610] sm:$0xff]
    %v4285 = vld [vmem:[#allocation8 + $0x618] sm:$0xff]
    %v4286 = vld [vmem:[#allocation8 + $0x620] sm:$0xff]
    %v4287 = vld [vmem:[#allocation8 + $0x628] sm:$0xff]
    %v4288 = vld [vmem:[#allocation8 + $0x630] sm:$0xff]
    %v4289 = vld [vmem:[#allocation8 + $0x638] sm:$0xff]
    %v4290 = vld [vmem:[#allocation8 + $0x640] sm:$0xff]
    %v4291 = vld [vmem:[#allocation8 + $0x648] sm:$0xff]
    %v4292 = vld [vmem:[#allocation8 + $0x650] sm:$0xff]
    %v4293 = vld [vmem:[#allocation8 + $0x658] sm:$0xff]
    %v4294 = vld [vmem:[#allocation8 + $0x660] sm:$0xff]
    %v4295 = vld [vmem:[#allocation8 + $0x668] sm:$0xff]
    %v4296 = vld [vmem:[#allocation8 + $0x670] sm:$0xff]
    %v4297 = vld [vmem:[#allocation8 + $0x678] sm:$0xff]
    %v4298 = vld [vmem:[#allocation8 + $0x680] sm:$0xff]
    %v4299 = vld [vmem:[#allocation8 + $0x688] sm:$0xff]
    %v4300 = vld [vmem:[#allocation8 + $0x690] sm:$0xff]
    %v4301 = vld [vmem:[#allocation8 + $0x698] sm:$0xff]
    %v4302 = vld [vmem:[#allocation8 + $0x6a0] sm:$0xff]
    %v4303 = vld [vmem:[#allocation8 + $0x6a8] sm:$0xff]
    %v4304 = vld [vmem:[#allocation8 + $0x6b0] sm:$0xff]
    %v4305 = vld [vmem:[#allocation8 + $0x6b8] sm:$0xff]
    %v4306 = vld [vmem:[#allocation8 + $0x6c0] sm:$0xff]
    %v4307 = vld [vmem:[#allocation8 + $0x6c8] sm:$0xff]
    %v4308 = vld [vmem:[#allocation8 + $0x6d0] sm:$0xff]
    %v4309 = vld [vmem:[#allocation8 + $0x6d8] sm:$0xff]
    %v4310 = vld [vmem:[#allocation8 + $0x6e0] sm:$0xff]
    %v4311 = vld [vmem:[#allocation8 + $0x6e8] sm:$0xff]
    %v4312 = vld [vmem:[#allocation8 + $0x6f0] sm:$0xff]
    %v4313 = vld [vmem:[#allocation8 + $0x6f8] sm:$0xff]
    %v4314 = vld [vmem:[#allocation8 + $0x700] sm:$0xff]
    %v4315 = vld [vmem:[#allocation8 + $0x708] sm:$0xff]
    %v4316 = vld [vmem:[#allocation8 + $0x710] sm:$0xff]
    %v4317 = vld [vmem:[#allocation8 + $0x718] sm:$0xff]
    %v4318 = vld [vmem:[#allocation8 + $0x720] sm:$0xff]
    %v4319 = vld [vmem:[#allocation8 + $0x728] sm:$0xff]
    %v4320 = vld [vmem:[#allocation8 + $0x730] sm:$0xff]
    %v4321 = vld [vmem:[#allocation8 + $0x738] sm:$0xff]
    %v4322 = vld [vmem:[#allocation8 + $0x740] sm:$0xff]
    %v4323 = vld [vmem:[#allocation8 + $0x748] sm:$0xff]
    %v4324 = vld [vmem:[#allocation8 + $0x750] sm:$0xff]
    %v4325 = vld [vmem:[#allocation8 + $0x758] sm:$0xff]
    %v4326 = vld [vmem:[#allocation8 + $0x760] sm:$0xff]
    %v4327 = vld [vmem:[#allocation8 + $0x768] sm:$0xff]
    %v4328 = vld [vmem:[#allocation8 + $0x770] sm:$0xff]
    %v4329 = vld [vmem:[#allocation8 + $0x778] sm:$0xff]
    %v4330 = vld [vmem:[#allocation8 + $0x780] sm:$0xff]
    %v4331 = vld [vmem:[#allocation8 + $0x788] sm:$0xff]
    %v4332 = vld [vmem:[#allocation8 + $0x790] sm:$0xff]
    %v4333 = vld [vmem:[#allocation8 + $0x798] sm:$0xff]
    %v4334 = vld [vmem:[#allocation8 + $0x7a0] sm:$0xff]
    %v4335 = vld [vmem:[#allocation8 + $0x7a8] sm:$0xff]
    %v4336 = vld [vmem:[#allocation8 + $0x7b0] sm:$0xff]
    %v4337 = vld [vmem:[#allocation8 + $0x7b8] sm:$0xff]
    %v4338 = vld [vmem:[#allocation8 + $0x7c0] sm:$0xff]
    %v4339 = vld [vmem:[#allocation8 + $0x7c8] sm:$0xff]
    %v4340 = vld [vmem:[#allocation8 + $0x7d0] sm:$0xff]
    %v4341 = vld [vmem:[#allocation8 + $0x7d8] sm:$0xff]
    %v4342 = vld [vmem:[#allocation8 + $0x7e0] sm:$0xff]
    %v4343 = vld [vmem:[#allocation8 + $0x7e8] sm:$0xff]
    %v4344 = vld [vmem:[#allocation8 + $0x7f0] sm:$0xff]
    %v4345 = vld [vmem:[#allocation8 + $0x7f8] sm:$0xff]
    %v4346 = vld [vmem:[#allocation8 + $0x800] sm:$0xff]
    %v4347 = vld [vmem:[#allocation8 + $0x808] sm:$0xff]
    %v4348 = vld [vmem:[#allocation8 + $0x810] sm:$0xff]
    %v4349 = vld [vmem:[#allocation8 + $0x818] sm:$0xff]
    %v4350 = vld [vmem:[#allocation8 + $0x820] sm:$0xff]
    %v4351 = vld [vmem:[#allocation8 + $0x828] sm:$0xff]
    %v4352 = vld [vmem:[#allocation8 + $0x830] sm:$0xff]
    %v4353 = vld [vmem:[#allocation8 + $0x838] sm:$0xff]
    %v4354 = vld [vmem:[#allocation8 + $0x840] sm:$0xff]
    %v4355 = vld [vmem:[#allocation8 + $0x848] sm:$0xff]
    %v4356 = vld [vmem:[#allocation8 + $0x850] sm:$0xff]
    %v4357 = vld [vmem:[#allocation8 + $0x858] sm:$0xff]
    %v4358 = vld [vmem:[#allocation8 + $0x860] sm:$0xff]
    %v4359 = vld [vmem:[#allocation8 + $0x868] sm:$0xff]
    %v4360 = vld [vmem:[#allocation8 + $0x870] sm:$0xff]
    %v4361 = vld [vmem:[#allocation8 + $0x878] sm:$0xff]
    %v4362 = vld [vmem:[#allocation8 + $0x880] sm:$0xff]
    %v4363 = vld [vmem:[#allocation8 + $0x888] sm:$0xff]
    %v4364 = vld [vmem:[#allocation8 + $0x890] sm:$0xff]
    %v4365 = vld [vmem:[#allocation8 + $0x898] sm:$0xff]
    %v4366 = vld [vmem:[#allocation8 + $0x8a0] sm:$0xff]
    %v4367 = vld [vmem:[#allocation8 + $0x8a8] sm:$0xff]
    %v4368 = vld [vmem:[#allocation8 + $0x8b0] sm:$0xff]
    %v4369 = vld [vmem:[#allocation8 + $0x8b8] sm:$0xff]
    %v4370 = vld [vmem:[#allocation8 + $0x8c0] sm:$0xff]
    %v4371 = vld [vmem:[#allocation8 + $0x8c8] sm:$0xff]
    %v4372 = vld [vmem:[#allocation8 + $0x8d0] sm:$0xff]
    %v4373 = vld [vmem:[#allocation8 + $0x8d8] sm:$0xff]
    %v4374 = vld [vmem:[#allocation8 + $0x8e0] sm:$0xff]
    %v4375 = vld [vmem:[#allocation8 + $0x8e8] sm:$0xff]
    %v4376 = vld [vmem:[#allocation8 + $0x8f0] sm:$0xff]
    %v4377 = vld [vmem:[#allocation8 + $0x8f8] sm:$0xff]
    %v4378 = vld [vmem:[#allocation8 + $0x900] sm:$0xff]
    %v4379 = vld [vmem:[#allocation8 + $0x908] sm:$0xff]
    %v4380 = vld [vmem:[#allocation8 + $0x910] sm:$0xff]
    %v4381 = vld [vmem:[#allocation8 + $0x918] sm:$0xff]
    %v4382 = vld [vmem:[#allocation8 + $0x920] sm:$0xff]
    %v4383 = vld [vmem:[#allocation8 + $0x928] sm:$0xff]
    %v4384 = vld [vmem:[#allocation8 + $0x930] sm:$0xff]
    %v4385 = vld [vmem:[#allocation8 + $0x938] sm:$0xff]
    %v4386 = vld [vmem:[#allocation8 + $0x940] sm:$0xff]
    %v4387 = vld [vmem:[#allocation8 + $0x948] sm:$0xff]
    %v4388 = vld [vmem:[#allocation8 + $0x950] sm:$0xff]
    %v4389 = vld [vmem:[#allocation8 + $0x958] sm:$0xff]
    %v4390 = vld [vmem:[#allocation8 + $0x960] sm:$0xff]
    %v4391 = vld [vmem:[#allocation8 + $0x968] sm:$0xff]
    %v4392 = vld [vmem:[#allocation8 + $0x970] sm:$0xff]
    %v4393 = vld [vmem:[#allocation8 + $0x978] sm:$0xff]
    %v4394 = vld [vmem:[#allocation8 + $0x980] sm:$0xff]
    %v4395 = vld [vmem:[#allocation8 + $0x988] sm:$0xff]
    %v4396 = vld [vmem:[#allocation8 + $0x990] sm:$0xff]
    %v4397 = vld [vmem:[#allocation8 + $0x998] sm:$0xff]
    %v4398 = vld [vmem:[#allocation8 + $0x9a0] sm:$0xff]
    %v4399 = vld [vmem:[#allocation8 + $0x9a8] sm:$0xff]
    %v4400 = vld [vmem:[#allocation8 + $0x9b0] sm:$0xff]
    %v4401 = vld [vmem:[#allocation8 + $0x9b8] sm:$0xff]
    %v4402 = vld [vmem:[#allocation8 + $0x9c0] sm:$0xff]
    %v4403 = vld [vmem:[#allocation8 + $0x9c8] sm:$0xff]
    %v4404 = vld [vmem:[#allocation8 + $0x9d0] sm:$0xff]
    %v4405 = vld [vmem:[#allocation8 + $0x9d8] sm:$0xff]
    %v4406 = vld [vmem:[#allocation8 + $0x9e0] sm:$0xff]
    %v4407 = vld [vmem:[#allocation8 + $0x9e8] sm:$0xff]
    %v4408 = vld [vmem:[#allocation8 + $0x9f0] sm:$0xff]
    %v4409 = vld [vmem:[#allocation8 + $0x9f8] sm:$0xff]
    %v4410 = vld [vmem:[#allocation8 + $0xa00] sm:$0xff]
    %v4411 = vld [vmem:[#allocation8 + $0xa08] sm:$0xff]
    %v4412 = vld [vmem:[#allocation8 + $0xa10] sm:$0xff]
    %v4413 = vld [vmem:[#allocation8 + $0xa18] sm:$0xff]
    %v4414 = vld [vmem:[#allocation8 + $0xa20] sm:$0xff]
    %v4415 = vld [vmem:[#allocation8 + $0xa28] sm:$0xff]
    %v4416 = vld [vmem:[#allocation8 + $0xa30] sm:$0xff]
    %v4417 = vld [vmem:[#allocation8 + $0xa38] sm:$0xff]
    %v4418 = vld [vmem:[#allocation8 + $0xa40] sm:$0xff]
    %v4419 = vld [vmem:[#allocation8 + $0xa48] sm:$0xff]
    %v4420 = vld [vmem:[#allocation8 + $0xa50] sm:$0xff]
    %v4421 = vld [vmem:[#allocation8 + $0xa58] sm:$0xff]
    %v4422 = vld [vmem:[#allocation8 + $0xa60] sm:$0xff]
    %v4423 = vld [vmem:[#allocation8 + $0xa68] sm:$0xff]
    %v4424 = vld [vmem:[#allocation8 + $0xa70] sm:$0xff]
    %v4425 = vld [vmem:[#allocation8 + $0xa78] sm:$0xff]
    %v4426 = vld [vmem:[#allocation8 + $0xa80] sm:$0xff]
    %v4427 = vld [vmem:[#allocation8 + $0xa88] sm:$0xff]
    %v4428 = vld [vmem:[#allocation8 + $0xa90] sm:$0xff]
    %v4429 = vld [vmem:[#allocation8 + $0xa98] sm:$0xff]
    %v4430 = vld [vmem:[#allocation8 + $0xaa0] sm:$0xff]
    %v4431 = vld [vmem:[#allocation8 + $0xaa8] sm:$0xff]
    %v4432 = vld [vmem:[#allocation8 + $0xab0] sm:$0xff]
    %v4433 = vld [vmem:[#allocation8 + $0xab8] sm:$0xff]
    %v4434 = vld [vmem:[#allocation8 + $0xac0] sm:$0xff]
    %v4435 = vld [vmem:[#allocation8 + $0xac8] sm:$0xff]
    %v4436 = vld [vmem:[#allocation8 + $0xad0] sm:$0xff]
    %v4437 = vld [vmem:[#allocation8 + $0xad8] sm:$0xff]
    %v4438 = vld [vmem:[#allocation8 + $0xae0] sm:$0xff]
    %v4439 = vld [vmem:[#allocation8 + $0xae8] sm:$0xff]
    %v4440 = vld [vmem:[#allocation8 + $0xaf0] sm:$0xff]
    %v4441 = vld [vmem:[#allocation8 + $0xaf8] sm:$0xff]
    %v4442 = vld [vmem:[#allocation8 + $0xb00] sm:$0xff]
    %v4443 = vld [vmem:[#allocation8 + $0xb08] sm:$0xff]
    %v4444 = vld [vmem:[#allocation8 + $0xb10] sm:$0xff]
    %v4445 = vld [vmem:[#allocation8 + $0xb18] sm:$0xff]
    %v4446 = vld [vmem:[#allocation8 + $0xb20] sm:$0xff]
    %v4447 = vld [vmem:[#allocation8 + $0xb28] sm:$0xff]
    %v4448 = vld [vmem:[#allocation8 + $0xb30] sm:$0xff]
    %v4449 = vld [vmem:[#allocation8 + $0xb38] sm:$0xff]
    %v4450 = vld [vmem:[#allocation8 + $0xb40] sm:$0xff]
    %v4451 = vld [vmem:[#allocation8 + $0xb48] sm:$0xff]
    %v4452 = vld [vmem:[#allocation8 + $0xb50] sm:$0xff]
    %v4453 = vld [vmem:[#allocation8 + $0xb58] sm:$0xff]
    %v4454 = vld [vmem:[#allocation8 + $0xb60] sm:$0xff]
    %v4455 = vld [vmem:[#allocation8 + $0xb68] sm:$0xff]
    %v4456 = vld [vmem:[#allocation8 + $0xb70] sm:$0xff]
    %v4457 = vld [vmem:[#allocation8 + $0xb78] sm:$0xff]
    %v4458 = vld [vmem:[#allocation8 + $0xb80] sm:$0xff]
    %v4459 = vld [vmem:[#allocation8 + $0xb88] sm:$0xff]
    %v4460 = vld [vmem:[#allocation8 + $0xb90] sm:$0xff]
    %v4461 = vld [vmem:[#allocation8 + $0xb98] sm:$0xff]
    %v4462 = vld [vmem:[#allocation8 + $0xba0] sm:$0xff]
    %v4463 = vld [vmem:[#allocation8 + $0xba8] sm:$0xff]
    %v4464 = vld [vmem:[#allocation8 + $0xbb0] sm:$0xff]
    %v4465 = vld [vmem:[#allocation8 + $0xbb8] sm:$0xff]
    %v4466 = vld [vmem:[#allocation8 + $0xbc0] sm:$0xff]
    %v4467 = vld [vmem:[#allocation8 + $0xbc8] sm:$0xff]
    %v4468 = vld [vmem:[#allocation8 + $0xbd0] sm:$0xff]
    %v4469 = vld [vmem:[#allocation8 + $0xbd8] sm:$0xff]
    %v4470 = vld [vmem:[#allocation8 + $0xbe0] sm:$0xff]
    %v4471 = vld [vmem:[#allocation8 + $0xbe8] sm:$0xff]
    %v4472 = vld [vmem:[#allocation8 + $0xbf0] sm:$0xff]
    %v4473 = vld [vmem:[#allocation8 + $0xbf8] sm:$0xff]
    %v4474 = vld [vmem:[#allocation8 + $0xc00] sm:$0xff]
    %v4475 = vld [vmem:[#allocation8 + $0xc08] sm:$0xff]
    %v4476 = vld [vmem:[#allocation8 + $0xc10] sm:$0xff]
    %v4477 = vld [vmem:[#allocation8 + $0xc18] sm:$0xff]
    %v4478 = vld [vmem:[#allocation8 + $0xc20] sm:$0xff]
    %v4479 = vld [vmem:[#allocation8 + $0xc28] sm:$0xff]
    %v4480 = vld [vmem:[#allocation8 + $0xc30] sm:$0xff]
    %v4481 = vld [vmem:[#allocation8 + $0xc38] sm:$0xff]
    %v4482 = vld [vmem:[#allocation8 + $0xc40] sm:$0xff]
    %v4483 = vld [vmem:[#allocation8 + $0xc48] sm:$0xff]
    %v4484 = vld [vmem:[#allocation8 + $0xc50] sm:$0xff]
    %v4485 = vld [vmem:[#allocation8 + $0xc58] sm:$0xff]
    %v4486 = vld [vmem:[#allocation8 + $0xc60] sm:$0xff]
    %v4487 = vld [vmem:[#allocation8 + $0xc68] sm:$0xff]
    %v4488 = vld [vmem:[#allocation8 + $0xc70] sm:$0xff]
    %v4489 = vld [vmem:[#allocation8 + $0xc78] sm:$0xff]
    %v4490 = vld [vmem:[#allocation8 + $0xc80] sm:$0xff]
    %v4491 = vld [vmem:[#allocation8 + $0xc88] sm:$0xff]
    %v4492 = vld [vmem:[#allocation8 + $0xc90] sm:$0xff]
    %v4493 = vld [vmem:[#allocation8 + $0xc98] sm:$0xff]
    %v4494 = vld [vmem:[#allocation8 + $0xca0] sm:$0xff]
    %v4495 = vld [vmem:[#allocation8 + $0xca8] sm:$0xff]
    %v4496 = vld [vmem:[#allocation8 + $0xcb0] sm:$0xff]
    %v4497 = vld [vmem:[#allocation8 + $0xcb8] sm:$0xff]
    %v4498 = vld [vmem:[#allocation8 + $0xcc0] sm:$0xff]
    %v4499 = vld [vmem:[#allocation8 + $0xcc8] sm:$0xff]
    %v4500 = vld [vmem:[#allocation8 + $0xcd0] sm:$0xff]
    %v4501 = vld [vmem:[#allocation8 + $0xcd8] sm:$0xff]
    %v4502 = vld [vmem:[#allocation8 + $0xce0] sm:$0xff]
    %v4503 = vld [vmem:[#allocation8 + $0xce8] sm:$0xff]
    %v4504 = vld [vmem:[#allocation8 + $0xcf0] sm:$0xff]
    %v4505 = vld [vmem:[#allocation8 + $0xcf8] sm:$0xff]
    %v4506 = vld [vmem:[#allocation8 + $0xd00] sm:$0xff]
    %v4507 = vld [vmem:[#allocation8 + $0xd08] sm:$0xff]
    %v4508 = vld [vmem:[#allocation8 + $0xd10] sm:$0xff]
    %v4509 = vld [vmem:[#allocation8 + $0xd18] sm:$0xff]
    %v4510 = vld [vmem:[#allocation8 + $0xd20] sm:$0xff]
    %v4511 = vld [vmem:[#allocation8 + $0xd28] sm:$0xff]
    %v4512 = vld [vmem:[#allocation8 + $0xd30] sm:$0xff]
    %v4513 = vld [vmem:[#allocation8 + $0xd38] sm:$0xff]
    %v4514 = vld [vmem:[#allocation8 + $0xd40] sm:$0xff]
    %v4515 = vld [vmem:[#allocation8 + $0xd48] sm:$0xff]
    %v4516 = vld [vmem:[#allocation8 + $0xd50] sm:$0xff]
    %v4517 = vld [vmem:[#allocation8 + $0xd58] sm:$0xff]
    %v4518 = vld [vmem:[#allocation8 + $0xd60] sm:$0xff]
    %v4519 = vld [vmem:[#allocation8 + $0xd68] sm:$0xff]
    %v4520 = vld [vmem:[#allocation8 + $0xd70] sm:$0xff]
    %v4521 = vld [vmem:[#allocation8 + $0xd78] sm:$0xff]
    %v4522 = vld [vmem:[#allocation8 + $0xd80] sm:$0xff]
    %v4523 = vld [vmem:[#allocation8 + $0xd88] sm:$0xff]
    %v4524 = vld [vmem:[#allocation8 + $0xd90] sm:$0xff]
    %v4525 = vld [vmem:[#allocation8 + $0xd98] sm:$0xff]
    %v4526 = vld [vmem:[#allocation8 + $0xda0] sm:$0xff]
    %v4527 = vld [vmem:[#allocation8 + $0xda8] sm:$0xff]
    %v4528 = vld [vmem:[#allocation8 + $0xdb0] sm:$0xff]
    %v4529 = vld [vmem:[#allocation8 + $0xdb8] sm:$0xff]
    %v4530 = vld [vmem:[#allocation8 + $0xdc0] sm:$0xff]
    %v4531 = vld [vmem:[#allocation8 + $0xdc8] sm:$0xff]
    %v4532 = vld [vmem:[#allocation8 + $0xdd0] sm:$0xff]
    %v4533 = vld [vmem:[#allocation8 + $0xdd8] sm:$0xff]
    %v4534 = vld [vmem:[#allocation8 + $0xde0] sm:$0xff]
    %v4535 = vld [vmem:[#allocation8 + $0xde8] sm:$0xff]
    %v4536 = vld [vmem:[#allocation8 + $0xdf0] sm:$0xff]
    %v4537 = vld [vmem:[#allocation8 + $0xdf8] sm:$0xff]
    %v4538 = vld [vmem:[#allocation8 + $0xe00] sm:$0xff]
    %v4539 = vld [vmem:[#allocation8 + $0xe08] sm:$0xff]
    %v4540 = vld [vmem:[#allocation8 + $0xe10] sm:$0xff]
    %v4541 = vld [vmem:[#allocation8 + $0xe18] sm:$0xff]
    %v4542 = vld [vmem:[#allocation8 + $0xe20] sm:$0xff]
    %v4543 = vld [vmem:[#allocation8 + $0xe28] sm:$0xff]
    %v4544 = vld [vmem:[#allocation8 + $0xe30] sm:$0xff]
    %v4545 = vld [vmem:[#allocation8 + $0xe38] sm:$0xff]
    %v4546 = vld [vmem:[#allocation8 + $0xe40] sm:$0xff]
    %v4547 = vld [vmem:[#allocation8 + $0xe48] sm:$0xff]
    %v4548 = vld [vmem:[#allocation8 + $0xe50] sm:$0xff]
    %v4549 = vld [vmem:[#allocation8 + $0xe58] sm:$0xff]
    %v4550 = vld [vmem:[#allocation8 + $0xe60] sm:$0xff]
    %v4551 = vld [vmem:[#allocation8 + $0xe68] sm:$0xff]
    %v4552 = vld [vmem:[#allocation8 + $0xe70] sm:$0xff]
    %v4553 = vld [vmem:[#allocation8 + $0xe78] sm:$0xff]
    %v4554 = vld [vmem:[#allocation8 + $0xe80] sm:$0xff]
    %v4555 = vld [vmem:[#allocation8 + $0xe88] sm:$0xff]
    %v4556 = vld [vmem:[#allocation8 + $0xe90] sm:$0xff]
    %v4557 = vld [vmem:[#allocation8 + $0xe98] sm:$0xff]
    %v4558 = vld [vmem:[#allocation8 + $0xea0] sm:$0xff]
    %v4559 = vld [vmem:[#allocation8 + $0xea8] sm:$0xff]
    %v4560 = vld [vmem:[#allocation8 + $0xeb0] sm:$0xff]
    %v4561 = vld [vmem:[#allocation8 + $0xeb8] sm:$0xff]
    %v4562 = vld [vmem:[#allocation8 + $0xec0] sm:$0xff]
    %v4563 = vld [vmem:[#allocation8 + $0xec8] sm:$0xff]
    %v4564 = vld [vmem:[#allocation8 + $0xed0] sm:$0xff]
    %v4565 = vld [vmem:[#allocation8 + $0xed8] sm:$0xff]
    %v4566 = vld [vmem:[#allocation8 + $0xee0] sm:$0xff]
    %v4567 = vld [vmem:[#allocation8 + $0xee8] sm:$0xff]
    %v4568 = vld [vmem:[#allocation8 + $0xef0] sm:$0xff]
    %v4569 = vld [vmem:[#allocation8 + $0xef8] sm:$0xff]
    %v4570 = vld [vmem:[#allocation8 + $0xf00] sm:$0xff]
    %v4571 = vld [vmem:[#allocation8 + $0xf08] sm:$0xff]
    %v4572 = vld [vmem:[#allocation8 + $0xf10] sm:$0xff]
    %v4573 = vld [vmem:[#allocation8 + $0xf18] sm:$0xff]
    %v4574 = vld [vmem:[#allocation8 + $0xf20] sm:$0xff]
    %v4575 = vld [vmem:[#allocation8 + $0xf28] sm:$0xff]
    %v4576 = vld [vmem:[#allocation8 + $0xf30] sm:$0xff]
    %v4577 = vld [vmem:[#allocation8 + $0xf38] sm:$0xff]
    %v4578 = vld [vmem:[#allocation8 + $0xf40] sm:$0xff]
    %v4579 = vld [vmem:[#allocation8 + $0xf48] sm:$0xff]
    %v4580 = vld [vmem:[#allocation8 + $0xf50] sm:$0xff]
    %v4581 = vld [vmem:[#allocation8 + $0xf58] sm:$0xff]
    %v4582 = vld [vmem:[#allocation8 + $0xf60] sm:$0xff]
    %v4583 = vld [vmem:[#allocation8 + $0xf68] sm:$0xff]
    %v4584 = vld [vmem:[#allocation8 + $0xf70] sm:$0xff]
    %v4585 = vld [vmem:[#allocation8 + $0xf78] sm:$0xff]
    %v4586 = vld [vmem:[#allocation8 + $0xf80] sm:$0xff]
    %v4587 = vld [vmem:[#allocation8 + $0xf88] sm:$0xff]
    %v4588 = vld [vmem:[#allocation8 + $0xf90] sm:$0xff]
    %v4589 = vld [vmem:[#allocation8 + $0xf98] sm:$0xff]
    %v4590 = vld [vmem:[#allocation8 + $0xfa0] sm:$0xff]
    %v4591 = vld [vmem:[#allocation8 + $0xfa8] sm:$0xff]
    %v4592 = vld [vmem:[#allocation8 + $0xfb0] sm:$0xff]
    %v4593 = vld [vmem:[#allocation8 + $0xfb8] sm:$0xff]
    %v4594 = vld [vmem:[#allocation8 + $0xfc0] sm:$0xff]
    %v4595 = vld [vmem:[#allocation8 + $0xfc8] sm:$0xff]
    %v4596 = vld [vmem:[#allocation8 + $0xfd0] sm:$0xff]
    %v4597 = vld [vmem:[#allocation8 + $0xfd8] sm:$0xff]
    %v4598 = vld [vmem:[#allocation8 + $0xfe0] sm:$0xff]
    %v4599 = vld [vmem:[#allocation8 + $0xfe8] sm:$0xff]
    %v4600 = vld [vmem:[#allocation8 + $0xff0] sm:$0xff]
    %v4601 = vld [vmem:[#allocation8 + $0xff8] sm:$0xff]
    %v4602 = vld [vmem:[#allocation10] sm:$0xff]
    %v4604 = vperm.slane %v4602, 0
    %v4605 = vperm.slane %v4602, 1
    %v4606 = vperm.slane %v4602, 2
    %v4607 = vperm.slane %v4602, 3
    %v4608 = vperm.slane %v4602, 4
    %v4609 = vperm.slane %v4602, 5
    %v4610 = vperm.slane %v4602, 6
    %v4611 = vperm.slane %v4602, 7
    %v5132 = vunpack.c.l.b16 %v4090
    %v5133 = vunpack.c.h.b16 %v4090
    %v5134 = vunpack.c.l.b16 %v4091
    %v5135 = vunpack.c.h.b16 %v4091
    %v5136 = vunpack.c.l.b16 %v4092
    %v5137 = vunpack.c.h.b16 %v4092
    %v5138 = vunpack.c.l.b16 %v4093
    %v5139 = vunpack.c.h.b16 %v4093
    %v5140 = vunpack.c.l.b16 %v4094
    %v5141 = vunpack.c.h.b16 %v4094
    %v5142 = vunpack.c.l.b16 %v4095
    %v5143 = vunpack.c.h.b16 %v4095
    %v5144 = vunpack.c.l.b16 %v4096
    %v5145 = vunpack.c.h.b16 %v4096
    %v5146 = vunpack.c.l.b16 %v4097
    %v5147 = vunpack.c.h.b16 %v4097
    %v5148 = vunpack.c.l.b16 %v4098
    %v5149 = vunpack.c.h.b16 %v4098
    %v5150 = vunpack.c.l.b16 %v4099
    %v5151 = vunpack.c.h.b16 %v4099
    %v5152 = vunpack.c.l.b16 %v4100
    %v5153 = vunpack.c.h.b16 %v4100
    %v5154 = vunpack.c.l.b16 %v4101
    %v5155 = vunpack.c.h.b16 %v4101
    %v5156 = vunpack.c.l.b16 %v4102
    %v5157 = vunpack.c.h.b16 %v4102
    %v5158 = vunpack.c.l.b16 %v4103
    %v5159 = vunpack.c.h.b16 %v4103
    %v5160 = vunpack.c.l.b16 %v4104
    %v5161 = vunpack.c.h.b16 %v4104
    %v5162 = vunpack.c.l.b16 %v4105
    %v5163 = vunpack.c.h.b16 %v4105
    %v5164 = vunpack.c.l.b16 %v4106
    %v5165 = vunpack.c.h.b16 %v4106
    %v5166 = vunpack.c.l.b16 %v4107
    %v5167 = vunpack.c.h.b16 %v4107
    %v5168 = vunpack.c.l.b16 %v4108
    %v5169 = vunpack.c.h.b16 %v4108
    %v5170 = vunpack.c.l.b16 %v4109
    %v5171 = vunpack.c.h.b16 %v4109
    %v5172 = vunpack.c.l.b16 %v4110
    %v5173 = vunpack.c.h.b16 %v4110
    %v5174 = vunpack.c.l.b16 %v4111
    %v5175 = vunpack.c.h.b16 %v4111
    %v5176 = vunpack.c.l.b16 %v4112
    %v5177 = vunpack.c.h.b16 %v4112
    %v5178 = vunpack.c.l.b16 %v4113
    %v5179 = vunpack.c.h.b16 %v4113
    %v5180 = vunpack.c.l.b16 %v4114
    %v5181 = vunpack.c.h.b16 %v4114
    %v5182 = vunpack.c.l.b16 %v4115
    %v5183 = vunpack.c.h.b16 %v4115
    %v5184 = vunpack.c.l.b16 %v4116
    %v5185 = vunpack.c.h.b16 %v4116
    %v5186 = vunpack.c.l.b16 %v4117
    %v5187 = vunpack.c.h.b16 %v4117
    %v5188 = vunpack.c.l.b16 %v4118
    %v5189 = vunpack.c.h.b16 %v4118
    %v5190 = vunpack.c.l.b16 %v4119
    %v5191 = vunpack.c.h.b16 %v4119
    %v5192 = vunpack.c.l.b16 %v4120
    %v5193 = vunpack.c.h.b16 %v4120
    %v5194 = vunpack.c.l.b16 %v4121
    %v5195 = vunpack.c.h.b16 %v4121
    %v5196 = vunpack.c.l.b16 %v4122
    %v5197 = vunpack.c.h.b16 %v4122
    %v5198 = vunpack.c.l.b16 %v4123
    %v5199 = vunpack.c.h.b16 %v4123
    %v5200 = vunpack.c.l.b16 %v4124
    %v5201 = vunpack.c.h.b16 %v4124
    %v5202 = vunpack.c.l.b16 %v4125
    %v5203 = vunpack.c.h.b16 %v4125
    %v5204 = vunpack.c.l.b16 %v4126
    %v5205 = vunpack.c.h.b16 %v4126
    %v5206 = vunpack.c.l.b16 %v4127
    %v5207 = vunpack.c.h.b16 %v4127
    %v5208 = vunpack.c.l.b16 %v4128
    %v5209 = vunpack.c.h.b16 %v4128
    %v5210 = vunpack.c.l.b16 %v4129
    %v5211 = vunpack.c.h.b16 %v4129
    %v5212 = vunpack.c.l.b16 %v4130
    %v5213 = vunpack.c.h.b16 %v4130
    %v5214 = vunpack.c.l.b16 %v4131
    %v5215 = vunpack.c.h.b16 %v4131
    %v5216 = vunpack.c.l.b16 %v4132
    %v5217 = vunpack.c.h.b16 %v4132
    %v5218 = vunpack.c.l.b16 %v4133
    %v5219 = vunpack.c.h.b16 %v4133
    %v5220 = vunpack.c.l.b16 %v4134
    %v5221 = vunpack.c.h.b16 %v4134
    %v5222 = vunpack.c.l.b16 %v4135
    %v5223 = vunpack.c.h.b16 %v4135
    %v5224 = vunpack.c.l.b16 %v4136
    %v5225 = vunpack.c.h.b16 %v4136
    %v5226 = vunpack.c.l.b16 %v4137
    %v5227 = vunpack.c.h.b16 %v4137
    %v5228 = vunpack.c.l.b16 %v4138
    %v5229 = vunpack.c.h.b16 %v4138
    %v5230 = vunpack.c.l.b16 %v4139
    %v5231 = vunpack.c.h.b16 %v4139
    %v5232 = vunpack.c.l.b16 %v4140
    %v5233 = vunpack.c.h.b16 %v4140
    %v5234 = vunpack.c.l.b16 %v4141
    %v5235 = vunpack.c.h.b16 %v4141
    %v5236 = vunpack.c.l.b16 %v4142
    %v5237 = vunpack.c.h.b16 %v4142
    %v5238 = vunpack.c.l.b16 %v4143
    %v5239 = vunpack.c.h.b16 %v4143
    %v5240 = vunpack.c.l.b16 %v4144
    %v5241 = vunpack.c.h.b16 %v4144
    %v5242 = vunpack.c.l.b16 %v4145
    %v5243 = vunpack.c.h.b16 %v4145
    %v5244 = vunpack.c.l.b16 %v4146
    %v5245 = vunpack.c.h.b16 %v4146
    %v5246 = vunpack.c.l.b16 %v4147
    %v5247 = vunpack.c.h.b16 %v4147
    %v5248 = vunpack.c.l.b16 %v4148
    %v5249 = vunpack.c.h.b16 %v4148
    %v5250 = vunpack.c.l.b16 %v4149
    %v5251 = vunpack.c.h.b16 %v4149
    %v5252 = vunpack.c.l.b16 %v4150
    %v5253 = vunpack.c.h.b16 %v4150
    %v5254 = vunpack.c.l.b16 %v4151
    %v5255 = vunpack.c.h.b16 %v4151
    %v5256 = vunpack.c.l.b16 %v4152
    %v5257 = vunpack.c.h.b16 %v4152
    %v5258 = vunpack.c.l.b16 %v4153
    %v5259 = vunpack.c.h.b16 %v4153
    %v5260 = vunpack.c.l.b16 %v4154
    %v5261 = vunpack.c.h.b16 %v4154
    %v5262 = vunpack.c.l.b16 %v4155
    %v5263 = vunpack.c.h.b16 %v4155
    %v5264 = vunpack.c.l.b16 %v4156
    %v5265 = vunpack.c.h.b16 %v4156
    %v5266 = vunpack.c.l.b16 %v4157
    %v5267 = vunpack.c.h.b16 %v4157
    %v5268 = vunpack.c.l.b16 %v4158
    %v5269 = vunpack.c.h.b16 %v4158
    %v5270 = vunpack.c.l.b16 %v4159
    %v5271 = vunpack.c.h.b16 %v4159
    %v5272 = vunpack.c.l.b16 %v4160
    %v5273 = vunpack.c.h.b16 %v4160
    %v5274 = vunpack.c.l.b16 %v4161
    %v5275 = vunpack.c.h.b16 %v4161
    %v5276 = vunpack.c.l.b16 %v4162
    %v5277 = vunpack.c.h.b16 %v4162
    %v5278 = vunpack.c.l.b16 %v4163
    %v5279 = vunpack.c.h.b16 %v4163
    %v5280 = vunpack.c.l.b16 %v4164
    %v5281 = vunpack.c.h.b16 %v4164
    %v5282 = vunpack.c.l.b16 %v4165
    %v5283 = vunpack.c.h.b16 %v4165
    %v5284 = vunpack.c.l.b16 %v4166
    %v5285 = vunpack.c.h.b16 %v4166
    %v5286 = vunpack.c.l.b16 %v4167
    %v5287 = vunpack.c.h.b16 %v4167
    %v5288 = vunpack.c.l.b16 %v4168
    %v5289 = vunpack.c.h.b16 %v4168
    %v5290 = vunpack.c.l.b16 %v4169
    %v5291 = vunpack.c.h.b16 %v4169
    %v5292 = vunpack.c.l.b16 %v4170
    %v5293 = vunpack.c.h.b16 %v4170
    %v5294 = vunpack.c.l.b16 %v4171
    %v5295 = vunpack.c.h.b16 %v4171
    %v5296 = vunpack.c.l.b16 %v4172
    %v5297 = vunpack.c.h.b16 %v4172
    %v5298 = vunpack.c.l.b16 %v4173
    %v5299 = vunpack.c.h.b16 %v4173
    %v5300 = vunpack.c.l.b16 %v4174
    %v5301 = vunpack.c.h.b16 %v4174
    %v5302 = vunpack.c.l.b16 %v4175
    %v5303 = vunpack.c.h.b16 %v4175
    %v5304 = vunpack.c.l.b16 %v4176
    %v5305 = vunpack.c.h.b16 %v4176
    %v5306 = vunpack.c.l.b16 %v4177
    %v5307 = vunpack.c.h.b16 %v4177
    %v5308 = vunpack.c.l.b16 %v4178
    %v5309 = vunpack.c.h.b16 %v4178
    %v5310 = vunpack.c.l.b16 %v4179
    %v5311 = vunpack.c.h.b16 %v4179
    %v5312 = vunpack.c.l.b16 %v4180
    %v5313 = vunpack.c.h.b16 %v4180
    %v5314 = vunpack.c.l.b16 %v4181
    %v5315 = vunpack.c.h.b16 %v4181
    %v5316 = vunpack.c.l.b16 %v4182
    %v5317 = vunpack.c.h.b16 %v4182
    %v5318 = vunpack.c.l.b16 %v4183
    %v5319 = vunpack.c.h.b16 %v4183
    %v5320 = vunpack.c.l.b16 %v4184
    %v5321 = vunpack.c.h.b16 %v4184
    %v5322 = vunpack.c.l.b16 %v4185
    %v5323 = vunpack.c.h.b16 %v4185
    %v5324 = vunpack.c.l.b16 %v4186
    %v5325 = vunpack.c.h.b16 %v4186
    %v5326 = vunpack.c.l.b16 %v4187
    %v5327 = vunpack.c.h.b16 %v4187
    %v5328 = vunpack.c.l.b16 %v4188
    %v5329 = vunpack.c.h.b16 %v4188
    %v5330 = vunpack.c.l.b16 %v4189
    %v5331 = vunpack.c.h.b16 %v4189
    %v5332 = vunpack.c.l.b16 %v4190
    %v5333 = vunpack.c.h.b16 %v4190
    %v5334 = vunpack.c.l.b16 %v4191
    %v5335 = vunpack.c.h.b16 %v4191
    %v5336 = vunpack.c.l.b16 %v4192
    %v5337 = vunpack.c.h.b16 %v4192
    %v5338 = vunpack.c.l.b16 %v4193
    %v5339 = vunpack.c.h.b16 %v4193
    %v5340 = vunpack.c.l.b16 %v4194
    %v5341 = vunpack.c.h.b16 %v4194
    %v5342 = vunpack.c.l.b16 %v4195
    %v5343 = vunpack.c.h.b16 %v4195
    %v5344 = vunpack.c.l.b16 %v4196
    %v5345 = vunpack.c.h.b16 %v4196
    %v5346 = vunpack.c.l.b16 %v4197
    %v5347 = vunpack.c.h.b16 %v4197
    %v5348 = vunpack.c.l.b16 %v4198
    %v5349 = vunpack.c.h.b16 %v4198
    %v5350 = vunpack.c.l.b16 %v4199
    %v5351 = vunpack.c.h.b16 %v4199
    %v5352 = vunpack.c.l.b16 %v4200
    %v5353 = vunpack.c.h.b16 %v4200
    %v5354 = vunpack.c.l.b16 %v4201
    %v5355 = vunpack.c.h.b16 %v4201
    %v5356 = vunpack.c.l.b16 %v4202
    %v5357 = vunpack.c.h.b16 %v4202
    %v5358 = vunpack.c.l.b16 %v4203
    %v5359 = vunpack.c.h.b16 %v4203
    %v5360 = vunpack.c.l.b16 %v4204
    %v5361 = vunpack.c.h.b16 %v4204
    %v5362 = vunpack.c.l.b16 %v4205
    %v5363 = vunpack.c.h.b16 %v4205
    %v5364 = vunpack.c.l.b16 %v4206
    %v5365 = vunpack.c.h.b16 %v4206
    %v5366 = vunpack.c.l.b16 %v4207
    %v5367 = vunpack.c.h.b16 %v4207
    %v5368 = vunpack.c.l.b16 %v4208
    %v5369 = vunpack.c.h.b16 %v4208
    %v5370 = vunpack.c.l.b16 %v4209
    %v5371 = vunpack.c.h.b16 %v4209
    %v5372 = vunpack.c.l.b16 %v4210
    %v5373 = vunpack.c.h.b16 %v4210
    %v5374 = vunpack.c.l.b16 %v4211
    %v5375 = vunpack.c.h.b16 %v4211
    %v5376 = vunpack.c.l.b16 %v4212
    %v5377 = vunpack.c.h.b16 %v4212
    %v5378 = vunpack.c.l.b16 %v4213
    %v5379 = vunpack.c.h.b16 %v4213
    %v5380 = vunpack.c.l.b16 %v4214
    %v5381 = vunpack.c.h.b16 %v4214
    %v5382 = vunpack.c.l.b16 %v4215
    %v5383 = vunpack.c.h.b16 %v4215
    %v5384 = vunpack.c.l.b16 %v4216
    %v5385 = vunpack.c.h.b16 %v4216
    %v5386 = vunpack.c.l.b16 %v4217
    %v5387 = vunpack.c.h.b16 %v4217
    %v5388 = vunpack.c.l.b16 %v4218
    %v5389 = vunpack.c.h.b16 %v4218
    %v5390 = vunpack.c.l.b16 %v4219
    %v5391 = vunpack.c.h.b16 %v4219
    %v5392 = vunpack.c.l.b16 %v4220
    %v5393 = vunpack.c.h.b16 %v4220
    %v5394 = vunpack.c.l.b16 %v4221
    %v5395 = vunpack.c.h.b16 %v4221
    %v5396 = vunpack.c.l.b16 %v4222
    %v5397 = vunpack.c.h.b16 %v4222
    %v5398 = vunpack.c.l.b16 %v4223
    %v5399 = vunpack.c.h.b16 %v4223
    %v5400 = vunpack.c.l.b16 %v4224
    %v5401 = vunpack.c.h.b16 %v4224
    %v5402 = vunpack.c.l.b16 %v4225
    %v5403 = vunpack.c.h.b16 %v4225
    %v5404 = vunpack.c.l.b16 %v4226
    %v5405 = vunpack.c.h.b16 %v4226
    %v5406 = vunpack.c.l.b16 %v4227
    %v5407 = vunpack.c.h.b16 %v4227
    %v5408 = vunpack.c.l.b16 %v4228
    %v5409 = vunpack.c.h.b16 %v4228
    %v5410 = vunpack.c.l.b16 %v4229
    %v5411 = vunpack.c.h.b16 %v4229
    %v5412 = vunpack.c.l.b16 %v4230
    %v5413 = vunpack.c.h.b16 %v4230
    %v5414 = vunpack.c.l.b16 %v4231
    %v5415 = vunpack.c.h.b16 %v4231
    %v5416 = vunpack.c.l.b16 %v4232
    %v5417 = vunpack.c.h.b16 %v4232
    %v5418 = vunpack.c.l.b16 %v4233
    %v5419 = vunpack.c.h.b16 %v4233
    %v5420 = vunpack.c.l.b16 %v4234
    %v5421 = vunpack.c.h.b16 %v4234
    %v5422 = vunpack.c.l.b16 %v4235
    %v5423 = vunpack.c.h.b16 %v4235
    %v5424 = vunpack.c.l.b16 %v4236
    %v5425 = vunpack.c.h.b16 %v4236
    %v5426 = vunpack.c.l.b16 %v4237
    %v5427 = vunpack.c.h.b16 %v4237
    %v5428 = vunpack.c.l.b16 %v4238
    %v5429 = vunpack.c.h.b16 %v4238
    %v5430 = vunpack.c.l.b16 %v4239
    %v5431 = vunpack.c.h.b16 %v4239
    %v5432 = vunpack.c.l.b16 %v4240
    %v5433 = vunpack.c.h.b16 %v4240
    %v5434 = vunpack.c.l.b16 %v4241
    %v5435 = vunpack.c.h.b16 %v4241
    %v5436 = vunpack.c.l.b16 %v4242
    %v5437 = vunpack.c.h.b16 %v4242
    %v5438 = vunpack.c.l.b16 %v4243
    %v5439 = vunpack.c.h.b16 %v4243
    %v5440 = vunpack.c.l.b16 %v4244
    %v5441 = vunpack.c.h.b16 %v4244
    %v5442 = vunpack.c.l.b16 %v4245
    %v5443 = vunpack.c.h.b16 %v4245
    %v5444 = vunpack.c.l.b16 %v4246
    %v5445 = vunpack.c.h.b16 %v4246
    %v5446 = vunpack.c.l.b16 %v4247
    %v5447 = vunpack.c.h.b16 %v4247
    %v5448 = vunpack.c.l.b16 %v4248
    %v5449 = vunpack.c.h.b16 %v4248
    %v5450 = vunpack.c.l.b16 %v4249
    %v5451 = vunpack.c.h.b16 %v4249
    %v5452 = vunpack.c.l.b16 %v4250
    %v5453 = vunpack.c.h.b16 %v4250
    %v5454 = vunpack.c.l.b16 %v4251
    %v5455 = vunpack.c.h.b16 %v4251
    %v5456 = vunpack.c.l.b16 %v4252
    %v5457 = vunpack.c.h.b16 %v4252
    %v5458 = vunpack.c.l.b16 %v4253
    %v5459 = vunpack.c.h.b16 %v4253
    %v5460 = vunpack.c.l.b16 %v4254
    %v5461 = vunpack.c.h.b16 %v4254
    %v5462 = vunpack.c.l.b16 %v4255
    %v5463 = vunpack.c.h.b16 %v4255
    %v5464 = vunpack.c.l.b16 %v4256
    %v5465 = vunpack.c.h.b16 %v4256
    %v5466 = vunpack.c.l.b16 %v4257
    %v5467 = vunpack.c.h.b16 %v4257
    %v5468 = vunpack.c.l.b16 %v4258
    %v5469 = vunpack.c.h.b16 %v4258
    %v5470 = vunpack.c.l.b16 %v4259
    %v5471 = vunpack.c.h.b16 %v4259
    %v5472 = vunpack.c.l.b16 %v4260
    %v5473 = vunpack.c.h.b16 %v4260
    %v5474 = vunpack.c.l.b16 %v4261
    %v5475 = vunpack.c.h.b16 %v4261
    %v5476 = vunpack.c.l.b16 %v4262
    %v5477 = vunpack.c.h.b16 %v4262
    %v5478 = vunpack.c.l.b16 %v4263
    %v5479 = vunpack.c.h.b16 %v4263
    %v5480 = vunpack.c.l.b16 %v4264
    %v5481 = vunpack.c.h.b16 %v4264
    %v5482 = vunpack.c.l.b16 %v4265
    %v5483 = vunpack.c.h.b16 %v4265
    %v5484 = vunpack.c.l.b16 %v4266
    %v5485 = vunpack.c.h.b16 %v4266
    %v5486 = vunpack.c.l.b16 %v4267
    %v5487 = vunpack.c.h.b16 %v4267
    %v5488 = vunpack.c.l.b16 %v4268
    %v5489 = vunpack.c.h.b16 %v4268
    %v5490 = vunpack.c.l.b16 %v4269
    %v5491 = vunpack.c.h.b16 %v4269
    %v5492 = vunpack.c.l.b16 %v4270
    %v5493 = vunpack.c.h.b16 %v4270
    %v5494 = vunpack.c.l.b16 %v4271
    %v5495 = vunpack.c.h.b16 %v4271
    %v5496 = vunpack.c.l.b16 %v4272
    %v5497 = vunpack.c.h.b16 %v4272
    %v5498 = vunpack.c.l.b16 %v4273
    %v5499 = vunpack.c.h.b16 %v4273
    %v5500 = vunpack.c.l.b16 %v4274
    %v5501 = vunpack.c.h.b16 %v4274
    %v5502 = vunpack.c.l.b16 %v4275
    %v5503 = vunpack.c.h.b16 %v4275
    %v5504 = vunpack.c.l.b16 %v4276
    %v5505 = vunpack.c.h.b16 %v4276
    %v5506 = vunpack.c.l.b16 %v4277
    %v5507 = vunpack.c.h.b16 %v4277
    %v5508 = vunpack.c.l.b16 %v4278
    %v5509 = vunpack.c.h.b16 %v4278
    %v5510 = vunpack.c.l.b16 %v4279
    %v5511 = vunpack.c.h.b16 %v4279
    %v5512 = vunpack.c.l.b16 %v4280
    %v5513 = vunpack.c.h.b16 %v4280
    %v5514 = vunpack.c.l.b16 %v4281
    %v5515 = vunpack.c.h.b16 %v4281
    %v5516 = vunpack.c.l.b16 %v4282
    %v5517 = vunpack.c.h.b16 %v4282
    %v5518 = vunpack.c.l.b16 %v4283
    %v5519 = vunpack.c.h.b16 %v4283
    %v5520 = vunpack.c.l.b16 %v4284
    %v5521 = vunpack.c.h.b16 %v4284
    %v5522 = vunpack.c.l.b16 %v4285
    %v5523 = vunpack.c.h.b16 %v4285
    %v5524 = vunpack.c.l.b16 %v4286
    %v5525 = vunpack.c.h.b16 %v4286
    %v5526 = vunpack.c.l.b16 %v4287
    %v5527 = vunpack.c.h.b16 %v4287
    %v5528 = vunpack.c.l.b16 %v4288
    %v5529 = vunpack.c.h.b16 %v4288
    %v5530 = vunpack.c.l.b16 %v4289
    %v5531 = vunpack.c.h.b16 %v4289
    %v5532 = vunpack.c.l.b16 %v4290
    %v5533 = vunpack.c.h.b16 %v4290
    %v5534 = vunpack.c.l.b16 %v4291
    %v5535 = vunpack.c.h.b16 %v4291
    %v5536 = vunpack.c.l.b16 %v4292
    %v5537 = vunpack.c.h.b16 %v4292
    %v5538 = vunpack.c.l.b16 %v4293
    %v5539 = vunpack.c.h.b16 %v4293
    %v5540 = vunpack.c.l.b16 %v4294
    %v5541 = vunpack.c.h.b16 %v4294
    %v5542 = vunpack.c.l.b16 %v4295
    %v5543 = vunpack.c.h.b16 %v4295
    %v5544 = vunpack.c.l.b16 %v4296
    %v5545 = vunpack.c.h.b16 %v4296
    %v5546 = vunpack.c.l.b16 %v4297
    %v5547 = vunpack.c.h.b16 %v4297
    %v5548 = vunpack.c.l.b16 %v4298
    %v5549 = vunpack.c.h.b16 %v4298
    %v5550 = vunpack.c.l.b16 %v4299
    %v5551 = vunpack.c.h.b16 %v4299
    %v5552 = vunpack.c.l.b16 %v4300
    %v5553 = vunpack.c.h.b16 %v4300
    %v5554 = vunpack.c.l.b16 %v4301
    %v5555 = vunpack.c.h.b16 %v4301
    %v5556 = vunpack.c.l.b16 %v4302
    %v5557 = vunpack.c.h.b16 %v4302
    %v5558 = vunpack.c.l.b16 %v4303
    %v5559 = vunpack.c.h.b16 %v4303
    %v5560 = vunpack.c.l.b16 %v4304
    %v5561 = vunpack.c.h.b16 %v4304
    %v5562 = vunpack.c.l.b16 %v4305
    %v5563 = vunpack.c.h.b16 %v4305
    %v5564 = vunpack.c.l.b16 %v4306
    %v5565 = vunpack.c.h.b16 %v4306
    %v5566 = vunpack.c.l.b16 %v4307
    %v5567 = vunpack.c.h.b16 %v4307
    %v5568 = vunpack.c.l.b16 %v4308
    %v5569 = vunpack.c.h.b16 %v4308
    %v5570 = vunpack.c.l.b16 %v4309
    %v5571 = vunpack.c.h.b16 %v4309
    %v5572 = vunpack.c.l.b16 %v4310
    %v5573 = vunpack.c.h.b16 %v4310
    %v5574 = vunpack.c.l.b16 %v4311
    %v5575 = vunpack.c.h.b16 %v4311
    %v5576 = vunpack.c.l.b16 %v4312
    %v5577 = vunpack.c.h.b16 %v4312
    %v5578 = vunpack.c.l.b16 %v4313
    %v5579 = vunpack.c.h.b16 %v4313
    %v5580 = vunpack.c.l.b16 %v4314
    %v5581 = vunpack.c.h.b16 %v4314
    %v5582 = vunpack.c.l.b16 %v4315
    %v5583 = vunpack.c.h.b16 %v4315
    %v5584 = vunpack.c.l.b16 %v4316
    %v5585 = vunpack.c.h.b16 %v4316
    %v5586 = vunpack.c.l.b16 %v4317
    %v5587 = vunpack.c.h.b16 %v4317
    %v5588 = vunpack.c.l.b16 %v4318
    %v5589 = vunpack.c.h.b16 %v4318
    %v5590 = vunpack.c.l.b16 %v4319
    %v5591 = vunpack.c.h.b16 %v4319
    %v5592 = vunpack.c.l.b16 %v4320
    %v5593 = vunpack.c.h.b16 %v4320
    %v5594 = vunpack.c.l.b16 %v4321
    %v5595 = vunpack.c.h.b16 %v4321
    %v5596 = vunpack.c.l.b16 %v4322
    %v5597 = vunpack.c.h.b16 %v4322
    %v5598 = vunpack.c.l.b16 %v4323
    %v5599 = vunpack.c.h.b16 %v4323
    %v5600 = vunpack.c.l.b16 %v4324
    %v5601 = vunpack.c.h.b16 %v4324
    %v5602 = vunpack.c.l.b16 %v4325
    %v5603 = vunpack.c.h.b16 %v4325
    %v5604 = vunpack.c.l.b16 %v4326
    %v5605 = vunpack.c.h.b16 %v4326
    %v5606 = vunpack.c.l.b16 %v4327
    %v5607 = vunpack.c.h.b16 %v4327
    %v5608 = vunpack.c.l.b16 %v4328
    %v5609 = vunpack.c.h.b16 %v4328
    %v5610 = vunpack.c.l.b16 %v4329
    %v5611 = vunpack.c.h.b16 %v4329
    %v5612 = vunpack.c.l.b16 %v4330
    %v5613 = vunpack.c.h.b16 %v4330
    %v5614 = vunpack.c.l.b16 %v4331
    %v5615 = vunpack.c.h.b16 %v4331
    %v5616 = vunpack.c.l.b16 %v4332
    %v5617 = vunpack.c.h.b16 %v4332
    %v5618 = vunpack.c.l.b16 %v4333
    %v5619 = vunpack.c.h.b16 %v4333
    %v5620 = vunpack.c.l.b16 %v4334
    %v5621 = vunpack.c.h.b16 %v4334
    %v5622 = vunpack.c.l.b16 %v4335
    %v5623 = vunpack.c.h.b16 %v4335
    %v5624 = vunpack.c.l.b16 %v4336
    %v5625 = vunpack.c.h.b16 %v4336
    %v5626 = vunpack.c.l.b16 %v4337
    %v5627 = vunpack.c.h.b16 %v4337
    %v5628 = vunpack.c.l.b16 %v4338
    %v5629 = vunpack.c.h.b16 %v4338
    %v5630 = vunpack.c.l.b16 %v4339
    %v5631 = vunpack.c.h.b16 %v4339
    %v5632 = vunpack.c.l.b16 %v4340
    %v5633 = vunpack.c.h.b16 %v4340
    %v5634 = vunpack.c.l.b16 %v4341
    %v5635 = vunpack.c.h.b16 %v4341
    %v5636 = vunpack.c.l.b16 %v4342
    %v5637 = vunpack.c.h.b16 %v4342
    %v5638 = vunpack.c.l.b16 %v4343
    %v5639 = vunpack.c.h.b16 %v4343
    %v5640 = vunpack.c.l.b16 %v4344
    %v5641 = vunpack.c.h.b16 %v4344
    %v5642 = vunpack.c.l.b16 %v4345
    %v5643 = vunpack.c.h.b16 %v4345
    %v5644 = vunpack.c.l.b16 %v4346
    %v5645 = vunpack.c.h.b16 %v4346
    %v5646 = vunpack.c.l.b16 %v4347
    %v5647 = vunpack.c.h.b16 %v4347
    %v5648 = vunpack.c.l.b16 %v4348
    %v5649 = vunpack.c.h.b16 %v4348
    %v5650 = vunpack.c.l.b16 %v4349
    %v5651 = vunpack.c.h.b16 %v4349
    %v5652 = vunpack.c.l.b16 %v4350
    %v5653 = vunpack.c.h.b16 %v4350
    %v5654 = vunpack.c.l.b16 %v4351
    %v5655 = vunpack.c.h.b16 %v4351
    %v5656 = vunpack.c.l.b16 %v4352
    %v5657 = vunpack.c.h.b16 %v4352
    %v5658 = vunpack.c.l.b16 %v4353
    %v5659 = vunpack.c.h.b16 %v4353
    %v5660 = vunpack.c.l.b16 %v4354
    %v5661 = vunpack.c.h.b16 %v4354
    %v5662 = vunpack.c.l.b16 %v4355
    %v5663 = vunpack.c.h.b16 %v4355
    %v5664 = vunpack.c.l.b16 %v4356
    %v5665 = vunpack.c.h.b16 %v4356
    %v5666 = vunpack.c.l.b16 %v4357
    %v5667 = vunpack.c.h.b16 %v4357
    %v5668 = vunpack.c.l.b16 %v4358
    %v5669 = vunpack.c.h.b16 %v4358
    %v5670 = vunpack.c.l.b16 %v4359
    %v5671 = vunpack.c.h.b16 %v4359
    %v5672 = vunpack.c.l.b16 %v4360
    %v5673 = vunpack.c.h.b16 %v4360
    %v5674 = vunpack.c.l.b16 %v4361
    %v5675 = vunpack.c.h.b16 %v4361
    %v5676 = vunpack.c.l.b16 %v4362
    %v5677 = vunpack.c.h.b16 %v4362
    %v5678 = vunpack.c.l.b16 %v4363
    %v5679 = vunpack.c.h.b16 %v4363
    %v5680 = vunpack.c.l.b16 %v4364
    %v5681 = vunpack.c.h.b16 %v4364
    %v5682 = vunpack.c.l.b16 %v4365
    %v5683 = vunpack.c.h.b16 %v4365
    %v5684 = vunpack.c.l.b16 %v4366
    %v5685 = vunpack.c.h.b16 %v4366
    %v5686 = vunpack.c.l.b16 %v4367
    %v5687 = vunpack.c.h.b16 %v4367
    %v5688 = vunpack.c.l.b16 %v4368
    %v5689 = vunpack.c.h.b16 %v4368
    %v5690 = vunpack.c.l.b16 %v4369
    %v5691 = vunpack.c.h.b16 %v4369
    %v5692 = vunpack.c.l.b16 %v4370
    %v5693 = vunpack.c.h.b16 %v4370
    %v5694 = vunpack.c.l.b16 %v4371
    %v5695 = vunpack.c.h.b16 %v4371
    %v5696 = vunpack.c.l.b16 %v4372
    %v5697 = vunpack.c.h.b16 %v4372
    %v5698 = vunpack.c.l.b16 %v4373
    %v5699 = vunpack.c.h.b16 %v4373
    %v5700 = vunpack.c.l.b16 %v4374
    %v5701 = vunpack.c.h.b16 %v4374
    %v5702 = vunpack.c.l.b16 %v4375
    %v5703 = vunpack.c.h.b16 %v4375
    %v5704 = vunpack.c.l.b16 %v4376
    %v5705 = vunpack.c.h.b16 %v4376
    %v5706 = vunpack.c.l.b16 %v4377
    %v5707 = vunpack.c.h.b16 %v4377
    %v5708 = vunpack.c.l.b16 %v4378
    %v5709 = vunpack.c.h.b16 %v4378
    %v5710 = vunpack.c.l.b16 %v4379
    %v5711 = vunpack.c.h.b16 %v4379
    %v5712 = vunpack.c.l.b16 %v4380
    %v5713 = vunpack.c.h.b16 %v4380
    %v5714 = vunpack.c.l.b16 %v4381
    %v5715 = vunpack.c.h.b16 %v4381
    %v5716 = vunpack.c.l.b16 %v4382
    %v5717 = vunpack.c.h.b16 %v4382
    %v5718 = vunpack.c.l.b16 %v4383
    %v5719 = vunpack.c.h.b16 %v4383
    %v5720 = vunpack.c.l.b16 %v4384
    %v5721 = vunpack.c.h.b16 %v4384
    %v5722 = vunpack.c.l.b16 %v4385
    %v5723 = vunpack.c.h.b16 %v4385
    %v5724 = vunpack.c.l.b16 %v4386
    %v5725 = vunpack.c.h.b16 %v4386
    %v5726 = vunpack.c.l.b16 %v4387
    %v5727 = vunpack.c.h.b16 %v4387
    %v5728 = vunpack.c.l.b16 %v4388
    %v5729 = vunpack.c.h.b16 %v4388
    %v5730 = vunpack.c.l.b16 %v4389
    %v5731 = vunpack.c.h.b16 %v4389
    %v5732 = vunpack.c.l.b16 %v4390
    %v5733 = vunpack.c.h.b16 %v4390
    %v5734 = vunpack.c.l.b16 %v4391
    %v5735 = vunpack.c.h.b16 %v4391
    %v5736 = vunpack.c.l.b16 %v4392
    %v5737 = vunpack.c.h.b16 %v4392
    %v5738 = vunpack.c.l.b16 %v4393
    %v5739 = vunpack.c.h.b16 %v4393
    %v5740 = vunpack.c.l.b16 %v4394
    %v5741 = vunpack.c.h.b16 %v4394
    %v5742 = vunpack.c.l.b16 %v4395
    %v5743 = vunpack.c.h.b16 %v4395
    %v5744 = vunpack.c.l.b16 %v4396
    %v5745 = vunpack.c.h.b16 %v4396
    %v5746 = vunpack.c.l.b16 %v4397
    %v5747 = vunpack.c.h.b16 %v4397
    %v5748 = vunpack.c.l.b16 %v4398
    %v5749 = vunpack.c.h.b16 %v4398
    %v5750 = vunpack.c.l.b16 %v4399
    %v5751 = vunpack.c.h.b16 %v4399
    %v5752 = vunpack.c.l.b16 %v4400
    %v5753 = vunpack.c.h.b16 %v4400
    %v5754 = vunpack.c.l.b16 %v4401
    %v5755 = vunpack.c.h.b16 %v4401
    %v5756 = vunpack.c.l.b16 %v4402
    %v5757 = vunpack.c.h.b16 %v4402
    %v5758 = vunpack.c.l.b16 %v4403
    %v5759 = vunpack.c.h.b16 %v4403
    %v5760 = vunpack.c.l.b16 %v4404
    %v5761 = vunpack.c.h.b16 %v4404
    %v5762 = vunpack.c.l.b16 %v4405
    %v5763 = vunpack.c.h.b16 %v4405
    %v5764 = vunpack.c.l.b16 %v4406
    %v5765 = vunpack.c.h.b16 %v4406
    %v5766 = vunpack.c.l.b16 %v4407
    %v5767 = vunpack.c.h.b16 %v4407
    %v5768 = vunpack.c.l.b16 %v4408
    %v5769 = vunpack.c.h.b16 %v4408
    %v5770 = vunpack.c.l.b16 %v4409
    %v5771 = vunpack.c.h.b16 %v4409
    %v5772 = vunpack.c.l.b16 %v4410
    %v5773 = vunpack.c.h.b16 %v4410
    %v5774 = vunpack.c.l.b16 %v4411
    %v5775 = vunpack.c.h.b16 %v4411
    %v5776 = vunpack.c.l.b16 %v4412
    %v5777 = vunpack.c.h.b16 %v4412
    %v5778 = vunpack.c.l.b16 %v4413
    %v5779 = vunpack.c.h.b16 %v4413
    %v5780 = vunpack.c.l.b16 %v4414
    %v5781 = vunpack.c.h.b16 %v4414
    %v5782 = vunpack.c.l.b16 %v4415
    %v5783 = vunpack.c.h.b16 %v4415
    %v5784 = vunpack.c.l.b16 %v4416
    %v5785 = vunpack.c.h.b16 %v4416
    %v5786 = vunpack.c.l.b16 %v4417
    %v5787 = vunpack.c.h.b16 %v4417
    %v5788 = vunpack.c.l.b16 %v4418
    %v5789 = vunpack.c.h.b16 %v4418
    %v5790 = vunpack.c.l.b16 %v4419
    %v5791 = vunpack.c.h.b16 %v4419
    %v5792 = vunpack.c.l.b16 %v4420
    %v5793 = vunpack.c.h.b16 %v4420
    %v5794 = vunpack.c.l.b16 %v4421
    %v5795 = vunpack.c.h.b16 %v4421
    %v5796 = vunpack.c.l.b16 %v4422
    %v5797 = vunpack.c.h.b16 %v4422
    %v5798 = vunpack.c.l.b16 %v4423
    %v5799 = vunpack.c.h.b16 %v4423
    %v5800 = vunpack.c.l.b16 %v4424
    %v5801 = vunpack.c.h.b16 %v4424
    %v5802 = vunpack.c.l.b16 %v4425
    %v5803 = vunpack.c.h.b16 %v4425
    %v5804 = vunpack.c.l.b16 %v4426
    %v5805 = vunpack.c.h.b16 %v4426
    %v5806 = vunpack.c.l.b16 %v4427
    %v5807 = vunpack.c.h.b16 %v4427
    %v5808 = vunpack.c.l.b16 %v4428
    %v5809 = vunpack.c.h.b16 %v4428
    %v5810 = vunpack.c.l.b16 %v4429
    %v5811 = vunpack.c.h.b16 %v4429
    %v5812 = vunpack.c.l.b16 %v4430
    %v5813 = vunpack.c.h.b16 %v4430
    %v5814 = vunpack.c.l.b16 %v4431
    %v5815 = vunpack.c.h.b16 %v4431
    %v5816 = vunpack.c.l.b16 %v4432
    %v5817 = vunpack.c.h.b16 %v4432
    %v5818 = vunpack.c.l.b16 %v4433
    %v5819 = vunpack.c.h.b16 %v4433
    %v5820 = vunpack.c.l.b16 %v4434
    %v5821 = vunpack.c.h.b16 %v4434
    %v5822 = vunpack.c.l.b16 %v4435
    %v5823 = vunpack.c.h.b16 %v4435
    %v5824 = vunpack.c.l.b16 %v4436
    %v5825 = vunpack.c.h.b16 %v4436
    %v5826 = vunpack.c.l.b16 %v4437
    %v5827 = vunpack.c.h.b16 %v4437
    %v5828 = vunpack.c.l.b16 %v4438
    %v5829 = vunpack.c.h.b16 %v4438
    %v5830 = vunpack.c.l.b16 %v4439
    %v5831 = vunpack.c.h.b16 %v4439
    %v5832 = vunpack.c.l.b16 %v4440
    %v5833 = vunpack.c.h.b16 %v4440
    %v5834 = vunpack.c.l.b16 %v4441
    %v5835 = vunpack.c.h.b16 %v4441
    %v5836 = vunpack.c.l.b16 %v4442
    %v5837 = vunpack.c.h.b16 %v4442
    %v5838 = vunpack.c.l.b16 %v4443
    %v5839 = vunpack.c.h.b16 %v4443
    %v5840 = vunpack.c.l.b16 %v4444
    %v5841 = vunpack.c.h.b16 %v4444
    %v5842 = vunpack.c.l.b16 %v4445
    %v5843 = vunpack.c.h.b16 %v4445
    %v5844 = vunpack.c.l.b16 %v4446
    %v5845 = vunpack.c.h.b16 %v4446
    %v5846 = vunpack.c.l.b16 %v4447
    %v5847 = vunpack.c.h.b16 %v4447
    %v5848 = vunpack.c.l.b16 %v4448
    %v5849 = vunpack.c.h.b16 %v4448
    %v5850 = vunpack.c.l.b16 %v4449
    %v5851 = vunpack.c.h.b16 %v4449
    %v5852 = vunpack.c.l.b16 %v4450
    %v5853 = vunpack.c.h.b16 %v4450
    %v5854 = vunpack.c.l.b16 %v4451
    %v5855 = vunpack.c.h.b16 %v4451
    %v5856 = vunpack.c.l.b16 %v4452
    %v5857 = vunpack.c.h.b16 %v4452
    %v5858 = vunpack.c.l.b16 %v4453
    %v5859 = vunpack.c.h.b16 %v4453
    %v5860 = vunpack.c.l.b16 %v4454
    %v5861 = vunpack.c.h.b16 %v4454
    %v5862 = vunpack.c.l.b16 %v4455
    %v5863 = vunpack.c.h.b16 %v4455
    %v5864 = vunpack.c.l.b16 %v4456
    %v5865 = vunpack.c.h.b16 %v4456
    %v5866 = vunpack.c.l.b16 %v4457
    %v5867 = vunpack.c.h.b16 %v4457
    %v5868 = vunpack.c.l.b16 %v4458
    %v5869 = vunpack.c.h.b16 %v4458
    %v5870 = vunpack.c.l.b16 %v4459
    %v5871 = vunpack.c.h.b16 %v4459
    %v5872 = vunpack.c.l.b16 %v4460
    %v5873 = vunpack.c.h.b16 %v4460
    %v5874 = vunpack.c.l.b16 %v4461
    %v5875 = vunpack.c.h.b16 %v4461
    %v5876 = vunpack.c.l.b16 %v4462
    %v5877 = vunpack.c.h.b16 %v4462
    %v5878 = vunpack.c.l.b16 %v4463
    %v5879 = vunpack.c.h.b16 %v4463
    %v5880 = vunpack.c.l.b16 %v4464
    %v5881 = vunpack.c.h.b16 %v4464
    %v5882 = vunpack.c.l.b16 %v4465
    %v5883 = vunpack.c.h.b16 %v4465
    %v5884 = vunpack.c.l.b16 %v4466
    %v5885 = vunpack.c.h.b16 %v4466
    %v5886 = vunpack.c.l.b16 %v4467
    %v5887 = vunpack.c.h.b16 %v4467
    %v5888 = vunpack.c.l.b16 %v4468
    %v5889 = vunpack.c.h.b16 %v4468
    %v5890 = vunpack.c.l.b16 %v4469
    %v5891 = vunpack.c.h.b16 %v4469
    %v5892 = vunpack.c.l.b16 %v4470
    %v5893 = vunpack.c.h.b16 %v4470
    %v5894 = vunpack.c.l.b16 %v4471
    %v5895 = vunpack.c.h.b16 %v4471
    %v5896 = vunpack.c.l.b16 %v4472
    %v5897 = vunpack.c.h.b16 %v4472
    %v5898 = vunpack.c.l.b16 %v4473
    %v5899 = vunpack.c.h.b16 %v4473
    %v5900 = vunpack.c.l.b16 %v4474
    %v5901 = vunpack.c.h.b16 %v4474
    %v5902 = vunpack.c.l.b16 %v4475
    %v5903 = vunpack.c.h.b16 %v4475
    %v5904 = vunpack.c.l.b16 %v4476
    %v5905 = vunpack.c.h.b16 %v4476
    %v5906 = vunpack.c.l.b16 %v4477
    %v5907 = vunpack.c.h.b16 %v4477
    %v5908 = vunpack.c.l.b16 %v4478
    %v5909 = vunpack.c.h.b16 %v4478
    %v5910 = vunpack.c.l.b16 %v4479
    %v5911 = vunpack.c.h.b16 %v4479
    %v5912 = vunpack.c.l.b16 %v4480
    %v5913 = vunpack.c.h.b16 %v4480
    %v5914 = vunpack.c.l.b16 %v4481
    %v5915 = vunpack.c.h.b16 %v4481
    %v5916 = vunpack.c.l.b16 %v4482
    %v5917 = vunpack.c.h.b16 %v4482
    %v5918 = vunpack.c.l.b16 %v4483
    %v5919 = vunpack.c.h.b16 %v4483
    %v5920 = vunpack.c.l.b16 %v4484
    %v5921 = vunpack.c.h.b16 %v4484
    %v5922 = vunpack.c.l.b16 %v4485
    %v5923 = vunpack.c.h.b16 %v4485
    %v5924 = vunpack.c.l.b16 %v4486
    %v5925 = vunpack.c.h.b16 %v4486
    %v5926 = vunpack.c.l.b16 %v4487
    %v5927 = vunpack.c.h.b16 %v4487
    %v5928 = vunpack.c.l.b16 %v4488
    %v5929 = vunpack.c.h.b16 %v4488
    %v5930 = vunpack.c.l.b16 %v4489
    %v5931 = vunpack.c.h.b16 %v4489
    %v5932 = vunpack.c.l.b16 %v4490
    %v5933 = vunpack.c.h.b16 %v4490
    %v5934 = vunpack.c.l.b16 %v4491
    %v5935 = vunpack.c.h.b16 %v4491
    %v5936 = vunpack.c.l.b16 %v4492
    %v5937 = vunpack.c.h.b16 %v4492
    %v5938 = vunpack.c.l.b16 %v4493
    %v5939 = vunpack.c.h.b16 %v4493
    %v5940 = vunpack.c.l.b16 %v4494
    %v5941 = vunpack.c.h.b16 %v4494
    %v5942 = vunpack.c.l.b16 %v4495
    %v5943 = vunpack.c.h.b16 %v4495
    %v5944 = vunpack.c.l.b16 %v4496
    %v5945 = vunpack.c.h.b16 %v4496
    %v5946 = vunpack.c.l.b16 %v4497
    %v5947 = vunpack.c.h.b16 %v4497
    %v5948 = vunpack.c.l.b16 %v4498
    %v5949 = vunpack.c.h.b16 %v4498
    %v5950 = vunpack.c.l.b16 %v4499
    %v5951 = vunpack.c.h.b16 %v4499
    %v5952 = vunpack.c.l.b16 %v4500
    %v5953 = vunpack.c.h.b16 %v4500
    %v5954 = vunpack.c.l.b16 %v4501
    %v5955 = vunpack.c.h.b16 %v4501
    %v5956 = vunpack.c.l.b16 %v4502
    %v5957 = vunpack.c.h.b16 %v4502
    %v5958 = vunpack.c.l.b16 %v4503
    %v5959 = vunpack.c.h.b16 %v4503
    %v5960 = vunpack.c.l.b16 %v4504
    %v5961 = vunpack.c.h.b16 %v4504
    %v5962 = vunpack.c.l.b16 %v4505
    %v5963 = vunpack.c.h.b16 %v4505
    %v5964 = vunpack.c.l.b16 %v4506
    %v5965 = vunpack.c.h.b16 %v4506
    %v5966 = vunpack.c.l.b16 %v4507
    %v5967 = vunpack.c.h.b16 %v4507
    %v5968 = vunpack.c.l.b16 %v4508
    %v5969 = vunpack.c.h.b16 %v4508
    %v5970 = vunpack.c.l.b16 %v4509
    %v5971 = vunpack.c.h.b16 %v4509
    %v5972 = vunpack.c.l.b16 %v4510
    %v5973 = vunpack.c.h.b16 %v4510
    %v5974 = vunpack.c.l.b16 %v4511
    %v5975 = vunpack.c.h.b16 %v4511
    %v5976 = vunpack.c.l.b16 %v4512
    %v5977 = vunpack.c.h.b16 %v4512
    %v5978 = vunpack.c.l.b16 %v4513
    %v5979 = vunpack.c.h.b16 %v4513
    %v5980 = vunpack.c.l.b16 %v4514
    %v5981 = vunpack.c.h.b16 %v4514
    %v5982 = vunpack.c.l.b16 %v4515
    %v5983 = vunpack.c.h.b16 %v4515
    %v5984 = vunpack.c.l.b16 %v4516
    %v5985 = vunpack.c.h.b16 %v4516
    %v5986 = vunpack.c.l.b16 %v4517
    %v5987 = vunpack.c.h.b16 %v4517
    %v5988 = vunpack.c.l.b16 %v4518
    %v5989 = vunpack.c.h.b16 %v4518
    %v5990 = vunpack.c.l.b16 %v4519
    %v5991 = vunpack.c.h.b16 %v4519
    %v5992 = vunpack.c.l.b16 %v4520
    %v5993 = vunpack.c.h.b16 %v4520
    %v5994 = vunpack.c.l.b16 %v4521
    %v5995 = vunpack.c.h.b16 %v4521
    %v5996 = vunpack.c.l.b16 %v4522
    %v5997 = vunpack.c.h.b16 %v4522
    %v5998 = vunpack.c.l.b16 %v4523
    %v5999 = vunpack.c.h.b16 %v4523
    %v6000 = vunpack.c.l.b16 %v4524
    %v6001 = vunpack.c.h.b16 %v4524
    %v6002 = vunpack.c.l.b16 %v4525
    %v6003 = vunpack.c.h.b16 %v4525
    %v6004 = vunpack.c.l.b16 %v4526
    %v6005 = vunpack.c.h.b16 %v4526
    %v6006 = vunpack.c.l.b16 %v4527
    %v6007 = vunpack.c.h.b16 %v4527
    %v6008 = vunpack.c.l.b16 %v4528
    %v6009 = vunpack.c.h.b16 %v4528
    %v6010 = vunpack.c.l.b16 %v4529
    %v6011 = vunpack.c.h.b16 %v4529
    %v6012 = vunpack.c.l.b16 %v4530
    %v6013 = vunpack.c.h.b16 %v4530
    %v6014 = vunpack.c.l.b16 %v4531
    %v6015 = vunpack.c.h.b16 %v4531
    %v6016 = vunpack.c.l.b16 %v4532
    %v6017 = vunpack.c.h.b16 %v4532
    %v6018 = vunpack.c.l.b16 %v4533
    %v6019 = vunpack.c.h.b16 %v4533
    %v6020 = vunpack.c.l.b16 %v4534
    %v6021 = vunpack.c.h.b16 %v4534
    %v6022 = vunpack.c.l.b16 %v4535
    %v6023 = vunpack.c.h.b16 %v4535
    %v6024 = vunpack.c.l.b16 %v4536
    %v6025 = vunpack.c.h.b16 %v4536
    %v6026 = vunpack.c.l.b16 %v4537
    %v6027 = vunpack.c.h.b16 %v4537
    %v6028 = vunpack.c.l.b16 %v4538
    %v6029 = vunpack.c.h.b16 %v4538
    %v6030 = vunpack.c.l.b16 %v4539
    %v6031 = vunpack.c.h.b16 %v4539
    %v6032 = vunpack.c.l.b16 %v4540
    %v6033 = vunpack.c.h.b16 %v4540
    %v6034 = vunpack.c.l.b16 %v4541
    %v6035 = vunpack.c.h.b16 %v4541
    %v6036 = vunpack.c.l.b16 %v4542
    %v6037 = vunpack.c.h.b16 %v4542
    %v6038 = vunpack.c.l.b16 %v4543
    %v6039 = vunpack.c.h.b16 %v4543
    %v6040 = vunpack.c.l.b16 %v4544
    %v6041 = vunpack.c.h.b16 %v4544
    %v6042 = vunpack.c.l.b16 %v4545
    %v6043 = vunpack.c.h.b16 %v4545
    %v6044 = vunpack.c.l.b16 %v4546
    %v6045 = vunpack.c.h.b16 %v4546
    %v6046 = vunpack.c.l.b16 %v4547
    %v6047 = vunpack.c.h.b16 %v4547
    %v6048 = vunpack.c.l.b16 %v4548
    %v6049 = vunpack.c.h.b16 %v4548
    %v6050 = vunpack.c.l.b16 %v4549
    %v6051 = vunpack.c.h.b16 %v4549
    %v6052 = vunpack.c.l.b16 %v4550
    %v6053 = vunpack.c.h.b16 %v4550
    %v6054 = vunpack.c.l.b16 %v4551
    %v6055 = vunpack.c.h.b16 %v4551
    %v6056 = vunpack.c.l.b16 %v4552
    %v6057 = vunpack.c.h.b16 %v4552
    %v6058 = vunpack.c.l.b16 %v4553
    %v6059 = vunpack.c.h.b16 %v4553
    %v6060 = vunpack.c.l.b16 %v4554
    %v6061 = vunpack.c.h.b16 %v4554
    %v6062 = vunpack.c.l.b16 %v4555
    %v6063 = vunpack.c.h.b16 %v4555
    %v6064 = vunpack.c.l.b16 %v4556
    %v6065 = vunpack.c.h.b16 %v4556
    %v6066 = vunpack.c.l.b16 %v4557
    %v6067 = vunpack.c.h.b16 %v4557
    %v6068 = vunpack.c.l.b16 %v4558
    %v6069 = vunpack.c.h.b16 %v4558
    %v6070 = vunpack.c.l.b16 %v4559
    %v6071 = vunpack.c.h.b16 %v4559
    %v6072 = vunpack.c.l.b16 %v4560
    %v6073 = vunpack.c.h.b16 %v4560
    %v6074 = vunpack.c.l.b16 %v4561
    %v6075 = vunpack.c.h.b16 %v4561
    %v6076 = vunpack.c.l.b16 %v4562
    %v6077 = vunpack.c.h.b16 %v4562
    %v6078 = vunpack.c.l.b16 %v4563
    %v6079 = vunpack.c.h.b16 %v4563
    %v6080 = vunpack.c.l.b16 %v4564
    %v6081 = vunpack.c.h.b16 %v4564
    %v6082 = vunpack.c.l.b16 %v4565
    %v6083 = vunpack.c.h.b16 %v4565
    %v6084 = vunpack.c.l.b16 %v4566
    %v6085 = vunpack.c.h.b16 %v4566
    %v6086 = vunpack.c.l.b16 %v4567
    %v6087 = vunpack.c.h.b16 %v4567
    %v6088 = vunpack.c.l.b16 %v4568
    %v6089 = vunpack.c.h.b16 %v4568
    %v6090 = vunpack.c.l.b16 %v4569
    %v6091 = vunpack.c.h.b16 %v4569
    %v6092 = vunpack.c.l.b16 %v4570
    %v6093 = vunpack.c.h.b16 %v4570
    %v6094 = vunpack.c.l.b16 %v4571
    %v6095 = vunpack.c.h.b16 %v4571
    %v6096 = vunpack.c.l.b16 %v4572
    %v6097 = vunpack.c.h.b16 %v4572
    %v6098 = vunpack.c.l.b16 %v4573
    %v6099 = vunpack.c.h.b16 %v4573
    %v6100 = vunpack.c.l.b16 %v4574
    %v6101 = vunpack.c.h.b16 %v4574
    %v6102 = vunpack.c.l.b16 %v4575
    %v6103 = vunpack.c.h.b16 %v4575
    %v6104 = vunpack.c.l.b16 %v4576
    %v6105 = vunpack.c.h.b16 %v4576
    %v6106 = vunpack.c.l.b16 %v4577
    %v6107 = vunpack.c.h.b16 %v4577
    %v6108 = vunpack.c.l.b16 %v4578
    %v6109 = vunpack.c.h.b16 %v4578
    %v6110 = vunpack.c.l.b16 %v4579
    %v6111 = vunpack.c.h.b16 %v4579
    %v6112 = vunpack.c.l.b16 %v4580
    %v6113 = vunpack.c.h.b16 %v4580
    %v6114 = vunpack.c.l.b16 %v4581
    %v6115 = vunpack.c.h.b16 %v4581
    %v6116 = vunpack.c.l.b16 %v4582
    %v6117 = vunpack.c.h.b16 %v4582
    %v6118 = vunpack.c.l.b16 %v4583
    %v6119 = vunpack.c.h.b16 %v4583
    %v6120 = vunpack.c.l.b16 %v4584
    %v6121 = vunpack.c.h.b16 %v4584
    %v6122 = vunpack.c.l.b16 %v4585
    %v6123 = vunpack.c.h.b16 %v4585
    %v6124 = vunpack.c.l.b16 %v4586
    %v6125 = vunpack.c.h.b16 %v4586
    %v6126 = vunpack.c.l.b16 %v4587
    %v6127 = vunpack.c.h.b16 %v4587
    %v6128 = vunpack.c.l.b16 %v4588
    %v6129 = vunpack.c.h.b16 %v4588
    %v6130 = vunpack.c.l.b16 %v4589
    %v6131 = vunpack.c.h.b16 %v4589
    %v6132 = vunpack.c.l.b16 %v4590
    %v6133 = vunpack.c.h.b16 %v4590
    %v6134 = vunpack.c.l.b16 %v4591
    %v6135 = vunpack.c.h.b16 %v4591
    %v6136 = vunpack.c.l.b16 %v4592
    %v6137 = vunpack.c.h.b16 %v4592
    %v6138 = vunpack.c.l.b16 %v4593
    %v6139 = vunpack.c.h.b16 %v4593
    %v6140 = vunpack.c.l.b16 %v4594
    %v6141 = vunpack.c.h.b16 %v4594
    %v6142 = vunpack.c.l.b16 %v4595
    %v6143 = vunpack.c.h.b16 %v4595
    %v6144 = vunpack.c.l.b16 %v4596
    %v6145 = vunpack.c.h.b16 %v4596
    %v6146 = vunpack.c.l.b16 %v4597
    %v6147 = vunpack.c.h.b16 %v4597
    %v6148 = vunpack.c.l.b16 %v4598
    %v6149 = vunpack.c.h.b16 %v4598
    %v6150 = vunpack.c.l.b16 %v4599
    %v6151 = vunpack.c.h.b16 %v4599
    %v6152 = vunpack.c.l.b16 %v4600
    %v6153 = vunpack.c.h.b16 %v4600
    %v6154 = vunpack.c.l.b16 %v4601
    %v6155 = vunpack.c.h.b16 %v4601
    %v6156 = vpack.c.b16 %v5140, %v5132
    %v6157 = vpack.c.b16 %v5141, %v5133
    %v6158 = vpack.c.b16 %v5142, %v5134
    %v6159 = vpack.c.b16 %v5143, %v5135
    %v6160 = vpack.c.b16 %v5144, %v5136
    %v6161 = vpack.c.b16 %v5145, %v5137
    %v6162 = vpack.c.b16 %v5146, %v5138
    %v6163 = vpack.c.b16 %v5147, %v5139
    %v6164 = vpack.c.b16 %v5156, %v5148
    %v6165 = vpack.c.b16 %v5157, %v5149
    %v6166 = vpack.c.b16 %v5158, %v5150
    %v6167 = vpack.c.b16 %v5159, %v5151
    %v6168 = vpack.c.b16 %v5160, %v5152
    %v6169 = vpack.c.b16 %v5161, %v5153
    %v6170 = vpack.c.b16 %v5162, %v5154
    %v6171 = vpack.c.b16 %v5163, %v5155
    %v6172 = vpack.c.b16 %v5172, %v5164
    %v6173 = vpack.c.b16 %v5173, %v5165
    %v6174 = vpack.c.b16 %v5174, %v5166
    %v6175 = vpack.c.b16 %v5175, %v5167
    %v6176 = vpack.c.b16 %v5176, %v5168
    %v6177 = vpack.c.b16 %v5177, %v5169
    %v6178 = vpack.c.b16 %v5178, %v5170
    %v6179 = vpack.c.b16 %v5179, %v5171
    %v6180 = vpack.c.b16 %v5188, %v5180
    %v6181 = vpack.c.b16 %v5189, %v5181
    %v6182 = vpack.c.b16 %v5190, %v5182
    %v6183 = vpack.c.b16 %v5191, %v5183
    %v6184 = vpack.c.b16 %v5192, %v5184
    %v6185 = vpack.c.b16 %v5193, %v5185
    %v6186 = vpack.c.b16 %v5194, %v5186
    %v6187 = vpack.c.b16 %v5195, %v5187
    %v6188 = vpack.c.b16 %v5204, %v5196
    %v6189 = vpack.c.b16 %v5205, %v5197
    %v6190 = vpack.c.b16 %v5206, %v5198
    %v6191 = vpack.c.b16 %v5207, %v5199
    %v6192 = vpack.c.b16 %v5208, %v5200
    %v6193 = vpack.c.b16 %v5209, %v5201
    %v6194 = vpack.c.b16 %v5210, %v5202
    %v6195 = vpack.c.b16 %v5211, %v5203
    %v6196 = vpack.c.b16 %v5220, %v5212
    %v6197 = vpack.c.b16 %v5221, %v5213
    %v6198 = vpack.c.b16 %v5222, %v5214
    %v6199 = vpack.c.b16 %v5223, %v5215
    %v6200 = vpack.c.b16 %v5224, %v5216
    %v6201 = vpack.c.b16 %v5225, %v5217
    %v6202 = vpack.c.b16 %v5226, %v5218
    %v6203 = vpack.c.b16 %v5227, %v5219
    %v6204 = vpack.c.b16 %v5236, %v5228
    %v6205 = vpack.c.b16 %v5237, %v5229
    %v6206 = vpack.c.b16 %v5238, %v5230
    %v6207 = vpack.c.b16 %v5239, %v5231
    %v6208 = vpack.c.b16 %v5240, %v5232
    %v6209 = vpack.c.b16 %v5241, %v5233
    %v6210 = vpack.c.b16 %v5242, %v5234
    %v6211 = vpack.c.b16 %v5243, %v5235
    %v6212 = vpack.c.b16 %v5252, %v5244
    %v6213 = vpack.c.b16 %v5253, %v5245
    %v6214 = vpack.c.b16 %v5254, %v5246
    %v6215 = vpack.c.b16 %v5255, %v5247
    %v6216 = vpack.c.b16 %v5256, %v5248
    %v6217 = vpack.c.b16 %v5257, %v5249
    %v6218 = vpack.c.b16 %v5258, %v5250
    %v6219 = vpack.c.b16 %v5259, %v5251
    %v6220 = vpack.c.b16 %v5268, %v5260
    %v6221 = vpack.c.b16 %v5269, %v5261
    %v6222 = vpack.c.b16 %v5270, %v5262
    %v6223 = vpack.c.b16 %v5271, %v5263
    %v6224 = vpack.c.b16 %v5272, %v5264
    %v6225 = vpack.c.b16 %v5273, %v5265
    %v6226 = vpack.c.b16 %v5274, %v5266
    %v6227 = vpack.c.b16 %v5275, %v5267
    %v6228 = vpack.c.b16 %v5284, %v5276
    %v6229 = vpack.c.b16 %v5285, %v5277
    %v6230 = vpack.c.b16 %v5286, %v5278
    %v6231 = vpack.c.b16 %v5287, %v5279
    %v6232 = vpack.c.b16 %v5288, %v5280
    %v6233 = vpack.c.b16 %v5289, %v5281
    %v6234 = vpack.c.b16 %v5290, %v5282
    %v6235 = vpack.c.b16 %v5291, %v5283
    %v6236 = vpack.c.b16 %v5300, %v5292
    %v6237 = vpack.c.b16 %v5301, %v5293
    %v6238 = vpack.c.b16 %v5302, %v5294
    %v6239 = vpack.c.b16 %v5303, %v5295
    %v6240 = vpack.c.b16 %v5304, %v5296
    %v6241 = vpack.c.b16 %v5305, %v5297
    %v6242 = vpack.c.b16 %v5306, %v5298
    %v6243 = vpack.c.b16 %v5307, %v5299
    %v6244 = vpack.c.b16 %v5316, %v5308
    %v6245 = vpack.c.b16 %v5317, %v5309
    %v6246 = vpack.c.b16 %v5318, %v5310
    %v6247 = vpack.c.b16 %v5319, %v5311
    %v6248 = vpack.c.b16 %v5320, %v5312
    %v6249 = vpack.c.b16 %v5321, %v5313
    %v6250 = vpack.c.b16 %v5322, %v5314
    %v6251 = vpack.c.b16 %v5323, %v5315
    %v6252 = vpack.c.b16 %v5332, %v5324
    %v6253 = vpack.c.b16 %v5333, %v5325
    %v6254 = vpack.c.b16 %v5334, %v5326
    %v6255 = vpack.c.b16 %v5335, %v5327
    %v6256 = vpack.c.b16 %v5336, %v5328
    %v6257 = vpack.c.b16 %v5337, %v5329
    %v6258 = vpack.c.b16 %v5338, %v5330
    %v6259 = vpack.c.b16 %v5339, %v5331
    %v6260 = vpack.c.b16 %v5348, %v5340
    %v6261 = vpack.c.b16 %v5349, %v5341
    %v6262 = vpack.c.b16 %v5350, %v5342
    %v6263 = vpack.c.b16 %v5351, %v5343
    %v6264 = vpack.c.b16 %v5352, %v5344
    %v6265 = vpack.c.b16 %v5353, %v5345
    %v6266 = vpack.c.b16 %v5354, %v5346
    %v6267 = vpack.c.b16 %v5355, %v5347
    %v6268 = vpack.c.b16 %v5364, %v5356
    %v6269 = vpack.c.b16 %v5365, %v5357
    %v6270 = vpack.c.b16 %v5366, %v5358
    %v6271 = vpack.c.b16 %v5367, %v5359
    %v6272 = vpack.c.b16 %v5368, %v5360
    %v6273 = vpack.c.b16 %v5369, %v5361
    %v6274 = vpack.c.b16 %v5370, %v5362
    %v6275 = vpack.c.b16 %v5371, %v5363
    %v6276 = vpack.c.b16 %v5380, %v5372
    %v6277 = vpack.c.b16 %v5381, %v5373
    %v6278 = vpack.c.b16 %v5382, %v5374
    %v6279 = vpack.c.b16 %v5383, %v5375
    %v6280 = vpack.c.b16 %v5384, %v5376
    %v6281 = vpack.c.b16 %v5385, %v5377
    %v6282 = vpack.c.b16 %v5386, %v5378
    %v6283 = vpack.c.b16 %v5387, %v5379
    %v6284 = vpack.c.b16 %v5396, %v5388
    %v6285 = vpack.c.b16 %v5397, %v5389
    %v6286 = vpack.c.b16 %v5398, %v5390
    %v6287 = vpack.c.b16 %v5399, %v5391
    %v6288 = vpack.c.b16 %v5400, %v5392
    %v6289 = vpack.c.b16 %v5401, %v5393
    %v6290 = vpack.c.b16 %v5402, %v5394
    %v6291 = vpack.c.b16 %v5403, %v5395
    %v6292 = vpack.c.b16 %v5412, %v5404
    %v6293 = vpack.c.b16 %v5413, %v5405
    %v6294 = vpack.c.b16 %v5414, %v5406
    %v6295 = vpack.c.b16 %v5415, %v5407
    %v6296 = vpack.c.b16 %v5416, %v5408
    %v6297 = vpack.c.b16 %v5417, %v5409
    %v6298 = vpack.c.b16 %v5418, %v5410
    %v6299 = vpack.c.b16 %v5419, %v5411
    %v6300 = vpack.c.b16 %v5428, %v5420
    %v6301 = vpack.c.b16 %v5429, %v5421
    %v6302 = vpack.c.b16 %v5430, %v5422
    %v6303 = vpack.c.b16 %v5431, %v5423
    %v6304 = vpack.c.b16 %v5432, %v5424
    %v6305 = vpack.c.b16 %v5433, %v5425
    %v6306 = vpack.c.b16 %v5434, %v5426
    %v6307 = vpack.c.b16 %v5435, %v5427
    %v6308 = vpack.c.b16 %v5444, %v5436
    %v6309 = vpack.c.b16 %v5445, %v5437
    %v6310 = vpack.c.b16 %v5446, %v5438
    %v6311 = vpack.c.b16 %v5447, %v5439
    %v6312 = vpack.c.b16 %v5448, %v5440
    %v6313 = vpack.c.b16 %v5449, %v5441
    %v6314 = vpack.c.b16 %v5450, %v5442
    %v6315 = vpack.c.b16 %v5451, %v5443
    %v6316 = vpack.c.b16 %v5460, %v5452
    %v6317 = vpack.c.b16 %v5461, %v5453
    %v6318 = vpack.c.b16 %v5462, %v5454
    %v6319 = vpack.c.b16 %v5463, %v5455
    %v6320 = vpack.c.b16 %v5464, %v5456
    %v6321 = vpack.c.b16 %v5465, %v5457
    %v6322 = vpack.c.b16 %v5466, %v5458
    %v6323 = vpack.c.b16 %v5467, %v5459
    %v6324 = vpack.c.b16 %v5476, %v5468
    %v6325 = vpack.c.b16 %v5477, %v5469
    %v6326 = vpack.c.b16 %v5478, %v5470
    %v6327 = vpack.c.b16 %v5479, %v5471
    %v6328 = vpack.c.b16 %v5480, %v5472
    %v6329 = vpack.c.b16 %v5481, %v5473
    %v6330 = vpack.c.b16 %v5482, %v5474
    %v6331 = vpack.c.b16 %v5483, %v5475
    %v6332 = vpack.c.b16 %v5492, %v5484
    %v6333 = vpack.c.b16 %v5493, %v5485
    %v6334 = vpack.c.b16 %v5494, %v5486
    %v6335 = vpack.c.b16 %v5495, %v5487
    %v6336 = vpack.c.b16 %v5496, %v5488
    %v6337 = vpack.c.b16 %v5497, %v5489
    %v6338 = vpack.c.b16 %v5498, %v5490
    %v6339 = vpack.c.b16 %v5499, %v5491
    %v6340 = vpack.c.b16 %v5508, %v5500
    %v6341 = vpack.c.b16 %v5509, %v5501
    %v6342 = vpack.c.b16 %v5510, %v5502
    %v6343 = vpack.c.b16 %v5511, %v5503
    %v6344 = vpack.c.b16 %v5512, %v5504
    %v6345 = vpack.c.b16 %v5513, %v5505
    %v6346 = vpack.c.b16 %v5514, %v5506
    %v6347 = vpack.c.b16 %v5515, %v5507
    %v6348 = vpack.c.b16 %v5524, %v5516
    %v6349 = vpack.c.b16 %v5525, %v5517
    %v6350 = vpack.c.b16 %v5526, %v5518
    %v6351 = vpack.c.b16 %v5527, %v5519
    %v6352 = vpack.c.b16 %v5528, %v5520
    %v6353 = vpack.c.b16 %v5529, %v5521
    %v6354 = vpack.c.b16 %v5530, %v5522
    %v6355 = vpack.c.b16 %v5531, %v5523
    %v6356 = vpack.c.b16 %v5540, %v5532
    %v6357 = vpack.c.b16 %v5541, %v5533
    %v6358 = vpack.c.b16 %v5542, %v5534
    %v6359 = vpack.c.b16 %v5543, %v5535
    %v6360 = vpack.c.b16 %v5544, %v5536
    %v6361 = vpack.c.b16 %v5545, %v5537
    %v6362 = vpack.c.b16 %v5546, %v5538
    %v6363 = vpack.c.b16 %v5547, %v5539
    %v6364 = vpack.c.b16 %v5556, %v5548
    %v6365 = vpack.c.b16 %v5557, %v5549
    %v6366 = vpack.c.b16 %v5558, %v5550
    %v6367 = vpack.c.b16 %v5559, %v5551
    %v6368 = vpack.c.b16 %v5560, %v5552
    %v6369 = vpack.c.b16 %v5561, %v5553
    %v6370 = vpack.c.b16 %v5562, %v5554
    %v6371 = vpack.c.b16 %v5563, %v5555
    %v6372 = vpack.c.b16 %v5572, %v5564
    %v6373 = vpack.c.b16 %v5573, %v5565
    %v6374 = vpack.c.b16 %v5574, %v5566
    %v6375 = vpack.c.b16 %v5575, %v5567
    %v6376 = vpack.c.b16 %v5576, %v5568
    %v6377 = vpack.c.b16 %v5577, %v5569
    %v6378 = vpack.c.b16 %v5578, %v5570
    %v6379 = vpack.c.b16 %v5579, %v5571
    %v6380 = vpack.c.b16 %v5588, %v5580
    %v6381 = vpack.c.b16 %v5589, %v5581
    %v6382 = vpack.c.b16 %v5590, %v5582
    %v6383 = vpack.c.b16 %v5591, %v5583
    %v6384 = vpack.c.b16 %v5592, %v5584
    %v6385 = vpack.c.b16 %v5593, %v5585
    %v6386 = vpack.c.b16 %v5594, %v5586
    %v6387 = vpack.c.b16 %v5595, %v5587
    %v6388 = vpack.c.b16 %v5604, %v5596
    %v6389 = vpack.c.b16 %v5605, %v5597
    %v6390 = vpack.c.b16 %v5606, %v5598
    %v6391 = vpack.c.b16 %v5607, %v5599
    %v6392 = vpack.c.b16 %v5608, %v5600
    %v6393 = vpack.c.b16 %v5609, %v5601
    %v6394 = vpack.c.b16 %v5610, %v5602
    %v6395 = vpack.c.b16 %v5611, %v5603
    %v6396 = vpack.c.b16 %v5620, %v5612
    %v6397 = vpack.c.b16 %v5621, %v5613
    %v6398 = vpack.c.b16 %v5622, %v5614
    %v6399 = vpack.c.b16 %v5623, %v5615
    %v6400 = vpack.c.b16 %v5624, %v5616
    %v6401 = vpack.c.b16 %v5625, %v5617
    %v6402 = vpack.c.b16 %v5626, %v5618
    %v6403 = vpack.c.b16 %v5627, %v5619
    %v6404 = vpack.c.b16 %v5636, %v5628
    %v6405 = vpack.c.b16 %v5637, %v5629
    %v6406 = vpack.c.b16 %v5638, %v5630
    %v6407 = vpack.c.b16 %v5639, %v5631
    %v6408 = vpack.c.b16 %v5640, %v5632
    %v6409 = vpack.c.b16 %v5641, %v5633
    %v6410 = vpack.c.b16 %v5642, %v5634
    %v6411 = vpack.c.b16 %v5643, %v5635
    %v6412 = vpack.c.b16 %v5652, %v5644
    %v6413 = vpack.c.b16 %v5653, %v5645
    %v6414 = vpack.c.b16 %v5654, %v5646
    %v6415 = vpack.c.b16 %v5655, %v5647
    %v6416 = vpack.c.b16 %v5656, %v5648
    %v6417 = vpack.c.b16 %v5657, %v5649
    %v6418 = vpack.c.b16 %v5658, %v5650
    %v6419 = vpack.c.b16 %v5659, %v5651
    %v6420 = vpack.c.b16 %v5668, %v5660
    %v6421 = vpack.c.b16 %v5669, %v5661
    %v6422 = vpack.c.b16 %v5670, %v5662
    %v6423 = vpack.c.b16 %v5671, %v5663
    %v6424 = vpack.c.b16 %v5672, %v5664
    %v6425 = vpack.c.b16 %v5673, %v5665
    %v6426 = vpack.c.b16 %v5674, %v5666
    %v6427 = vpack.c.b16 %v5675, %v5667
    %v6428 = vpack.c.b16 %v5684, %v5676
    %v6429 = vpack.c.b16 %v5685, %v5677
    %v6430 = vpack.c.b16 %v5686, %v5678
    %v6431 = vpack.c.b16 %v5687, %v5679
    %v6432 = vpack.c.b16 %v5688, %v5680
    %v6433 = vpack.c.b16 %v5689, %v5681
    %v6434 = vpack.c.b16 %v5690, %v5682
    %v6435 = vpack.c.b16 %v5691, %v5683
    %v6436 = vpack.c.b16 %v5700, %v5692
    %v6437 = vpack.c.b16 %v5701, %v5693
    %v6438 = vpack.c.b16 %v5702, %v5694
    %v6439 = vpack.c.b16 %v5703, %v5695
    %v6440 = vpack.c.b16 %v5704, %v5696
    %v6441 = vpack.c.b16 %v5705, %v5697
    %v6442 = vpack.c.b16 %v5706, %v5698
    %v6443 = vpack.c.b16 %v5707, %v5699
    %v6444 = vpack.c.b16 %v5716, %v5708
    %v6445 = vpack.c.b16 %v5717, %v5709
    %v6446 = vpack.c.b16 %v5718, %v5710
    %v6447 = vpack.c.b16 %v5719, %v5711
    %v6448 = vpack.c.b16 %v5720, %v5712
    %v6449 = vpack.c.b16 %v5721, %v5713
    %v6450 = vpack.c.b16 %v5722, %v5714
    %v6451 = vpack.c.b16 %v5723, %v5715
    %v6452 = vpack.c.b16 %v5732, %v5724
    %v6453 = vpack.c.b16 %v5733, %v5725
    %v6454 = vpack.c.b16 %v5734, %v5726
    %v6455 = vpack.c.b16 %v5735, %v5727
    %v6456 = vpack.c.b16 %v5736, %v5728
    %v6457 = vpack.c.b16 %v5737, %v5729
    %v6458 = vpack.c.b16 %v5738, %v5730
    %v6459 = vpack.c.b16 %v5739, %v5731
    %v6460 = vpack.c.b16 %v5748, %v5740
    %v6461 = vpack.c.b16 %v5749, %v5741
    %v6462 = vpack.c.b16 %v5750, %v5742
    %v6463 = vpack.c.b16 %v5751, %v5743
    %v6464 = vpack.c.b16 %v5752, %v5744
    %v6465 = vpack.c.b16 %v5753, %v5745
    %v6466 = vpack.c.b16 %v5754, %v5746
    %v6467 = vpack.c.b16 %v5755, %v5747
    %v6468 = vpack.c.b16 %v5764, %v5756
    %v6469 = vpack.c.b16 %v5765, %v5757
    %v6470 = vpack.c.b16 %v5766, %v5758
    %v6471 = vpack.c.b16 %v5767, %v5759
    %v6472 = vpack.c.b16 %v5768, %v5760
    %v6473 = vpack.c.b16 %v5769, %v5761
    %v6474 = vpack.c.b16 %v5770, %v5762
    %v6475 = vpack.c.b16 %v5771, %v5763
    %v6476 = vpack.c.b16 %v5780, %v5772
    %v6477 = vpack.c.b16 %v5781, %v5773
    %v6478 = vpack.c.b16 %v5782, %v5774
    %v6479 = vpack.c.b16 %v5783, %v5775
    %v6480 = vpack.c.b16 %v5784, %v5776
    %v6481 = vpack.c.b16 %v5785, %v5777
    %v6482 = vpack.c.b16 %v5786, %v5778
    %v6483 = vpack.c.b16 %v5787, %v5779
    %v6484 = vpack.c.b16 %v5796, %v5788
    %v6485 = vpack.c.b16 %v5797, %v5789
    %v6486 = vpack.c.b16 %v5798, %v5790
    %v6487 = vpack.c.b16 %v5799, %v5791
    %v6488 = vpack.c.b16 %v5800, %v5792
    %v6489 = vpack.c.b16 %v5801, %v5793
    %v6490 = vpack.c.b16 %v5802, %v5794
    %v6491 = vpack.c.b16 %v5803, %v5795
    %v6492 = vpack.c.b16 %v5812, %v5804
    %v6493 = vpack.c.b16 %v5813, %v5805
    %v6494 = vpack.c.b16 %v5814, %v5806
    %v6495 = vpack.c.b16 %v5815, %v5807
    %v6496 = vpack.c.b16 %v5816, %v5808
    %v6497 = vpack.c.b16 %v5817, %v5809
    %v6498 = vpack.c.b16 %v5818, %v5810
    %v6499 = vpack.c.b16 %v5819, %v5811
    %v6500 = vpack.c.b16 %v5828, %v5820
    %v6501 = vpack.c.b16 %v5829, %v5821
    %v6502 = vpack.c.b16 %v5830, %v5822
    %v6503 = vpack.c.b16 %v5831, %v5823
    %v6504 = vpack.c.b16 %v5832, %v5824
    %v6505 = vpack.c.b16 %v5833, %v5825
    %v6506 = vpack.c.b16 %v5834, %v5826
    %v6507 = vpack.c.b16 %v5835, %v5827
    %v6508 = vpack.c.b16 %v5844, %v5836
    %v6509 = vpack.c.b16 %v5845, %v5837
    %v6510 = vpack.c.b16 %v5846, %v5838
    %v6511 = vpack.c.b16 %v5847, %v5839
    %v6512 = vpack.c.b16 %v5848, %v5840
    %v6513 = vpack.c.b16 %v5849, %v5841
    %v6514 = vpack.c.b16 %v5850, %v5842
    %v6515 = vpack.c.b16 %v5851, %v5843
    %v6516 = vpack.c.b16 %v5860, %v5852
    %v6517 = vpack.c.b16 %v5861, %v5853
    %v6518 = vpack.c.b16 %v5862, %v5854
    %v6519 = vpack.c.b16 %v5863, %v5855
    %v6520 = vpack.c.b16 %v5864, %v5856
    %v6521 = vpack.c.b16 %v5865, %v5857
    %v6522 = vpack.c.b16 %v5866, %v5858
    %v6523 = vpack.c.b16 %v5867, %v5859
    %v6524 = vpack.c.b16 %v5876, %v5868
    %v6525 = vpack.c.b16 %v5877, %v5869
    %v6526 = vpack.c.b16 %v5878, %v5870
    %v6527 = vpack.c.b16 %v5879, %v5871
    %v6528 = vpack.c.b16 %v5880, %v5872
    %v6529 = vpack.c.b16 %v5881, %v5873
    %v6530 = vpack.c.b16 %v5882, %v5874
    %v6531 = vpack.c.b16 %v5883, %v5875
    %v6532 = vpack.c.b16 %v5892, %v5884
    %v6533 = vpack.c.b16 %v5893, %v5885
    %v6534 = vpack.c.b16 %v5894, %v5886
    %v6535 = vpack.c.b16 %v5895, %v5887
    %v6536 = vpack.c.b16 %v5896, %v5888
    %v6537 = vpack.c.b16 %v5897, %v5889
    %v6538 = vpack.c.b16 %v5898, %v5890
    %v6539 = vpack.c.b16 %v5899, %v5891
    %v6540 = vpack.c.b16 %v5908, %v5900
    %v6541 = vpack.c.b16 %v5909, %v5901
    %v6542 = vpack.c.b16 %v5910, %v5902
    %v6543 = vpack.c.b16 %v5911, %v5903
    %v6544 = vpack.c.b16 %v5912, %v5904
    %v6545 = vpack.c.b16 %v5913, %v5905
    %v6546 = vpack.c.b16 %v5914, %v5906
    %v6547 = vpack.c.b16 %v5915, %v5907
    %v6548 = vpack.c.b16 %v5924, %v5916
    %v6549 = vpack.c.b16 %v5925, %v5917
    %v6550 = vpack.c.b16 %v5926, %v5918
    %v6551 = vpack.c.b16 %v5927, %v5919
    %v6552 = vpack.c.b16 %v5928, %v5920
    %v6553 = vpack.c.b16 %v5929, %v5921
    %v6554 = vpack.c.b16 %v5930, %v5922
    %v6555 = vpack.c.b16 %v5931, %v5923
    %v6556 = vpack.c.b16 %v5940, %v5932
    %v6557 = vpack.c.b16 %v5941, %v5933
    %v6558 = vpack.c.b16 %v5942, %v5934
    %v6559 = vpack.c.b16 %v5943, %v5935
    %v6560 = vpack.c.b16 %v5944, %v5936
    %v6561 = vpack.c.b16 %v5945, %v5937
    %v6562 = vpack.c.b16 %v5946, %v5938
    %v6563 = vpack.c.b16 %v5947, %v5939
    %v6564 = vpack.c.b16 %v5956, %v5948
    %v6565 = vpack.c.b16 %v5957, %v5949
    %v6566 = vpack.c.b16 %v5958, %v5950
    %v6567 = vpack.c.b16 %v5959, %v5951
    %v6568 = vpack.c.b16 %v5960, %v5952
    %v6569 = vpack.c.b16 %v5961, %v5953
    %v6570 = vpack.c.b16 %v5962, %v5954
    %v6571 = vpack.c.b16 %v5963, %v5955
    %v6572 = vpack.c.b16 %v5972, %v5964
    %v6573 = vpack.c.b16 %v5973, %v5965
    %v6574 = vpack.c.b16 %v5974, %v5966
    %v6575 = vpack.c.b16 %v5975, %v5967
    %v6576 = vpack.c.b16 %v5976, %v5968
    %v6577 = vpack.c.b16 %v5977, %v5969
    %v6578 = vpack.c.b16 %v5978, %v5970
    %v6579 = vpack.c.b16 %v5979, %v5971
    %v6580 = vpack.c.b16 %v5988, %v5980
    %v6581 = vpack.c.b16 %v5989, %v5981
    %v6582 = vpack.c.b16 %v5990, %v5982
    %v6583 = vpack.c.b16 %v5991, %v5983
    %v6584 = vpack.c.b16 %v5992, %v5984
    %v6585 = vpack.c.b16 %v5993, %v5985
    %v6586 = vpack.c.b16 %v5994, %v5986
    %v6587 = vpack.c.b16 %v5995, %v5987
    %v6588 = vpack.c.b16 %v6004, %v5996
    %v6589 = vpack.c.b16 %v6005, %v5997
    %v6590 = vpack.c.b16 %v6006, %v5998
    %v6591 = vpack.c.b16 %v6007, %v5999
    %v6592 = vpack.c.b16 %v6008, %v6000
    %v6593 = vpack.c.b16 %v6009, %v6001
    %v6594 = vpack.c.b16 %v6010, %v6002
    %v6595 = vpack.c.b16 %v6011, %v6003
    %v6596 = vpack.c.b16 %v6020, %v6012
    %v6597 = vpack.c.b16 %v6021, %v6013
    %v6598 = vpack.c.b16 %v6022, %v6014
    %v6599 = vpack.c.b16 %v6023, %v6015
    %v6600 = vpack.c.b16 %v6024, %v6016
    %v6601 = vpack.c.b16 %v6025, %v6017
    %v6602 = vpack.c.b16 %v6026, %v6018
    %v6603 = vpack.c.b16 %v6027, %v6019
    %v6604 = vpack.c.b16 %v6036, %v6028
    %v6605 = vpack.c.b16 %v6037, %v6029
    %v6606 = vpack.c.b16 %v6038, %v6030
    %v6607 = vpack.c.b16 %v6039, %v6031
    %v6608 = vpack.c.b16 %v6040, %v6032
    %v6609 = vpack.c.b16 %v6041, %v6033
    %v6610 = vpack.c.b16 %v6042, %v6034
    %v6611 = vpack.c.b16 %v6043, %v6035
    %v6612 = vpack.c.b16 %v6052, %v6044
    %v6613 = vpack.c.b16 %v6053, %v6045
    %v6614 = vpack.c.b16 %v6054, %v6046
    %v6615 = vpack.c.b16 %v6055, %v6047
    %v6616 = vpack.c.b16 %v6056, %v6048
    %v6617 = vpack.c.b16 %v6057, %v6049
    %v6618 = vpack.c.b16 %v6058, %v6050
    %v6619 = vpack.c.b16 %v6059, %v6051
    %v6620 = vpack.c.b16 %v6068, %v6060
    %v6621 = vpack.c.b16 %v6069, %v6061
    %v6622 = vpack.c.b16 %v6070, %v6062
    %v6623 = vpack.c.b16 %v6071, %v6063
    %v6624 = vpack.c.b16 %v6072, %v6064
    %v6625 = vpack.c.b16 %v6073, %v6065
    %v6626 = vpack.c.b16 %v6074, %v6066
    %v6627 = vpack.c.b16 %v6075, %v6067
    %v6628 = vpack.c.b16 %v6084, %v6076
    %v6629 = vpack.c.b16 %v6085, %v6077
    %v6630 = vpack.c.b16 %v6086, %v6078
    %v6631 = vpack.c.b16 %v6087, %v6079
    %v6632 = vpack.c.b16 %v6088, %v6080
    %v6633 = vpack.c.b16 %v6089, %v6081
    %v6634 = vpack.c.b16 %v6090, %v6082
    %v6635 = vpack.c.b16 %v6091, %v6083
    %v6636 = vpack.c.b16 %v6100, %v6092
    %v6637 = vpack.c.b16 %v6101, %v6093
    %v6638 = vpack.c.b16 %v6102, %v6094
    %v6639 = vpack.c.b16 %v6103, %v6095
    %v6640 = vpack.c.b16 %v6104, %v6096
    %v6641 = vpack.c.b16 %v6105, %v6097
    %v6642 = vpack.c.b16 %v6106, %v6098
    %v6643 = vpack.c.b16 %v6107, %v6099
    %v6644 = vpack.c.b16 %v6116, %v6108
    %v6645 = vpack.c.b16 %v6117, %v6109
    %v6646 = vpack.c.b16 %v6118, %v6110
    %v6647 = vpack.c.b16 %v6119, %v6111
    %v6648 = vpack.c.b16 %v6120, %v6112
    %v6649 = vpack.c.b16 %v6121, %v6113
    %v6650 = vpack.c.b16 %v6122, %v6114
    %v6651 = vpack.c.b16 %v6123, %v6115
    %v6652 = vpack.c.b16 %v6132, %v6124
    %v6653 = vpack.c.b16 %v6133, %v6125
    %v6654 = vpack.c.b16 %v6134, %v6126
    %v6655 = vpack.c.b16 %v6135, %v6127
    %v6656 = vpack.c.b16 %v6136, %v6128
    %v6657 = vpack.c.b16 %v6137, %v6129
    %v6658 = vpack.c.b16 %v6138, %v6130
    %v6659 = vpack.c.b16 %v6139, %v6131
    %v6660 = vpack.c.b16 %v6148, %v6140
    %v6661 = vpack.c.b16 %v6149, %v6141
    %v6662 = vpack.c.b16 %v6150, %v6142
    %v6663 = vpack.c.b16 %v6151, %v6143
    %v6664 = vpack.c.b16 %v6152, %v6144
    %v6665 = vpack.c.b16 %v6153, %v6145
    %v6666 = vpack.c.b16 %v6154, %v6146
    %v6667 = vpack.c.b16 %v6155, %v6147
    %7180 = vmatpush.bf16.msra.mxu0 %v6212
    %7181 = vmatpush.bf16.msra.mxu0 %v6204
    %7182 = vmatpush.bf16.msra.mxu0 %v6196
    %7183 = vmatpush.bf16.msra.mxu0 %v6188
    %7184 = vmatpush.bf16.msra.mxu0 %v6180
    %7185 = vmatpush.bf16.msra.mxu0 %v6172
    %7186 = vmatpush.bf16.msra.mxu0 %v6164
    %7187 = vmatpush.bf16.msra.mxu0 %v6156
    %7188 = vmatmul.bf16.gmra.mxu0 %v4082
    %v7189 = vpop.f32.mrf.mxu0
    %v7190 = vadd.f32 %v4604, %v7189
    %v7191 = vpop.f32.mrf.mxu0
    %7192 = vdwg.mxu0
    %7193 = vmatpush.bf16.msra.mxu0 %v6276
    %7194 = vmatpush.bf16.msra.mxu0 %v6268
    %7195 = vmatpush.bf16.msra.mxu0 %v6260
    %7196 = vmatpush.bf16.msra.mxu0 %v6252
    %7197 = vmatpush.bf16.msra.mxu0 %v6244
    %7198 = vmatpush.bf16.msra.mxu0 %v6236
    %7199 = vmatpush.bf16.msra.mxu0 %v6228
    %7200 = vmatpush.bf16.msra.mxu0 %v6220
    %7201 = vmatmul.bf16.gmra.mxu0 %v4083
    %v7202 = vpop.f32.mrf.mxu0
    %v7203 = vadd.f32 %v7190, %v7202
    %v7204 = vpop.f32.mrf.mxu0
    %7205 = vdwg.mxu0
    %7206 = vmatpush.bf16.msra.mxu0 %v6340
    %7207 = vmatpush.bf16.msra.mxu0 %v6332
    %7208 = vmatpush.bf16.msra.mxu0 %v6324
    %7209 = vmatpush.bf16.msra.mxu0 %v6316
    %7210 = vmatpush.bf16.msra.mxu0 %v6308
    %7211 = vmatpush.bf16.msra.mxu0 %v6300
    %7212 = vmatpush.bf16.msra.mxu0 %v6292
    %7213 = vmatpush.bf16.msra.mxu0 %v6284
    %7214 = vmatmul.bf16.gmra.mxu0 %v4084
    %v7215 = vpop.f32.mrf.mxu0
    %v7216 = vadd.f32 %v7203, %v7215
    %v7217 = vpop.f32.mrf.mxu0
    %7218 = vdwg.mxu0
    %7219 = vmatpush.bf16.msra.mxu0 %v6404
    %7220 = vmatpush.bf16.msra.mxu0 %v6396
    %7221 = vmatpush.bf16.msra.mxu0 %v6388
    %7222 = vmatpush.bf16.msra.mxu0 %v6380
    %7223 = vmatpush.bf16.msra.mxu0 %v6372
    %7224 = vmatpush.bf16.msra.mxu0 %v6364
    %7225 = vmatpush.bf16.msra.mxu0 %v6356
    %7226 = vmatpush.bf16.msra.mxu0 %v6348
    %7227 = vmatmul.bf16.gmra.mxu0 %v4085
    %v7228 = vpop.f32.mrf.mxu0
    %v7229 = vadd.f32 %v7216, %v7228
    %v7230 = vpop.f32.mrf.mxu0
    %7231 = vdwg.mxu0
    %7232 = vmatpush.bf16.msra.mxu0 %v6468
    %7233 = vmatpush.bf16.msra.mxu0 %v6460
    %7234 = vmatpush.bf16.msra.mxu0 %v6452
    %7235 = vmatpush.bf16.msra.mxu0 %v6444
    %7236 = vmatpush.bf16.msra.mxu0 %v6436
    %7237 = vmatpush.bf16.msra.mxu0 %v6428
    %7238 = vmatpush.bf16.msra.mxu0 %v6420
    %7239 = vmatpush.bf16.msra.mxu0 %v6412
    %7240 = vmatmul.bf16.gmra.mxu0 %v4086
    %v7241 = vpop.f32.mrf.mxu0
    %v7242 = vadd.f32 %v7229, %v7241
    %v7243 = vpop.f32.mrf.mxu0
    %7244 = vdwg.mxu0
    %7245 = vmatpush.bf16.msra.mxu0 %v6532
    %7246 = vmatpush.bf16.msra.mxu0 %v6524
    %7247 = vmatpush.bf16.msra.mxu0 %v6516
    %7248 = vmatpush.bf16.msra.mxu0 %v6508
    %7249 = vmatpush.bf16.msra.mxu0 %v6500
    %7250 = vmatpush.bf16.msra.mxu0 %v6492
    %7251 = vmatpush.bf16.msra.mxu0 %v6484
    %7252 = vmatpush.bf16.msra.mxu0 %v6476
    %7253 = vmatmul.bf16.gmra.mxu0 %v4087
    %v7254 = vpop.f32.mrf.mxu0
    %v7255 = vadd.f32 %v7242, %v7254
    %v7256 = vpop.f32.mrf.mxu0
    %7257 = vdwg.mxu0
    %7258 = vmatpush.bf16.msra.mxu0 %v6596
    %7259 = vmatpush.bf16.msra.mxu0 %v6588
    %7260 = vmatpush.bf16.msra.mxu0 %v6580
    %7261 = vmatpush.bf16.msra.mxu0 %v6572
    %7262 = vmatpush.bf16.msra.mxu0 %v6564
    %7263 = vmatpush.bf16.msra.mxu0 %v6556
    %7264 = vmatpush.bf16.msra.mxu0 %v6548
    %7265 = vmatpush.bf16.msra.mxu0 %v6540
    %7266 = vmatmul.bf16.gmra.mxu0 %v4088
    %v7267 = vpop.f32.mrf.mxu0
    %v7268 = vadd.f32 %v7255, %v7267
    %v7269 = vpop.f32.mrf.mxu0
    %7270 = vdwg.mxu0
    %7271 = vmatpush.bf16.msra.mxu0 %v6660
    %7272 = vmatpush.bf16.msra.mxu0 %v6652
    %7273 = vmatpush.bf16.msra.mxu0 %v6644
    %7274 = vmatpush.bf16.msra.mxu0 %v6636
    %7275 = vmatpush.bf16.msra.mxu0 %v6628
    %7276 = vmatpush.bf16.msra.mxu0 %v6620
    %7277 = vmatpush.bf16.msra.mxu0 %v6612
    %7278 = vmatpush.bf16.msra.mxu0 %v6604
    %7279 = vmatmul.bf16.gmra.mxu0 %v4089
    %v7280 = vpop.f32.mrf.mxu0
    %v7281 = vadd.f32 %v7268, %v7280
    %v7282 = vpop.f32.mrf.mxu0
    %7283 = vdwg.mxu0
    %7284 = vmatpush.bf16.msra.mxu0 %v6213
    %7285 = vmatpush.bf16.msra.mxu0 %v6205
    %7286 = vmatpush.bf16.msra.mxu0 %v6197
    %7287 = vmatpush.bf16.msra.mxu0 %v6189
    %7288 = vmatpush.bf16.msra.mxu0 %v6181
    %7289 = vmatpush.bf16.msra.mxu0 %v6173
    %7290 = vmatpush.bf16.msra.mxu0 %v6165
    %7291 = vmatpush.bf16.msra.mxu0 %v6157
    %7292 = vmatmul.bf16.gmra.mxu0 %v4082
    %v7293 = vpop.f32.mrf.mxu0
    %v7294 = vadd.f32 %v4605, %v7293
    %v7295 = vpop.f32.mrf.mxu0
    %7296 = vdwg.mxu0
    %7297 = vmatpush.bf16.msra.mxu0 %v6277
    %7298 = vmatpush.bf16.msra.mxu0 %v6269
    %7299 = vmatpush.bf16.msra.mxu0 %v6261
    %7300 = vmatpush.bf16.msra.mxu0 %v6253
    %7301 = vmatpush.bf16.msra.mxu0 %v6245
    %7302 = vmatpush.bf16.msra.mxu0 %v6237
    %7303 = vmatpush.bf16.msra.mxu0 %v6229
    %7304 = vmatpush.bf16.msra.mxu0 %v6221
    %7305 = vmatmul.bf16.gmra.mxu0 %v4083
    %v7306 = vpop.f32.mrf.mxu0
    %v7307 = vadd.f32 %v7294, %v7306
    %v7308 = vpop.f32.mrf.mxu0
    %7309 = vdwg.mxu0
    %7310 = vmatpush.bf16.msra.mxu0 %v6341
    %7311 = vmatpush.bf16.msra.mxu0 %v6333
    %7312 = vmatpush.bf16.msra.mxu0 %v6325
    %7313 = vmatpush.bf16.msra.mxu0 %v6317
    %7314 = vmatpush.bf16.msra.mxu0 %v6309
    %7315 = vmatpush.bf16.msra.mxu0 %v6301
    %7316 = vmatpush.bf16.msra.mxu0 %v6293
    %7317 = vmatpush.bf16.msra.mxu0 %v6285
    %7318 = vmatmul.bf16.gmra.mxu0 %v4084
    %v7319 = vpop.f32.mrf.mxu0
    %v7320 = vadd.f32 %v7307, %v7319
    %v7321 = vpop.f32.mrf.mxu0
    %7322 = vdwg.mxu0
    %7323 = vmatpush.bf16.msra.mxu0 %v6405
    %7324 = vmatpush.bf16.msra.mxu0 %v6397
    %7325 = vmatpush.bf16.msra.mxu0 %v6389
    %7326 = vmatpush.bf16.msra.mxu0 %v6381
    %7327 = vmatpush.bf16.msra.mxu0 %v6373
    %7328 = vmatpush.bf16.msra.mxu0 %v6365
    %7329 = vmatpush.bf16.msra.mxu0 %v6357
    %7330 = vmatpush.bf16.msra.mxu0 %v6349
    %7331 = vmatmul.bf16.gmra.mxu0 %v4085
    %v7332 = vpop.f32.mrf.mxu0
    %v7333 = vadd.f32 %v7320, %v7332
    %v7334 = vpop.f32.mrf.mxu0
    %7335 = vdwg.mxu0
    %7336 = vmatpush.bf16.msra.mxu0 %v6469
    %7337 = vmatpush.bf16.msra.mxu0 %v6461
    %7338 = vmatpush.bf16.msra.mxu0 %v6453
    %7339 = vmatpush.bf16.msra.mxu0 %v6445
    %7340 = vmatpush.bf16.msra.mxu0 %v6437
    %7341 = vmatpush.bf16.msra.mxu0 %v6429
    %7342 = vmatpush.bf16.msra.mxu0 %v6421
    %7343 = vmatpush.bf16.msra.mxu0 %v6413
    %7344 = vmatmul.bf16.gmra.mxu0 %v4086
    %v7345 = vpop.f32.mrf.mxu0
    %v7346 = vadd.f32 %v7333, %v7345
    %v7347 = vpop.f32.mrf.mxu0
    %7348 = vdwg.mxu0
    %7349 = vmatpush.bf16.msra.mxu0 %v6533
    %7350 = vmatpush.bf16.msra.mxu0 %v6525
    %7351 = vmatpush.bf16.msra.mxu0 %v6517
    %7352 = vmatpush.bf16.msra.mxu0 %v6509
    %7353 = vmatpush.bf16.msra.mxu0 %v6501
    %7354 = vmatpush.bf16.msra.mxu0 %v6493
    %7355 = vmatpush.bf16.msra.mxu0 %v6485
    %7356 = vmatpush.bf16.msra.mxu0 %v6477
    %7357 = vmatmul.bf16.gmra.mxu0 %v4087
    %v7358 = vpop.f32.mrf.mxu0
    %v7359 = vadd.f32 %v7346, %v7358
    %v7360 = vpop.f32.mrf.mxu0
    %7361 = vdwg.mxu0
    %7362 = vmatpush.bf16.msra.mxu0 %v6597
    %7363 = vmatpush.bf16.msra.mxu0 %v6589
    %7364 = vmatpush.bf16.msra.mxu0 %v6581
    %7365 = vmatpush.bf16.msra.mxu0 %v6573
    %7366 = vmatpush.bf16.msra.mxu0 %v6565
    %7367 = vmatpush.bf16.msra.mxu0 %v6557
    %7368 = vmatpush.bf16.msra.mxu0 %v6549
    %7369 = vmatpush.bf16.msra.mxu0 %v6541
    %7370 = vmatmul.bf16.gmra.mxu0 %v4088
    %v7371 = vpop.f32.mrf.mxu0
    %v7372 = vadd.f32 %v7359, %v7371
    %v7373 = vpop.f32.mrf.mxu0
    %7374 = vdwg.mxu0
    %7375 = vmatpush.bf16.msra.mxu0 %v6661
    %7376 = vmatpush.bf16.msra.mxu0 %v6653
    %7377 = vmatpush.bf16.msra.mxu0 %v6645
    %7378 = vmatpush.bf16.msra.mxu0 %v6637
    %7379 = vmatpush.bf16.msra.mxu0 %v6629
    %7380 = vmatpush.bf16.msra.mxu0 %v6621
    %7381 = vmatpush.bf16.msra.mxu0 %v6613
    %7382 = vmatpush.bf16.msra.mxu0 %v6605
    %7383 = vmatmul.bf16.gmra.mxu0 %v4089
    %v7384 = vpop.f32.mrf.mxu0
    %v7385 = vadd.f32 %v7372, %v7384
    %v7386 = vpop.f32.mrf.mxu0
    %7387 = vdwg.mxu0
    %7388 = vmatpush.bf16.msra.mxu0 %v6214
    %7389 = vmatpush.bf16.msra.mxu0 %v6206
    %7390 = vmatpush.bf16.msra.mxu0 %v6198
    %7391 = vmatpush.bf16.msra.mxu0 %v6190
    %7392 = vmatpush.bf16.msra.mxu0 %v6182
    %7393 = vmatpush.bf16.msra.mxu0 %v6174
    %7394 = vmatpush.bf16.msra.mxu0 %v6166
    %7395 = vmatpush.bf16.msra.mxu0 %v6158
    %7396 = vmatmul.bf16.gmra.mxu0 %v4082
    %v7397 = vpop.f32.mrf.mxu0
    %v7398 = vadd.f32 %v4606, %v7397
    %v7399 = vpop.f32.mrf.mxu0
    %7400 = vdwg.mxu0
    %7401 = vmatpush.bf16.msra.mxu0 %v6278
    %7402 = vmatpush.bf16.msra.mxu0 %v6270
    %7403 = vmatpush.bf16.msra.mxu0 %v6262
    %7404 = vmatpush.bf16.msra.mxu0 %v6254
    %7405 = vmatpush.bf16.msra.mxu0 %v6246
    %7406 = vmatpush.bf16.msra.mxu0 %v6238
    %7407 = vmatpush.bf16.msra.mxu0 %v6230
    %7408 = vmatpush.bf16.msra.mxu0 %v6222
    %7409 = vmatmul.bf16.gmra.mxu0 %v4083
    %v7410 = vpop.f32.mrf.mxu0
    %v7411 = vadd.f32 %v7398, %v7410
    %v7412 = vpop.f32.mrf.mxu0
    %7413 = vdwg.mxu0
    %7414 = vmatpush.bf16.msra.mxu0 %v6342
    %7415 = vmatpush.bf16.msra.mxu0 %v6334
    %7416 = vmatpush.bf16.msra.mxu0 %v6326
    %7417 = vmatpush.bf16.msra.mxu0 %v6318
    %7418 = vmatpush.bf16.msra.mxu0 %v6310
    %7419 = vmatpush.bf16.msra.mxu0 %v6302
    %7420 = vmatpush.bf16.msra.mxu0 %v6294
    %7421 = vmatpush.bf16.msra.mxu0 %v6286
    %7422 = vmatmul.bf16.gmra.mxu0 %v4084
    %v7423 = vpop.f32.mrf.mxu0
    %v7424 = vadd.f32 %v7411, %v7423
    %v7425 = vpop.f32.mrf.mxu0
    %7426 = vdwg.mxu0
    %7427 = vmatpush.bf16.msra.mxu0 %v6406
    %7428 = vmatpush.bf16.msra.mxu0 %v6398
    %7429 = vmatpush.bf16.msra.mxu0 %v6390
    %7430 = vmatpush.bf16.msra.mxu0 %v6382
    %7431 = vmatpush.bf16.msra.mxu0 %v6374
    %7432 = vmatpush.bf16.msra.mxu0 %v6366
    %7433 = vmatpush.bf16.msra.mxu0 %v6358
    %7434 = vmatpush.bf16.msra.mxu0 %v6350
    %7435 = vmatmul.bf16.gmra.mxu0 %v4085
    %v7436 = vpop.f32.mrf.mxu0
    %v7437 = vadd.f32 %v7424, %v7436
    %v7438 = vpop.f32.mrf.mxu0
    %7439 = vdwg.mxu0
    %7440 = vmatpush.bf16.msra.mxu0 %v6470
    %7441 = vmatpush.bf16.msra.mxu0 %v6462
    %7442 = vmatpush.bf16.msra.mxu0 %v6454
    %7443 = vmatpush.bf16.msra.mxu0 %v6446
    %7444 = vmatpush.bf16.msra.mxu0 %v6438
    %7445 = vmatpush.bf16.msra.mxu0 %v6430
    %7446 = vmatpush.bf16.msra.mxu0 %v6422
    %7447 = vmatpush.bf16.msra.mxu0 %v6414
    %7448 = vmatmul.bf16.gmra.mxu0 %v4086
    %v7449 = vpop.f32.mrf.mxu0
    %v7450 = vadd.f32 %v7437, %v7449
    %v7451 = vpop.f32.mrf.mxu0
    %7452 = vdwg.mxu0
    %7453 = vmatpush.bf16.msra.mxu0 %v6534
    %7454 = vmatpush.bf16.msra.mxu0 %v6526
    %7455 = vmatpush.bf16.msra.mxu0 %v6518
    %7456 = vmatpush.bf16.msra.mxu0 %v6510
    %7457 = vmatpush.bf16.msra.mxu0 %v6502
    %7458 = vmatpush.bf16.msra.mxu0 %v6494
    %7459 = vmatpush.bf16.msra.mxu0 %v6486
    %7460 = vmatpush.bf16.msra.mxu0 %v6478
    %7461 = vmatmul.bf16.gmra.mxu0 %v4087
    %v7462 = vpop.f32.mrf.mxu0
    %v7463 = vadd.f32 %v7450, %v7462
    %v7464 = vpop.f32.mrf.mxu0
    %7465 = vdwg.mxu0
    %7466 = vmatpush.bf16.msra.mxu0 %v6598
    %7467 = vmatpush.bf16.msra.mxu0 %v6590
    %7468 = vmatpush.bf16.msra.mxu0 %v6582
    %7469 = vmatpush.bf16.msra.mxu0 %v6574
    %7470 = vmatpush.bf16.msra.mxu0 %v6566
    %7471 = vmatpush.bf16.msra.mxu0 %v6558
    %7472 = vmatpush.bf16.msra.mxu0 %v6550
    %7473 = vmatpush.bf16.msra.mxu0 %v6542
    %7474 = vmatmul.bf16.gmra.mxu0 %v4088
    %v7475 = vpop.f32.mrf.mxu0
    %v7476 = vadd.f32 %v7463, %v7475
    %v7477 = vpop.f32.mrf.mxu0
    %7478 = vdwg.mxu0
    %7479 = vmatpush.bf16.msra.mxu0 %v6662
    %7480 = vmatpush.bf16.msra.mxu0 %v6654
    %7481 = vmatpush.bf16.msra.mxu0 %v6646
    %7482 = vmatpush.bf16.msra.mxu0 %v6638
    %7483 = vmatpush.bf16.msra.mxu0 %v6630
    %7484 = vmatpush.bf16.msra.mxu0 %v6622
    %7485 = vmatpush.bf16.msra.mxu0 %v6614
    %7486 = vmatpush.bf16.msra.mxu0 %v6606
    %7487 = vmatmul.bf16.gmra.mxu0 %v4089
    %v7488 = vpop.f32.mrf.mxu0
    %v7489 = vadd.f32 %v7476, %v7488
    %v7490 = vpop.f32.mrf.mxu0
    %7491 = vdwg.mxu0
    %7492 = vmatpush.bf16.msra.mxu0 %v6215
    %7493 = vmatpush.bf16.msra.mxu0 %v6207
    %7494 = vmatpush.bf16.msra.mxu0 %v6199
    %7495 = vmatpush.bf16.msra.mxu0 %v6191
    %7496 = vmatpush.bf16.msra.mxu0 %v6183
    %7497 = vmatpush.bf16.msra.mxu0 %v6175
    %7498 = vmatpush.bf16.msra.mxu0 %v6167
    %7499 = vmatpush.bf16.msra.mxu0 %v6159
    %7500 = vmatmul.bf16.gmra.mxu0 %v4082
    %v7501 = vpop.f32.mrf.mxu0
    %v7502 = vadd.f32 %v4607, %v7501
    %v7503 = vpop.f32.mrf.mxu0
    %7504 = vdwg.mxu0
    %7505 = vmatpush.bf16.msra.mxu0 %v6279
    %7506 = vmatpush.bf16.msra.mxu0 %v6271
    %7507 = vmatpush.bf16.msra.mxu0 %v6263
    %7508 = vmatpush.bf16.msra.mxu0 %v6255
    %7509 = vmatpush.bf16.msra.mxu0 %v6247
    %7510 = vmatpush.bf16.msra.mxu0 %v6239
    %7511 = vmatpush.bf16.msra.mxu0 %v6231
    %7512 = vmatpush.bf16.msra.mxu0 %v6223
    %7513 = vmatmul.bf16.gmra.mxu0 %v4083
    %v7514 = vpop.f32.mrf.mxu0
    %v7515 = vadd.f32 %v7502, %v7514
    %v7516 = vpop.f32.mrf.mxu0
    %7517 = vdwg.mxu0
    %7518 = vmatpush.bf16.msra.mxu0 %v6343
    %7519 = vmatpush.bf16.msra.mxu0 %v6335
    %7520 = vmatpush.bf16.msra.mxu0 %v6327
    %7521 = vmatpush.bf16.msra.mxu0 %v6319
    %7522 = vmatpush.bf16.msra.mxu0 %v6311
    %7523 = vmatpush.bf16.msra.mxu0 %v6303
    %7524 = vmatpush.bf16.msra.mxu0 %v6295
    %7525 = vmatpush.bf16.msra.mxu0 %v6287
    %7526 = vmatmul.bf16.gmra.mxu0 %v4084
    %v7527 = vpop.f32.mrf.mxu0
    %v7528 = vadd.f32 %v7515, %v7527
    %v7529 = vpop.f32.mrf.mxu0
    %7530 = vdwg.mxu0
    %7531 = vmatpush.bf16.msra.mxu0 %v6407
    %7532 = vmatpush.bf16.msra.mxu0 %v6399
    %7533 = vmatpush.bf16.msra.mxu0 %v6391
    %7534 = vmatpush.bf16.msra.mxu0 %v6383
    %7535 = vmatpush.bf16.msra.mxu0 %v6375
    %7536 = vmatpush.bf16.msra.mxu0 %v6367
    %7537 = vmatpush.bf16.msra.mxu0 %v6359
    %7538 = vmatpush.bf16.msra.mxu0 %v6351
    %7539 = vmatmul.bf16.gmra.mxu0 %v4085
    %v7540 = vpop.f32.mrf.mxu0
    %v7541 = vadd.f32 %v7528, %v7540
    %v7542 = vpop.f32.mrf.mxu0
    %7543 = vdwg.mxu0
    %7544 = vmatpush.bf16.msra.mxu0 %v6471
    %7545 = vmatpush.bf16.msra.mxu0 %v6463
    %7546 = vmatpush.bf16.msra.mxu0 %v6455
    %7547 = vmatpush.bf16.msra.mxu0 %v6447
    %7548 = vmatpush.bf16.msra.mxu0 %v6439
    %7549 = vmatpush.bf16.msra.mxu0 %v6431
    %7550 = vmatpush.bf16.msra.mxu0 %v6423
    %7551 = vmatpush.bf16.msra.mxu0 %v6415
    %7552 = vmatmul.bf16.gmra.mxu0 %v4086
    %v7553 = vpop.f32.mrf.mxu0
    %v7554 = vadd.f32 %v7541, %v7553
    %v7555 = vpop.f32.mrf.mxu0
    %7556 = vdwg.mxu0
    %7557 = vmatpush.bf16.msra.mxu0 %v6535
    %7558 = vmatpush.bf16.msra.mxu0 %v6527
    %7559 = vmatpush.bf16.msra.mxu0 %v6519
    %7560 = vmatpush.bf16.msra.mxu0 %v6511
    %7561 = vmatpush.bf16.msra.mxu0 %v6503
    %7562 = vmatpush.bf16.msra.mxu0 %v6495
    %7563 = vmatpush.bf16.msra.mxu0 %v6487
    %7564 = vmatpush.bf16.msra.mxu0 %v6479
    %7565 = vmatmul.bf16.gmra.mxu0 %v4087
    %v7566 = vpop.f32.mrf.mxu0
    %v7567 = vadd.f32 %v7554, %v7566
    %v7568 = vpop.f32.mrf.mxu0
    %7569 = vdwg.mxu0
    %7570 = vmatpush.bf16.msra.mxu0 %v6599
    %7571 = vmatpush.bf16.msra.mxu0 %v6591
    %7572 = vmatpush.bf16.msra.mxu0 %v6583
    %7573 = vmatpush.bf16.msra.mxu0 %v6575
    %7574 = vmatpush.bf16.msra.mxu0 %v6567
    %7575 = vmatpush.bf16.msra.mxu0 %v6559
    %7576 = vmatpush.bf16.msra.mxu0 %v6551
    %7577 = vmatpush.bf16.msra.mxu0 %v6543
    %7578 = vmatmul.bf16.gmra.mxu0 %v4088
    %v7579 = vpop.f32.mrf.mxu0
    %v7580 = vadd.f32 %v7567, %v7579
    %v7581 = vpop.f32.mrf.mxu0
    %7582 = vdwg.mxu0
    %7583 = vmatpush.bf16.msra.mxu0 %v6663
    %7584 = vmatpush.bf16.msra.mxu0 %v6655
    %7585 = vmatpush.bf16.msra.mxu0 %v6647
    %7586 = vmatpush.bf16.msra.mxu0 %v6639
    %7587 = vmatpush.bf16.msra.mxu0 %v6631
    %7588 = vmatpush.bf16.msra.mxu0 %v6623
    %7589 = vmatpush.bf16.msra.mxu0 %v6615
    %7590 = vmatpush.bf16.msra.mxu0 %v6607
    %7591 = vmatmul.bf16.gmra.mxu0 %v4089
    %v7592 = vpop.f32.mrf.mxu0
    %v7593 = vadd.f32 %v7580, %v7592
    %v7594 = vpop.f32.mrf.mxu0
    %7595 = vdwg.mxu0
    %7596 = vmatpush.bf16.msra.mxu0 %v6216
    %7597 = vmatpush.bf16.msra.mxu0 %v6208
    %7598 = vmatpush.bf16.msra.mxu0 %v6200
    %7599 = vmatpush.bf16.msra.mxu0 %v6192
    %7600 = vmatpush.bf16.msra.mxu0 %v6184
    %7601 = vmatpush.bf16.msra.mxu0 %v6176
    %7602 = vmatpush.bf16.msra.mxu0 %v6168
    %7603 = vmatpush.bf16.msra.mxu0 %v6160
    %7604 = vmatmul.bf16.gmra.mxu0 %v4082
    %v7605 = vpop.f32.mrf.mxu0
    %v7606 = vadd.f32 %v4608, %v7605
    %v7607 = vpop.f32.mrf.mxu0
    %7608 = vdwg.mxu0
    %7609 = vmatpush.bf16.msra.mxu0 %v6280
    %7610 = vmatpush.bf16.msra.mxu0 %v6272
    %7611 = vmatpush.bf16.msra.mxu0 %v6264
    %7612 = vmatpush.bf16.msra.mxu0 %v6256
    %7613 = vmatpush.bf16.msra.mxu0 %v6248
    %7614 = vmatpush.bf16.msra.mxu0 %v6240
    %7615 = vmatpush.bf16.msra.mxu0 %v6232
    %7616 = vmatpush.bf16.msra.mxu0 %v6224
    %7617 = vmatmul.bf16.gmra.mxu0 %v4083
    %v7618 = vpop.f32.mrf.mxu0
    %v7619 = vadd.f32 %v7606, %v7618
    %v7620 = vpop.f32.mrf.mxu0
    %7621 = vdwg.mxu0
    %7622 = vmatpush.bf16.msra.mxu0 %v6344
    %7623 = vmatpush.bf16.msra.mxu0 %v6336
    %7624 = vmatpush.bf16.msra.mxu0 %v6328
    %7625 = vmatpush.bf16.msra.mxu0 %v6320
    %7626 = vmatpush.bf16.msra.mxu0 %v6312
    %7627 = vmatpush.bf16.msra.mxu0 %v6304
    %7628 = vmatpush.bf16.msra.mxu0 %v6296
    %7629 = vmatpush.bf16.msra.mxu0 %v6288
    %7630 = vmatmul.bf16.gmra.mxu0 %v4084
    %v7631 = vpop.f32.mrf.mxu0
    %v7632 = vadd.f32 %v7619, %v7631
    %v7633 = vpop.f32.mrf.mxu0
    %7634 = vdwg.mxu0
    %7635 = vmatpush.bf16.msra.mxu0 %v6408
    %7636 = vmatpush.bf16.msra.mxu0 %v6400
    %7637 = vmatpush.bf16.msra.mxu0 %v6392
    %7638 = vmatpush.bf16.msra.mxu0 %v6384
    %7639 = vmatpush.bf16.msra.mxu0 %v6376
    %7640 = vmatpush.bf16.msra.mxu0 %v6368
    %7641 = vmatpush.bf16.msra.mxu0 %v6360
    %7642 = vmatpush.bf16.msra.mxu0 %v6352
    %7643 = vmatmul.bf16.gmra.mxu0 %v4085
    %v7644 = vpop.f32.mrf.mxu0
    %v7645 = vadd.f32 %v7632, %v7644
    %v7646 = vpop.f32.mrf.mxu0
    %7647 = vdwg.mxu0
    %7648 = vmatpush.bf16.msra.mxu0 %v6472
    %7649 = vmatpush.bf16.msra.mxu0 %v6464
    %7650 = vmatpush.bf16.msra.mxu0 %v6456
    %7651 = vmatpush.bf16.msra.mxu0 %v6448
    %7652 = vmatpush.bf16.msra.mxu0 %v6440
    %7653 = vmatpush.bf16.msra.mxu0 %v6432
    %7654 = vmatpush.bf16.msra.mxu0 %v6424
    %7655 = vmatpush.bf16.msra.mxu0 %v6416
    %7656 = vmatmul.bf16.gmra.mxu0 %v4086
    %v7657 = vpop.f32.mrf.mxu0
    %v7658 = vadd.f32 %v7645, %v7657
    %v7659 = vpop.f32.mrf.mxu0
    %7660 = vdwg.mxu0
    %7661 = vmatpush.bf16.msra.mxu0 %v6536
    %7662 = vmatpush.bf16.msra.mxu0 %v6528
    %7663 = vmatpush.bf16.msra.mxu0 %v6520
    %7664 = vmatpush.bf16.msra.mxu0 %v6512
    %7665 = vmatpush.bf16.msra.mxu0 %v6504
    %7666 = vmatpush.bf16.msra.mxu0 %v6496
    %7667 = vmatpush.bf16.msra.mxu0 %v6488
    %7668 = vmatpush.bf16.msra.mxu0 %v6480
    %7669 = vmatmul.bf16.gmra.mxu0 %v4087
    %v7670 = vpop.f32.mrf.mxu0
    %v7671 = vadd.f32 %v7658, %v7670
    %v7672 = vpop.f32.mrf.mxu0
    %7673 = vdwg.mxu0
    %7674 = vmatpush.bf16.msra.mxu0 %v6600
    %7675 = vmatpush.bf16.msra.mxu0 %v6592
    %7676 = vmatpush.bf16.msra.mxu0 %v6584
    %7677 = vmatpush.bf16.msra.mxu0 %v6576
    %7678 = vmatpush.bf16.msra.mxu0 %v6568
    %7679 = vmatpush.bf16.msra.mxu0 %v6560
    %7680 = vmatpush.bf16.msra.mxu0 %v6552
    %7681 = vmatpush.bf16.msra.mxu0 %v6544
    %7682 = vmatmul.bf16.gmra.mxu0 %v4088
    %v7683 = vpop.f32.mrf.mxu0
    %v7684 = vadd.f32 %v7671, %v7683
    %v7685 = vpop.f32.mrf.mxu0
    %7686 = vdwg.mxu0
    %7687 = vmatpush.bf16.msra.mxu0 %v6664
    %7688 = vmatpush.bf16.msra.mxu0 %v6656
    %7689 = vmatpush.bf16.msra.mxu0 %v6648
    %7690 = vmatpush.bf16.msra.mxu0 %v6640
    %7691 = vmatpush.bf16.msra.mxu0 %v6632
    %7692 = vmatpush.bf16.msra.mxu0 %v6624
    %7693 = vmatpush.bf16.msra.mxu0 %v6616
    %7694 = vmatpush.bf16.msra.mxu0 %v6608
    %7695 = vmatmul.bf16.gmra.mxu0 %v4089
    %v7696 = vpop.f32.mrf.mxu0
    %v7697 = vadd.f32 %v7684, %v7696
    %v7698 = vpop.f32.mrf.mxu0
    %7699 = vdwg.mxu0
    %7700 = vmatpush.bf16.msra.mxu0 %v6217
    %7701 = vmatpush.bf16.msra.mxu0 %v6209
    %7702 = vmatpush.bf16.msra.mxu0 %v6201
    %7703 = vmatpush.bf16.msra.mxu0 %v6193
    %7704 = vmatpush.bf16.msra.mxu0 %v6185
    %7705 = vmatpush.bf16.msra.mxu0 %v6177
    %7706 = vmatpush.bf16.msra.mxu0 %v6169
    %7707 = vmatpush.bf16.msra.mxu0 %v6161
    %7708 = vmatmul.bf16.gmra.mxu0 %v4082
    %v7709 = vpop.f32.mrf.mxu0
    %v7710 = vadd.f32 %v4609, %v7709
    %v7711 = vpop.f32.mrf.mxu0
    %7712 = vdwg.mxu0
    %7713 = vmatpush.bf16.msra.mxu0 %v6281
    %7714 = vmatpush.bf16.msra.mxu0 %v6273
    %7715 = vmatpush.bf16.msra.mxu0 %v6265
    %7716 = vmatpush.bf16.msra.mxu0 %v6257
    %7717 = vmatpush.bf16.msra.mxu0 %v6249
    %7718 = vmatpush.bf16.msra.mxu0 %v6241
    %7719 = vmatpush.bf16.msra.mxu0 %v6233
    %7720 = vmatpush.bf16.msra.mxu0 %v6225
    %7721 = vmatmul.bf16.gmra.mxu0 %v4083
    %v7722 = vpop.f32.mrf.mxu0
    %v7723 = vadd.f32 %v7710, %v7722
    %v7724 = vpop.f32.mrf.mxu0
    %7725 = vdwg.mxu0
    %7726 = vmatpush.bf16.msra.mxu0 %v6345
    %7727 = vmatpush.bf16.msra.mxu0 %v6337
    %7728 = vmatpush.bf16.msra.mxu0 %v6329
    %7729 = vmatpush.bf16.msra.mxu0 %v6321
    %7730 = vmatpush.bf16.msra.mxu0 %v6313
    %7731 = vmatpush.bf16.msra.mxu0 %v6305
    %7732 = vmatpush.bf16.msra.mxu0 %v6297
    %7733 = vmatpush.bf16.msra.mxu0 %v6289
    %7734 = vmatmul.bf16.gmra.mxu0 %v4084
    %v7735 = vpop.f32.mrf.mxu0
    %v7736 = vadd.f32 %v7723, %v7735
    %v7737 = vpop.f32.mrf.mxu0
    %7738 = vdwg.mxu0
    %7739 = vmatpush.bf16.msra.mxu0 %v6409
    %7740 = vmatpush.bf16.msra.mxu0 %v6401
    %7741 = vmatpush.bf16.msra.mxu0 %v6393
    %7742 = vmatpush.bf16.msra.mxu0 %v6385
    %7743 = vmatpush.bf16.msra.mxu0 %v6377
    %7744 = vmatpush.bf16.msra.mxu0 %v6369
    %7745 = vmatpush.bf16.msra.mxu0 %v6361
    %7746 = vmatpush.bf16.msra.mxu0 %v6353
    %7747 = vmatmul.bf16.gmra.mxu0 %v4085
    %v7748 = vpop.f32.mrf.mxu0
    %v7749 = vadd.f32 %v7736, %v7748
    %v7750 = vpop.f32.mrf.mxu0
    %7751 = vdwg.mxu0
    %7752 = vmatpush.bf16.msra.mxu0 %v6473
    %7753 = vmatpush.bf16.msra.mxu0 %v6465
    %7754 = vmatpush.bf16.msra.mxu0 %v6457
    %7755 = vmatpush.bf16.msra.mxu0 %v6449
    %7756 = vmatpush.bf16.msra.mxu0 %v6441
    %7757 = vmatpush.bf16.msra.mxu0 %v6433
    %7758 = vmatpush.bf16.msra.mxu0 %v6425
    %7759 = vmatpush.bf16.msra.mxu0 %v6417
    %7760 = vmatmul.bf16.gmra.mxu0 %v4086
    %v7761 = vpop.f32.mrf.mxu0
    %v7762 = vadd.f32 %v7749, %v7761
    %v7763 = vpop.f32.mrf.mxu0
    %7764 = vdwg.mxu0
    %7765 = vmatpush.bf16.msra.mxu0 %v6537
    %7766 = vmatpush.bf16.msra.mxu0 %v6529
    %7767 = vmatpush.bf16.msra.mxu0 %v6521
    %7768 = vmatpush.bf16.msra.mxu0 %v6513
    %7769 = vmatpush.bf16.msra.mxu0 %v6505
    %7770 = vmatpush.bf16.msra.mxu0 %v6497
    %7771 = vmatpush.bf16.msra.mxu0 %v6489
    %7772 = vmatpush.bf16.msra.mxu0 %v6481
    %7773 = vmatmul.bf16.gmra.mxu0 %v4087
    %v7774 = vpop.f32.mrf.mxu0
    %v7775 = vadd.f32 %v7762, %v7774
    %v7776 = vpop.f32.mrf.mxu0
    %7777 = vdwg.mxu0
    %7778 = vmatpush.bf16.msra.mxu0 %v6601
    %7779 = vmatpush.bf16.msra.mxu0 %v6593
    %7780 = vmatpush.bf16.msra.mxu0 %v6585
    %7781 = vmatpush.bf16.msra.mxu0 %v6577
    %7782 = vmatpush.bf16.msra.mxu0 %v6569
    %7783 = vmatpush.bf16.msra.mxu0 %v6561
    %7784 = vmatpush.bf16.msra.mxu0 %v6553
    %7785 = vmatpush.bf16.msra.mxu0 %v6545
    %7786 = vmatmul.bf16.gmra.mxu0 %v4088
    %v7787 = vpop.f32.mrf.mxu0
    %v7788 = vadd.f32 %v7775, %v7787
    %v7789 = vpop.f32.mrf.mxu0
    %7790 = vdwg.mxu0
    %7791 = vmatpush.bf16.msra.mxu0 %v6665
    %7792 = vmatpush.bf16.msra.mxu0 %v6657
    %7793 = vmatpush.bf16.msra.mxu0 %v6649
    %7794 = vmatpush.bf16.msra.mxu0 %v6641
    %7795 = vmatpush.bf16.msra.mxu0 %v6633
    %7796 = vmatpush.bf16.msra.mxu0 %v6625
    %7797 = vmatpush.bf16.msra.mxu0 %v6617
    %7798 = vmatpush.bf16.msra.mxu0 %v6609
    %7799 = vmatmul.bf16.gmra.mxu0 %v4089
    %v7800 = vpop.f32.mrf.mxu0
    %v7801 = vadd.f32 %v7788, %v7800
    %v7802 = vpop.f32.mrf.mxu0
    %7803 = vdwg.mxu0
    %7804 = vmatpush.bf16.msra.mxu0 %v6218
    %7805 = vmatpush.bf16.msra.mxu0 %v6210
    %7806 = vmatpush.bf16.msra.mxu0 %v6202
    %7807 = vmatpush.bf16.msra.mxu0 %v6194
    %7808 = vmatpush.bf16.msra.mxu0 %v6186
    %7809 = vmatpush.bf16.msra.mxu0 %v6178
    %7810 = vmatpush.bf16.msra.mxu0 %v6170
    %7811 = vmatpush.bf16.msra.mxu0 %v6162
    %7812 = vmatmul.bf16.gmra.mxu0 %v4082
    %v7813 = vpop.f32.mrf.mxu0
    %v7814 = vadd.f32 %v4610, %v7813
    %v7815 = vpop.f32.mrf.mxu0
    %7816 = vdwg.mxu0
    %7817 = vmatpush.bf16.msra.mxu0 %v6282
    %7818 = vmatpush.bf16.msra.mxu0 %v6274
    %7819 = vmatpush.bf16.msra.mxu0 %v6266
    %7820 = vmatpush.bf16.msra.mxu0 %v6258
    %7821 = vmatpush.bf16.msra.mxu0 %v6250
    %7822 = vmatpush.bf16.msra.mxu0 %v6242
    %7823 = vmatpush.bf16.msra.mxu0 %v6234
    %7824 = vmatpush.bf16.msra.mxu0 %v6226
    %7825 = vmatmul.bf16.gmra.mxu0 %v4083
    %v7826 = vpop.f32.mrf.mxu0
    %v7827 = vadd.f32 %v7814, %v7826
    %v7828 = vpop.f32.mrf.mxu0
    %7829 = vdwg.mxu0
    %7830 = vmatpush.bf16.msra.mxu0 %v6346
    %7831 = vmatpush.bf16.msra.mxu0 %v6338
    %7832 = vmatpush.bf16.msra.mxu0 %v6330
    %7833 = vmatpush.bf16.msra.mxu0 %v6322
    %7834 = vmatpush.bf16.msra.mxu0 %v6314
    %7835 = vmatpush.bf16.msra.mxu0 %v6306
    %7836 = vmatpush.bf16.msra.mxu0 %v6298
    %7837 = vmatpush.bf16.msra.mxu0 %v6290
    %7838 = vmatmul.bf16.gmra.mxu0 %v4084
    %v7839 = vpop.f32.mrf.mxu0
    %v7840 = vadd.f32 %v7827, %v7839
    %v7841 = vpop.f32.mrf.mxu0
    %7842 = vdwg.mxu0
    %7843 = vmatpush.bf16.msra.mxu0 %v6410
    %7844 = vmatpush.bf16.msra.mxu0 %v6402
    %7845 = vmatpush.bf16.msra.mxu0 %v6394
    %7846 = vmatpush.bf16.msra.mxu0 %v6386
    %7847 = vmatpush.bf16.msra.mxu0 %v6378
    %7848 = vmatpush.bf16.msra.mxu0 %v6370
    %7849 = vmatpush.bf16.msra.mxu0 %v6362
    %7850 = vmatpush.bf16.msra.mxu0 %v6354
    %7851 = vmatmul.bf16.gmra.mxu0 %v4085
    %v7852 = vpop.f32.mrf.mxu0
    %v7853 = vadd.f32 %v7840, %v7852
    %v7854 = vpop.f32.mrf.mxu0
    %7855 = vdwg.mxu0
    %7856 = vmatpush.bf16.msra.mxu0 %v6474
    %7857 = vmatpush.bf16.msra.mxu0 %v6466
    %7858 = vmatpush.bf16.msra.mxu0 %v6458
    %7859 = vmatpush.bf16.msra.mxu0 %v6450
    %7860 = vmatpush.bf16.msra.mxu0 %v6442
    %7861 = vmatpush.bf16.msra.mxu0 %v6434
    %7862 = vmatpush.bf16.msra.mxu0 %v6426
    %7863 = vmatpush.bf16.msra.mxu0 %v6418
    %7864 = vmatmul.bf16.gmra.mxu0 %v4086
    %v7865 = vpop.f32.mrf.mxu0
    %v7866 = vadd.f32 %v7853, %v7865
    %v7867 = vpop.f32.mrf.mxu0
    %7868 = vdwg.mxu0
    %7869 = vmatpush.bf16.msra.mxu0 %v6538
    %7870 = vmatpush.bf16.msra.mxu0 %v6530
    %7871 = vmatpush.bf16.msra.mxu0 %v6522
    %7872 = vmatpush.bf16.msra.mxu0 %v6514
    %7873 = vmatpush.bf16.msra.mxu0 %v6506
    %7874 = vmatpush.bf16.msra.mxu0 %v6498
    %7875 = vmatpush.bf16.msra.mxu0 %v6490
    %7876 = vmatpush.bf16.msra.mxu0 %v6482
    %7877 = vmatmul.bf16.gmra.mxu0 %v4087
    %v7878 = vpop.f32.mrf.mxu0
    %v7879 = vadd.f32 %v7866, %v7878
    %v7880 = vpop.f32.mrf.mxu0
    %7881 = vdwg.mxu0
    %7882 = vmatpush.bf16.msra.mxu0 %v6602
    %7883 = vmatpush.bf16.msra.mxu0 %v6594
    %7884 = vmatpush.bf16.msra.mxu0 %v6586
    %7885 = vmatpush.bf16.msra.mxu0 %v6578
    %7886 = vmatpush.bf16.msra.mxu0 %v6570
    %7887 = vmatpush.bf16.msra.mxu0 %v6562
    %7888 = vmatpush.bf16.msra.mxu0 %v6554
    %7889 = vmatpush.bf16.msra.mxu0 %v6546
    %7890 = vmatmul.bf16.gmra.mxu0 %v4088
    %v7891 = vpop.f32.mrf.mxu0
    %v7892 = vadd.f32 %v7879, %v7891
    %v7893 = vpop.f32.mrf.mxu0
    %7894 = vdwg.mxu0
    %7895 = vmatpush.bf16.msra.mxu0 %v6666
    %7896 = vmatpush.bf16.msra.mxu0 %v6658
    %7897 = vmatpush.bf16.msra.mxu0 %v6650
    %7898 = vmatpush.bf16.msra.mxu0 %v6642
    %7899 = vmatpush.bf16.msra.mxu0 %v6634
    %7900 = vmatpush.bf16.msra.mxu0 %v6626
    %7901 = vmatpush.bf16.msra.mxu0 %v6618
    %7902 = vmatpush.bf16.msra.mxu0 %v6610
    %7903 = vmatmul.bf16.gmra.mxu0 %v4089
    %v7904 = vpop.f32.mrf.mxu0
    %v7905 = vadd.f32 %v7892, %v7904
    %v7906 = vpop.f32.mrf.mxu0
    %7907 = vdwg.mxu0
    %7908 = vmatpush.bf16.msra.mxu0 %v6219
    %7909 = vmatpush.bf16.msra.mxu0 %v6211
    %7910 = vmatpush.bf16.msra.mxu0 %v6203
    %7911 = vmatpush.bf16.msra.mxu0 %v6195
    %7912 = vmatpush.bf16.msra.mxu0 %v6187
    %7913 = vmatpush.bf16.msra.mxu0 %v6179
    %7914 = vmatpush.bf16.msra.mxu0 %v6171
    %7915 = vmatpush.bf16.msra.mxu0 %v6163
    %7916 = vmatmul.bf16.gmra.mxu0 %v4082
    %v7917 = vpop.f32.mrf.mxu0
    %v7918 = vadd.f32 %v4611, %v7917
    %v7919 = vpop.f32.mrf.mxu0
    %7920 = vdwg.mxu0
    %7921 = vmatpush.bf16.msra.mxu0 %v6283
    %7922 = vmatpush.bf16.msra.mxu0 %v6275
    %7923 = vmatpush.bf16.msra.mxu0 %v6267
    %7924 = vmatpush.bf16.msra.mxu0 %v6259
    %7925 = vmatpush.bf16.msra.mxu0 %v6251
    %7926 = vmatpush.bf16.msra.mxu0 %v6243
    %7927 = vmatpush.bf16.msra.mxu0 %v6235
    %7928 = vmatpush.bf16.msra.mxu0 %v6227
    %7929 = vmatmul.bf16.gmra.mxu0 %v4083
    %v7930 = vpop.f32.mrf.mxu0
    %v7931 = vadd.f32 %v7918, %v7930
    %v7932 = vpop.f32.mrf.mxu0
    %7933 = vdwg.mxu0
    %7934 = vmatpush.bf16.msra.mxu0 %v6347
    %7935 = vmatpush.bf16.msra.mxu0 %v6339
    %7936 = vmatpush.bf16.msra.mxu0 %v6331
    %7937 = vmatpush.bf16.msra.mxu0 %v6323
    %7938 = vmatpush.bf16.msra.mxu0 %v6315
    %7939 = vmatpush.bf16.msra.mxu0 %v6307
    %7940 = vmatpush.bf16.msra.mxu0 %v6299
    %7941 = vmatpush.bf16.msra.mxu0 %v6291
    %7942 = vmatmul.bf16.gmra.mxu0 %v4084
    %v7943 = vpop.f32.mrf.mxu0
    %v7944 = vadd.f32 %v7931, %v7943
    %v7945 = vpop.f32.mrf.mxu0
    %7946 = vdwg.mxu0
    %7947 = vmatpush.bf16.msra.mxu0 %v6411
    %7948 = vmatpush.bf16.msra.mxu0 %v6403
    %7949 = vmatpush.bf16.msra.mxu0 %v6395
    %7950 = vmatpush.bf16.msra.mxu0 %v6387
    %7951 = vmatpush.bf16.msra.mxu0 %v6379
    %7952 = vmatpush.bf16.msra.mxu0 %v6371
    %7953 = vmatpush.bf16.msra.mxu0 %v6363
    %7954 = vmatpush.bf16.msra.mxu0 %v6355
    %7955 = vmatmul.bf16.gmra.mxu0 %v4085
    %v7956 = vpop.f32.mrf.mxu0
    %v7957 = vadd.f32 %v7944, %v7956
    %v7958 = vpop.f32.mrf.mxu0
    %7959 = vdwg.mxu0
    %7960 = vmatpush.bf16.msra.mxu0 %v6475
    %7961 = vmatpush.bf16.msra.mxu0 %v6467
    %7962 = vmatpush.bf16.msra.mxu0 %v6459
    %7963 = vmatpush.bf16.msra.mxu0 %v6451
    %7964 = vmatpush.bf16.msra.mxu0 %v6443
    %7965 = vmatpush.bf16.msra.mxu0 %v6435
    %7966 = vmatpush.bf16.msra.mxu0 %v6427
    %7967 = vmatpush.bf16.msra.mxu0 %v6419
    %7968 = vmatmul.bf16.gmra.mxu0 %v4086
    %v7969 = vpop.f32.mrf.mxu0
    %v7970 = vadd.f32 %v7957, %v7969
    %v7971 = vpop.f32.mrf.mxu0
    %7972 = vdwg.mxu0
    %7973 = vmatpush.bf16.msra.mxu0 %v6539
    %7974 = vmatpush.bf16.msra.mxu0 %v6531
    %7975 = vmatpush.bf16.msra.mxu0 %v6523
    %7976 = vmatpush.bf16.msra.mxu0 %v6515
    %7977 = vmatpush.bf16.msra.mxu0 %v6507
    %7978 = vmatpush.bf16.msra.mxu0 %v6499
    %7979 = vmatpush.bf16.msra.mxu0 %v6491
    %7980 = vmatpush.bf16.msra.mxu0 %v6483
    %7981 = vmatmul.bf16.gmra.mxu0 %v4087
    %v7982 = vpop.f32.mrf.mxu0
    %v7983 = vadd.f32 %v7970, %v7982
    %v7984 = vpop.f32.mrf.mxu0
    %7985 = vdwg.mxu0
    %7986 = vmatpush.bf16.msra.mxu0 %v6603
    %7987 = vmatpush.bf16.msra.mxu0 %v6595
    %7988 = vmatpush.bf16.msra.mxu0 %v6587
    %7989 = vmatpush.bf16.msra.mxu0 %v6579
    %7990 = vmatpush.bf16.msra.mxu0 %v6571
    %7991 = vmatpush.bf16.msra.mxu0 %v6563
    %7992 = vmatpush.bf16.msra.mxu0 %v6555
    %7993 = vmatpush.bf16.msra.mxu0 %v6547
    %7994 = vmatmul.bf16.gmra.mxu0 %v4088
    %v7995 = vpop.f32.mrf.mxu0
    %v7996 = vadd.f32 %v7983, %v7995
    %v7997 = vpop.f32.mrf.mxu0
    %7998 = vdwg.mxu0
    %7999 = vmatpush.bf16.msra.mxu0 %v6667
    %8000 = vmatpush.bf16.msra.mxu0 %v6659
    %8001 = vmatpush.bf16.msra.mxu0 %v6651
    %8002 = vmatpush.bf16.msra.mxu0 %v6643
    %8003 = vmatpush.bf16.msra.mxu0 %v6635
    %8004 = vmatpush.bf16.msra.mxu0 %v6627
    %8005 = vmatpush.bf16.msra.mxu0 %v6619
    %8006 = vmatpush.bf16.msra.mxu0 %v6611
    %8007 = vmatmul.bf16.gmra.mxu0 %v4089
    %v8008 = vpop.f32.mrf.mxu0
    %v8009 = vadd.f32 %v7996, %v8008
    %v8010 = vpop.f32.mrf.mxu0
    %8011 = vdwg.mxu0
    %v8012 = vmax.f32 %v7281, 0.0
    %v8013 = vmax.f32 %v7385, 0.0
    %v8014 = vmax.f32 %v7489, 0.0
    %v8015 = vmax.f32 %v7593, 0.0
    %v8016 = vmax.f32 %v7697, 0.0
    %v8017 = vmax.f32 %v7801, 0.0
    %v8018 = vmax.f32 %v7905, 0.0
    %v8019 = vmax.f32 %v8009, 0.0
    %v8020 = vpack.c.bf16 %v8012, %v8012
    %v8021 = vpack.c.bf16 %v8013, %v8013
    %v8022 = vpack.c.bf16 %v8014, %v8014
    %v8023 = vpack.c.bf16 %v8015, %v8015
    %v8024 = vpack.c.bf16 %v8016, %v8016
    %v8025 = vpack.c.bf16 %v8017, %v8017
    %v8026 = vpack.c.bf16 %v8018, %v8018
    %v8027 = vpack.c.bf16 %v8019, %v8019
    %v8028 = vld [vmem:[#allocation11] sm:$0xf]
    %v8029 = vld [vmem:[#allocation11 + $0x4] sm:$0xf]
    %v8030 = vld [vmem:[#allocation11 + $0x8] sm:$0xf]
    %v8031 = vld [vmem:[#allocation11 + $0xc] sm:$0xf]
    %v8032 = vld [vmem:[#allocation11 + $0x10] sm:$0xf]
    %v8033 = vld [vmem:[#allocation11 + $0x14] sm:$0xf]
    %v8034 = vld [vmem:[#allocation11 + $0x18] sm:$0xf]
    %v8035 = vld [vmem:[#allocation11 + $0x1c] sm:$0xf]
    %v8036 = vld [vmem:[#allocation11 + $0x20] sm:$0xf]
    %v8037 = vld [vmem:[#allocation11 + $0x24] sm:$0xf]
    %v8038 = vld [vmem:[#allocation11 + $0x28] sm:$0xf]
    %v8039 = vld [vmem:[#allocation11 + $0x2c] sm:$0xf]
    %v8040 = vld [vmem:[#allocation11 + $0x30] sm:$0xf]
    %v8041 = vld [vmem:[#allocation11 + $0x34] sm:$0xf]
    %v8042 = vld [vmem:[#allocation11 + $0x38] sm:$0xf]
    %v8043 = vld [vmem:[#allocation11 + $0x3c] sm:$0xf]
    %v8044 = vld [vmem:[#allocation11 + $0x40] sm:$0xf]
    %v8045 = vld [vmem:[#allocation11 + $0x44] sm:$0xf]
    %v8046 = vld [vmem:[#allocation11 + $0x48] sm:$0xf]
    %v8047 = vld [vmem:[#allocation11 + $0x4c] sm:$0xf]
    %v8048 = vld [vmem:[#allocation11 + $0x50] sm:$0xf]
    %v8049 = vld [vmem:[#allocation11 + $0x54] sm:$0xf]
    %v8050 = vld [vmem:[#allocation11 + $0x58] sm:$0xf]
    %v8051 = vld [vmem:[#allocation11 + $0x5c] sm:$0xf]
    %v8052 = vld [vmem:[#allocation11 + $0x60] sm:$0xf]
    %v8053 = vld [vmem:[#allocation11 + $0x64] sm:$0xf]
    %v8054 = vld [vmem:[#allocation11 + $0x68] sm:$0xf]
    %v8055 = vld [vmem:[#allocation11 + $0x6c] sm:$0xf]
    %v8056 = vld [vmem:[#allocation11 + $0x70] sm:$0xf]
    %v8057 = vld [vmem:[#allocation11 + $0x74] sm:$0xf]
    %v8058 = vld [vmem:[#allocation11 + $0x78] sm:$0xf]
    %v8059 = vld [vmem:[#allocation11 + $0x7c] sm:$0xf]
    %v8060 = vld [vmem:[#allocation11 + $0x80] sm:$0xf]
    %v8061 = vld [vmem:[#allocation11 + $0x84] sm:$0xf]
    %v8062 = vld [vmem:[#allocation11 + $0x88] sm:$0xf]
    %v8063 = vld [vmem:[#allocation11 + $0x8c] sm:$0xf]
    %v8064 = vld [vmem:[#allocation11 + $0x90] sm:$0xf]
    %v8065 = vld [vmem:[#allocation11 + $0x94] sm:$0xf]
    %v8066 = vld [vmem:[#allocation11 + $0x98] sm:$0xf]
    %v8067 = vld [vmem:[#allocation11 + $0x9c] sm:$0xf]
    %v8068 = vld [vmem:[#allocation11 + $0xa0] sm:$0xf]
    %v8069 = vld [vmem:[#allocation11 + $0xa4] sm:$0xf]
    %v8070 = vld [vmem:[#allocation11 + $0xa8] sm:$0xf]
    %v8071 = vld [vmem:[#allocation11 + $0xac] sm:$0xf]
    %v8072 = vld [vmem:[#allocation11 + $0xb0] sm:$0xf]
    %v8073 = vld [vmem:[#allocation11 + $0xb4] sm:$0xf]
    %v8074 = vld [vmem:[#allocation11 + $0xb8] sm:$0xf]
    %v8075 = vld [vmem:[#allocation11 + $0xbc] sm:$0xf]
    %v8076 = vld [vmem:[#allocation11 + $0xc0] sm:$0xf]
    %v8077 = vld [vmem:[#allocation11 + $0xc4] sm:$0xf]
    %v8078 = vld [vmem:[#allocation11 + $0xc8] sm:$0xf]
    %v8079 = vld [vmem:[#allocation11 + $0xcc] sm:$0xf]
    %v8080 = vld [vmem:[#allocation11 + $0xd0] sm:$0xf]
    %v8081 = vld [vmem:[#allocation11 + $0xd4] sm:$0xf]
    %v8082 = vld [vmem:[#allocation11 + $0xd8] sm:$0xf]
    %v8083 = vld [vmem:[#allocation11 + $0xdc] sm:$0xf]
    %v8084 = vld [vmem:[#allocation11 + $0xe0] sm:$0xf]
    %v8085 = vld [vmem:[#allocation11 + $0xe4] sm:$0xf]
    %v8086 = vld [vmem:[#allocation11 + $0xe8] sm:$0xf]
    %v8087 = vld [vmem:[#allocation11 + $0xec] sm:$0xf]
    %v8088 = vld [vmem:[#allocation11 + $0xf0] sm:$0xf]
    %v8089 = vld [vmem:[#allocation11 + $0xf4] sm:$0xf]
    %v8090 = vld [vmem:[#allocation11 + $0xf8] sm:$0xf]
    %v8091 = vld [vmem:[#allocation11 + $0xfc] sm:$0xf]
    %v8092 = vld [vmem:[#allocation11 + $0x100] sm:$0xf]
    %v8093 = vld [vmem:[#allocation11 + $0x104] sm:$0xf]
    %v8094 = vld [vmem:[#allocation11 + $0x108] sm:$0xf]
    %v8095 = vld [vmem:[#allocation11 + $0x10c] sm:$0xf]
    %v8096 = vld [vmem:[#allocation11 + $0x110] sm:$0xf]
    %v8097 = vld [vmem:[#allocation11 + $0x114] sm:$0xf]
    %v8098 = vld [vmem:[#allocation11 + $0x118] sm:$0xf]
    %v8099 = vld [vmem:[#allocation11 + $0x11c] sm:$0xf]
    %v8100 = vld [vmem:[#allocation11 + $0x120] sm:$0xf]
    %v8101 = vld [vmem:[#allocation11 + $0x124] sm:$0xf]
    %v8102 = vld [vmem:[#allocation11 + $0x128] sm:$0xf]
    %v8103 = vld [vmem:[#allocation11 + $0x12c] sm:$0xf]
    %v8104 = vld [vmem:[#allocation11 + $0x130] sm:$0xf]
    %v8105 = vld [vmem:[#allocation11 + $0x134] sm:$0xf]
    %v8106 = vld [vmem:[#allocation11 + $0x138] sm:$0xf]
    %v8107 = vld [vmem:[#allocation11 + $0x13c] sm:$0xf]
    %v8108 = vld [vmem:[#allocation11 + $0x140] sm:$0xf]
    %v8109 = vld [vmem:[#allocation11 + $0x144] sm:$0xf]
    %v8110 = vld [vmem:[#allocation11 + $0x148] sm:$0xf]
    %v8111 = vld [vmem:[#allocation11 + $0x14c] sm:$0xf]
    %v8112 = vld [vmem:[#allocation11 + $0x150] sm:$0xf]
    %v8113 = vld [vmem:[#allocation11 + $0x154] sm:$0xf]
    %v8114 = vld [vmem:[#allocation11 + $0x158] sm:$0xf]
    %v8115 = vld [vmem:[#allocation11 + $0x15c] sm:$0xf]
    %v8116 = vld [vmem:[#allocation11 + $0x160] sm:$0xf]
    %v8117 = vld [vmem:[#allocation11 + $0x164] sm:$0xf]
    %v8118 = vld [vmem:[#allocation11 + $0x168] sm:$0xf]
    %v8119 = vld [vmem:[#allocation11 + $0x16c] sm:$0xf]
    %v8120 = vld [vmem:[#allocation11 + $0x170] sm:$0xf]
    %v8121 = vld [vmem:[#allocation11 + $0x174] sm:$0xf]
    %v8122 = vld [vmem:[#allocation11 + $0x178] sm:$0xf]
    %v8123 = vld [vmem:[#allocation11 + $0x17c] sm:$0xf]
    %v8124 = vld [vmem:[#allocation11 + $0x180] sm:$0xf]
    %v8125 = vld [vmem:[#allocation11 + $0x184] sm:$0xf]
    %v8126 = vld [vmem:[#allocation11 + $0x188] sm:$0xf]
    %v8127 = vld [vmem:[#allocation11 + $0x18c] sm:$0xf]
    %v8128 = vld [vmem:[#allocation11 + $0x190] sm:$0xf]
    %v8129 = vld [vmem:[#allocation11 + $0x194] sm:$0xf]
    %v8130 = vld [vmem:[#allocation11 + $0x198] sm:$0xf]
    %v8131 = vld [vmem:[#allocation11 + $0x19c] sm:$0xf]
    %v8132 = vld [vmem:[#allocation11 + $0x1a0] sm:$0xf]
    %v8133 = vld [vmem:[#allocation11 + $0x1a4] sm:$0xf]
    %v8134 = vld [vmem:[#allocation11 + $0x1a8] sm:$0xf]
    %v8135 = vld [vmem:[#allocation11 + $0x1ac] sm:$0xf]
    %v8136 = vld [vmem:[#allocation11 + $0x1b0] sm:$0xf]
    %v8137 = vld [vmem:[#allocation11 + $0x1b4] sm:$0xf]
    %v8138 = vld [vmem:[#allocation11 + $0x1b8] sm:$0xf]
    %v8139 = vld [vmem:[#allocation11 + $0x1bc] sm:$0xf]
    %v8140 = vld [vmem:[#allocation11 + $0x1c0] sm:$0xf]
    %v8141 = vld [vmem:[#allocation11 + $0x1c4] sm:$0xf]
    %v8142 = vld [vmem:[#allocation11 + $0x1c8] sm:$0xf]
    %v8143 = vld [vmem:[#allocation11 + $0x1cc] sm:$0xf]
    %v8144 = vld [vmem:[#allocation11 + $0x1d0] sm:$0xf]
    %v8145 = vld [vmem:[#allocation11 + $0x1d4] sm:$0xf]
    %v8146 = vld [vmem:[#allocation11 + $0x1d8] sm:$0xf]
    %v8147 = vld [vmem:[#allocation11 + $0x1dc] sm:$0xf]
    %v8148 = vld [vmem:[#allocation11 + $0x1e0] sm:$0xf]
    %v8149 = vld [vmem:[#allocation11 + $0x1e4] sm:$0xf]
    %v8150 = vld [vmem:[#allocation11 + $0x1e8] sm:$0xf]
    %v8151 = vld [vmem:[#allocation11 + $0x1ec] sm:$0xf]
    %v8152 = vld [vmem:[#allocation11 + $0x1f0] sm:$0xf]
    %v8153 = vld [vmem:[#allocation11 + $0x1f4] sm:$0xf]
    %v8154 = vld [vmem:[#allocation11 + $0x1f8] sm:$0xf]
    %v8155 = vld [vmem:[#allocation11 + $0x1fc] sm:$0xf]
    %v8156 = vld [vmem:[#allocation13] sm:$0x1]
    %v8158 = vperm.slane %v8156, 0
    %v8288 = vunpack.c.l.b16 %v8028
    %v8289 = vunpack.c.l.b16 %v8029
    %v8290 = vunpack.c.l.b16 %v8030
    %v8291 = vunpack.c.l.b16 %v8031
    %v8292 = vunpack.c.l.b16 %v8032
    %v8293 = vunpack.c.l.b16 %v8033
    %v8294 = vunpack.c.l.b16 %v8034
    %v8295 = vunpack.c.l.b16 %v8035
    %v8296 = vunpack.c.l.b16 %v8036
    %v8297 = vunpack.c.l.b16 %v8037
    %v8298 = vunpack.c.l.b16 %v8038
    %v8299 = vunpack.c.l.b16 %v8039
    %v8300 = vunpack.c.l.b16 %v8040
    %v8301 = vunpack.c.l.b16 %v8041
    %v8302 = vunpack.c.l.b16 %v8042
    %v8303 = vunpack.c.l.b16 %v8043
    %v8304 = vunpack.c.l.b16 %v8044
    %v8305 = vunpack.c.l.b16 %v8045
    %v8306 = vunpack.c.l.b16 %v8046
    %v8307 = vunpack.c.l.b16 %v8047
    %v8308 = vunpack.c.l.b16 %v8048
    %v8309 = vunpack.c.l.b16 %v8049
    %v8310 = vunpack.c.l.b16 %v8050
    %v8311 = vunpack.c.l.b16 %v8051
    %v8312 = vunpack.c.l.b16 %v8052
    %v8313 = vunpack.c.l.b16 %v8053
    %v8314 = vunpack.c.l.b16 %v8054
    %v8315 = vunpack.c.l.b16 %v8055
    %v8316 = vunpack.c.l.b16 %v8056
    %v8317 = vunpack.c.l.b16 %v8057
    %v8318 = vunpack.c.l.b16 %v8058
    %v8319 = vunpack.c.l.b16 %v8059
    %v8320 = vunpack.c.l.b16 %v8060
    %v8321 = vunpack.c.l.b16 %v8061
    %v8322 = vunpack.c.l.b16 %v8062
    %v8323 = vunpack.c.l.b16 %v8063
    %v8324 = vunpack.c.l.b16 %v8064
    %v8325 = vunpack.c.l.b16 %v8065
    %v8326 = vunpack.c.l.b16 %v8066
    %v8327 = vunpack.c.l.b16 %v8067
    %v8328 = vunpack.c.l.b16 %v8068
    %v8329 = vunpack.c.l.b16 %v8069
    %v8330 = vunpack.c.l.b16 %v8070
    %v8331 = vunpack.c.l.b16 %v8071
    %v8332 = vunpack.c.l.b16 %v8072
    %v8333 = vunpack.c.l.b16 %v8073
    %v8334 = vunpack.c.l.b16 %v8074
    %v8335 = vunpack.c.l.b16 %v8075
    %v8336 = vunpack.c.l.b16 %v8076
    %v8337 = vunpack.c.l.b16 %v8077
    %v8338 = vunpack.c.l.b16 %v8078
    %v8339 = vunpack.c.l.b16 %v8079
    %v8340 = vunpack.c.l.b16 %v8080
    %v8341 = vunpack.c.l.b16 %v8081
    %v8342 = vunpack.c.l.b16 %v8082
    %v8343 = vunpack.c.l.b16 %v8083
    %v8344 = vunpack.c.l.b16 %v8084
    %v8345 = vunpack.c.l.b16 %v8085
    %v8346 = vunpack.c.l.b16 %v8086
    %v8347 = vunpack.c.l.b16 %v8087
    %v8348 = vunpack.c.l.b16 %v8088
    %v8349 = vunpack.c.l.b16 %v8089
    %v8350 = vunpack.c.l.b16 %v8090
    %v8351 = vunpack.c.l.b16 %v8091
    %v8352 = vunpack.c.l.b16 %v8092
    %v8353 = vunpack.c.l.b16 %v8093
    %v8354 = vunpack.c.l.b16 %v8094
    %v8355 = vunpack.c.l.b16 %v8095
    %v8356 = vunpack.c.l.b16 %v8096
    %v8357 = vunpack.c.l.b16 %v8097
    %v8358 = vunpack.c.l.b16 %v8098
    %v8359 = vunpack.c.l.b16 %v8099
    %v8360 = vunpack.c.l.b16 %v8100
    %v8361 = vunpack.c.l.b16 %v8101
    %v8362 = vunpack.c.l.b16 %v8102
    %v8363 = vunpack.c.l.b16 %v8103
    %v8364 = vunpack.c.l.b16 %v8104
    %v8365 = vunpack.c.l.b16 %v8105
    %v8366 = vunpack.c.l.b16 %v8106
    %v8367 = vunpack.c.l.b16 %v8107
    %v8368 = vunpack.c.l.b16 %v8108
    %v8369 = vunpack.c.l.b16 %v8109
    %v8370 = vunpack.c.l.b16 %v8110
    %v8371 = vunpack.c.l.b16 %v8111
    %v8372 = vunpack.c.l.b16 %v8112
    %v8373 = vunpack.c.l.b16 %v8113
    %v8374 = vunpack.c.l.b16 %v8114
    %v8375 = vunpack.c.l.b16 %v8115
    %v8376 = vunpack.c.l.b16 %v8116
    %v8377 = vunpack.c.l.b16 %v8117
    %v8378 = vunpack.c.l.b16 %v8118
    %v8379 = vunpack.c.l.b16 %v8119
    %v8380 = vunpack.c.l.b16 %v8120
    %v8381 = vunpack.c.l.b16 %v8121
    %v8382 = vunpack.c.l.b16 %v8122
    %v8383 = vunpack.c.l.b16 %v8123
    %v8384 = vunpack.c.l.b16 %v8124
    %v8385 = vunpack.c.l.b16 %v8125
    %v8386 = vunpack.c.l.b16 %v8126
    %v8387 = vunpack.c.l.b16 %v8127
    %v8388 = vunpack.c.l.b16 %v8128
    %v8389 = vunpack.c.l.b16 %v8129
    %v8390 = vunpack.c.l.b16 %v8130
    %v8391 = vunpack.c.l.b16 %v8131
    %v8392 = vunpack.c.l.b16 %v8132
    %v8393 = vunpack.c.l.b16 %v8133
    %v8394 = vunpack.c.l.b16 %v8134
    %v8395 = vunpack.c.l.b16 %v8135
    %v8396 = vunpack.c.l.b16 %v8136
    %v8397 = vunpack.c.l.b16 %v8137
    %v8398 = vunpack.c.l.b16 %v8138
    %v8399 = vunpack.c.l.b16 %v8139
    %v8400 = vunpack.c.l.b16 %v8140
    %v8401 = vunpack.c.l.b16 %v8141
    %v8402 = vunpack.c.l.b16 %v8142
    %v8403 = vunpack.c.l.b16 %v8143
    %v8404 = vunpack.c.l.b16 %v8144
    %v8405 = vunpack.c.l.b16 %v8145
    %v8406 = vunpack.c.l.b16 %v8146
    %v8407 = vunpack.c.l.b16 %v8147
    %v8408 = vunpack.c.l.b16 %v8148
    %v8409 = vunpack.c.l.b16 %v8149
    %v8410 = vunpack.c.l.b16 %v8150
    %v8411 = vunpack.c.l.b16 %v8151
    %v8412 = vunpack.c.l.b16 %v8152
    %v8413 = vunpack.c.l.b16 %v8153
    %v8414 = vunpack.c.l.b16 %v8154
    %v8415 = vunpack.c.l.b16 %v8155
    %v8416 = vpack.c.b16 %v8289, %v8288
    %v8417 = vpack.c.b16 %v8291, %v8290
    %v8418 = vpack.c.b16 %v8293, %v8292
    %v8419 = vpack.c.b16 %v8295, %v8294
    %v8420 = vpack.c.b16 %v8297, %v8296
    %v8421 = vpack.c.b16 %v8299, %v8298
    %v8422 = vpack.c.b16 %v8301, %v8300
    %v8423 = vpack.c.b16 %v8303, %v8302
    %v8424 = vpack.c.b16 %v8305, %v8304
    %v8425 = vpack.c.b16 %v8307, %v8306
    %v8426 = vpack.c.b16 %v8309, %v8308
    %v8427 = vpack.c.b16 %v8311, %v8310
    %v8428 = vpack.c.b16 %v8313, %v8312
    %v8429 = vpack.c.b16 %v8315, %v8314
    %v8430 = vpack.c.b16 %v8317, %v8316
    %v8431 = vpack.c.b16 %v8319, %v8318
    %v8432 = vpack.c.b16 %v8321, %v8320
    %v8433 = vpack.c.b16 %v8323, %v8322
    %v8434 = vpack.c.b16 %v8325, %v8324
    %v8435 = vpack.c.b16 %v8327, %v8326
    %v8436 = vpack.c.b16 %v8329, %v8328
    %v8437 = vpack.c.b16 %v8331, %v8330
    %v8438 = vpack.c.b16 %v8333, %v8332
    %v8439 = vpack.c.b16 %v8335, %v8334
    %v8440 = vpack.c.b16 %v8337, %v8336
    %v8441 = vpack.c.b16 %v8339, %v8338
    %v8442 = vpack.c.b16 %v8341, %v8340
    %v8443 = vpack.c.b16 %v8343, %v8342
    %v8444 = vpack.c.b16 %v8345, %v8344
    %v8445 = vpack.c.b16 %v8347, %v8346
    %v8446 = vpack.c.b16 %v8349, %v8348
    %v8447 = vpack.c.b16 %v8351, %v8350
    %v8448 = vpack.c.b16 %v8353, %v8352
    %v8449 = vpack.c.b16 %v8355, %v8354
    %v8450 = vpack.c.b16 %v8357, %v8356
    %v8451 = vpack.c.b16 %v8359, %v8358
    %v8452 = vpack.c.b16 %v8361, %v8360
    %v8453 = vpack.c.b16 %v8363, %v8362
    %v8454 = vpack.c.b16 %v8365, %v8364
    %v8455 = vpack.c.b16 %v8367, %v8366
    %v8456 = vpack.c.b16 %v8369, %v8368
    %v8457 = vpack.c.b16 %v8371, %v8370
    %v8458 = vpack.c.b16 %v8373, %v8372
    %v8459 = vpack.c.b16 %v8375, %v8374
    %v8460 = vpack.c.b16 %v8377, %v8376
    %v8461 = vpack.c.b16 %v8379, %v8378
    %v8462 = vpack.c.b16 %v8381, %v8380
    %v8463 = vpack.c.b16 %v8383, %v8382
    %v8464 = vpack.c.b16 %v8385, %v8384
    %v8465 = vpack.c.b16 %v8387, %v8386
    %v8466 = vpack.c.b16 %v8389, %v8388
    %v8467 = vpack.c.b16 %v8391, %v8390
    %v8468 = vpack.c.b16 %v8393, %v8392
    %v8469 = vpack.c.b16 %v8395, %v8394
    %v8470 = vpack.c.b16 %v8397, %v8396
    %v8471 = vpack.c.b16 %v8399, %v8398
    %v8472 = vpack.c.b16 %v8401, %v8400
    %v8473 = vpack.c.b16 %v8403, %v8402
    %v8474 = vpack.c.b16 %v8405, %v8404
    %v8475 = vpack.c.b16 %v8407, %v8406
    %v8476 = vpack.c.b16 %v8409, %v8408
    %v8477 = vpack.c.b16 %v8411, %v8410
    %v8478 = vpack.c.b16 %v8413, %v8412
    %v8479 = vpack.c.b16 %v8415, %v8414
    %8544 = vmatpush.bf16.msra.mxu0 %v8423
    %8545 = vmatpush.bf16.msra.mxu0 %v8422
    %8546 = vmatpush.bf16.msra.mxu0 %v8421
    %8547 = vmatpush.bf16.msra.mxu0 %v8420
    %8548 = vmatpush.bf16.msra.mxu0 %v8419
    %8549 = vmatpush.bf16.msra.mxu0 %v8418
    %8550 = vmatpush.bf16.msra.mxu0 %v8417
    %8551 = vmatpush.bf16.msra.mxu0 %v8416
    %8552 = vmatmul.bf16.gmra.mxu0 %v8020
    %v8553 = vpop.f32.mrf.mxu0
    %v8554 = vadd.f32 %v8158, %v8553
    %v8555 = vpop.f32.mrf.mxu0
    %8556 = vdwg.mxu0
    %8557 = vmatpush.bf16.msra.mxu0 %v8431
    %8558 = vmatpush.bf16.msra.mxu0 %v8430
    %8559 = vmatpush.bf16.msra.mxu0 %v8429
    %8560 = vmatpush.bf16.msra.mxu0 %v8428
    %8561 = vmatpush.bf16.msra.mxu0 %v8427
    %8562 = vmatpush.bf16.msra.mxu0 %v8426
    %8563 = vmatpush.bf16.msra.mxu0 %v8425
    %8564 = vmatpush.bf16.msra.mxu0 %v8424
    %8565 = vmatmul.bf16.gmra.mxu0 %v8021
    %v8566 = vpop.f32.mrf.mxu0
    %v8567 = vadd.f32 %v8554, %v8566
    %v8568 = vpop.f32.mrf.mxu0
    %8569 = vdwg.mxu0
    %8570 = vmatpush.bf16.msra.mxu0 %v8439
    %8571 = vmatpush.bf16.msra.mxu0 %v8438
    %8572 = vmatpush.bf16.msra.mxu0 %v8437
    %8573 = vmatpush.bf16.msra.mxu0 %v8436
    %8574 = vmatpush.bf16.msra.mxu0 %v8435
    %8575 = vmatpush.bf16.msra.mxu0 %v8434
    %8576 = vmatpush.bf16.msra.mxu0 %v8433
    %8577 = vmatpush.bf16.msra.mxu0 %v8432
    %8578 = vmatmul.bf16.gmra.mxu0 %v8022
    %v8579 = vpop.f32.mrf.mxu0
    %v8580 = vadd.f32 %v8567, %v8579
    %v8581 = vpop.f32.mrf.mxu0
    %8582 = vdwg.mxu0
    %8583 = vmatpush.bf16.msra.mxu0 %v8447
    %8584 = vmatpush.bf16.msra.mxu0 %v8446
    %8585 = vmatpush.bf16.msra.mxu0 %v8445
    %8586 = vmatpush.bf16.msra.mxu0 %v8444
    %8587 = vmatpush.bf16.msra.mxu0 %v8443
    %8588 = vmatpush.bf16.msra.mxu0 %v8442
    %8589 = vmatpush.bf16.msra.mxu0 %v8441
    %8590 = vmatpush.bf16.msra.mxu0 %v8440
    %8591 = vmatmul.bf16.gmra.mxu0 %v8023
    %v8592 = vpop.f32.mrf.mxu0
    %v8593 = vadd.f32 %v8580, %v8592
    %v8594 = vpop.f32.mrf.mxu0
    %8595 = vdwg.mxu0
    %8596 = vmatpush.bf16.msra.mxu0 %v8455
    %8597 = vmatpush.bf16.msra.mxu0 %v8454
    %8598 = vmatpush.bf16.msra.mxu0 %v8453
    %8599 = vmatpush.bf16.msra.mxu0 %v8452
    %8600 = vmatpush.bf16.msra.mxu0 %v8451
    %8601 = vmatpush.bf16.msra.mxu0 %v8450
    %8602 = vmatpush.bf16.msra.mxu0 %v8449
    %8603 = vmatpush.bf16.msra.mxu0 %v8448
    %8604 = vmatmul.bf16.gmra.mxu0 %v8024
    %v8605 = vpop.f32.mrf.mxu0
    %v8606 = vadd.f32 %v8593, %v8605
    %v8607 = vpop.f32.mrf.mxu0
    %8608 = vdwg.mxu0
    %8609 = vmatpush.bf16.msra.mxu0 %v8463
    %8610 = vmatpush.bf16.msra.mxu0 %v8462
    %8611 = vmatpush.bf16.msra.mxu0 %v8461
    %8612 = vmatpush.bf16.msra.mxu0 %v8460
    %8613 = vmatpush.bf16.msra.mxu0 %v8459
    %8614 = vmatpush.bf16.msra.mxu0 %v8458
    %8615 = vmatpush.bf16.msra.mxu0 %v8457
    %8616 = vmatpush.bf16.msra.mxu0 %v8456
    %8617 = vmatmul.bf16.gmra.mxu0 %v8025
    %v8618 = vpop.f32.mrf.mxu0
    %v8619 = vadd.f32 %v8606, %v8618
    %v8620 = vpop.f32.mrf.mxu0
    %8621 = vdwg.mxu0
    %8622 = vmatpush.bf16.msra.mxu0 %v8471
    %8623 = vmatpush.bf16.msra.mxu0 %v8470
    %8624 = vmatpush.bf16.msra.mxu0 %v8469
    %8625 = vmatpush.bf16.msra.mxu0 %v8468
    %8626 = vmatpush.bf16.msra.mxu0 %v8467
    %8627 = vmatpush.bf16.msra.mxu0 %v8466
    %8628 = vmatpush.bf16.msra.mxu0 %v8465
    %8629 = vmatpush.bf16.msra.mxu0 %v8464
    %8630 = vmatmul.bf16.gmra.mxu0 %v8026
    %v8631 = vpop.f32.mrf.mxu0
    %v8632 = vadd.f32 %v8619, %v8631
    %v8633 = vpop.f32.mrf.mxu0
    %8634 = vdwg.mxu0
    %8635 = vmatpush.bf16.msra.mxu0 %v8479
    %8636 = vmatpush.bf16.msra.mxu0 %v8478
    %8637 = vmatpush.bf16.msra.mxu0 %v8477
    %8638 = vmatpush.bf16.msra.mxu0 %v8476
    %8639 = vmatpush.bf16.msra.mxu0 %v8475
    %8640 = vmatpush.bf16.msra.mxu0 %v8474
    %8641 = vmatpush.bf16.msra.mxu0 %v8473
    %8642 = vmatpush.bf16.msra.mxu0 %v8472
    %8643 = vmatmul.bf16.gmra.mxu0 %v8027
    %v8644 = vpop.f32.mrf.mxu0
    %v8645 = vadd.f32 %v8632, %v8644
    %v8646 = vpop.f32.mrf.mxu0
    %8647 = vdwg.mxu0
    %8648 = vst [vmem:[#allocation14] sm:$0xff] %v8645
    // Predicated region
    $region58: #{tpu_custom_call.1} parent=1 // pred_check
      _
    $region59: #{tpu_custom_call.1} parent=1 // pred_check_branch
      %8650 = sbr.rel (0) target = $region61
    $region60: #{tpu_custom_call.1} parent=1 // pred_region
      %8652 = vsyncadd [#allocation4], 0
      %s8654 = sshll.u32 [#allocation14], 4
      %s8655 = int_to_ptr.vmem [resolvable:$true] %s8654
      %s8656 = sshll.u32 %s7, 4
      %s8657 = int_to_ptr.hbm [resolvable:$true] %s8656
      %8659 = dma.vmem_to_hbm [thread:$0]  %s8655, 128, %s8657, [#allocation4]
    $region61: #{tpu_custom_call.1} parent=1 // pred_fallthru
      _
    // Predicated region
    $region62: #{tpu_custom_call.1} parent=1 // pred_check
      _
    $region63: #{tpu_custom_call.1} parent=1 // pred_check_branch
      %8661 = sbr.rel (0) target = $region65
    $region64: #{tpu_custom_call.1} parent=1 // pred_region
      %8663 = dma.done [#allocation4], 128
    $region65: #{tpu_custom_call.1} parent=1 // pred_fallthru
      _
    %8664 = vsyncpa [#allocation3], 1
    %8665 = vsyncpa [#allocation6], 1
    %8666 = vsyncpa [#allocation9], 1
    %8667 = vsyncpa [#allocation12], 1
    %8668 = vsyncpa [#allocation4], 1

</llo_original>
